<compile_context>
chip_gen: v7x
topology: tpu7x:2x2x1
jax: 0.10.0
libtpu: 0.0.40
codegen_flags: <defaults>
</compile_context>

<pallas_src>
import functools

import jax
import jax.numpy as jnp
from jax.experimental import pallas as pl
from jax.experimental.pallas import tpu as pltpu


# ----------------------------------------------------------------------------
# Pallas kernels
# ----------------------------------------------------------------------------
def _stem_blocks_kernel(p_ref, ws_ref, bs_ref, wb_ref, bb_ref, o_ref):
    """Fused:  SiLU(patches @ Wstem + bstem)  ->  SiLU(h @ Wblocks + bblocks)."""
    h = jnp.dot(p_ref[...], ws_ref[...], preferred_element_type=jnp.float32)
    h = h + bs_ref[...]
    h = h * jax.nn.sigmoid(h)                       # SiLU, f32 epilogue on the accumulator
    y = jnp.dot(h.astype(wb_ref.dtype), wb_ref[...],
                preferred_element_type=jnp.float32)
    y = y + bb_ref[...]
    y = y * jax.nn.sigmoid(y)
    o_ref[...] = y.astype(o_ref.dtype)


def stem_blocks(patches, w_stem, b_stem, w_blocks, b_blocks, *, tm):
    """patches:[Mp,Ks] -> bf16 features [Mp, 384]; M tiled, weights VMEM-resident."""
    Mp, Ks = patches.shape
    Ns = w_stem.shape[1]
    Kb, Nb = w_blocks.shape
    return pl.pallas_call(
        _stem_blocks_kernel,
        out_shape=jax.ShapeDtypeStruct((Mp, Nb), jnp.bfloat16),
        grid=(Mp // tm,),
        in_specs=[
            pl.BlockSpec((tm, Ks), lambda i: (i, 0)),
            pl.BlockSpec((Ks, Ns), lambda i: (0, 0)),
            pl.BlockSpec((1, Ns), lambda i: (0, 0)),
            pl.BlockSpec((Kb, Nb), lambda i: (0, 0)),
            pl.BlockSpec((1, Nb), lambda i: (0, 0)),
        ],
        out_specs=pl.BlockSpec((tm, Nb), lambda i: (i, 0)),
        compiler_params=pltpu.CompilerParams(
            dimension_semantics=("parallel",),
            vmem_limit_bytes=32 * 1024 * 1024,
        ),
    )(patches, w_stem, b_stem, w_blocks, b_blocks)


def _head_pool_kernel(inv_hw, x_ref, w_ref, b_ref, o_ref, acc_ref):
    """Fused conv_head(1x1)+bn2+SiLU with global average pooling over spatial tiles."""
    s = pl.program_id(1)

    @pl.when(s == 0)
    def _():
        acc_ref[...] = jnp.zeros_like(acc_ref)

    y = jnp.dot(x_ref[0], w_ref[...], preferred_element_type=jnp.float32)
    y = y + b_ref[...]
    y = y * jax.nn.sigmoid(y)                       # SiLU after folded bn2
    acc_ref[...] += jnp.sum(y, axis=0, keepdims=True)

    @pl.when(s == pl.num_programs(1) - 1)
    def _():
        o_ref[...] = (acc_ref[...] * inv_hw).reshape((1, 1, -1)).astype(o_ref.dtype)


def head_pool(x_bsc, w_head, b_head, *, ts):
    """x:[B,HW,Cin] bf16 -> pooled:[B,Cout] f32  (features never round-trip through HBM)."""
    B, HW, Cin = x_bsc.shape
    Cout = w_head.shape[1]
    kern = functools.partial(_head_pool_kernel, float(1.0 / HW))
    out = pl.pallas_call(
        kern,
        out_shape=jax.ShapeDtypeStruct((B, 1, Cout), jnp.float32),
        grid=(B, HW // ts),
        in_specs=[
            pl.BlockSpec((1, ts, Cin), lambda b, s: (b, s, 0)),
            pl.BlockSpec((Cin, Cout), lambda b, s: (0, 0)),
            pl.BlockSpec((1, Cout), lambda b, s: (0, 0)),
        ],
        out_specs=pl.BlockSpec((1, 1, Cout), lambda b, s: (b, 0, 0)),
        scratch_shapes=[pltpu.VMEM((1, Cout), jnp.float32)],
        compiler_params=pltpu.CompilerParams(
            dimension_semantics=("parallel", "arbitrary"),
            vmem_limit_bytes=32 * 1024 * 1024,
        ),
    )(x_bsc, w_head, b_head)
    return out.reshape(B, Cout)


def _classifier_kernel(x_ref, w1_ref, b1_ref, w2_ref, b2_ref, o_ref):
    """Linear -> ReLU -> (Dropout eval = identity) -> Linear, lane-dense padded."""
    h = jnp.dot(x_ref[...], w1_ref[...], preferred_element_type=jnp.float32) + b1_ref[...]
    h = jnp.maximum(h, 0.0)
    y = jnp.dot(h.astype(w2_ref.dtype), w2_ref[...], preferred_element_type=jnp.float32)
    o_ref[...] = y + b2_ref[...]


def classifier_head(pooled, w1p, b1p, w2p, b2p):
    """pooled:[B,1536] bf16 -> padded logits [B, 128] f32 (real logits in cols 0:6)."""
    B, F = pooled.shape
    Hp = w1p.shape[1]
    Op = w2p.shape[1]
    return pl.pallas_call(
        _classifier_kernel,
        out_shape=jax.ShapeDtypeStruct((B, Op), jnp.float32),
        grid=(1,),
        in_specs=[
            pl.BlockSpec((B, F), lambda i: (0, 0)),
            pl.BlockSpec((F, Hp), lambda i: (0, 0)),
            pl.BlockSpec((1, Hp), lambda i: (0, 0)),
            pl.BlockSpec((Hp, Op), lambda i: (0, 0)),
            pl.BlockSpec((1, Op), lambda i: (0, 0)),
        ],
        out_specs=pl.BlockSpec((B, Op), lambda i: (0, 0)),
        compiler_params=pltpu.CompilerParams(
            vmem_limit_bytes=32 * 1024 * 1024,
        ),
    )(pooled, w1p, b1p, w2p, b2p)


# ----------------------------------------------------------------------------
# Plain-JAX glue: im2col, batchnorm folding, tiling helpers, parameters
# ----------------------------------------------------------------------------
def _round_up(x, m):
    return ((x + m - 1) // m) * m


def _pick_spatial_tile(hw, max_tile=512):
    if hw <= max_tile:
        return hw
    for t in range(max_tile - (max_tile % 8), 7, -8):
        if hw % t == 0:
            return t
    return hw


def im2col(x_nhwc, kh, kw, stride, pad):
    B, H, W, C = x_nhwc.shape
    xp = jnp.pad(x_nhwc, ((0, 0), (pad, pad), (pad, pad), (0, 0)))
    Ho = (H + 2 * pad - kh) // stride + 1
    Wo = (W + 2 * pad - kw) // stride + 1
    cols = []
    for i in range(kh):
        for j in range(kw):
            cols.append(xp[:, i:i + stride * Ho:stride, j:j + stride * Wo:stride, :])
    patches = jnp.stack(cols, axis=-2)              # [B, Ho, Wo, kh*kw, C]
    return patches.reshape(B, Ho, Wo, kh * kw * C), Ho, Wo


def fold_bn(w_flat, gamma, beta, mean, var, eps=1e-5):
    """Fold inference BatchNorm into a bias-free conv: returns (w_folded, bias)."""
    scale = gamma / jnp.sqrt(var + eps)
    return w_flat * scale[None, :], beta - mean * scale


def make_params(key):
    ks = jax.random.split(key, 12)
    p = {}

    def normal(k, shape, s=0.05):
        return (s * jax.random.normal(k, shape)).astype(jnp.float32)

    # conv_stem: 3x3 s2, 3 -> 40 (torch layout [Cout, Cin, kh, kw]) + bn1
    w = normal(ks[0], (40, 3, 3, 3))
    p["stem_w"] = jnp.transpose(w, (2, 3, 1, 0)).reshape(3 * 3 * 3, 40)   # [kh*kw*Cin, Cout]
    p["bn1"] = (jnp.ones((40,)), jnp.zeros((40,)),
                normal(ks[1], (40,)), jnp.abs(normal(ks[2], (40,))) + 1.0)

    # TODO(synk): stand-in for the efficientnet_b3 MBConv block stack (40 -> 384 pointwise).
    p["blocks_w"] = normal(ks[3], (40, 384))
    p["blocks_b"] = normal(ks[4], (384,))

    # conv_head: 1x1, 384 -> 1536 + bn2
    p["head_w"] = normal(ks[5], (384, 1536))
    p["bn2"] = (jnp.ones((1536,)), jnp.zeros((1536,)),
                normal(ks[6], (1536,)), jnp.abs(normal(ks[7], (1536,))) + 1.0)

    # classifier (torch Linear weight is [out, in] -> stored transposed [in, out])
    p["cls"] = (normal(ks[8], (1536, 480)), normal(ks[9], (480,)),
                normal(ks[10], (480, 6)), normal(ks[11], (6,)))
    return p


def effnet_erosion_forward(x_nchw, p):
    B = x_nchw.shape[0]
    x = jnp.transpose(x_nchw, (0, 2, 3, 1)).astype(jnp.float32)           # NCHW -> NHWC

    # --- conv_stem + bn1 + SiLU, fused with the blocks stand-in (40 -> 384) ---
    g, b_, m, v = p["bn1"]
    w_stem, bias_stem = fold_bn(p["stem_w"], g, b_, m, v)
    patches, Ho, Wo = im2col(x, 3, 3, stride=2, pad=1)
    M = B * Ho * Wo
    Ks = patches.shape[-1]
    tm = 512 if M >= 512 else _round_up(M, 8)
    Mp = _round_up(M, tm)
    patches = patches.reshape(M, Ks)
    if Mp != M:
        patches = jnp.pad(patches, ((0, Mp - M), (0, 0)))
    feats = stem_blocks(
        patches.astype(jnp.bfloat16),
        w_stem.astype(jnp.bfloat16), bias_stem.reshape(1, -1).astype(jnp.float32),
        p["blocks_w"].astype(jnp.bfloat16), p["blocks_b"].reshape(1, -1).astype(jnp.float32),
        tm=tm)                                                            # [Mp, 384] bf16
    feats = feats[:M].reshape(B, Ho * Wo, -1)

    # --- conv_head (1x1) + bn2 + SiLU, fused with GlobalAvgPool2d ---
    g, b_, m, v = p["bn2"]
    w_head, bias_head = fold_bn(p["head_w"], g, b_, m, v)
    ts = _pick_spatial_tile(Ho * Wo)
    pooled = head_pool(
        feats, w_head.astype(jnp.bfloat16),
        bias_head.reshape(1, -1).astype(jnp.float32), ts=ts)              # [B, 1536] f32

    # --- classifier: Linear(1536,480) + ReLU + Dropout(eval=identity) + Linear(480,6) ---
    w1, b1, w2, b2 = p["cls"]
    Hpad, Opad = 512, 128                     # lane-dense padding (480->512, 6->128)
    w1p = jnp.zeros((w1.shape[0], Hpad), jnp.bfloat16).at[:, :w1.shape[1]].set(w1.astype(jnp.bfloat16))
    b1p = jnp.zeros((1, Hpad), jnp.float32).at[:, :b1.shape[0]].set(b1)
    w2p = jnp.zeros((Hpad, Opad), jnp.bfloat16).at[:w2.shape[0], :w2.shape[1]].set(w2.astype(jnp.bfloat16))
    b2p = jnp.zeros((1, Opad), jnp.float32).at[:, :b2.shape[0]].set(b2)
    logits = classifier_head(pooled.astype(jnp.bfloat16), w1p, b1p, w2p, b2p)
    return logits[:, :w2.shape[1]]                                        # [B, 6]


if __name__ == "__main__":
    key = jax.random.PRNGKey(0)
    k_x, k_p = jax.random.split(key)
    x = jax.random.normal(k_x, (2, 3, 16, 16), dtype=jnp.float32)         # NCHW, like PyTorch
    params = make_params(k_p)

    y = jax.jit(effnet_erosion_forward)(x, params)
    jax.block_until_ready(y)
    assert y.shape == (2, 6)
    print("KERNEL_OK")
</pallas_src>

<mosaic_0001>
module attributes {stable_mosaic.version = 11 : i64} {
  func.func @_head_pool_kernel(%arg0: i32, %arg1: i32, %arg2: memref<1x64x384xbf16, #tpu.memory_space<vmem>>, %arg3: memref<384x1536xbf16, #tpu.memory_space<vmem>>, %arg4: memref<1x1536xf32, #tpu.memory_space<vmem>>, %arg5: memref<1x1x1536xf32, #tpu.memory_space<vmem>>, %arg6: memref<1x1536xf32, #tpu.memory_space<vmem>>) attributes {dimension_semantics = [#tpu.dimension_semantics<parallel>, #tpu.dimension_semantics<arbitrary>], iteration_bounds = array<i64: 2, 1>, scalar_prefetch = 0 : i64, scratch_operands = 1 : i64, tpu.core_type = #tpu.core_type<tc>, window_params = [{transform_indices = @transform_0, window_bounds = array<i64: 1, 64, 384>}, {pipeline_mode = #tpu.pipeline_mode<synchronous>, transform_indices = @transform_1, window_bounds = array<i64: 384, 1536>}, {pipeline_mode = #tpu.pipeline_mode<synchronous>, transform_indices = @transform_2, window_bounds = array<i64: 1, 1536>}, {transform_indices = @transform_3, window_bounds = array<i64: 1, 1, 1536>}]} {
    %c0_i32 = arith.constant 0 : i32
    %0 = arith.cmpi eq, %arg1, %c0_i32 : i32
    %1 = arith.extui %0 : i1 to i32
    %c0_i32_0 = arith.constant 0 : i32
    %2 = arith.cmpi ne, %1, %c0_i32_0 : i32
    scf.if %2 {
      %cst_15 = arith.constant 0.000000e+00 : f32
      %24 = vector.broadcast %cst_15 : f32 to vector<1x1536xf32>
      %c0_16 = arith.constant 0 : index
      %c0_17 = arith.constant 0 : index
      %25 = vector.load %arg6[%c0_16, %c0_17] : memref<1x1536xf32, #tpu.memory_space<vmem>>, vector<1x1536xf32>
      tpu.vector_store %arg6[%c0_16, %c0_17], %24 {strides = array<i32>} : memref<1x1536xf32, #tpu.memory_space<vmem>>, vector<1x1536xf32>,
    } else {
    }
    %c0 = arith.constant 0 : index
    %c0_1 = arith.constant 0 : index
    %c0_2 = arith.constant 0 : index
    %3 = vector.load %arg2[%c0, %c0_1, %c0_2] : memref<1x64x384xbf16, #tpu.memory_space<vmem>>, vector<1x64x384xbf16>
    %4 = vector.shape_cast %3 : vector<1x64x384xbf16> to vector<64x384xbf16>
    %c0_3 = arith.constant 0 : index
    %c0_4 = arith.constant 0 : index
    %5 = vector.load %arg3[%c0_3, %c0_4] : memref<384x1536xbf16, #tpu.memory_space<vmem>>, vector<384x1536xbf16>
    %cst = arith.constant dense<0.000000e+00> : vector<64x1536xf32>
    %6 = tpu.matmul %4, %5, %cst {dimension_numbers = #tpu.dot_dimension_numbers<[1], [0], [0], [1], [0, 0, 1, 1], [], []>} : vector<64x384xbf16>, vector<384x1536xbf16>, vector<64x1536xf32> -> vector<64x1536xf32>
    %c0_5 = arith.constant 0 : index
    %c0_6 = arith.constant 0 : index
    %7 = vector.load %arg4[%c0_5, %c0_6] : memref<1x1536xf32, #tpu.memory_space<vmem>>, vector<1x1536xf32>
    %8 = vector.broadcast %7 : vector<1x1536xf32> to vector<64x1536xf32>
    %9 = arith.addf %6, %8 : vector<64x1536xf32>
    %10 = arith.negf %9 : vector<64x1536xf32>
    %11 = math.exp %10 : vector<64x1536xf32>
    %cst_7 = arith.constant 1.000000e+00 : f32
    %12 = vector.broadcast %cst_7 : f32 to vector<64x1536xf32>
    %13 = arith.addf %12, %11 : vector<64x1536xf32>
    %14 = arith.divf %12, %13 : vector<64x1536xf32>
    %15 = arith.mulf %9, %14 : vector<64x1536xf32>
    %c0_8 = arith.constant 0 : index
    %c0_9 = arith.constant 0 : index
    %16 = vector.load %arg6[%c0_8, %c0_9] : memref<1x1536xf32, #tpu.memory_space<vmem>>, vector<1x1536xf32>
    %cst_10 = arith.constant dense<0.000000e+00> : vector<1536xf32>
    %17 = vector.multi_reduction <add>, %15, %cst_10 [0] : vector<64x1536xf32> to vector<1536xf32>
    %18 = vector.shape_cast %17 : vector<1536xf32> to vector<1x1536xf32>
    %19 = arith.addf %16, %18 : vector<1x1536xf32>
    %c0_11 = arith.constant 0 : index
    %c0_12 = arith.constant 0 : index
    %20 = vector.load %arg6[%c0_11, %c0_12] : memref<1x1536xf32, #tpu.memory_space<vmem>>, vector<1x1536xf32>
    tpu.vector_store %arg6[%c0_11, %c0_12], %19 {strides = array<i32>} : memref<1x1536xf32, #tpu.memory_space<vmem>>, vector<1x1536xf32>,
    %c0_i32_13 = arith.constant 0 : i32
    %21 = arith.cmpi eq, %arg1, %c0_i32_13 : i32
    %22 = arith.extui %21 : i1 to i32
    %c0_i32_14 = arith.constant 0 : i32
    %23 = arith.cmpi ne, %22, %c0_i32_14 : i32
    scf.if %23 {
      %c0_15 = arith.constant 0 : index
      %c0_16 = arith.constant 0 : index
      %24 = vector.load %arg6[%c0_15, %c0_16] : memref<1x1536xf32, #tpu.memory_space<vmem>>, vector<1x1536xf32>
      %cst_17 = arith.constant 1.562500e-02 : f32
      %25 = vector.broadcast %cst_17 : f32 to vector<1x1536xf32>
      %26 = arith.mulf %24, %25 : vector<1x1536xf32>
      %27 = vector.shape_cast %26 : vector<1x1536xf32> to vector<1x1x1536xf32>
      %c0_18 = arith.constant 0 : index
      %c0_19 = arith.constant 0 : index
      %c0_20 = arith.constant 0 : index
      %28 = vector.load %arg5[%c0_18, %c0_19, %c0_20] : memref<1x1x1536xf32, #tpu.memory_space<vmem>>, vector<1x1x1536xf32>
      tpu.vector_store %arg5[%c0_18, %c0_19, %c0_20], %27 {strides = array<i32>} : memref<1x1x1536xf32, #tpu.memory_space<vmem>>, vector<1x1x1536xf32>,
    } else {
    }
    return
  }
  func.func @transform_0(%arg0: i32, %arg1: i32) -> (i32, i32, i32) {
    %c0_i32 = arith.constant 0 : i32
    %c0_i32_0 = arith.constant 0 : i32
    return %arg0, %arg1, %c0_i32 : i32, i32, i32
  }
  func.func @transform_1(%arg0: i32, %arg1: i32) -> (i32, i32) {
    %c0_i32 = arith.constant 0 : i32
    %c0_i32_0 = arith.constant 0 : i32
    %c0_i32_1 = arith.constant 0 : i32
    return %c0_i32, %c0_i32_0 : i32, i32
  }
  func.func @transform_2(%arg0: i32, %arg1: i32) -> (i32, i32) {
    %c0_i32 = arith.constant 0 : i32
    %c0_i32_0 = arith.constant 0 : i32
    %c0_i32_1 = arith.constant 0 : i32
    return %c0_i32, %c0_i32_0 : i32, i32
  }
  func.func @transform_3(%arg0: i32, %arg1: i32) -> (i32, i32, i32) {
    %c0_i32 = arith.constant 0 : i32
    %c0_i32_0 = arith.constant 0 : i32
    %c0_i32_1 = arith.constant 0 : i32
    return %arg0, %c0_i32, %c0_i32_0 : i32, i32, i32
  }
}

module attributes {stable_mosaic.version = 11 : i64} {
  func.func @_stem_blocks_kernel(%arg0: i32, %arg1: memref<128x27xbf16, #tpu.memory_space<vmem>>, %arg2: memref<27x40xbf16, #tpu.memory_space<vmem>>, %arg3: memref<1x40xf32, #tpu.memory_space<vmem>>, %arg4: memref<40x384xbf16, #tpu.memory_space<vmem>>, %arg5: memref<1x384xf32, #tpu.memory_space<vmem>>, %arg6: memref<128x384xbf16, #tpu.memory_space<vmem>>) attributes {dimension_semantics = [#tpu.dimension_semantics<parallel>], iteration_bounds = array<i64: 1>, scalar_prefetch = 0 : i64, scratch_operands = 0 : i64, tpu.core_type = #tpu.core_type<tc>, window_params = [{transform_indices = @transform_0, window_bounds = array<i64: 128, 27>}, {pipeline_mode = #tpu.pipeline_mode<synchronous>, transform_indices = @transform_1, window_bounds = array<i64: 27, 40>}, {pipeline_mode = #tpu.pipeline_mode<synchronous>, transform_indices = @transform_2, window_bounds = array<i64: 1, 40>}, {pipeline_mode = #tpu.pipeline_mode<synchronous>, transform_indices = @transform_3, window_bounds = array<i64: 40, 384>}, {pipeline_mode = #tpu.pipeline_mode<synchronous>, transform_indices = @transform_4, window_bounds = array<i64: 1, 384>}, {transform_indices = @transform_5, window_bounds = array<i64: 128, 384>}]} {
    %c0 = arith.constant 0 : index
    %c0_0 = arith.constant 0 : index
    %0 = vector.load %arg1[%c0, %c0_0] : memref<128x27xbf16, #tpu.memory_space<vmem>>, vector<128x27xbf16>
    %c0_1 = arith.constant 0 : index
    %c0_2 = arith.constant 0 : index
    %1 = vector.load %arg2[%c0_1, %c0_2] : memref<27x40xbf16, #tpu.memory_space<vmem>>, vector<27x40xbf16>
    %cst = arith.constant dense<0.000000e+00> : vector<128x40xf32>
    %2 = tpu.matmul %0, %1, %cst {dimension_numbers = #tpu.dot_dimension_numbers<[1], [0], [0], [1], [0, 0, 1, 1], [], []>} : vector<128x27xbf16>, vector<27x40xbf16>, vector<128x40xf32> -> vector<128x40xf32>
    %c0_3 = arith.constant 0 : index
    %c0_4 = arith.constant 0 : index
    %3 = vector.load %arg3[%c0_3, %c0_4] : memref<1x40xf32, #tpu.memory_space<vmem>>, vector<1x40xf32>
    %4 = vector.broadcast %3 : vector<1x40xf32> to vector<128x40xf32>
    %5 = arith.addf %2, %4 : vector<128x40xf32>
    %6 = arith.negf %5 : vector<128x40xf32>
    %7 = math.exp %6 : vector<128x40xf32>
    %cst_5 = arith.constant 1.000000e+00 : f32
    %8 = vector.broadcast %cst_5 : f32 to vector<128x40xf32>
    %9 = arith.addf %8, %7 : vector<128x40xf32>
    %10 = arith.divf %8, %9 : vector<128x40xf32>
    %11 = arith.mulf %5, %10 : vector<128x40xf32>
    %12 = arith.truncf %11 : vector<128x40xf32> to vector<128x40xbf16>
    %c0_6 = arith.constant 0 : index
    %c0_7 = arith.constant 0 : index
    %13 = vector.load %arg4[%c0_6, %c0_7] : memref<40x384xbf16, #tpu.memory_space<vmem>>, vector<40x384xbf16>
    %cst_8 = arith.constant dense<0.000000e+00> : vector<128x384xf32>
    %14 = tpu.matmul %12, %13, %cst_8 {dimension_numbers = #tpu.dot_dimension_numbers<[1], [0], [0], [1], [0, 0, 1, 1], [], []>} : vector<128x40xbf16>, vector<40x384xbf16>, vector<128x384xf32> -> vector<128x384xf32>
    %c0_9 = arith.constant 0 : index
    %c0_10 = arith.constant 0 : index
    %15 = vector.load %arg5[%c0_9, %c0_10] : memref<1x384xf32, #tpu.memory_space<vmem>>, vector<1x384xf32>
    %16 = vector.broadcast %15 : vector<1x384xf32> to vector<128x384xf32>
    %17 = arith.addf %14, %16 : vector<128x384xf32>
    %18 = arith.negf %17 : vector<128x384xf32>
    %19 = math.exp %18 : vector<128x384xf32>
    %cst_11 = arith.constant 1.000000e+00 : f32
    %20 = vector.broadcast %cst_11 : f32 to vector<128x384xf32>
    %21 = arith.addf %20, %19 : vector<128x384xf32>
    %22 = arith.divf %20, %21 : vector<128x384xf32>
    %23 = arith.mulf %17, %22 : vector<128x384xf32>
    %24 = arith.truncf %23 : vector<128x384xf32> to vector<128x384xbf16>
    %c0_12 = arith.constant 0 : index
    %c0_13 = arith.constant 0 : index
    %25 = vector.load %arg6[%c0_12, %c0_13] : memref<128x384xbf16, #tpu.memory_space<vmem>>, vector<128x384xbf16>
    tpu.vector_store %arg6[%c0_12, %c0_13], %24 {strides = array<i32>} : memref<128x384xbf16, #tpu.memory_space<vmem>>, vector<128x384xbf16>,
    return
  }
  func.func @transform_0(%arg0: i32) -> (i32, i32) {
    %c0_i32 = arith.constant 0 : i32
    %c0_i32_0 = arith.constant 0 : i32
    return %arg0, %c0_i32 : i32, i32
  }
  func.func @transform_1(%arg0: i32) -> (i32, i32) {
    %c0_i32 = arith.constant 0 : i32
    %c0_i32_0 = arith.constant 0 : i32
    %c0_i32_1 = arith.constant 0 : i32
    return %c0_i32, %c0_i32_0 : i32, i32
  }
  func.func @transform_2(%arg0: i32) -> (i32, i32) {
    %c0_i32 = arith.constant 0 : i32
    %c0_i32_0 = arith.constant 0 : i32
    %c0_i32_1 = arith.constant 0 : i32
    return %c0_i32, %c0_i32_0 : i32, i32
  }
  func.func @transform_3(%arg0: i32) -> (i32, i32) {
    %c0_i32 = arith.constant 0 : i32
    %c0_i32_0 = arith.constant 0 : i32
    %c0_i32_1 = arith.constant 0 : i32
    return %c0_i32, %c0_i32_0 : i32, i32
  }
  func.func @transform_4(%arg0: i32) -> (i32, i32) {
    %c0_i32 = arith.constant 0 : i32
    %c0_i32_0 = arith.constant 0 : i32
    %c0_i32_1 = arith.constant 0 : i32
    return %c0_i32, %c0_i32_0 : i32, i32
  }
  func.func @transform_5(%arg0: i32) -> (i32, i32) {
    %c0_i32 = arith.constant 0 : i32
    %c0_i32_0 = arith.constant 0 : i32
    return %arg0, %c0_i32 : i32, i32
  }
}

module attributes {stable_mosaic.version = 11 : i64} {
  func.func @_classifier_kernel(%arg0: i32, %arg1: memref<2x1536xbf16, #tpu.memory_space<vmem>>, %arg2: memref<1536x512xbf16, #tpu.memory_space<vmem>>, %arg3: memref<1x512xf32, #tpu.memory_space<vmem>>, %arg4: memref<512x128xbf16, #tpu.memory_space<vmem>>, %arg5: memref<1x128xf32, #tpu.memory_space<vmem>>, %arg6: memref<2x128xf32, #tpu.memory_space<vmem>>) attributes {dimension_semantics = [#tpu.dimension_semantics<arbitrary>], iteration_bounds = array<i64: 1>, scalar_prefetch = 0 : i64, scratch_operands = 0 : i64, tpu.core_type = #tpu.core_type<tc>, window_params = [{pipeline_mode = #tpu.pipeline_mode<synchronous>, transform_indices = @transform_0, window_bounds = array<i64: 2, 1536>}, {pipeline_mode = #tpu.pipeline_mode<synchronous>, transform_indices = @transform_1, window_bounds = array<i64: 1536, 512>}, {pipeline_mode = #tpu.pipeline_mode<synchronous>, transform_indices = @transform_2, window_bounds = array<i64: 1, 512>}, {pipeline_mode = #tpu.pipeline_mode<synchronous>, transform_indices = @transform_3, window_bounds = array<i64: 512, 128>}, {pipeline_mode = #tpu.pipeline_mode<synchronous>, transform_indices = @transform_4, window_bounds = array<i64: 1, 128>}, {pipeline_mode = #tpu.pipeline_mode<synchronous>, transform_indices = @transform_5, window_bounds = array<i64: 2, 128>}]} {
    %c0 = arith.constant 0 : index
    %c0_0 = arith.constant 0 : index
    %0 = vector.load %arg1[%c0, %c0_0] : memref<2x1536xbf16, #tpu.memory_space<vmem>>, vector<2x1536xbf16>
    %c0_1 = arith.constant 0 : index
    %c0_2 = arith.constant 0 : index
    %1 = vector.load %arg2[%c0_1, %c0_2] : memref<1536x512xbf16, #tpu.memory_space<vmem>>, vector<1536x512xbf16>
    %cst = arith.constant dense<0.000000e+00> : vector<2x512xf32>
    %2 = tpu.matmul %0, %1, %cst {dimension_numbers = #tpu.dot_dimension_numbers<[1], [0], [0], [1], [0, 0, 1, 1], [], []>} : vector<2x1536xbf16>, vector<1536x512xbf16>, vector<2x512xf32> -> vector<2x512xf32>
    %c0_3 = arith.constant 0 : index
    %c0_4 = arith.constant 0 : index
    %3 = vector.load %arg3[%c0_3, %c0_4] : memref<1x512xf32, #tpu.memory_space<vmem>>, vector<1x512xf32>
    %4 = vector.broadcast %3 : vector<1x512xf32> to vector<2x512xf32>
    %5 = arith.addf %2, %4 : vector<2x512xf32>
    %cst_5 = arith.constant 0.000000e+00 : f32
    %6 = vector.broadcast %cst_5 : f32 to vector<2x512xf32>
    %7 = arith.maximumf %5, %6 : vector<2x512xf32>
    %8 = arith.truncf %7 : vector<2x512xf32> to vector<2x512xbf16>
    %c0_6 = arith.constant 0 : index
    %c0_7 = arith.constant 0 : index
    %9 = vector.load %arg4[%c0_6, %c0_7] : memref<512x128xbf16, #tpu.memory_space<vmem>>, vector<512x128xbf16>
    %cst_8 = arith.constant dense<0.000000e+00> : vector<2x128xf32>
    %10 = tpu.matmul %8, %9, %cst_8 {dimension_numbers = #tpu.dot_dimension_numbers<[1], [0], [0], [1], [0, 0, 1, 1], [], []>} : vector<2x512xbf16>, vector<512x128xbf16>, vector<2x128xf32> -> vector<2x128xf32>
    %c0_9 = arith.constant 0 : index
    %c0_10 = arith.constant 0 : index
    %11 = vector.load %arg5[%c0_9, %c0_10] : memref<1x128xf32, #tpu.memory_space<vmem>>, vector<1x128xf32>
    %12 = vector.broadcast %11 : vector<1x128xf32> to vector<2x128xf32>
    %13 = arith.addf %10, %12 : vector<2x128xf32>
    %c0_11 = arith.constant 0 : index
    %c0_12 = arith.constant 0 : index
    %14 = vector.load %arg6[%c0_11, %c0_12] : memref<2x128xf32, #tpu.memory_space<vmem>>, vector<2x128xf32>
    tpu.vector_store %arg6[%c0_11, %c0_12], %13 {strides = array<i32>} : memref<2x128xf32, #tpu.memory_space<vmem>>, vector<2x128xf32>,
    return
  }
  func.func @transform_0(%arg0: i32) -> (i32, i32) {
    %c0_i32 = arith.constant 0 : i32
    %c0_i32_0 = arith.constant 0 : i32
    %c0_i32_1 = arith.constant 0 : i32
    return %c0_i32, %c0_i32_0 : i32, i32
  }
  func.func @transform_1(%arg0: i32) -> (i32, i32) {
    %c0_i32 = arith.constant 0 : i32
    %c0_i32_0 = arith.constant 0 : i32
    %c0_i32_1 = arith.constant 0 : i32
    return %c0_i32, %c0_i32_0 : i32, i32
  }
  func.func @transform_2(%arg0: i32) -> (i32, i32) {
    %c0_i32 = arith.constant 0 : i32
    %c0_i32_0 = arith.constant 0 : i32
    %c0_i32_1 = arith.constant 0 : i32
    return %c0_i32, %c0_i32_0 : i32, i32
  }
  func.func @transform_3(%arg0: i32) -> (i32, i32) {
    %c0_i32 = arith.constant 0 : i32
    %c0_i32_0 = arith.constant 0 : i32
    %c0_i32_1 = arith.constant 0 : i32
    return %c0_i32, %c0_i32_0 : i32, i32
  }
  func.func @transform_4(%arg0: i32) -> (i32, i32) {
    %c0_i32 = arith.constant 0 : i32
    %c0_i32_0 = arith.constant 0 : i32
    %c0_i32_1 = arith.constant 0 : i32
    return %c0_i32, %c0_i32_0 : i32, i32
  }
  func.func @transform_5(%arg0: i32) -> (i32, i32) {
    %c0_i32 = arith.constant 0 : i32
    %c0_i32_0 = arith.constant 0 : i32
    %c0_i32_1 = arith.constant 0 : i32
    return %c0_i32, %c0_i32_0 : i32, i32
  }
}

</mosaic_0001>

<llo_original>
// kernel: effnet_erosion_forward.3
$region0: #{effnet_erosion_forward.3}
  #allocation0 [shape = 'u32[]', space=smem, size = 0x4, offset = 0x4, fixed_abs, tag = 'smem constant byte address 0x4 - core index']
  #allocation1 [shape = 'u32[144,128]{1,0:T(1,128)}', space=vmem, size = 0x12000, scoped, tag = 'internal scratch']
  %s0 = inlined_call_operand.vmem [shape: bf16[128,27], index: 0, kind: input, shape index: {}]
  %s1 = inlined_call_operand.vmem [shape: bf16[27,40], index: 1, kind: input, shape index: {}]
  %s2 = inlined_call_operand.vmem [shape: f32[1,40], index: 2, kind: input, shape index: {}]
  %s3 = inlined_call_operand.vmem [shape: bf16[40,384], index: 3, kind: input, shape index: {}]
  %s4 = inlined_call_operand.vmem [shape: f32[1,384], index: 4, kind: input, shape index: {}]
  %s5 = inlined_call_operand.vmem [shape: bf16[128,384], index: 5, kind: output, shape index: {}]
  %s6 = sld [smem:[#allocation0]]
  $region30: #{effnet_erosion_forward.3} parent=0
    _
  %s8 = ssub.s32 1, %s6
  %s9 = scalar_select 0, %s8, %s6
  // Predicated region
  $region2: #{effnet_erosion_forward.3} parent=0 // pred_check
    _
  $region3: #{effnet_erosion_forward.3} parent=0 // pred_check_branch
    %11 = sbr.rel (0) target = $region5
  $region4: #{effnet_erosion_forward.3} parent=0 // pred_region
    _
  $region5: #{effnet_erosion_forward.3} parent=0 // pred_fallthru
    _
  // Predicated region
  $region6: #{effnet_erosion_forward.3} parent=0 // pred_check
    _
  $region7: #{effnet_erosion_forward.3} parent=0 // pred_check_branch
    %13 = sbr.rel (0) target = $region9
  $region8: #{effnet_erosion_forward.3} parent=0 // pred_region
    _
  $region9: #{effnet_erosion_forward.3} parent=0 // pred_fallthru
    _
  // Predicated region
  $region10: #{effnet_erosion_forward.3} parent=0 // pred_check
    _
  $region11: #{effnet_erosion_forward.3} parent=0 // pred_check_branch
    %15 = sbr.rel (0) target = $region13
  $region12: #{effnet_erosion_forward.3} parent=0 // pred_region
    _
  $region13: #{effnet_erosion_forward.3} parent=0 // pred_fallthru
    _
  // Predicated region
  $region14: #{effnet_erosion_forward.3} parent=0 // pred_check
    _
  $region15: #{effnet_erosion_forward.3} parent=0 // pred_check_branch
    %17 = sbr.rel (0) target = $region17
  $region16: #{effnet_erosion_forward.3} parent=0 // pred_region
    _
  $region17: #{effnet_erosion_forward.3} parent=0 // pred_fallthru
    _
  // Predicated region
  $region18: #{effnet_erosion_forward.3} parent=0 // pred_check
    _
  $region19: #{effnet_erosion_forward.3} parent=0 // pred_check_branch
    %19 = sbr.rel (0) target = $region21
  $region20: #{effnet_erosion_forward.3} parent=0 // pred_region
    _
  $region21: #{effnet_erosion_forward.3} parent=0 // pred_fallthru
    _
  %v21 = vld [vmem:[%s0] sm:$0xf]
  %v22 = vld [vmem:[%s0 + $0x4] sm:$0xf]
  %v23 = vld [vmem:[%s0 + $0x8] sm:$0xf]
  %v24 = vld [vmem:[%s0 + $0xc] sm:$0xf]
  %v25 = vld [vmem:[%s0 + $0x10] sm:$0xf]
  %v26 = vld [vmem:[%s0 + $0x14] sm:$0xf]
  %v27 = vld [vmem:[%s0 + $0x18] sm:$0xf]
  %v28 = vld [vmem:[%s0 + $0x1c] sm:$0xf]
  %v29 = vld [vmem:[%s0 + $0x20] sm:$0xf]
  %v30 = vld [vmem:[%s0 + $0x24] sm:$0xf]
  %v31 = vld [vmem:[%s0 + $0x28] sm:$0xf]
  %v32 = vld [vmem:[%s0 + $0x2c] sm:$0xf]
  %v33 = vld [vmem:[%s0 + $0x30] sm:$0xf]
  %v34 = vld [vmem:[%s0 + $0x34] sm:$0xf]
  %v35 = vld [vmem:[%s0 + $0x38] sm:$0xf]
  %v36 = vld [vmem:[%s0 + $0x3c] sm:$0xf]
  %v37 = vld [vmem:[%s1] sm:$0xf]
  %v38 = vld [vmem:[%s1 + $0x4] sm:$0xf]
  %v39 = vld [vmem:[%s1 + $0x8] sm:$0xf]
  %v40 = vld [vmem:[%s1 + $0xc] sm:$0x3]
  %v41 = vld [vmem:[%s2] sm:$0x1]
  %v43 = vlaneseq
  %v44 = vshrl.u32 %v43, 7
  %v45 = vsub.s32 0, %v44
  %v46 = vrot.slane %v41, %v45
  %v64 = vunpack.c.l.b16 %v21
  %v65 = vunpack.c.l.b16 %v22
  %v66 = vunpack.c.l.b16 %v23
  %v67 = vunpack.c.l.b16 %v24
  %v68 = vunpack.c.l.b16 %v25
  %v69 = vunpack.c.l.b16 %v26
  %v70 = vunpack.c.l.b16 %v27
  %v71 = vunpack.c.l.b16 %v28
  %v72 = vunpack.c.l.b16 %v29
  %v73 = vunpack.c.l.b16 %v30
  %v74 = vunpack.c.l.b16 %v31
  %v75 = vunpack.c.l.b16 %v32
  %v76 = vunpack.c.l.b16 %v33
  %v77 = vunpack.c.l.b16 %v34
  %v78 = vunpack.c.l.b16 %v35
  %v79 = vunpack.c.l.b16 %v36
  %v80 = vpack.c.b16 %v65, %v64
  %v81 = vpack.c.b16 %v67, %v66
  %v82 = vpack.c.b16 %v69, %v68
  %v83 = vpack.c.b16 %v71, %v70
  %v84 = vpack.c.b16 %v73, %v72
  %v85 = vpack.c.b16 %v75, %v74
  %v86 = vpack.c.b16 %v77, %v76
  %v87 = vpack.c.b16 %v79, %v78
  %v92 = vunpack.c.l.b16 %v37
  %v93 = vunpack.c.l.b16 %v38
  %v94 = vunpack.c.l.b16 %v39
  %v95 = vunpack.c.l.b16 %v40
  %v96 = vpack.c.b16 %v93, %v92
  %v97 = vpack.c.b16 %v95, %v94
  %vm99 = vcmask 220160
  %v101 = vsel %vm99, %v80, 0
  %v104 = vsel %vm99, %v81, 0
  %v107 = vsel %vm99, %v82, 0
  %v110 = vsel %vm99, %v83, 0
  %v113 = vsel %vm99, %v84, 0
  %v116 = vsel %vm99, %v85, 0
  %v119 = vsel %vm99, %v86, 0
  %v122 = vsel %vm99, %v87, 0
  %vm124 = vcmask 1044480
  %vm125 = vcmask 1045504
  %v126 = vsel %vm124, 4294967295, 65535
  %v127 = vsel %vm125, %v126, 0
  %v129 = vand.u32 %v97, %v127
  %131 = vmatprep.subr.bf16.mxu0 0
  %132 = vmatpush1.bf16.msra.mxu0 %v96
  %133 = vmatprep.subr.bf16.mxu0 0
  %134 = vmatpush1.bf16.msra.mxu0 %v129
  %135 = vmatprep.subr.bf16.mxu0 0
  %136 = vmatpush1.bf16.msra.mxu0 0
  %137 = vmatprep.subr.bf16.mxu0 0
  %138 = vmatpush1.bf16.msra.mxu0 0
  %139 = vmatprep.subr.bf16.mxu0 0
  %140 = vmatpush1.bf16.msra.mxu0 0
  %141 = vmatprep.subr.bf16.mxu0 0
  %142 = vmatpush1.bf16.msra.mxu0 0
  %143 = vmatprep.subr.bf16.mxu0 0
  %144 = vmatpush1.bf16.msra.mxu0 0
  %145 = vmatprep.subr.bf16.mxu0 0
  %146 = vmatpush1.bf16.msra.mxu0 0
  %147 = vmatprep.subr.bf16.mxu0 0
  %148 = vmatpush1.bf16.msra.mxu0 0
  %149 = vmatprep.subr.bf16.mxu0 0
  %150 = vmatpush1.bf16.msra.mxu0 0
  %151 = vmatprep.subr.bf16.mxu0 0
  %152 = vmatpush1.bf16.msra.mxu0 0
  %153 = vmatprep.subr.bf16.mxu0 0
  %154 = vmatpush1.bf16.msra.mxu0 0
  %155 = vmatprep.subr.bf16.mxu0 0
  %156 = vmatpush1.bf16.msra.mxu0 0
  %157 = vmatprep.subr.bf16.mxu0 0
  %158 = vmatpush1.bf16.msra.mxu0 0
  %159 = vmatprep.subr.bf16.mxu0 0
  %160 = vmatpush1.bf16.msra.mxu0 0
  %161 = vmatprep.subr.bf16.mxu0 0
  %162 = vmatpush1.bf16.msra.mxu0 0
  %163 = vmatprep.mubr.bf16.mxu0 0
  %164 = vmatmul.mubr.bf16.gmra.mrb[0].mxu0 %v101
  %v165 = vpop.f32.mrb[0].mxu0
  %v166 = vadd.f32 %v46, %v165
  %v167 = vpop.f32.mrb[0].mxu0
  %v168 = vpop.f32.mrb[0].mxu0
  %v169 = vadd.f32 %v46, %v168
  %v170 = vpop.f32.mrb[0].mxu0
  %171 = vmatprep.mubr.bf16.mxu0 0
  %172 = vmatmul.mubr.bf16.gmra.mrb[0].mxu0 %v104
  %v173 = vpop.f32.mrb[0].mxu0
  %v174 = vadd.f32 %v46, %v173
  %v175 = vpop.f32.mrb[0].mxu0
  %v176 = vpop.f32.mrb[0].mxu0
  %v177 = vadd.f32 %v46, %v176
  %v178 = vpop.f32.mrb[0].mxu0
  %179 = vmatprep.mubr.bf16.mxu0 0
  %180 = vmatmul.mubr.bf16.gmra.mrb[0].mxu0 %v107
  %v181 = vpop.f32.mrb[0].mxu0
  %v182 = vadd.f32 %v46, %v181
  %v183 = vpop.f32.mrb[0].mxu0
  %v184 = vpop.f32.mrb[0].mxu0
  %v185 = vadd.f32 %v46, %v184
  %v186 = vpop.f32.mrb[0].mxu0
  %187 = vmatprep.mubr.bf16.mxu0 0
  %188 = vmatmul.mubr.bf16.gmra.mrb[0].mxu0 %v110
  %v189 = vpop.f32.mrb[0].mxu0
  %v190 = vadd.f32 %v46, %v189
  %v191 = vpop.f32.mrb[0].mxu0
  %v192 = vpop.f32.mrb[0].mxu0
  %v193 = vadd.f32 %v46, %v192
  %v194 = vpop.f32.mrb[0].mxu0
  %195 = vmatprep.mubr.bf16.mxu0 0
  %196 = vmatmul.mubr.bf16.gmra.mrb[0].mxu0 %v113
  %v197 = vpop.f32.mrb[0].mxu0
  %v198 = vadd.f32 %v46, %v197
  %v199 = vpop.f32.mrb[0].mxu0
  %v200 = vpop.f32.mrb[0].mxu0
  %v201 = vadd.f32 %v46, %v200
  %v202 = vpop.f32.mrb[0].mxu0
  %203 = vmatprep.mubr.bf16.mxu0 0
  %204 = vmatmul.mubr.bf16.gmra.mrb[0].mxu0 %v116
  %v205 = vpop.f32.mrb[0].mxu0
  %v206 = vadd.f32 %v46, %v205
  %v207 = vpop.f32.mrb[0].mxu0
  %v208 = vpop.f32.mrb[0].mxu0
  %v209 = vadd.f32 %v46, %v208
  %v210 = vpop.f32.mrb[0].mxu0
  %211 = vmatprep.mubr.bf16.mxu0 0
  %212 = vmatmul.mubr.bf16.gmra.mrb[0].mxu0 %v119
  %v213 = vpop.f32.mrb[0].mxu0
  %v214 = vadd.f32 %v46, %v213
  %v215 = vpop.f32.mrb[0].mxu0
  %v216 = vpop.f32.mrb[0].mxu0
  %v217 = vadd.f32 %v46, %v216
  %v218 = vpop.f32.mrb[0].mxu0
  %219 = vmatprep.mubr.bf16.mxu0 0
  %220 = vmatmul.mubr.bf16.gmra.mrb[0].mxu0 %v122
  %v221 = vpop.f32.mrb[0].mxu0
  %v222 = vadd.f32 %v46, %v221
  %v223 = vpop.f32.mrb[0].mxu0
  %v224 = vpop.f32.mrb[0].mxu0
  %v225 = vadd.f32 %v46, %v224
  %v226 = vpop.f32.mrb[0].mxu0
  %227 = vdwg.mxu0
  %v228 = vxor.u32 %v166, 2147483648
  %v229 = vxor.u32 %v169, 2147483648
  %v230 = vxor.u32 %v174, 2147483648
  %v231 = vxor.u32 %v177, 2147483648
  %v232 = vxor.u32 %v182, 2147483648
  %v233 = vxor.u32 %v185, 2147483648
  %v234 = vxor.u32 %v190, 2147483648
  %v235 = vxor.u32 %v193, 2147483648
  %v236 = vxor.u32 %v198, 2147483648
  %v237 = vxor.u32 %v201, 2147483648
  %v238 = vxor.u32 %v206, 2147483648
  %v239 = vxor.u32 %v209, 2147483648
  %v240 = vxor.u32 %v214, 2147483648
  %v241 = vxor.u32 %v217, 2147483648
  %v242 = vxor.u32 %v222, 2147483648
  %v243 = vxor.u32 %v225, 2147483648
  %v244 = vmul.f32 %v228, 1.442695
  %v245 = vpow.pop %v244
  %v246 = vmul.f32 %v229, 1.442695
  %v247 = vpow.pop %v246
  %v248 = vmul.f32 %v230, 1.442695
  %v249 = vpow.pop %v248
  %v250 = vmul.f32 %v231, 1.442695
  %v251 = vpow.pop %v250
  %v252 = vmul.f32 %v232, 1.442695
  %v253 = vpow.pop %v252
  %v254 = vmul.f32 %v233, 1.442695
  %v255 = vpow.pop %v254
  %v256 = vmul.f32 %v234, 1.442695
  %v257 = vpow.pop %v256
  %v258 = vmul.f32 %v235, 1.442695
  %v259 = vpow.pop %v258
  %v260 = vmul.f32 %v236, 1.442695
  %v261 = vpow.pop %v260
  %v262 = vmul.f32 %v237, 1.442695
  %v263 = vpow.pop %v262
  %v264 = vmul.f32 %v238, 1.442695
  %v265 = vpow.pop %v264
  %v266 = vmul.f32 %v239, 1.442695
  %v267 = vpow.pop %v266
  %v268 = vmul.f32 %v240, 1.442695
  %v269 = vpow.pop %v268
  %v270 = vmul.f32 %v241, 1.442695
  %v271 = vpow.pop %v270
  %v272 = vmul.f32 %v242, 1.442695
  %v273 = vpow.pop %v272
  %v274 = vmul.f32 %v243, 1.442695
  %v275 = vpow.pop %v274
  %v276 = vadd.f32 %v245, 1.0
  %v277 = vadd.f32 %v247, 1.0
  %v278 = vadd.f32 %v249, 1.0
  %v279 = vadd.f32 %v251, 1.0
  %v280 = vadd.f32 %v253, 1.0
  %v281 = vadd.f32 %v255, 1.0
  %v282 = vadd.f32 %v257, 1.0
  %v283 = vadd.f32 %v259, 1.0
  %v284 = vadd.f32 %v261, 1.0
  %v285 = vadd.f32 %v263, 1.0
  %v286 = vadd.f32 %v265, 1.0
  %v287 = vadd.f32 %v267, 1.0
  %v288 = vadd.f32 %v269, 1.0
  %v289 = vadd.f32 %v271, 1.0
  %v290 = vadd.f32 %v273, 1.0
  %v291 = vadd.f32 %v275, 1.0
  %v292 = vrcp.pop %v276
  %v293 = vmul.f32 1.0, %v292
  %v294 = vrcp.pop %v277
  %v295 = vmul.f32 1.0, %v294
  %v296 = vrcp.pop %v278
  %v297 = vmul.f32 1.0, %v296
  %v298 = vrcp.pop %v279
  %v299 = vmul.f32 1.0, %v298
  %v300 = vrcp.pop %v280
  %v301 = vmul.f32 1.0, %v300
  %v302 = vrcp.pop %v281
  %v303 = vmul.f32 1.0, %v302
  %v304 = vrcp.pop %v282
  %v305 = vmul.f32 1.0, %v304
  %v306 = vrcp.pop %v283
  %v307 = vmul.f32 1.0, %v306
  %v308 = vrcp.pop %v284
  %v309 = vmul.f32 1.0, %v308
  %v310 = vrcp.pop %v285
  %v311 = vmul.f32 1.0, %v310
  %v312 = vrcp.pop %v286
  %v313 = vmul.f32 1.0, %v312
  %v314 = vrcp.pop %v287
  %v315 = vmul.f32 1.0, %v314
  %v316 = vrcp.pop %v288
  %v317 = vmul.f32 1.0, %v316
  %v318 = vrcp.pop %v289
  %v319 = vmul.f32 1.0, %v318
  %v320 = vrcp.pop %v290
  %v321 = vmul.f32 1.0, %v320
  %v322 = vrcp.pop %v291
  %v323 = vmul.f32 1.0, %v322
  %v324 = vmul.f32 %v166, %v293
  %v325 = vmul.f32 %v169, %v295
  %v326 = vmul.f32 %v174, %v297
  %v327 = vmul.f32 %v177, %v299
  %v328 = vmul.f32 %v182, %v301
  %v329 = vmul.f32 %v185, %v303
  %v330 = vmul.f32 %v190, %v305
  %v331 = vmul.f32 %v193, %v307
  %v332 = vmul.f32 %v198, %v309
  %v333 = vmul.f32 %v201, %v311
  %v334 = vmul.f32 %v206, %v313
  %v335 = vmul.f32 %v209, %v315
  %v336 = vmul.f32 %v214, %v317
  %v337 = vmul.f32 %v217, %v319
  %v338 = vmul.f32 %v222, %v321
  %v339 = vmul.f32 %v225, %v323
  %v340 = vpack.c.bf16 %v325, %v324
  %v341 = vpack.c.bf16 %v327, %v326
  %v342 = vpack.c.bf16 %v329, %v328
  %v343 = vpack.c.bf16 %v331, %v330
  %v344 = vpack.c.bf16 %v333, %v332
  %v345 = vpack.c.bf16 %v335, %v334
  %v346 = vpack.c.bf16 %v337, %v336
  %v347 = vpack.c.bf16 %v339, %v338
  %v348 = vld [vmem:[%s3] sm:$0xff]
  %v349 = vld [vmem:[%s3 + $0x8] sm:$0xf]
  %v350 = vld [vmem:[%s3 + $0xc] sm:$0xff]
  %v351 = vld [vmem:[%s3 + $0x14] sm:$0xf]
  %v352 = vld [vmem:[%s3 + $0x18] sm:$0xff]
  %v353 = vld [vmem:[%s3 + $0x20] sm:$0xf]
  %v354 = vld [vmem:[%s3 + $0x24] sm:$0xff]
  %v355 = vld [vmem:[%s3 + $0x2c] sm:$0xf]
  %v356 = vld [vmem:[%s3 + $0x30] sm:$0xff]
  %v357 = vld [vmem:[%s3 + $0x38] sm:$0xf]
  %v358 = vld [vmem:[%s4] sm:$0x7]
  %v360 = vlaneseq
  %v361 = vshrl.u32 %v360, 7
  %v362 = vsub.s32 0, %v361
  %v363 = vrot.slane %v358, %v362
  %v364 = vlaneseq
  %v365 = vshrl.u32 %v364, 7
  %v366 = vsub.s32 1, %v365
  %v367 = vrot.slane %v358, %v366
  %v368 = vlaneseq
  %v369 = vshrl.u32 %v368, 7
  %v370 = vsub.s32 2, %v369
  %v371 = vrot.slane %v358, %v370
  %v385 = vunpack.c.l.b16 %v348
  %v386 = vunpack.c.h.b16 %v348
  %v387 = vunpack.c.l.b16 %v349
  %v388 = vunpack.c.l.b16 %v350
  %v389 = vunpack.c.h.b16 %v350
  %v390 = vunpack.c.l.b16 %v351
  %v391 = vunpack.c.l.b16 %v352
  %v392 = vunpack.c.h.b16 %v352
  %v393 = vunpack.c.l.b16 %v353
  %v394 = vunpack.c.l.b16 %v354
  %v395 = vunpack.c.h.b16 %v354
  %v396 = vunpack.c.l.b16 %v355
  %v397 = vunpack.c.l.b16 %v356
  %v398 = vunpack.c.h.b16 %v356
  %v399 = vunpack.c.l.b16 %v357
  %v400 = vpack.c.b16 %v388, %v385
  %v401 = vpack.c.b16 %v389, %v386
  %v402 = vpack.c.b16 %v390, %v387
  %v403 = vpack.c.b16 %v394, %v391
  %v404 = vpack.c.b16 %v395, %v392
  %v405 = vpack.c.b16 %v396, %v393
  %v406 = vpack.c.b16 %v397, %v397
  %v407 = vpack.c.b16 %v398, %v398
  %v408 = vpack.c.b16 %v399, %v399
  %vm415 = vcmask 326656
  %v417 = vsel %vm415, %v340, 0
  %v420 = vsel %vm415, %v341, 0
  %v423 = vsel %vm415, %v342, 0
  %v426 = vsel %vm415, %v343, 0
  %v429 = vsel %vm415, %v344, 0
  %v432 = vsel %vm415, %v345, 0
  %v435 = vsel %vm415, %v346, 0
  %v438 = vsel %vm415, %v347, 0
  %vm440 = vcmask 1043456
  %v442 = vsel %vm440, %v406, 0
  %v445 = vsel %vm440, %v407, 0
  %v448 = vsel %vm440, %v408, 0
  %450 = vmatprep.subr.bf16.mxu0 %v401
  %451 = vmatpush1.bf16.msra.mxu0 %v400
  %452 = vmatprep.subr.bf16.mxu0 %v404
  %453 = vmatpush1.bf16.msra.mxu0 %v403
  %454 = vmatprep.subr.bf16.mxu0 %v445
  %455 = vmatpush1.bf16.msra.mxu0 %v442
  %456 = vmatprep.subr.bf16.mxu0 0
  %457 = vmatpush1.bf16.msra.mxu0 0
  %458 = vmatprep.subr.bf16.mxu0 0
  %459 = vmatpush1.bf16.msra.mxu0 0
  %460 = vmatprep.subr.bf16.mxu0 0
  %461 = vmatpush1.bf16.msra.mxu0 0
  %462 = vmatprep.subr.bf16.mxu0 0
  %463 = vmatpush1.bf16.msra.mxu0 0
  %464 = vmatprep.subr.bf16.mxu0 0
  %465 = vmatpush1.bf16.msra.mxu0 0
  %466 = vmatprep.subr.bf16.mxu0 0
  %467 = vmatpush1.bf16.msra.mxu0 0
  %468 = vmatprep.subr.bf16.mxu0 0
  %469 = vmatpush1.bf16.msra.mxu0 0
  %470 = vmatprep.subr.bf16.mxu0 0
  %471 = vmatpush1.bf16.msra.mxu0 0
  %472 = vmatprep.subr.bf16.mxu0 0
  %473 = vmatpush1.bf16.msra.mxu0 0
  %474 = vmatprep.subr.bf16.mxu0 0
  %475 = vmatpush1.bf16.msra.mxu0 0
  %476 = vmatprep.subr.bf16.mxu0 0
  %477 = vmatpush1.bf16.msra.mxu0 0
  %478 = vmatprep.subr.bf16.mxu0 0
  %479 = vmatpush1.bf16.msra.mxu0 0
  %480 = vmatprep.subr.bf16.mxu0 0
  %481 = vmatpush1.bf16.msra.mxu0 0
  %482 = vmatprep.mubr.bf16.mxu0 0
  %483 = vmatmul.mubr.bf16.gmra.mrb[0].mxu0 %v417
  %v484 = vpop.f32.mrb[0].mxu0
  %v485 = vadd.f32 %v363, %v484
  %v486 = vpop.f32.mrb[0].mxu0
  %v487 = vadd.f32 %v367, %v486
  %v488 = vpop.f32.mrb[0].mxu0
  %v489 = vadd.f32 %v363, %v488
  %v490 = vpop.f32.mrb[0].mxu0
  %v491 = vadd.f32 %v367, %v490
  %492 = vmatprep.mubr.bf16.mxu0 0
  %493 = vmatmul.mubr.bf16.gmra.mrb[0].mxu0 %v420
  %v494 = vpop.f32.mrb[0].mxu0
  %v495 = vadd.f32 %v363, %v494
  %v496 = vpop.f32.mrb[0].mxu0
  %v497 = vadd.f32 %v367, %v496
  %v498 = vpop.f32.mrb[0].mxu0
  %v499 = vadd.f32 %v363, %v498
  %v500 = vpop.f32.mrb[0].mxu0
  %v501 = vadd.f32 %v367, %v500
  %502 = vmatprep.mubr.bf16.mxu0 0
  %503 = vmatmul.mubr.bf16.gmra.mrb[0].mxu0 %v423
  %v504 = vpop.f32.mrb[0].mxu0
  %v505 = vadd.f32 %v363, %v504
  %v506 = vpop.f32.mrb[0].mxu0
  %v507 = vadd.f32 %v367, %v506
  %v508 = vpop.f32.mrb[0].mxu0
  %v509 = vadd.f32 %v363, %v508
  %v510 = vpop.f32.mrb[0].mxu0
  %v511 = vadd.f32 %v367, %v510
  %512 = vmatprep.mubr.bf16.mxu0 0
  %513 = vmatmul.mubr.bf16.gmra.mrb[0].mxu0 %v426
  %v514 = vpop.f32.mrb[0].mxu0
  %v515 = vadd.f32 %v363, %v514
  %v516 = vpop.f32.mrb[0].mxu0
  %v517 = vadd.f32 %v367, %v516
  %v518 = vpop.f32.mrb[0].mxu0
  %v519 = vadd.f32 %v363, %v518
  %v520 = vpop.f32.mrb[0].mxu0
  %v521 = vadd.f32 %v367, %v520
  %522 = vmatprep.mubr.bf16.mxu0 0
  %523 = vmatmul.mubr.bf16.gmra.mrb[0].mxu0 %v429
  %v524 = vpop.f32.mrb[0].mxu0
  %v525 = vadd.f32 %v363, %v524
  %v526 = vpop.f32.mrb[0].mxu0
  %v527 = vadd.f32 %v367, %v526
  %v528 = vpop.f32.mrb[0].mxu0
  %v529 = vadd.f32 %v363, %v528
  %v530 = vpop.f32.mrb[0].mxu0
  %v531 = vadd.f32 %v367, %v530
  %532 = vmatprep.mubr.bf16.mxu0 0
  %533 = vmatmul.mubr.bf16.gmra.mrb[0].mxu0 %v432
  %v534 = vpop.f32.mrb[0].mxu0
  %v535 = vadd.f32 %v363, %v534
  %v536 = vpop.f32.mrb[0].mxu0
  %v537 = vadd.f32 %v367, %v536
  %v538 = vpop.f32.mrb[0].mxu0
  %v539 = vadd.f32 %v363, %v538
  %v540 = vpop.f32.mrb[0].mxu0
  %v541 = vadd.f32 %v367, %v540
  %542 = vmatprep.mubr.bf16.mxu0 0
  %543 = vmatmul.mubr.bf16.gmra.mrb[0].mxu0 %v435
  %v544 = vpop.f32.mrb[0].mxu0
  %v545 = vadd.f32 %v363, %v544
  %v546 = vpop.f32.mrb[0].mxu0
  %v547 = vadd.f32 %v367, %v546
  %v548 = vpop.f32.mrb[0].mxu0
  %v549 = vadd.f32 %v363, %v548
  %v550 = vpop.f32.mrb[0].mxu0
  %v551 = vadd.f32 %v367, %v550
  %552 = vmatprep.mubr.bf16.mxu0 0
  %553 = vmatmul.mubr.bf16.gmra.mrb[0].mxu0 %v438
  %v554 = vpop.f32.mrb[0].mxu0
  %v555 = vadd.f32 %v363, %v554
  %v556 = vpop.f32.mrb[0].mxu0
  %v557 = vadd.f32 %v367, %v556
  %v558 = vpop.f32.mrb[0].mxu0
  %v559 = vadd.f32 %v363, %v558
  %v560 = vpop.f32.mrb[0].mxu0
  %v561 = vadd.f32 %v367, %v560
  %562 = vdwg.mxu0
  %563 = vmatprep.subr.bf16.mxu0 0
  %564 = vmatpush1.bf16.msra.mxu0 %v402
  %565 = vmatprep.subr.bf16.mxu0 0
  %566 = vmatpush1.bf16.msra.mxu0 %v405
  %567 = vmatprep.subr.bf16.mxu0 0
  %568 = vmatpush1.bf16.msra.mxu0 %v448
  %569 = vmatprep.subr.bf16.mxu0 0
  %570 = vmatpush1.bf16.msra.mxu0 0
  %571 = vmatprep.subr.bf16.mxu0 0
  %572 = vmatpush1.bf16.msra.mxu0 0
  %573 = vmatprep.subr.bf16.mxu0 0
  %574 = vmatpush1.bf16.msra.mxu0 0
  %575 = vmatprep.subr.bf16.mxu0 0
  %576 = vmatpush1.bf16.msra.mxu0 0
  %577 = vmatprep.subr.bf16.mxu0 0
  %578 = vmatpush1.bf16.msra.mxu0 0
  %579 = vmatprep.subr.bf16.mxu0 0
  %580 = vmatpush1.bf16.msra.mxu0 0
  %581 = vmatprep.subr.bf16.mxu0 0
  %582 = vmatpush1.bf16.msra.mxu0 0
  %583 = vmatprep.subr.bf16.mxu0 0
  %584 = vmatpush1.bf16.msra.mxu0 0
  %585 = vmatprep.subr.bf16.mxu0 0
  %586 = vmatpush1.bf16.msra.mxu0 0
  %587 = vmatprep.subr.bf16.mxu0 0
  %588 = vmatpush1.bf16.msra.mxu0 0
  %589 = vmatprep.subr.bf16.mxu0 0
  %590 = vmatpush1.bf16.msra.mxu0 0
  %591 = vmatprep.subr.bf16.mxu0 0
  %592 = vmatpush1.bf16.msra.mxu0 0
  %593 = vmatprep.subr.bf16.mxu0 0
  %594 = vmatpush1.bf16.msra.mxu0 0
  %595 = vmatprep.mubr.bf16.mxu0 0
  %596 = vmatmul.mubr.bf16.gmra.mrb[0].mxu0 %v417
  %v597 = vpop.f32.mrb[0].mxu0
  %v598 = vadd.f32 %v371, %v597
  %v599 = vpop.f32.mrb[0].mxu0
  %v600 = vpop.f32.mrb[0].mxu0
  %v601 = vadd.f32 %v371, %v600
  %v602 = vpop.f32.mrb[0].mxu0
  %603 = vmatprep.mubr.bf16.mxu0 0
  %604 = vmatmul.mubr.bf16.gmra.mrb[0].mxu0 %v420
  %v605 = vpop.f32.mrb[0].mxu0
  %v606 = vadd.f32 %v371, %v605
  %v607 = vpop.f32.mrb[0].mxu0
  %v608 = vpop.f32.mrb[0].mxu0
  %v609 = vadd.f32 %v371, %v608
  %v610 = vpop.f32.mrb[0].mxu0
  %611 = vmatprep.mubr.bf16.mxu0 0
  %612 = vmatmul.mubr.bf16.gmra.mrb[0].mxu0 %v423
  %v613 = vpop.f32.mrb[0].mxu0
  %v614 = vadd.f32 %v371, %v613
  %v615 = vpop.f32.mrb[0].mxu0
  %v616 = vpop.f32.mrb[0].mxu0
  %v617 = vadd.f32 %v371, %v616
  %v618 = vpop.f32.mrb[0].mxu0
  %619 = vmatprep.mubr.bf16.mxu0 0
  %620 = vmatmul.mubr.bf16.gmra.mrb[0].mxu0 %v426
  %v621 = vpop.f32.mrb[0].mxu0
  %v622 = vadd.f32 %v371, %v621
  %v623 = vpop.f32.mrb[0].mxu0
  %v624 = vpop.f32.mrb[0].mxu0
  %v625 = vadd.f32 %v371, %v624
  %v626 = vpop.f32.mrb[0].mxu0
  %627 = vmatprep.mubr.bf16.mxu0 0
  %628 = vmatmul.mubr.bf16.gmra.mrb[0].mxu0 %v429
  %v629 = vpop.f32.mrb[0].mxu0
  %v630 = vadd.f32 %v371, %v629
  %v631 = vpop.f32.mrb[0].mxu0
  %v632 = vpop.f32.mrb[0].mxu0
  %v633 = vadd.f32 %v371, %v632
  %v634 = vpop.f32.mrb[0].mxu0
  %635 = vmatprep.mubr.bf16.mxu0 0
  %636 = vmatmul.mubr.bf16.gmra.mrb[0].mxu0 %v432
  %v637 = vpop.f32.mrb[0].mxu0
  %v638 = vadd.f32 %v371, %v637
  %v639 = vpop.f32.mrb[0].mxu0
  %v640 = vpop.f32.mrb[0].mxu0
  %v641 = vadd.f32 %v371, %v640
  %v642 = vpop.f32.mrb[0].mxu0
  %643 = vmatprep.mubr.bf16.mxu0 0
  %644 = vmatmul.mubr.bf16.gmra.mrb[0].mxu0 %v435
  %v645 = vpop.f32.mrb[0].mxu0
  %v646 = vadd.f32 %v371, %v645
  %v647 = vpop.f32.mrb[0].mxu0
  %v648 = vpop.f32.mrb[0].mxu0
  %v649 = vadd.f32 %v371, %v648
  %v650 = vpop.f32.mrb[0].mxu0
  %651 = vmatprep.mubr.bf16.mxu0 0
  %652 = vmatmul.mubr.bf16.gmra.mrb[0].mxu0 %v438
  %v653 = vpop.f32.mrb[0].mxu0
  %v654 = vadd.f32 %v371, %v653
  %v655 = vpop.f32.mrb[0].mxu0
  %v656 = vpop.f32.mrb[0].mxu0
  %v657 = vadd.f32 %v371, %v656
  %v658 = vpop.f32.mrb[0].mxu0
  %659 = vdwg.mxu0
  %v660 = vxor.u32 %v485, 2147483648
  %v661 = vxor.u32 %v487, 2147483648
  %v662 = vxor.u32 %v598, 2147483648
  %v663 = vxor.u32 %v489, 2147483648
  %v664 = vxor.u32 %v491, 2147483648
  %v665 = vxor.u32 %v601, 2147483648
  %v666 = vxor.u32 %v495, 2147483648
  %v667 = vxor.u32 %v497, 2147483648
  %v668 = vxor.u32 %v606, 2147483648
  %v669 = vxor.u32 %v499, 2147483648
  %v670 = vxor.u32 %v501, 2147483648
  %v671 = vxor.u32 %v609, 2147483648
  %v672 = vxor.u32 %v505, 2147483648
  %v673 = vxor.u32 %v507, 2147483648
  %v674 = vxor.u32 %v614, 2147483648
  %v675 = vxor.u32 %v509, 2147483648
  %v676 = vxor.u32 %v511, 2147483648
  %v677 = vxor.u32 %v617, 2147483648
  %v678 = vxor.u32 %v515, 2147483648
  %v679 = vxor.u32 %v517, 2147483648
  %v680 = vxor.u32 %v622, 2147483648
  %v681 = vxor.u32 %v519, 2147483648
  %v682 = vxor.u32 %v521, 2147483648
  %v683 = vxor.u32 %v625, 2147483648
  %v684 = vxor.u32 %v525, 2147483648
  %v685 = vxor.u32 %v527, 2147483648
  %v686 = vxor.u32 %v630, 2147483648
  %v687 = vxor.u32 %v529, 2147483648
  %v688 = vxor.u32 %v531, 2147483648
  %v689 = vxor.u32 %v633, 2147483648
  %v690 = vxor.u32 %v535, 2147483648
  %v691 = vxor.u32 %v537, 2147483648
  %v692 = vxor.u32 %v638, 2147483648
  %v693 = vxor.u32 %v539, 2147483648
  %v694 = vxor.u32 %v541, 2147483648
  %v695 = vxor.u32 %v641, 2147483648
  %v696 = vxor.u32 %v545, 2147483648
  %v697 = vxor.u32 %v547, 2147483648
  %v698 = vxor.u32 %v646, 2147483648
  %v699 = vxor.u32 %v549, 2147483648
  %v700 = vxor.u32 %v551, 2147483648
  %v701 = vxor.u32 %v649, 2147483648
  %v702 = vxor.u32 %v555, 2147483648
  %v703 = vxor.u32 %v557, 2147483648
  %v704 = vxor.u32 %v654, 2147483648
  %v705 = vxor.u32 %v559, 2147483648
  %v706 = vxor.u32 %v561, 2147483648
  %v707 = vxor.u32 %v657, 2147483648
  %v708 = vmul.f32 %v660, 1.442695
  %v709 = vpow.pop %v708
  %v710 = vmul.f32 %v661, 1.442695
  %v711 = vpow.pop %v710
  %v712 = vmul.f32 %v662, 1.442695
  %v713 = vpow.pop %v712
  %v714 = vmul.f32 %v663, 1.442695
  %v715 = vpow.pop %v714
  %v716 = vmul.f32 %v664, 1.442695
  %v717 = vpow.pop %v716
  %v718 = vmul.f32 %v665, 1.442695
  %v719 = vpow.pop %v718
  %v720 = vmul.f32 %v666, 1.442695
  %v721 = vpow.pop %v720
  %v722 = vmul.f32 %v667, 1.442695
  %v723 = vpow.pop %v722
  %v724 = vmul.f32 %v668, 1.442695
  %v725 = vpow.pop %v724
  %v726 = vmul.f32 %v669, 1.442695
  %v727 = vpow.pop %v726
  %v728 = vmul.f32 %v670, 1.442695
  %v729 = vpow.pop %v728
  %v730 = vmul.f32 %v671, 1.442695
  %v731 = vpow.pop %v730
  %v732 = vmul.f32 %v672, 1.442695
  %v733 = vpow.pop %v732
  %v734 = vmul.f32 %v673, 1.442695
  %v735 = vpow.pop %v734
  %v736 = vmul.f32 %v674, 1.442695
  %v737 = vpow.pop %v736
  %v738 = vmul.f32 %v675, 1.442695
  %v739 = vpow.pop %v738
  %v740 = vmul.f32 %v676, 1.442695
  %v741 = vpow.pop %v740
  %v742 = vmul.f32 %v677, 1.442695
  %v743 = vpow.pop %v742
  %v744 = vmul.f32 %v678, 1.442695
  %v745 = vpow.pop %v744
  %v746 = vmul.f32 %v679, 1.442695
  %v747 = vpow.pop %v746
  %v748 = vmul.f32 %v680, 1.442695
  %v749 = vpow.pop %v748
  %v750 = vmul.f32 %v681, 1.442695
  %v751 = vpow.pop %v750
  %v752 = vmul.f32 %v682, 1.442695
  %v753 = vpow.pop %v752
  %v754 = vmul.f32 %v683, 1.442695
  %v755 = vpow.pop %v754
  %v756 = vmul.f32 %v684, 1.442695
  %v757 = vpow.pop %v756
  %v758 = vmul.f32 %v685, 1.442695
  %v759 = vpow.pop %v758
  %v760 = vmul.f32 %v686, 1.442695
  %v761 = vpow.pop %v760
  %v762 = vmul.f32 %v687, 1.442695
  %v763 = vpow.pop %v762
  %v764 = vmul.f32 %v688, 1.442695
  %v765 = vpow.pop %v764
  %v766 = vmul.f32 %v689, 1.442695
  %v767 = vpow.pop %v766
  %v768 = vmul.f32 %v690, 1.442695
  %v769 = vpow.pop %v768
  %v770 = vmul.f32 %v691, 1.442695
  %v771 = vpow.pop %v770
  %v772 = vmul.f32 %v692, 1.442695
  %v773 = vpow.pop %v772
  %v774 = vmul.f32 %v693, 1.442695
  %v775 = vpow.pop %v774
  %v776 = vmul.f32 %v694, 1.442695
  %v777 = vpow.pop %v776
  %v778 = vmul.f32 %v695, 1.442695
  %v779 = vpow.pop %v778
  %v780 = vmul.f32 %v696, 1.442695
  %v781 = vpow.pop %v780
  %v782 = vmul.f32 %v697, 1.442695
  %v783 = vpow.pop %v782
  %v784 = vmul.f32 %v698, 1.442695
  %v785 = vpow.pop %v784
  %v786 = vmul.f32 %v699, 1.442695
  %v787 = vpow.pop %v786
  %v788 = vmul.f32 %v700, 1.442695
  %v789 = vpow.pop %v788
  %v790 = vmul.f32 %v701, 1.442695
  %v791 = vpow.pop %v790
  %v792 = vmul.f32 %v702, 1.442695
  %v793 = vpow.pop %v792
  %v794 = vmul.f32 %v703, 1.442695
  %v795 = vpow.pop %v794
  %v796 = vmul.f32 %v704, 1.442695
  %v797 = vpow.pop %v796
  %v798 = vmul.f32 %v705, 1.442695
  %v799 = vpow.pop %v798
  %v800 = vmul.f32 %v706, 1.442695
  %v801 = vpow.pop %v800
  %v802 = vmul.f32 %v707, 1.442695
  %v803 = vpow.pop %v802
  %v804 = vadd.f32 %v709, 1.0
  %v805 = vadd.f32 %v711, 1.0
  %v806 = vadd.f32 %v713, 1.0
  %v807 = vadd.f32 %v715, 1.0
  %v808 = vadd.f32 %v717, 1.0
  %v809 = vadd.f32 %v719, 1.0
  %v810 = vadd.f32 %v721, 1.0
  %v811 = vadd.f32 %v723, 1.0
  %v812 = vadd.f32 %v725, 1.0
  %v813 = vadd.f32 %v727, 1.0
  %v814 = vadd.f32 %v729, 1.0
  %v815 = vadd.f32 %v731, 1.0
  %v816 = vadd.f32 %v733, 1.0
  %v817 = vadd.f32 %v735, 1.0
  %v818 = vadd.f32 %v737, 1.0
  %v819 = vadd.f32 %v739, 1.0
  %v820 = vadd.f32 %v741, 1.0
  %v821 = vadd.f32 %v743, 1.0
  %v822 = vadd.f32 %v745, 1.0
  %v823 = vadd.f32 %v747, 1.0
  %v824 = vadd.f32 %v749, 1.0
  %v825 = vadd.f32 %v751, 1.0
  %v826 = vadd.f32 %v753, 1.0
  %v827 = vadd.f32 %v755, 1.0
  %v828 = vadd.f32 %v757, 1.0
  %v829 = vadd.f32 %v759, 1.0
  %v830 = vadd.f32 %v761, 1.0
  %v831 = vadd.f32 %v763, 1.0
  %v832 = vadd.f32 %v765, 1.0
  %v833 = vadd.f32 %v767, 1.0
  %v834 = vadd.f32 %v769, 1.0
  %v835 = vadd.f32 %v771, 1.0
  %v836 = vadd.f32 %v773, 1.0
  %v837 = vadd.f32 %v775, 1.0
  %v838 = vadd.f32 %v777, 1.0
  %v839 = vadd.f32 %v779, 1.0
  %v840 = vadd.f32 %v781, 1.0
  %v841 = vadd.f32 %v783, 1.0
  %v842 = vadd.f32 %v785, 1.0
  %v843 = vadd.f32 %v787, 1.0
  %v844 = vadd.f32 %v789, 1.0
  %v845 = vadd.f32 %v791, 1.0
  %v846 = vadd.f32 %v793, 1.0
  %v847 = vadd.f32 %v795, 1.0
  %v848 = vadd.f32 %v797, 1.0
  %v849 = vadd.f32 %v799, 1.0
  %v850 = vadd.f32 %v801, 1.0
  %v851 = vadd.f32 %v803, 1.0
  %v852 = vrcp.pop %v804
  %v853 = vmul.f32 1.0, %v852
  %v854 = vrcp.pop %v805
  %v855 = vmul.f32 1.0, %v854
  %v856 = vrcp.pop %v806
  %v857 = vmul.f32 1.0, %v856
  %v858 = vrcp.pop %v807
  %v859 = vmul.f32 1.0, %v858
  %v860 = vrcp.pop %v808
  %v861 = vmul.f32 1.0, %v860
  %v862 = vrcp.pop %v809
  %v863 = vmul.f32 1.0, %v862
  %v864 = vrcp.pop %v810
  %v865 = vmul.f32 1.0, %v864
  %v866 = vrcp.pop %v811
  %v867 = vmul.f32 1.0, %v866
  %v868 = vrcp.pop %v812
  %v869 = vmul.f32 1.0, %v868
  %v870 = vrcp.pop %v813
  %v871 = vmul.f32 1.0, %v870
  %v872 = vrcp.pop %v814
  %v873 = vmul.f32 1.0, %v872
  %v874 = vrcp.pop %v815
  %v875 = vmul.f32 1.0, %v874
  %v876 = vrcp.pop %v816
  %v877 = vmul.f32 1.0, %v876
  %v878 = vrcp.pop %v817
  %v879 = vmul.f32 1.0, %v878
  %v880 = vrcp.pop %v818
  %v881 = vmul.f32 1.0, %v880
  %v882 = vrcp.pop %v819
  %v883 = vmul.f32 1.0, %v882
  %v884 = vrcp.pop %v820
  %v885 = vmul.f32 1.0, %v884
  %v886 = vrcp.pop %v821
  %v887 = vmul.f32 1.0, %v886
  %v888 = vrcp.pop %v822
  %v889 = vmul.f32 1.0, %v888
  %v890 = vrcp.pop %v823
  %v891 = vmul.f32 1.0, %v890
  %v892 = vrcp.pop %v824
  %v893 = vmul.f32 1.0, %v892
  %v894 = vrcp.pop %v825
  %v895 = vmul.f32 1.0, %v894
  %v896 = vrcp.pop %v826
  %v897 = vmul.f32 1.0, %v896
  %v898 = vrcp.pop %v827
  %v899 = vmul.f32 1.0, %v898
  %v900 = vrcp.pop %v828
  %v901 = vmul.f32 1.0, %v900
  %v902 = vrcp.pop %v829
  %v903 = vmul.f32 1.0, %v902
  %v904 = vrcp.pop %v830
  %v905 = vmul.f32 1.0, %v904
  %v906 = vrcp.pop %v831
  %v907 = vmul.f32 1.0, %v906
  %v908 = vrcp.pop %v832
  %v909 = vmul.f32 1.0, %v908
  %v910 = vrcp.pop %v833
  %v911 = vmul.f32 1.0, %v910
  %v912 = vrcp.pop %v834
  %v913 = vmul.f32 1.0, %v912
  %v914 = vrcp.pop %v835
  %v915 = vmul.f32 1.0, %v914
  %v916 = vrcp.pop %v836
  %v917 = vmul.f32 1.0, %v916
  %v918 = vrcp.pop %v837
  %v919 = vmul.f32 1.0, %v918
  %v920 = vrcp.pop %v838
  %v921 = vmul.f32 1.0, %v920
  %v922 = vrcp.pop %v839
  %v923 = vmul.f32 1.0, %v922
  %v924 = vrcp.pop %v840
  %v925 = vmul.f32 1.0, %v924
  %v926 = vrcp.pop %v841
  %v927 = vmul.f32 1.0, %v926
  %v928 = vrcp.pop %v842
  %v929 = vmul.f32 1.0, %v928
  %v930 = vrcp.pop %v843
  %v931 = vmul.f32 1.0, %v930
  %v932 = vrcp.pop %v844
  %v933 = vmul.f32 1.0, %v932
  %v934 = vrcp.pop %v845
  %v935 = vmul.f32 1.0, %v934
  %v936 = vrcp.pop %v846
  %v937 = vmul.f32 1.0, %v936
  %v938 = vrcp.pop %v847
  %v939 = vmul.f32 1.0, %v938
  %v940 = vrcp.pop %v848
  %v941 = vmul.f32 1.0, %v940
  %v942 = vrcp.pop %v849
  %v943 = vmul.f32 1.0, %v942
  %v944 = vrcp.pop %v850
  %v945 = vmul.f32 1.0, %v944
  %v946 = vrcp.pop %v851
  %v947 = vmul.f32 1.0, %v946
  %v948 = vmul.f32 %v485, %v853
  %v949 = vmul.f32 %v487, %v855
  %v950 = vmul.f32 %v598, %v857
  %v951 = vmul.f32 %v489, %v859
  %v952 = vmul.f32 %v491, %v861
  %v953 = vmul.f32 %v601, %v863
  %v954 = vmul.f32 %v495, %v865
  %v955 = vmul.f32 %v497, %v867
  %v956 = vmul.f32 %v606, %v869
  %v957 = vmul.f32 %v499, %v871
  %v958 = vmul.f32 %v501, %v873
  %v959 = vmul.f32 %v609, %v875
  %v960 = vmul.f32 %v505, %v877
  %v961 = vmul.f32 %v507, %v879
  %v962 = vmul.f32 %v614, %v881
  %v963 = vmul.f32 %v509, %v883
  %v964 = vmul.f32 %v511, %v885
  %v965 = vmul.f32 %v617, %v887
  %v966 = vmul.f32 %v515, %v889
  %v967 = vmul.f32 %v517, %v891
  %v968 = vmul.f32 %v622, %v893
  %v969 = vmul.f32 %v519, %v895
  %v970 = vmul.f32 %v521, %v897
  %v971 = vmul.f32 %v625, %v899
  %v972 = vmul.f32 %v525, %v901
  %v973 = vmul.f32 %v527, %v903
  %v974 = vmul.f32 %v630, %v905
  %v975 = vmul.f32 %v529, %v907
  %v976 = vmul.f32 %v531, %v909
  %v977 = vmul.f32 %v633, %v911
  %v978 = vmul.f32 %v535, %v913
  %v979 = vmul.f32 %v537, %v915
  %v980 = vmul.f32 %v638, %v917
  %v981 = vmul.f32 %v539, %v919
  %v982 = vmul.f32 %v541, %v921
  %v983 = vmul.f32 %v641, %v923
  %v984 = vmul.f32 %v545, %v925
  %v985 = vmul.f32 %v547, %v927
  %v986 = vmul.f32 %v646, %v929
  %v987 = vmul.f32 %v549, %v931
  %v988 = vmul.f32 %v551, %v933
  %v989 = vmul.f32 %v649, %v935
  %v990 = vmul.f32 %v555, %v937
  %v991 = vmul.f32 %v557, %v939
  %v992 = vmul.f32 %v654, %v941
  %v993 = vmul.f32 %v559, %v943
  %v994 = vmul.f32 %v561, %v945
  %v995 = vmul.f32 %v657, %v947
  %v996 = vpack.c.bf16 %v951, %v948
  %v997 = vpack.c.bf16 %v952, %v949
  %v998 = vpack.c.bf16 %v953, %v950
  %v999 = vpack.c.bf16 %v957, %v954
  %v1000 = vpack.c.bf16 %v958, %v955
  %v1001 = vpack.c.bf16 %v959, %v956
  %v1002 = vpack.c.bf16 %v963, %v960
  %v1003 = vpack.c.bf16 %v964, %v961
  %v1004 = vpack.c.bf16 %v965, %v962
  %v1005 = vpack.c.bf16 %v969, %v966
  %v1006 = vpack.c.bf16 %v970, %v967
  %v1007 = vpack.c.bf16 %v971, %v968
  %v1008 = vpack.c.bf16 %v975, %v972
  %v1009 = vpack.c.bf16 %v976, %v973
  %v1010 = vpack.c.bf16 %v977, %v974
  %v1011 = vpack.c.bf16 %v981, %v978
  %v1012 = vpack.c.bf16 %v982, %v979
  %v1013 = vpack.c.bf16 %v983, %v980
  %v1014 = vpack.c.bf16 %v987, %v984
  %v1015 = vpack.c.bf16 %v988, %v985
  %v1016 = vpack.c.bf16 %v989, %v986
  %v1017 = vpack.c.bf16 %v993, %v990
  %v1018 = vpack.c.bf16 %v994, %v991
  %v1019 = vpack.c.bf16 %v995, %v992
  %v1044 = vunpack.c.l.b16 %v996
  %v1045 = vunpack.c.l.b16 %v997
  %v1046 = vunpack.c.l.b16 %v998
  %v1047 = vunpack.c.h.b16 %v996
  %v1048 = vunpack.c.h.b16 %v997
  %v1049 = vunpack.c.h.b16 %v998
  %v1050 = vunpack.c.l.b16 %v999
  %v1051 = vunpack.c.l.b16 %v1000
  %v1052 = vunpack.c.l.b16 %v1001
  %v1053 = vunpack.c.h.b16 %v999
  %v1054 = vunpack.c.h.b16 %v1000
  %v1055 = vunpack.c.h.b16 %v1001
  %v1056 = vunpack.c.l.b16 %v1002
  %v1057 = vunpack.c.l.b16 %v1003
  %v1058 = vunpack.c.l.b16 %v1004
  %v1059 = vunpack.c.h.b16 %v1002
  %v1060 = vunpack.c.h.b16 %v1003
  %v1061 = vunpack.c.h.b16 %v1004
  %v1062 = vunpack.c.l.b16 %v1005
  %v1063 = vunpack.c.l.b16 %v1006
  %v1064 = vunpack.c.l.b16 %v1007
  %v1065 = vunpack.c.h.b16 %v1005
  %v1066 = vunpack.c.h.b16 %v1006
  %v1067 = vunpack.c.h.b16 %v1007
  %v1068 = vunpack.c.l.b16 %v1008
  %v1069 = vunpack.c.l.b16 %v1009
  %v1070 = vunpack.c.l.b16 %v1010
  %v1071 = vunpack.c.h.b16 %v1008
  %v1072 = vunpack.c.h.b16 %v1009
  %v1073 = vunpack.c.h.b16 %v1010
  %v1074 = vunpack.c.l.b16 %v1011
  %v1075 = vunpack.c.l.b16 %v1012
  %v1076 = vunpack.c.l.b16 %v1013
  %v1077 = vunpack.c.h.b16 %v1011
  %v1078 = vunpack.c.h.b16 %v1012
  %v1079 = vunpack.c.h.b16 %v1013
  %v1080 = vunpack.c.l.b16 %v1014
  %v1081 = vunpack.c.l.b16 %v1015
  %v1082 = vunpack.c.l.b16 %v1016
  %v1083 = vunpack.c.h.b16 %v1014
  %v1084 = vunpack.c.h.b16 %v1015
  %v1085 = vunpack.c.h.b16 %v1016
  %v1086 = vunpack.c.l.b16 %v1017
  %v1087 = vunpack.c.l.b16 %v1018
  %v1088 = vunpack.c.l.b16 %v1019
  %v1089 = vunpack.c.h.b16 %v1017
  %v1090 = vunpack.c.h.b16 %v1018
  %v1091 = vunpack.c.h.b16 %v1019
  %v1092 = vpack.c.b16 %v1045, %v1044
  %v1093 = vpack.c.b16 %v1046, %v1046
  %v1094 = vpack.c.b16 %v1048, %v1047
  %v1095 = vpack.c.b16 %v1049, %v1049
  %v1096 = vpack.c.b16 %v1051, %v1050
  %v1097 = vpack.c.b16 %v1052, %v1052
  %v1098 = vpack.c.b16 %v1054, %v1053
  %v1099 = vpack.c.b16 %v1055, %v1055
  %v1100 = vpack.c.b16 %v1057, %v1056
  %v1101 = vpack.c.b16 %v1058, %v1058
  %v1102 = vpack.c.b16 %v1060, %v1059
  %v1103 = vpack.c.b16 %v1061, %v1061
  %v1104 = vpack.c.b16 %v1063, %v1062
  %v1105 = vpack.c.b16 %v1064, %v1064
  %v1106 = vpack.c.b16 %v1066, %v1065
  %v1107 = vpack.c.b16 %v1067, %v1067
  %v1108 = vpack.c.b16 %v1069, %v1068
  %v1109 = vpack.c.b16 %v1070, %v1070
  %v1110 = vpack.c.b16 %v1072, %v1071
  %v1111 = vpack.c.b16 %v1073, %v1073
  %v1112 = vpack.c.b16 %v1075, %v1074
  %v1113 = vpack.c.b16 %v1076, %v1076
  %v1114 = vpack.c.b16 %v1078, %v1077
  %v1115 = vpack.c.b16 %v1079, %v1079
  %v1116 = vpack.c.b16 %v1081, %v1080
  %v1117 = vpack.c.b16 %v1082, %v1082
  %v1118 = vpack.c.b16 %v1084, %v1083
  %v1119 = vpack.c.b16 %v1085, %v1085
  %v1120 = vpack.c.b16 %v1087, %v1086
  %v1121 = vpack.c.b16 %v1088, %v1088
  %v1122 = vpack.c.b16 %v1090, %v1089
  %v1123 = vpack.c.b16 %v1091, %v1091
  %1156 = vst [vmem:[%s5] sm:$0xff] %v1092
  %1157 = vst [vmem:[%s5 + $0x8] sm:$0xf] %v1093
  %1158 = vst [vmem:[%s5 + $0xc] sm:$0xff] %v1094
  %1159 = vst [vmem:[%s5 + $0x14] sm:$0xf] %v1095
  %1160 = vst [vmem:[%s5 + $0x18] sm:$0xff] %v1096
  %1161 = vst [vmem:[%s5 + $0x20] sm:$0xf] %v1097
  %1162 = vst [vmem:[%s5 + $0x24] sm:$0xff] %v1098
  %1163 = vst [vmem:[%s5 + $0x2c] sm:$0xf] %v1099
  %1164 = vst [vmem:[%s5 + $0x30] sm:$0xff] %v1100
  %1165 = vst [vmem:[%s5 + $0x38] sm:$0xf] %v1101
  %1166 = vst [vmem:[%s5 + $0x3c] sm:$0xff] %v1102
  %1167 = vst [vmem:[%s5 + $0x44] sm:$0xf] %v1103
  %1168 = vst [vmem:[%s5 + $0x48] sm:$0xff] %v1104
  %1169 = vst [vmem:[%s5 + $0x50] sm:$0xf] %v1105
  %1170 = vst [vmem:[%s5 + $0x54] sm:$0xff] %v1106
  %1171 = vst [vmem:[%s5 + $0x5c] sm:$0xf] %v1107
  %1172 = vst [vmem:[%s5 + $0x60] sm:$0xff] %v1108
  %1173 = vst [vmem:[%s5 + $0x68] sm:$0xf] %v1109
  %1174 = vst [vmem:[%s5 + $0x6c] sm:$0xff] %v1110
  %1175 = vst [vmem:[%s5 + $0x74] sm:$0xf] %v1111
  %1176 = vst [vmem:[%s5 + $0x78] sm:$0xff] %v1112
  %1177 = vst [vmem:[%s5 + $0x80] sm:$0xf] %v1113
  %1178 = vst [vmem:[%s5 + $0x84] sm:$0xff] %v1114
  %1179 = vst [vmem:[%s5 + $0x8c] sm:$0xf] %v1115
  %1180 = vst [vmem:[%s5 + $0x90] sm:$0xff] %v1116
  %1181 = vst [vmem:[%s5 + $0x98] sm:$0xf] %v1117
  %1182 = vst [vmem:[%s5 + $0x9c] sm:$0xff] %v1118
  %1183 = vst [vmem:[%s5 + $0xa4] sm:$0xf] %v1119
  %1184 = vst [vmem:[%s5 + $0xa8] sm:$0xff] %v1120
  %1185 = vst [vmem:[%s5 + $0xb0] sm:$0xf] %v1121
  %1186 = vst [vmem:[%s5 + $0xb4] sm:$0xff] %v1122
  %1187 = vst [vmem:[%s5 + $0xbc] sm:$0xf] %v1123
  // Predicated region
  $region22: #{effnet_erosion_forward.3} parent=0 // pred_check
    _
  $region23: #{effnet_erosion_forward.3} parent=0 // pred_check_branch
    %1189 = sbr.rel (0) target = $region25
  $region24: #{effnet_erosion_forward.3} parent=0 // pred_region
    _
  $region25: #{effnet_erosion_forward.3} parent=0 // pred_fallthru
    _
  // Predicated region
  $region26: #{effnet_erosion_forward.3} parent=0 // pred_check
    _
  $region27: #{effnet_erosion_forward.3} parent=0 // pred_check_branch
    %1191 = sbr.rel (0) target = $region29
  $region28: #{effnet_erosion_forward.3} parent=0 // pred_region
    _
  $region29: #{effnet_erosion_forward.3} parent=0 // pred_fallthru
    _

// kernel: effnet_erosion_forward.4
$region0: #{effnet_erosion_forward.4}
  #allocation0 [shape = 'u32[]', space=smem, size = 0x4, offset = 0x4, fixed_abs, tag = 'smem constant byte address 0x4 - core index']
  #allocation1 [shape = 'u32[144,128]{1,0:T(1,128)}', space=vmem, size = 0x12000, scoped, tag = 'internal scratch']
  #allocation2 [shape = 'f32[1,1536]{1,0:T(1,128)}', space=vmem, size = 0x1800, scoped, tag = 'scratch operand']
  %s0 = inlined_call_operand.vmem [shape: bf16[2,64,384], index: 0, kind: input, shape index: {}]
  %s1 = inlined_call_operand.vmem [shape: bf16[384,1536], index: 1, kind: input, shape index: {}]
  %s2 = inlined_call_operand.vmem [shape: f32[1,1536], index: 2, kind: input, shape index: {}]
  %s3 = inlined_call_operand.vmem [shape: f32[2,1,1536], index: 3, kind: output, shape index: {}]
  %s4 = sld [smem:[#allocation0]]
  $region53: #{effnet_erosion_forward.4} parent=0
    _
  %s6 = ssub.s32 1, %s4
  %s7 = scalar_select 0, %s6, %s4
  loop: start=0, step=1, limit=4
  $region2: #{effnet_erosion_forward.4} parent=0 // loop_pre_header
    _
  $region3: #{effnet_erosion_forward.4} parent=0 // loop_header
    %s9 = sphi 0, %s13
    %p10 = scmp.ge.s32.totalorder %s9, 4
    %s16 = sphi 0, %s28
    %s17 = sphi 0, %s24
    %s18 = sphi 0, %s16
    %s19 = sphi 0, %s17
    %s20 = sphi 0, %s18
    %s21 = sphi 0, %s19
    %s33 = sphi 0, %s35
    %s36 = sphi 0, %s33
    %s37 = sphi 0, %s36
    %s53 = sphi 0, %s37
    %s57 = sphi 0, %s57
    %s59 = sphi 0, %s57
    %s60 = sphi 0, %s59
    %s74 = sphi 0, %s60
    %s78 = sphi 0, %s78
    %s80 = sphi 0, %s78
    %s81 = sphi 0, %s80
    %s95 = sphi 0, %s81
    %s101 = sphi 0, %s103
    %s104 = sphi 0, %s101
    %s105 = sphi 0, %s104
    %s121 = sphi 0, %s105
  $region4: #{effnet_erosion_forward.4} parent=0 // loop_header_branch
    %12 = sbr.rel (%p10) target = $region8
  $region5: #{effnet_erosion_forward.4} parent=0 // loop_body
    %s14 = ssub.s32 %s9, 1
    %s15 = ssub.s32 %s9, 2
    %s22 = sadd.s32 1, %s17
    %p23 = scmp.ge.s32.totalorder %s22, 1
    %s24 = scalar_select %p23, 0, %s22
    %s25 = sadd.s32 1, %s16
    %s26 = scalar_select %p23, %s25, %s16
    %p27 = scmp.ge.s32.totalorder %s26, 2
    %s28 = scalar_select %p27, 0, %s26
    %s29 = ssub.s32 %s16, %s28
    %s30 = ssub.s32 %s17, %s24
    %s31 = sor.u32 %s29, %s30
    %p32 = scmp.eq.s32.totalorder %s31, 0
    %s34 = sadd.s32 %s33, 1
    %s35 = scalar_select %p32, %s33, %s34
    %p38 = pneg %p32
    %p39 = scmp.eq.s32.totalorder %s9, 1
    %p40 = por %p38, %p39
    %p41 = scmp.ne.s32.totalorder %s33, %s36
    %p42 = scmp.eq.s32.totalorder %s9, 0
    %p43 = por %p41, %p42
    %p44 = scmp.ne.s32.totalorder %s33, %s36
    %p45 = scmp.eq.s32.totalorder %s14, 1
    %p46 = por %p44, %p45
    %p47 = scmp.ne.s32.totalorder %s36, %s37
    %p48 = scmp.eq.s32.totalorder %s14, 0
    %p49 = por %p47, %p48
    %p50 = scmp.ne.s32.totalorder %s36, %s37
    %p51 = scmp.eq.s32.totalorder %s15, 1
    %p52 = por %p50, %p51
    %p54 = scmp.ne.s32.totalorder %s37, %s53
    %p55 = scmp.eq.s32.totalorder %s15, 0
    %p56 = por %p54, %p55
    %s58 = sadd.s32 %s57, 1
    %p61 = scmp.eq.s32.totalorder %s9, 1
    %p62 = scmp.ne.s32.totalorder %s57, %s59
    %p63 = scmp.eq.s32.totalorder %s9, 0
    %p64 = por %p62, %p63
    %p65 = scmp.ne.s32.totalorder %s57, %s59
    %p66 = scmp.eq.s32.totalorder %s14, 1
    %p67 = por %p65, %p66
    %p68 = scmp.ne.s32.totalorder %s59, %s60
    %p69 = scmp.eq.s32.totalorder %s14, 0
    %p70 = por %p68, %p69
    %p71 = scmp.ne.s32.totalorder %s59, %s60
    %p72 = scmp.eq.s32.totalorder %s15, 1
    %p73 = por %p71, %p72
    %p75 = scmp.ne.s32.totalorder %s60, %s74
    %p76 = scmp.eq.s32.totalorder %s15, 0
    %p77 = por %p75, %p76
    %s79 = sadd.s32 %s78, 1
    %p82 = scmp.eq.s32.totalorder %s9, 1
    %p83 = scmp.ne.s32.totalorder %s78, %s80
    %p84 = scmp.eq.s32.totalorder %s9, 0
    %p85 = por %p83, %p84
    %p86 = scmp.ne.s32.totalorder %s78, %s80
    %p87 = scmp.eq.s32.totalorder %s14, 1
    %p88 = por %p86, %p87
    %p89 = scmp.ne.s32.totalorder %s80, %s81
    %p90 = scmp.eq.s32.totalorder %s14, 0
    %p91 = por %p89, %p90
    %p92 = scmp.ne.s32.totalorder %s80, %s81
    %p93 = scmp.eq.s32.totalorder %s15, 1
    %p94 = por %p92, %p93
    %p96 = scmp.ne.s32.totalorder %s81, %s95
    %p97 = scmp.eq.s32.totalorder %s15, 0
    %p98 = por %p96, %p97
    %s99 = ssub.s32 %s16, %s28
    %p100 = scmp.eq.s32.totalorder %s99, 0
    %s102 = sadd.s32 %s101, 1
    %s103 = scalar_select %p100, %s101, %s102
    %p106 = pneg %p100
    %p107 = scmp.eq.s32.totalorder %s9, 1
    %p108 = por %p106, %p107
    %p109 = scmp.ne.s32.totalorder %s101, %s104
    %p110 = scmp.eq.s32.totalorder %s9, 0
    %p111 = por %p109, %p110
    %p112 = scmp.ne.s32.totalorder %s101, %s104
    %p113 = scmp.eq.s32.totalorder %s14, 1
    %p114 = por %p112, %p113
    %p115 = scmp.ne.s32.totalorder %s104, %s105
    %p116 = scmp.eq.s32.totalorder %s14, 0
    %p117 = por %p115, %p116
    %p118 = scmp.ne.s32.totalorder %s104, %s105
    %p119 = scmp.eq.s32.totalorder %s15, 1
    %p120 = por %p118, %p119
    %p122 = scmp.ne.s32.totalorder %s105, %s121
    %p123 = scmp.eq.s32.totalorder %s15, 0
    %p124 = por %p122, %p123
    %p125 = scmp.le.s32.totalorder 1, %s9
    %p126 = scmp.lt.s32.totalorder %s9, 3
    %p127 = pnand %p125, %p126
    %p128 = pneg %p127
    // Predicated region
    $region9: #{effnet_erosion_forward.4} parent=5 // pred_check
      _
    $region10: #{effnet_erosion_forward.4} parent=5 // pred_check_branch
      %130 = sbr.rel (%p127) target = $region12
    $region11: #{effnet_erosion_forward.4} parent=5 // pred_region
      %s131 = ssub.s32 %s9, 1
      // Predicated region
      $region13: #{effnet_erosion_forward.4} parent=11 // pred_check
        %p132 = pneg %p70
      $region14: #{effnet_erosion_forward.4} parent=11 // pred_check_branch
        %134 = sbr.rel (%p132) target = $region16
      $region15: #{effnet_erosion_forward.4} parent=11 // pred_region
        _
      $region16: #{effnet_erosion_forward.4} parent=11 // pred_fallthru
        _
      // Predicated region
      $region17: #{effnet_erosion_forward.4} parent=11 // pred_check
        %p135 = pneg %p91
      $region18: #{effnet_erosion_forward.4} parent=11 // pred_check_branch
        %137 = sbr.rel (%p135) target = $region20
      $region19: #{effnet_erosion_forward.4} parent=11 // pred_region
        _
      $region20: #{effnet_erosion_forward.4} parent=11 // pred_fallthru
        _
    $region12: #{effnet_erosion_forward.4} parent=5 // pred_fallthru
      _
    %p138 = scmp.lt.s32.totalorder %s9, 2
    // Predicated region
    $region21: #{effnet_erosion_forward.4} parent=5 // pred_check
      %p139 = pneg %p138
    $region22: #{effnet_erosion_forward.4} parent=5 // pred_check_branch
      %141 = sbr.rel (%p139) target = $region24
    $region23: #{effnet_erosion_forward.4} parent=5 // pred_region
      // Predicated region
      $region25: #{effnet_erosion_forward.4} parent=23 // pred_check
        %p142 = pneg %p43
      $region26: #{effnet_erosion_forward.4} parent=23 // pred_check_branch
        %144 = sbr.rel (%p142) target = $region28
      $region27: #{effnet_erosion_forward.4} parent=23 // pred_region
        %s145 = smul.u32 8, %s17
        %p146 = scmp.lt.s32.totalorder %s16, 1
        %s147 = scalar_select %p146, %s16, 1
        %p148 = scmp.lt.s32.totalorder %s145, 7
        %s149 = scalar_select %p148, %s145, 7
        %s150 = smul.addr %s149, 3
        %s151 = smul.addr %s147, 24
        %s152 = sadd.s32 %s150, %s151
        %s153 = smul.addr %s152, 4
        %s154 = scalar_lea.vmem %s0, %s153
        %s155 = smul.u32 8, %s17
      $region28: #{effnet_erosion_forward.4} parent=23 // pred_fallthru
        _
    $region24: #{effnet_erosion_forward.4} parent=5 // pred_fallthru
      _
    %p156 = scmp.le.s32.totalorder 1, %s9
    %p157 = scmp.lt.s32.totalorder %s9, 3
    %p158 = pnand %p156, %p157
    %p159 = pneg %p158
    // Predicated region
    $region29: #{effnet_erosion_forward.4} parent=5 // pred_check
      _
    $region30: #{effnet_erosion_forward.4} parent=5 // pred_check_branch
      %161 = sbr.rel (%p158) target = $region32
    $region31: #{effnet_erosion_forward.4} parent=5 // pred_region
      %s162 = ssub.s32 %s9, 1
      %s163 = smul.u32 8, %s19
      %p164 = scmp.lt.s32.totalorder %s18, 1
      %s165 = scalar_select %p164, %s18, 1
      %p166 = scmp.lt.s32.totalorder %s163, 7
      %s167 = scalar_select %p166, %s163, 7
      %s168 = smul.addr %s167, 3
      %s169 = smul.addr %s165, 24
      %s170 = sadd.s32 %s168, %s169
      %s171 = smul.addr %s170, 4
      %s172 = scalar_lea.vmem %s0, %s171
      %p173 = pneg %p49
      %p174 = pneg %p46
      %p175 = pneg %p70
      %p176 = pneg %p67
      %p177 = pneg %p91
      %p178 = pneg %p88
      %p179 = pneg %p117
      %p180 = pneg %p114
      %p181 = scmp.lt.s32.totalorder %s18, 1
      %s182 = scalar_select %p181, %s18, 1
      %s183 = smul.addr %s182, 12
      %s184 = scalar_lea.vmem %s3, %s183
      %s185 = smul.u32 8, %s19
      %p186 = scmp.lt.s32.totalorder %s18, 1
      %s187 = scalar_select %p186, %s18, 1
      %p188 = scmp.lt.s32.totalorder %s185, 7
      %s189 = scalar_select %p188, %s185, 7
      %s190 = smul.addr %s189, 3
      %s191 = smul.addr %s187, 24
      %s192 = sadd.s32 %s190, %s191
      %s193 = smul.addr %s192, 4
      %s194 = scalar_lea.vmem %s0, %s193
      %s195 = smul.u32 8, %s19
      %p196 = scmp.lt.s32.totalorder %s18, 1
      %s197 = scalar_select %p196, %s18, 1
      %s198 = smul.addr %s197, 12
      %s199 = scalar_lea.vmem %s3, %s198
      %p201 = scmp.eq.s32.totalorder %s19, 0
      // Predicated region
      $region33: #{effnet_erosion_forward.4} parent=31 // pred_check
        %p202 = pneg %p201
      $region34: #{effnet_erosion_forward.4} parent=31 // pred_check_branch
        %204 = sbr.rel (%p202) target = $region36
      $region35: #{effnet_erosion_forward.4} parent=31 // pred_region
        %205 = vst [vmem:[#allocation2] sm:$0xff] 0.0
        %v206 = vlaneseq
        %vm207 = vcmp.ge.s32.totalorder %v206, 0
        %vm208 = vcmp.lt.s32.totalorder %v206, 512
        %vm209 = vmand %vm207, %vm208
        %210 = vst.msk [vmem:[#allocation2 + $0x8] sm:$0xf] %vm209, 0.0
      $region36: #{effnet_erosion_forward.4} parent=31 // pred_fallthru
        _
      %v211 = vld [vmem:[%s194] sm:$0xff]
      %v212 = vld [vmem:[%s194 + $0x8] sm:$0xf]
      %v213 = vld [vmem:[%s194 + $0xc] sm:$0xff]
      %v214 = vld [vmem:[%s194 + $0x14] sm:$0xf]
      %v215 = vld [vmem:[%s194 + $0x18] sm:$0xff]
      %v216 = vld [vmem:[%s194 + $0x20] sm:$0xf]
      %v217 = vld [vmem:[%s194 + $0x24] sm:$0xff]
      %v218 = vld [vmem:[%s194 + $0x2c] sm:$0xf]
      %v219 = vld [vmem:[%s194 + $0x30] sm:$0xff]
      %v220 = vld [vmem:[%s194 + $0x38] sm:$0xf]
      %v221 = vld [vmem:[%s194 + $0x3c] sm:$0xff]
      %v222 = vld [vmem:[%s194 + $0x44] sm:$0xf]
      %v223 = vld [vmem:[%s194 + $0x48] sm:$0xff]
      %v224 = vld [vmem:[%s194 + $0x50] sm:$0xf]
      %v225 = vld [vmem:[%s194 + $0x54] sm:$0xff]
      %v226 = vld [vmem:[%s194 + $0x5c] sm:$0xf]
      %v227 = vld [vmem:[%s1] sm:$0xff]
      %v228 = vld [vmem:[%s1 + $0x8] sm:$0xff]
      %v229 = vld [vmem:[%s1 + $0x10] sm:$0xff]
      %v230 = vld [vmem:[%s1 + $0x18] sm:$0xff]
      %v231 = vld [vmem:[%s1 + $0x20] sm:$0xff]
      %v232 = vld [vmem:[%s1 + $0x28] sm:$0xff]
      %v233 = vld [vmem:[%s1 + $0x30] sm:$0xff]
      %v234 = vld [vmem:[%s1 + $0x38] sm:$0xff]
      %v235 = vld [vmem:[%s1 + $0x40] sm:$0xff]
      %v236 = vld [vmem:[%s1 + $0x48] sm:$0xff]
      %v237 = vld [vmem:[%s1 + $0x50] sm:$0xff]
      %v238 = vld [vmem:[%s1 + $0x58] sm:$0xff]
      %v239 = vld [vmem:[%s1 + $0x60] sm:$0xff]
      %v240 = vld [vmem:[%s1 + $0x68] sm:$0xff]
      %v241 = vld [vmem:[%s1 + $0x70] sm:$0xff]
      %v242 = vld [vmem:[%s1 + $0x78] sm:$0xff]
      %v243 = vld [vmem:[%s1 + $0x80] sm:$0xff]
      %v244 = vld [vmem:[%s1 + $0x88] sm:$0xff]
      %v245 = vld [vmem:[%s1 + $0x90] sm:$0xff]
      %v246 = vld [vmem:[%s1 + $0x98] sm:$0xff]
      %v247 = vld [vmem:[%s1 + $0xa0] sm:$0xff]
      %v248 = vld [vmem:[%s1 + $0xa8] sm:$0xff]
      %v249 = vld [vmem:[%s1 + $0xb0] sm:$0xff]
      %v250 = vld [vmem:[%s1 + $0xb8] sm:$0xff]
      %v251 = vld [vmem:[%s1 + $0xc0] sm:$0xff]
      %v252 = vld [vmem:[%s1 + $0xc8] sm:$0xff]
      %v253 = vld [vmem:[%s1 + $0xd0] sm:$0xff]
      %v254 = vld [vmem:[%s1 + $0xd8] sm:$0xff]
      %v255 = vld [vmem:[%s1 + $0xe0] sm:$0xff]
      %v256 = vld [vmem:[%s1 + $0xe8] sm:$0xff]
      %v257 = vld [vmem:[%s1 + $0xf0] sm:$0xff]
      %v258 = vld [vmem:[%s1 + $0xf8] sm:$0xff]
      %v259 = vld [vmem:[%s1 + $0x100] sm:$0xff]
      %v260 = vld [vmem:[%s1 + $0x108] sm:$0xff]
      %v261 = vld [vmem:[%s1 + $0x110] sm:$0xff]
      %v262 = vld [vmem:[%s1 + $0x118] sm:$0xff]
      %v263 = vld [vmem:[%s1 + $0x120] sm:$0xff]
      %v264 = vld [vmem:[%s1 + $0x128] sm:$0xff]
      %v265 = vld [vmem:[%s1 + $0x130] sm:$0xff]
      %v266 = vld [vmem:[%s1 + $0x138] sm:$0xff]
      %v267 = vld [vmem:[%s1 + $0x140] sm:$0xff]
      %v268 = vld [vmem:[%s1 + $0x148] sm:$0xff]
      %v269 = vld [vmem:[%s1 + $0x150] sm:$0xff]
      %v270 = vld [vmem:[%s1 + $0x158] sm:$0xff]
      %v271 = vld [vmem:[%s1 + $0x160] sm:$0xff]
      %v272 = vld [vmem:[%s1 + $0x168] sm:$0xff]
      %v273 = vld [vmem:[%s1 + $0x170] sm:$0xff]
      %v274 = vld [vmem:[%s1 + $0x178] sm:$0xff]
      %v275 = vld [vmem:[%s1 + $0x180] sm:$0xff]
      %v276 = vld [vmem:[%s1 + $0x188] sm:$0xff]
      %v277 = vld [vmem:[%s1 + $0x190] sm:$0xff]
      %v278 = vld [vmem:[%s1 + $0x198] sm:$0xff]
      %v279 = vld [vmem:[%s1 + $0x1a0] sm:$0xff]
      %v280 = vld [vmem:[%s1 + $0x1a8] sm:$0xff]
      %v281 = vld [vmem:[%s1 + $0x1b0] sm:$0xff]
      %v282 = vld [vmem:[%s1 + $0x1b8] sm:$0xff]
      %v283 = vld [vmem:[%s1 + $0x1c0] sm:$0xff]
      %v284 = vld [vmem:[%s1 + $0x1c8] sm:$0xff]
      %v285 = vld [vmem:[%s1 + $0x1d0] sm:$0xff]
      %v286 = vld [vmem:[%s1 + $0x1d8] sm:$0xff]
      %v287 = vld [vmem:[%s1 + $0x1e0] sm:$0xff]
      %v288 = vld [vmem:[%s1 + $0x1e8] sm:$0xff]
      %v289 = vld [vmem:[%s1 + $0x1f0] sm:$0xff]
      %v290 = vld [vmem:[%s1 + $0x1f8] sm:$0xff]
      %v291 = vld [vmem:[%s1 + $0x200] sm:$0xff]
      %v292 = vld [vmem:[%s1 + $0x208] sm:$0xff]
      %v293 = vld [vmem:[%s1 + $0x210] sm:$0xff]
      %v294 = vld [vmem:[%s1 + $0x218] sm:$0xff]
      %v295 = vld [vmem:[%s1 + $0x220] sm:$0xff]
      %v296 = vld [vmem:[%s1 + $0x228] sm:$0xff]
      %v297 = vld [vmem:[%s1 + $0x230] sm:$0xff]
      %v298 = vld [vmem:[%s1 + $0x238] sm:$0xff]
      %v299 = vld [vmem:[%s1 + $0x240] sm:$0xff]
      %v300 = vld [vmem:[%s1 + $0x248] sm:$0xff]
      %v301 = vld [vmem:[%s1 + $0x250] sm:$0xff]
      %v302 = vld [vmem:[%s1 + $0x258] sm:$0xff]
      %v303 = vld [vmem:[%s1 + $0x260] sm:$0xff]
      %v304 = vld [vmem:[%s1 + $0x268] sm:$0xff]
      %v305 = vld [vmem:[%s1 + $0x270] sm:$0xff]
      %v306 = vld [vmem:[%s1 + $0x278] sm:$0xff]
      %v307 = vld [vmem:[%s1 + $0x280] sm:$0xff]
      %v308 = vld [vmem:[%s1 + $0x288] sm:$0xff]
      %v309 = vld [vmem:[%s1 + $0x290] sm:$0xff]
      %v310 = vld [vmem:[%s1 + $0x298] sm:$0xff]
      %v311 = vld [vmem:[%s1 + $0x2a0] sm:$0xff]
      %v312 = vld [vmem:[%s1 + $0x2a8] sm:$0xff]
      %v313 = vld [vmem:[%s1 + $0x2b0] sm:$0xff]
      %v314 = vld [vmem:[%s1 + $0x2b8] sm:$0xff]
      %v315 = vld [vmem:[%s1 + $0x2c0] sm:$0xff]
      %v316 = vld [vmem:[%s1 + $0x2c8] sm:$0xff]
      %v317 = vld [vmem:[%s1 + $0x2d0] sm:$0xff]
      %v318 = vld [vmem:[%s1 + $0x2d8] sm:$0xff]
      %v319 = vld [vmem:[%s1 + $0x2e0] sm:$0xff]
      %v320 = vld [vmem:[%s1 + $0x2e8] sm:$0xff]
      %v321 = vld [vmem:[%s1 + $0x2f0] sm:$0xff]
      %v322 = vld [vmem:[%s1 + $0x2f8] sm:$0xff]
      %v323 = vld [vmem:[%s1 + $0x300] sm:$0xff]
      %v324 = vld [vmem:[%s1 + $0x308] sm:$0xff]
      %v325 = vld [vmem:[%s1 + $0x310] sm:$0xff]
      %v326 = vld [vmem:[%s1 + $0x318] sm:$0xff]
      %v327 = vld [vmem:[%s1 + $0x320] sm:$0xff]
      %v328 = vld [vmem:[%s1 + $0x328] sm:$0xff]
      %v329 = vld [vmem:[%s1 + $0x330] sm:$0xff]
      %v330 = vld [vmem:[%s1 + $0x338] sm:$0xff]
      %v331 = vld [vmem:[%s1 + $0x340] sm:$0xff]
      %v332 = vld [vmem:[%s1 + $0x348] sm:$0xff]
      %v333 = vld [vmem:[%s1 + $0x350] sm:$0xff]
      %v334 = vld [vmem:[%s1 + $0x358] sm:$0xff]
      %v335 = vld [vmem:[%s1 + $0x360] sm:$0xff]
      %v336 = vld [vmem:[%s1 + $0x368] sm:$0xff]
      %v337 = vld [vmem:[%s1 + $0x370] sm:$0xff]
      %v338 = vld [vmem:[%s1 + $0x378] sm:$0xff]
      %v339 = vld [vmem:[%s1 + $0x380] sm:$0xff]
      %v340 = vld [vmem:[%s1 + $0x388] sm:$0xff]
      %v341 = vld [vmem:[%s1 + $0x390] sm:$0xff]
      %v342 = vld [vmem:[%s1 + $0x398] sm:$0xff]
      %v343 = vld [vmem:[%s1 + $0x3a0] sm:$0xff]
      %v344 = vld [vmem:[%s1 + $0x3a8] sm:$0xff]
      %v345 = vld [vmem:[%s1 + $0x3b0] sm:$0xff]
      %v346 = vld [vmem:[%s1 + $0x3b8] sm:$0xff]
      %v347 = vld [vmem:[%s1 + $0x3c0] sm:$0xff]
      %v348 = vld [vmem:[%s1 + $0x3c8] sm:$0xff]
      %v349 = vld [vmem:[%s1 + $0x3d0] sm:$0xff]
      %v350 = vld [vmem:[%s1 + $0x3d8] sm:$0xff]
      %v351 = vld [vmem:[%s1 + $0x3e0] sm:$0xff]
      %v352 = vld [vmem:[%s1 + $0x3e8] sm:$0xff]
      %v353 = vld [vmem:[%s1 + $0x3f0] sm:$0xff]
      %v354 = vld [vmem:[%s1 + $0x3f8] sm:$0xff]
      %v355 = vld [vmem:[%s1 + $0x400] sm:$0xff]
      %v356 = vld [vmem:[%s1 + $0x408] sm:$0xff]
      %v357 = vld [vmem:[%s1 + $0x410] sm:$0xff]
      %v358 = vld [vmem:[%s1 + $0x418] sm:$0xff]
      %v359 = vld [vmem:[%s1 + $0x420] sm:$0xff]
      %v360 = vld [vmem:[%s1 + $0x428] sm:$0xff]
      %v361 = vld [vmem:[%s1 + $0x430] sm:$0xff]
      %v362 = vld [vmem:[%s1 + $0x438] sm:$0xff]
      %v363 = vld [vmem:[%s1 + $0x440] sm:$0xff]
      %v364 = vld [vmem:[%s1 + $0x448] sm:$0xff]
      %v365 = vld [vmem:[%s1 + $0x450] sm:$0xff]
      %v366 = vld [vmem:[%s1 + $0x458] sm:$0xff]
      %v367 = vld [vmem:[%s1 + $0x460] sm:$0xff]
      %v368 = vld [vmem:[%s1 + $0x468] sm:$0xff]
      %v369 = vld [vmem:[%s1 + $0x470] sm:$0xff]
      %v370 = vld [vmem:[%s1 + $0x478] sm:$0xff]
      %v371 = vld [vmem:[%s1 + $0x480] sm:$0xff]
      %v372 = vld [vmem:[%s1 + $0x488] sm:$0xff]
      %v373 = vld [vmem:[%s1 + $0x490] sm:$0xff]
      %v374 = vld [vmem:[%s1 + $0x498] sm:$0xff]
      %v375 = vld [vmem:[%s1 + $0x4a0] sm:$0xff]
      %v376 = vld [vmem:[%s1 + $0x4a8] sm:$0xff]
      %v377 = vld [vmem:[%s1 + $0x4b0] sm:$0xff]
      %v378 = vld [vmem:[%s1 + $0x4b8] sm:$0xff]
      %v379 = vld [vmem:[%s1 + $0x4c0] sm:$0xff]
      %v380 = vld [vmem:[%s1 + $0x4c8] sm:$0xff]
      %v381 = vld [vmem:[%s1 + $0x4d0] sm:$0xff]
      %v382 = vld [vmem:[%s1 + $0x4d8] sm:$0xff]
      %v383 = vld [vmem:[%s1 + $0x4e0] sm:$0xff]
      %v384 = vld [vmem:[%s1 + $0x4e8] sm:$0xff]
      %v385 = vld [vmem:[%s1 + $0x4f0] sm:$0xff]
      %v386 = vld [vmem:[%s1 + $0x4f8] sm:$0xff]
      %v387 = vld [vmem:[%s1 + $0x500] sm:$0xff]
      %v388 = vld [vmem:[%s1 + $0x508] sm:$0xff]
      %v389 = vld [vmem:[%s1 + $0x510] sm:$0xff]
      %v390 = vld [vmem:[%s1 + $0x518] sm:$0xff]
      %v391 = vld [vmem:[%s1 + $0x520] sm:$0xff]
      %v392 = vld [vmem:[%s1 + $0x528] sm:$0xff]
      %v393 = vld [vmem:[%s1 + $0x530] sm:$0xff]
      %v394 = vld [vmem:[%s1 + $0x538] sm:$0xff]
      %v395 = vld [vmem:[%s1 + $0x540] sm:$0xff]
      %v396 = vld [vmem:[%s1 + $0x548] sm:$0xff]
      %v397 = vld [vmem:[%s1 + $0x550] sm:$0xff]
      %v398 = vld [vmem:[%s1 + $0x558] sm:$0xff]
      %v399 = vld [vmem:[%s1 + $0x560] sm:$0xff]
      %v400 = vld [vmem:[%s1 + $0x568] sm:$0xff]
      %v401 = vld [vmem:[%s1 + $0x570] sm:$0xff]
      %v402 = vld [vmem:[%s1 + $0x578] sm:$0xff]
      %v403 = vld [vmem:[%s1 + $0x580] sm:$0xff]
      %v404 = vld [vmem:[%s1 + $0x588] sm:$0xff]
      %v405 = vld [vmem:[%s1 + $0x590] sm:$0xff]
      %v406 = vld [vmem:[%s1 + $0x598] sm:$0xff]
      %v407 = vld [vmem:[%s1 + $0x5a0] sm:$0xff]
      %v408 = vld [vmem:[%s1 + $0x5a8] sm:$0xff]
      %v409 = vld [vmem:[%s1 + $0x5b0] sm:$0xff]
      %v410 = vld [vmem:[%s1 + $0x5b8] sm:$0xff]
      %v411 = vld [vmem:[%s1 + $0x5c0] sm:$0xff]
      %v412 = vld [vmem:[%s1 + $0x5c8] sm:$0xff]
      %v413 = vld [vmem:[%s1 + $0x5d0] sm:$0xff]
      %v414 = vld [vmem:[%s1 + $0x5d8] sm:$0xff]
      %v415 = vld [vmem:[%s1 + $0x5e0] sm:$0xff]
      %v416 = vld [vmem:[%s1 + $0x5e8] sm:$0xff]
      %v417 = vld [vmem:[%s1 + $0x5f0] sm:$0xff]
      %v418 = vld [vmem:[%s1 + $0x5f8] sm:$0xff]
      %v419 = vld [vmem:[%s1 + $0x600] sm:$0xff]
      %v420 = vld [vmem:[%s1 + $0x608] sm:$0xff]
      %v421 = vld [vmem:[%s1 + $0x610] sm:$0xff]
      %v422 = vld [vmem:[%s1 + $0x618] sm:$0xff]
      %v423 = vld [vmem:[%s1 + $0x620] sm:$0xff]
      %v424 = vld [vmem:[%s1 + $0x628] sm:$0xff]
      %v425 = vld [vmem:[%s1 + $0x630] sm:$0xff]
      %v426 = vld [vmem:[%s1 + $0x638] sm:$0xff]
      %v427 = vld [vmem:[%s1 + $0x640] sm:$0xff]
      %v428 = vld [vmem:[%s1 + $0x648] sm:$0xff]
      %v429 = vld [vmem:[%s1 + $0x650] sm:$0xff]
      %v430 = vld [vmem:[%s1 + $0x658] sm:$0xff]
      %v431 = vld [vmem:[%s1 + $0x660] sm:$0xff]
      %v432 = vld [vmem:[%s1 + $0x668] sm:$0xff]
      %v433 = vld [vmem:[%s1 + $0x670] sm:$0xff]
      %v434 = vld [vmem:[%s1 + $0x678] sm:$0xff]
      %v435 = vld [vmem:[%s1 + $0x680] sm:$0xff]
      %v436 = vld [vmem:[%s1 + $0x688] sm:$0xff]
      %v437 = vld [vmem:[%s1 + $0x690] sm:$0xff]
      %v438 = vld [vmem:[%s1 + $0x698] sm:$0xff]
      %v439 = vld [vmem:[%s1 + $0x6a0] sm:$0xff]
      %v440 = vld [vmem:[%s1 + $0x6a8] sm:$0xff]
      %v441 = vld [vmem:[%s1 + $0x6b0] sm:$0xff]
      %v442 = vld [vmem:[%s1 + $0x6b8] sm:$0xff]
      %v443 = vld [vmem:[%s1 + $0x6c0] sm:$0xff]
      %v444 = vld [vmem:[%s1 + $0x6c8] sm:$0xff]
      %v445 = vld [vmem:[%s1 + $0x6d0] sm:$0xff]
      %v446 = vld [vmem:[%s1 + $0x6d8] sm:$0xff]
      %v447 = vld [vmem:[%s1 + $0x6e0] sm:$0xff]
      %v448 = vld [vmem:[%s1 + $0x6e8] sm:$0xff]
      %v449 = vld [vmem:[%s1 + $0x6f0] sm:$0xff]
      %v450 = vld [vmem:[%s1 + $0x6f8] sm:$0xff]
      %v451 = vld [vmem:[%s1 + $0x700] sm:$0xff]
      %v452 = vld [vmem:[%s1 + $0x708] sm:$0xff]
      %v453 = vld [vmem:[%s1 + $0x710] sm:$0xff]
      %v454 = vld [vmem:[%s1 + $0x718] sm:$0xff]
      %v455 = vld [vmem:[%s1 + $0x720] sm:$0xff]
      %v456 = vld [vmem:[%s1 + $0x728] sm:$0xff]
      %v457 = vld [vmem:[%s1 + $0x730] sm:$0xff]
      %v458 = vld [vmem:[%s1 + $0x738] sm:$0xff]
      %v459 = vld [vmem:[%s1 + $0x740] sm:$0xff]
      %v460 = vld [vmem:[%s1 + $0x748] sm:$0xff]
      %v461 = vld [vmem:[%s1 + $0x750] sm:$0xff]
      %v462 = vld [vmem:[%s1 + $0x758] sm:$0xff]
      %v463 = vld [vmem:[%s1 + $0x760] sm:$0xff]
      %v464 = vld [vmem:[%s1 + $0x768] sm:$0xff]
      %v465 = vld [vmem:[%s1 + $0x770] sm:$0xff]
      %v466 = vld [vmem:[%s1 + $0x778] sm:$0xff]
      %v467 = vld [vmem:[%s1 + $0x780] sm:$0xff]
      %v468 = vld [vmem:[%s1 + $0x788] sm:$0xff]
      %v469 = vld [vmem:[%s1 + $0x790] sm:$0xff]
      %v470 = vld [vmem:[%s1 + $0x798] sm:$0xff]
      %v471 = vld [vmem:[%s1 + $0x7a0] sm:$0xff]
      %v472 = vld [vmem:[%s1 + $0x7a8] sm:$0xff]
      %v473 = vld [vmem:[%s1 + $0x7b0] sm:$0xff]
      %v474 = vld [vmem:[%s1 + $0x7b8] sm:$0xff]
      %v475 = vld [vmem:[%s1 + $0x7c0] sm:$0xff]
      %v476 = vld [vmem:[%s1 + $0x7c8] sm:$0xff]
      %v477 = vld [vmem:[%s1 + $0x7d0] sm:$0xff]
      %v478 = vld [vmem:[%s1 + $0x7d8] sm:$0xff]
      %v479 = vld [vmem:[%s1 + $0x7e0] sm:$0xff]
      %v480 = vld [vmem:[%s1 + $0x7e8] sm:$0xff]
      %v481 = vld [vmem:[%s1 + $0x7f0] sm:$0xff]
      %v482 = vld [vmem:[%s1 + $0x7f8] sm:$0xff]
      %v483 = vld [vmem:[%s1 + $0x800] sm:$0xff]
      %v484 = vld [vmem:[%s1 + $0x808] sm:$0xff]
      %v485 = vld [vmem:[%s1 + $0x810] sm:$0xff]
      %v486 = vld [vmem:[%s1 + $0x818] sm:$0xff]
      %v487 = vld [vmem:[%s1 + $0x820] sm:$0xff]
      %v488 = vld [vmem:[%s1 + $0x828] sm:$0xff]
      %v489 = vld [vmem:[%s1 + $0x830] sm:$0xff]
      %v490 = vld [vmem:[%s1 + $0x838] sm:$0xff]
      %v491 = vld [vmem:[%s1 + $0x840] sm:$0xff]
      %v492 = vld [vmem:[%s1 + $0x848] sm:$0xff]
      %v493 = vld [vmem:[%s1 + $0x850] sm:$0xff]
      %v494 = vld [vmem:[%s1 + $0x858] sm:$0xff]
      %v495 = vld [vmem:[%s1 + $0x860] sm:$0xff]
      %v496 = vld [vmem:[%s1 + $0x868] sm:$0xff]
      %v497 = vld [vmem:[%s1 + $0x870] sm:$0xff]
      %v498 = vld [vmem:[%s1 + $0x878] sm:$0xff]
      %v499 = vld [vmem:[%s1 + $0x880] sm:$0xff]
      %v500 = vld [vmem:[%s1 + $0x888] sm:$0xff]
      %v501 = vld [vmem:[%s1 + $0x890] sm:$0xff]
      %v502 = vld [vmem:[%s1 + $0x898] sm:$0xff]
      %v503 = vld [vmem:[%s1 + $0x8a0] sm:$0xff]
      %v504 = vld [vmem:[%s1 + $0x8a8] sm:$0xff]
      %v505 = vld [vmem:[%s1 + $0x8b0] sm:$0xff]
      %v506 = vld [vmem:[%s1 + $0x8b8] sm:$0xff]
      %v507 = vld [vmem:[%s1 + $0x8c0] sm:$0xff]
      %v508 = vld [vmem:[%s1 + $0x8c8] sm:$0xff]
      %v509 = vld [vmem:[%s1 + $0x8d0] sm:$0xff]
      %v510 = vld [vmem:[%s1 + $0x8d8] sm:$0xff]
      %v511 = vld [vmem:[%s1 + $0x8e0] sm:$0xff]
      %v512 = vld [vmem:[%s1 + $0x8e8] sm:$0xff]
      %v513 = vld [vmem:[%s1 + $0x8f0] sm:$0xff]
      %v514 = vld [vmem:[%s1 + $0x8f8] sm:$0xff]
      %v515 = vld [vmem:[%s2] sm:$0xff]
      %v516 = vld [vmem:[%s2 + $0x8] sm:$0xf]
      %v519 = vlaneseq
      %v520 = vshrl.u32 %v519, 7
      %v521 = vsub.s32 0, %v520
      %v522 = vrot.slane %v515, %v521
      %v523 = vlaneseq
      %v524 = vshrl.u32 %v523, 7
      %v525 = vsub.s32 1, %v524
      %v526 = vrot.slane %v515, %v525
      %v527 = vlaneseq
      %v528 = vshrl.u32 %v527, 7
      %v529 = vsub.s32 2, %v528
      %v530 = vrot.slane %v515, %v529
      %v531 = vlaneseq
      %v532 = vshrl.u32 %v531, 7
      %v533 = vsub.s32 3, %v532
      %v534 = vrot.slane %v515, %v533
      %v535 = vlaneseq
      %v536 = vshrl.u32 %v535, 7
      %v537 = vsub.s32 4, %v536
      %v538 = vrot.slane %v515, %v537
      %v539 = vlaneseq
      %v540 = vshrl.u32 %v539, 7
      %v541 = vsub.s32 5, %v540
      %v542 = vrot.slane %v515, %v541
      %v543 = vlaneseq
      %v544 = vshrl.u32 %v543, 7
      %v545 = vsub.s32 6, %v544
      %v546 = vrot.slane %v515, %v545
      %v547 = vlaneseq
      %v548 = vshrl.u32 %v547, 7
      %v549 = vsub.s32 7, %v548
      %v550 = vrot.slane %v515, %v549
      %v551 = vlaneseq
      %v552 = vshrl.u32 %v551, 7
      %v553 = vsub.s32 0, %v552
      %v554 = vrot.slane %v516, %v553
      %v555 = vlaneseq
      %v556 = vshrl.u32 %v555, 7
      %v557 = vsub.s32 1, %v556
      %v558 = vrot.slane %v516, %v557
      %v559 = vlaneseq
      %v560 = vshrl.u32 %v559, 7
      %v561 = vsub.s32 2, %v560
      %v562 = vrot.slane %v516, %v561
      %v563 = vlaneseq
      %v564 = vshrl.u32 %v563, 7
      %v565 = vsub.s32 3, %v564
      %v566 = vrot.slane %v516, %v565
      %v595 = vunpack.c.l.b16 %v211
      %v596 = vunpack.c.h.b16 %v211
      %v597 = vunpack.c.l.b16 %v212
      %v598 = vunpack.c.l.b16 %v213
      %v599 = vunpack.c.h.b16 %v213
      %v600 = vunpack.c.l.b16 %v214
      %v601 = vunpack.c.l.b16 %v215
      %v602 = vunpack.c.h.b16 %v215
      %v603 = vunpack.c.l.b16 %v216
      %v604 = vunpack.c.l.b16 %v217
      %v605 = vunpack.c.h.b16 %v217
      %v606 = vunpack.c.l.b16 %v218
      %v607 = vunpack.c.l.b16 %v219
      %v608 = vunpack.c.h.b16 %v219
      %v609 = vunpack.c.l.b16 %v220
      %v610 = vunpack.c.l.b16 %v221
      %v611 = vunpack.c.h.b16 %v221
      %v612 = vunpack.c.l.b16 %v222
      %v613 = vunpack.c.l.b16 %v223
      %v614 = vunpack.c.h.b16 %v223
      %v615 = vunpack.c.l.b16 %v224
      %v616 = vunpack.c.l.b16 %v225
      %v617 = vunpack.c.h.b16 %v225
      %v618 = vunpack.c.l.b16 %v226
      %v619 = vpack.c.b16 %v598, %v595
      %v620 = vpack.c.b16 %v599, %v596
      %v621 = vpack.c.b16 %v600, %v597
      %v622 = vpack.c.b16 %v604, %v601
      %v623 = vpack.c.b16 %v605, %v602
      %v624 = vpack.c.b16 %v606, %v603
      %v625 = vpack.c.b16 %v610, %v607
      %v626 = vpack.c.b16 %v611, %v608
      %v627 = vpack.c.b16 %v612, %v609
      %v628 = vpack.c.b16 %v616, %v613
      %v629 = vpack.c.b16 %v617, %v614
      %v630 = vpack.c.b16 %v618, %v615
      %v931 = vunpack.c.l.b16 %v227
      %v932 = vunpack.c.h.b16 %v227
      %v933 = vunpack.c.l.b16 %v228
      %v934 = vunpack.c.h.b16 %v228
      %v935 = vunpack.c.l.b16 %v229
      %v936 = vunpack.c.h.b16 %v229
      %v937 = vunpack.c.l.b16 %v230
      %v938 = vunpack.c.h.b16 %v230
      %v939 = vunpack.c.l.b16 %v231
      %v940 = vunpack.c.h.b16 %v231
      %v941 = vunpack.c.l.b16 %v232
      %v942 = vunpack.c.h.b16 %v232
      %v943 = vunpack.c.l.b16 %v233
      %v944 = vunpack.c.h.b16 %v233
      %v945 = vunpack.c.l.b16 %v234
      %v946 = vunpack.c.h.b16 %v234
      %v947 = vunpack.c.l.b16 %v235
      %v948 = vunpack.c.h.b16 %v235
      %v949 = vunpack.c.l.b16 %v236
      %v950 = vunpack.c.h.b16 %v236
      %v951 = vunpack.c.l.b16 %v237
      %v952 = vunpack.c.h.b16 %v237
      %v953 = vunpack.c.l.b16 %v238
      %v954 = vunpack.c.h.b16 %v238
      %v955 = vunpack.c.l.b16 %v239
      %v956 = vunpack.c.h.b16 %v239
      %v957 = vunpack.c.l.b16 %v240
      %v958 = vunpack.c.h.b16 %v240
      %v959 = vunpack.c.l.b16 %v241
      %v960 = vunpack.c.h.b16 %v241
      %v961 = vunpack.c.l.b16 %v242
      %v962 = vunpack.c.h.b16 %v242
      %v963 = vunpack.c.l.b16 %v243
      %v964 = vunpack.c.h.b16 %v243
      %v965 = vunpack.c.l.b16 %v244
      %v966 = vunpack.c.h.b16 %v244
      %v967 = vunpack.c.l.b16 %v245
      %v968 = vunpack.c.h.b16 %v245
      %v969 = vunpack.c.l.b16 %v246
      %v970 = vunpack.c.h.b16 %v246
      %v971 = vunpack.c.l.b16 %v247
      %v972 = vunpack.c.h.b16 %v247
      %v973 = vunpack.c.l.b16 %v248
      %v974 = vunpack.c.h.b16 %v248
      %v975 = vunpack.c.l.b16 %v249
      %v976 = vunpack.c.h.b16 %v249
      %v977 = vunpack.c.l.b16 %v250
      %v978 = vunpack.c.h.b16 %v250
      %v979 = vunpack.c.l.b16 %v251
      %v980 = vunpack.c.h.b16 %v251
      %v981 = vunpack.c.l.b16 %v252
      %v982 = vunpack.c.h.b16 %v252
      %v983 = vunpack.c.l.b16 %v253
      %v984 = vunpack.c.h.b16 %v253
      %v985 = vunpack.c.l.b16 %v254
      %v986 = vunpack.c.h.b16 %v254
      %v987 = vunpack.c.l.b16 %v255
      %v988 = vunpack.c.h.b16 %v255
      %v989 = vunpack.c.l.b16 %v256
      %v990 = vunpack.c.h.b16 %v256
      %v991 = vunpack.c.l.b16 %v257
      %v992 = vunpack.c.h.b16 %v257
      %v993 = vunpack.c.l.b16 %v258
      %v994 = vunpack.c.h.b16 %v258
      %v995 = vunpack.c.l.b16 %v259
      %v996 = vunpack.c.h.b16 %v259
      %v997 = vunpack.c.l.b16 %v260
      %v998 = vunpack.c.h.b16 %v260
      %v999 = vunpack.c.l.b16 %v261
      %v1000 = vunpack.c.h.b16 %v261
      %v1001 = vunpack.c.l.b16 %v262
      %v1002 = vunpack.c.h.b16 %v262
      %v1003 = vunpack.c.l.b16 %v263
      %v1004 = vunpack.c.h.b16 %v263
      %v1005 = vunpack.c.l.b16 %v264
      %v1006 = vunpack.c.h.b16 %v264
      %v1007 = vunpack.c.l.b16 %v265
      %v1008 = vunpack.c.h.b16 %v265
      %v1009 = vunpack.c.l.b16 %v266
      %v1010 = vunpack.c.h.b16 %v266
      %v1011 = vunpack.c.l.b16 %v267
      %v1012 = vunpack.c.h.b16 %v267
      %v1013 = vunpack.c.l.b16 %v268
      %v1014 = vunpack.c.h.b16 %v268
      %v1015 = vunpack.c.l.b16 %v269
      %v1016 = vunpack.c.h.b16 %v269
      %v1017 = vunpack.c.l.b16 %v270
      %v1018 = vunpack.c.h.b16 %v270
      %v1019 = vunpack.c.l.b16 %v271
      %v1020 = vunpack.c.h.b16 %v271
      %v1021 = vunpack.c.l.b16 %v272
      %v1022 = vunpack.c.h.b16 %v272
      %v1023 = vunpack.c.l.b16 %v273
      %v1024 = vunpack.c.h.b16 %v273
      %v1025 = vunpack.c.l.b16 %v274
      %v1026 = vunpack.c.h.b16 %v274
      %v1027 = vunpack.c.l.b16 %v275
      %v1028 = vunpack.c.h.b16 %v275
      %v1029 = vunpack.c.l.b16 %v276
      %v1030 = vunpack.c.h.b16 %v276
      %v1031 = vunpack.c.l.b16 %v277
      %v1032 = vunpack.c.h.b16 %v277
      %v1033 = vunpack.c.l.b16 %v278
      %v1034 = vunpack.c.h.b16 %v278
      %v1035 = vunpack.c.l.b16 %v279
      %v1036 = vunpack.c.h.b16 %v279
      %v1037 = vunpack.c.l.b16 %v280
      %v1038 = vunpack.c.h.b16 %v280
      %v1039 = vunpack.c.l.b16 %v281
      %v1040 = vunpack.c.h.b16 %v281
      %v1041 = vunpack.c.l.b16 %v282
      %v1042 = vunpack.c.h.b16 %v282
      %v1043 = vunpack.c.l.b16 %v283
      %v1044 = vunpack.c.h.b16 %v283
      %v1045 = vunpack.c.l.b16 %v284
      %v1046 = vunpack.c.h.b16 %v284
      %v1047 = vunpack.c.l.b16 %v285
      %v1048 = vunpack.c.h.b16 %v285
      %v1049 = vunpack.c.l.b16 %v286
      %v1050 = vunpack.c.h.b16 %v286
      %v1051 = vunpack.c.l.b16 %v287
      %v1052 = vunpack.c.h.b16 %v287
      %v1053 = vunpack.c.l.b16 %v288
      %v1054 = vunpack.c.h.b16 %v288
      %v1055 = vunpack.c.l.b16 %v289
      %v1056 = vunpack.c.h.b16 %v289
      %v1057 = vunpack.c.l.b16 %v290
      %v1058 = vunpack.c.h.b16 %v290
      %v1059 = vunpack.c.l.b16 %v291
      %v1060 = vunpack.c.h.b16 %v291
      %v1061 = vunpack.c.l.b16 %v292
      %v1062 = vunpack.c.h.b16 %v292
      %v1063 = vunpack.c.l.b16 %v293
      %v1064 = vunpack.c.h.b16 %v293
      %v1065 = vunpack.c.l.b16 %v294
      %v1066 = vunpack.c.h.b16 %v294
      %v1067 = vunpack.c.l.b16 %v295
      %v1068 = vunpack.c.h.b16 %v295
      %v1069 = vunpack.c.l.b16 %v296
      %v1070 = vunpack.c.h.b16 %v296
      %v1071 = vunpack.c.l.b16 %v297
      %v1072 = vunpack.c.h.b16 %v297
      %v1073 = vunpack.c.l.b16 %v298
      %v1074 = vunpack.c.h.b16 %v298
      %v1075 = vunpack.c.l.b16 %v299
      %v1076 = vunpack.c.h.b16 %v299
      %v1077 = vunpack.c.l.b16 %v300
      %v1078 = vunpack.c.h.b16 %v300
      %v1079 = vunpack.c.l.b16 %v301
      %v1080 = vunpack.c.h.b16 %v301
      %v1081 = vunpack.c.l.b16 %v302
      %v1082 = vunpack.c.h.b16 %v302
      %v1083 = vunpack.c.l.b16 %v303
      %v1084 = vunpack.c.h.b16 %v303
      %v1085 = vunpack.c.l.b16 %v304
      %v1086 = vunpack.c.h.b16 %v304
      %v1087 = vunpack.c.l.b16 %v305
      %v1088 = vunpack.c.h.b16 %v305
      %v1089 = vunpack.c.l.b16 %v306
      %v1090 = vunpack.c.h.b16 %v306
      %v1091 = vunpack.c.l.b16 %v307
      %v1092 = vunpack.c.h.b16 %v307
      %v1093 = vunpack.c.l.b16 %v308
      %v1094 = vunpack.c.h.b16 %v308
      %v1095 = vunpack.c.l.b16 %v309
      %v1096 = vunpack.c.h.b16 %v309
      %v1097 = vunpack.c.l.b16 %v310
      %v1098 = vunpack.c.h.b16 %v310
      %v1099 = vunpack.c.l.b16 %v311
      %v1100 = vunpack.c.h.b16 %v311
      %v1101 = vunpack.c.l.b16 %v312
      %v1102 = vunpack.c.h.b16 %v312
      %v1103 = vunpack.c.l.b16 %v313
      %v1104 = vunpack.c.h.b16 %v313
      %v1105 = vunpack.c.l.b16 %v314
      %v1106 = vunpack.c.h.b16 %v314
      %v1107 = vunpack.c.l.b16 %v315
      %v1108 = vunpack.c.h.b16 %v315
      %v1109 = vunpack.c.l.b16 %v316
      %v1110 = vunpack.c.h.b16 %v316
      %v1111 = vunpack.c.l.b16 %v317
      %v1112 = vunpack.c.h.b16 %v317
      %v1113 = vunpack.c.l.b16 %v318
      %v1114 = vunpack.c.h.b16 %v318
      %v1115 = vunpack.c.l.b16 %v319
      %v1116 = vunpack.c.h.b16 %v319
      %v1117 = vunpack.c.l.b16 %v320
      %v1118 = vunpack.c.h.b16 %v320
      %v1119 = vunpack.c.l.b16 %v321
      %v1120 = vunpack.c.h.b16 %v321
      %v1121 = vunpack.c.l.b16 %v322
      %v1122 = vunpack.c.h.b16 %v322
      %v1123 = vunpack.c.l.b16 %v323
      %v1124 = vunpack.c.h.b16 %v323
      %v1125 = vunpack.c.l.b16 %v324
      %v1126 = vunpack.c.h.b16 %v324
      %v1127 = vunpack.c.l.b16 %v325
      %v1128 = vunpack.c.h.b16 %v325
      %v1129 = vunpack.c.l.b16 %v326
      %v1130 = vunpack.c.h.b16 %v326
      %v1131 = vunpack.c.l.b16 %v327
      %v1132 = vunpack.c.h.b16 %v327
      %v1133 = vunpack.c.l.b16 %v328
      %v1134 = vunpack.c.h.b16 %v328
      %v1135 = vunpack.c.l.b16 %v329
      %v1136 = vunpack.c.h.b16 %v329
      %v1137 = vunpack.c.l.b16 %v330
      %v1138 = vunpack.c.h.b16 %v330
      %v1139 = vunpack.c.l.b16 %v331
      %v1140 = vunpack.c.h.b16 %v331
      %v1141 = vunpack.c.l.b16 %v332
      %v1142 = vunpack.c.h.b16 %v332
      %v1143 = vunpack.c.l.b16 %v333
      %v1144 = vunpack.c.h.b16 %v333
      %v1145 = vunpack.c.l.b16 %v334
      %v1146 = vunpack.c.h.b16 %v334
      %v1147 = vunpack.c.l.b16 %v335
      %v1148 = vunpack.c.h.b16 %v335
      %v1149 = vunpack.c.l.b16 %v336
      %v1150 = vunpack.c.h.b16 %v336
      %v1151 = vunpack.c.l.b16 %v337
      %v1152 = vunpack.c.h.b16 %v337
      %v1153 = vunpack.c.l.b16 %v338
      %v1154 = vunpack.c.h.b16 %v338
      %v1155 = vunpack.c.l.b16 %v339
      %v1156 = vunpack.c.h.b16 %v339
      %v1157 = vunpack.c.l.b16 %v340
      %v1158 = vunpack.c.h.b16 %v340
      %v1159 = vunpack.c.l.b16 %v341
      %v1160 = vunpack.c.h.b16 %v341
      %v1161 = vunpack.c.l.b16 %v342
      %v1162 = vunpack.c.h.b16 %v342
      %v1163 = vunpack.c.l.b16 %v343
      %v1164 = vunpack.c.h.b16 %v343
      %v1165 = vunpack.c.l.b16 %v344
      %v1166 = vunpack.c.h.b16 %v344
      %v1167 = vunpack.c.l.b16 %v345
      %v1168 = vunpack.c.h.b16 %v345
      %v1169 = vunpack.c.l.b16 %v346
      %v1170 = vunpack.c.h.b16 %v346
      %v1171 = vunpack.c.l.b16 %v347
      %v1172 = vunpack.c.h.b16 %v347
      %v1173 = vunpack.c.l.b16 %v348
      %v1174 = vunpack.c.h.b16 %v348
      %v1175 = vunpack.c.l.b16 %v349
      %v1176 = vunpack.c.h.b16 %v349
      %v1177 = vunpack.c.l.b16 %v350
      %v1178 = vunpack.c.h.b16 %v350
      %v1179 = vunpack.c.l.b16 %v351
      %v1180 = vunpack.c.h.b16 %v351
      %v1181 = vunpack.c.l.b16 %v352
      %v1182 = vunpack.c.h.b16 %v352
      %v1183 = vunpack.c.l.b16 %v353
      %v1184 = vunpack.c.h.b16 %v353
      %v1185 = vunpack.c.l.b16 %v354
      %v1186 = vunpack.c.h.b16 %v354
      %v1187 = vunpack.c.l.b16 %v355
      %v1188 = vunpack.c.h.b16 %v355
      %v1189 = vunpack.c.l.b16 %v356
      %v1190 = vunpack.c.h.b16 %v356
      %v1191 = vunpack.c.l.b16 %v357
      %v1192 = vunpack.c.h.b16 %v357
      %v1193 = vunpack.c.l.b16 %v358
      %v1194 = vunpack.c.h.b16 %v358
      %v1195 = vunpack.c.l.b16 %v359
      %v1196 = vunpack.c.h.b16 %v359
      %v1197 = vunpack.c.l.b16 %v360
      %v1198 = vunpack.c.h.b16 %v360
      %v1199 = vunpack.c.l.b16 %v361
      %v1200 = vunpack.c.h.b16 %v361
      %v1201 = vunpack.c.l.b16 %v362
      %v1202 = vunpack.c.h.b16 %v362
      %v1203 = vunpack.c.l.b16 %v363
      %v1204 = vunpack.c.h.b16 %v363
      %v1205 = vunpack.c.l.b16 %v364
      %v1206 = vunpack.c.h.b16 %v364
      %v1207 = vunpack.c.l.b16 %v365
      %v1208 = vunpack.c.h.b16 %v365
      %v1209 = vunpack.c.l.b16 %v366
      %v1210 = vunpack.c.h.b16 %v366
      %v1211 = vunpack.c.l.b16 %v367
      %v1212 = vunpack.c.h.b16 %v367
      %v1213 = vunpack.c.l.b16 %v368
      %v1214 = vunpack.c.h.b16 %v368
      %v1215 = vunpack.c.l.b16 %v369
      %v1216 = vunpack.c.h.b16 %v369
      %v1217 = vunpack.c.l.b16 %v370
      %v1218 = vunpack.c.h.b16 %v370
      %v1219 = vunpack.c.l.b16 %v371
      %v1220 = vunpack.c.h.b16 %v371
      %v1221 = vunpack.c.l.b16 %v372
      %v1222 = vunpack.c.h.b16 %v372
      %v1223 = vunpack.c.l.b16 %v373
      %v1224 = vunpack.c.h.b16 %v373
      %v1225 = vunpack.c.l.b16 %v374
      %v1226 = vunpack.c.h.b16 %v374
      %v1227 = vunpack.c.l.b16 %v375
      %v1228 = vunpack.c.h.b16 %v375
      %v1229 = vunpack.c.l.b16 %v376
      %v1230 = vunpack.c.h.b16 %v376
      %v1231 = vunpack.c.l.b16 %v377
      %v1232 = vunpack.c.h.b16 %v377
      %v1233 = vunpack.c.l.b16 %v378
      %v1234 = vunpack.c.h.b16 %v378
      %v1235 = vunpack.c.l.b16 %v379
      %v1236 = vunpack.c.h.b16 %v379
      %v1237 = vunpack.c.l.b16 %v380
      %v1238 = vunpack.c.h.b16 %v380
      %v1239 = vunpack.c.l.b16 %v381
      %v1240 = vunpack.c.h.b16 %v381
      %v1241 = vunpack.c.l.b16 %v382
      %v1242 = vunpack.c.h.b16 %v382
      %v1243 = vunpack.c.l.b16 %v383
      %v1244 = vunpack.c.h.b16 %v383
      %v1245 = vunpack.c.l.b16 %v384
      %v1246 = vunpack.c.h.b16 %v384
      %v1247 = vunpack.c.l.b16 %v385
      %v1248 = vunpack.c.h.b16 %v385
      %v1249 = vunpack.c.l.b16 %v386
      %v1250 = vunpack.c.h.b16 %v386
      %v1251 = vunpack.c.l.b16 %v387
      %v1252 = vunpack.c.h.b16 %v387
      %v1253 = vunpack.c.l.b16 %v388
      %v1254 = vunpack.c.h.b16 %v388
      %v1255 = vunpack.c.l.b16 %v389
      %v1256 = vunpack.c.h.b16 %v389
      %v1257 = vunpack.c.l.b16 %v390
      %v1258 = vunpack.c.h.b16 %v390
      %v1259 = vunpack.c.l.b16 %v391
      %v1260 = vunpack.c.h.b16 %v391
      %v1261 = vunpack.c.l.b16 %v392
      %v1262 = vunpack.c.h.b16 %v392
      %v1263 = vunpack.c.l.b16 %v393
      %v1264 = vunpack.c.h.b16 %v393
      %v1265 = vunpack.c.l.b16 %v394
      %v1266 = vunpack.c.h.b16 %v394
      %v1267 = vunpack.c.l.b16 %v395
      %v1268 = vunpack.c.h.b16 %v395
      %v1269 = vunpack.c.l.b16 %v396
      %v1270 = vunpack.c.h.b16 %v396
      %v1271 = vunpack.c.l.b16 %v397
      %v1272 = vunpack.c.h.b16 %v397
      %v1273 = vunpack.c.l.b16 %v398
      %v1274 = vunpack.c.h.b16 %v398
      %v1275 = vunpack.c.l.b16 %v399
      %v1276 = vunpack.c.h.b16 %v399
      %v1277 = vunpack.c.l.b16 %v400
      %v1278 = vunpack.c.h.b16 %v400
      %v1279 = vunpack.c.l.b16 %v401
      %v1280 = vunpack.c.h.b16 %v401
      %v1281 = vunpack.c.l.b16 %v402
      %v1282 = vunpack.c.h.b16 %v402
      %v1283 = vunpack.c.l.b16 %v403
      %v1284 = vunpack.c.h.b16 %v403
      %v1285 = vunpack.c.l.b16 %v404
      %v1286 = vunpack.c.h.b16 %v404
      %v1287 = vunpack.c.l.b16 %v405
      %v1288 = vunpack.c.h.b16 %v405
      %v1289 = vunpack.c.l.b16 %v406
      %v1290 = vunpack.c.h.b16 %v406
      %v1291 = vunpack.c.l.b16 %v407
      %v1292 = vunpack.c.h.b16 %v407
      %v1293 = vunpack.c.l.b16 %v408
      %v1294 = vunpack.c.h.b16 %v408
      %v1295 = vunpack.c.l.b16 %v409
      %v1296 = vunpack.c.h.b16 %v409
      %v1297 = vunpack.c.l.b16 %v410
      %v1298 = vunpack.c.h.b16 %v410
      %v1299 = vunpack.c.l.b16 %v411
      %v1300 = vunpack.c.h.b16 %v411
      %v1301 = vunpack.c.l.b16 %v412
      %v1302 = vunpack.c.h.b16 %v412
      %v1303 = vunpack.c.l.b16 %v413
      %v1304 = vunpack.c.h.b16 %v413
      %v1305 = vunpack.c.l.b16 %v414
      %v1306 = vunpack.c.h.b16 %v414
      %v1307 = vunpack.c.l.b16 %v415
      %v1308 = vunpack.c.h.b16 %v415
      %v1309 = vunpack.c.l.b16 %v416
      %v1310 = vunpack.c.h.b16 %v416
      %v1311 = vunpack.c.l.b16 %v417
      %v1312 = vunpack.c.h.b16 %v417
      %v1313 = vunpack.c.l.b16 %v418
      %v1314 = vunpack.c.h.b16 %v418
      %v1315 = vunpack.c.l.b16 %v419
      %v1316 = vunpack.c.h.b16 %v419
      %v1317 = vunpack.c.l.b16 %v420
      %v1318 = vunpack.c.h.b16 %v420
      %v1319 = vunpack.c.l.b16 %v421
      %v1320 = vunpack.c.h.b16 %v421
      %v1321 = vunpack.c.l.b16 %v422
      %v1322 = vunpack.c.h.b16 %v422
      %v1323 = vunpack.c.l.b16 %v423
      %v1324 = vunpack.c.h.b16 %v423
      %v1325 = vunpack.c.l.b16 %v424
      %v1326 = vunpack.c.h.b16 %v424
      %v1327 = vunpack.c.l.b16 %v425
      %v1328 = vunpack.c.h.b16 %v425
      %v1329 = vunpack.c.l.b16 %v426
      %v1330 = vunpack.c.h.b16 %v426
      %v1331 = vunpack.c.l.b16 %v427
      %v1332 = vunpack.c.h.b16 %v427
      %v1333 = vunpack.c.l.b16 %v428
      %v1334 = vunpack.c.h.b16 %v428
      %v1335 = vunpack.c.l.b16 %v429
      %v1336 = vunpack.c.h.b16 %v429
      %v1337 = vunpack.c.l.b16 %v430
      %v1338 = vunpack.c.h.b16 %v430
      %v1339 = vunpack.c.l.b16 %v431
      %v1340 = vunpack.c.h.b16 %v431
      %v1341 = vunpack.c.l.b16 %v432
      %v1342 = vunpack.c.h.b16 %v432
      %v1343 = vunpack.c.l.b16 %v433
      %v1344 = vunpack.c.h.b16 %v433
      %v1345 = vunpack.c.l.b16 %v434
      %v1346 = vunpack.c.h.b16 %v434
      %v1347 = vunpack.c.l.b16 %v435
      %v1348 = vunpack.c.h.b16 %v435
      %v1349 = vunpack.c.l.b16 %v436
      %v1350 = vunpack.c.h.b16 %v436
      %v1351 = vunpack.c.l.b16 %v437
      %v1352 = vunpack.c.h.b16 %v437
      %v1353 = vunpack.c.l.b16 %v438
      %v1354 = vunpack.c.h.b16 %v438
      %v1355 = vunpack.c.l.b16 %v439
      %v1356 = vunpack.c.h.b16 %v439
      %v1357 = vunpack.c.l.b16 %v440
      %v1358 = vunpack.c.h.b16 %v440
      %v1359 = vunpack.c.l.b16 %v441
      %v1360 = vunpack.c.h.b16 %v441
      %v1361 = vunpack.c.l.b16 %v442
      %v1362 = vunpack.c.h.b16 %v442
      %v1363 = vunpack.c.l.b16 %v443
      %v1364 = vunpack.c.h.b16 %v443
      %v1365 = vunpack.c.l.b16 %v444
      %v1366 = vunpack.c.h.b16 %v444
      %v1367 = vunpack.c.l.b16 %v445
      %v1368 = vunpack.c.h.b16 %v445
      %v1369 = vunpack.c.l.b16 %v446
      %v1370 = vunpack.c.h.b16 %v446
      %v1371 = vunpack.c.l.b16 %v447
      %v1372 = vunpack.c.h.b16 %v447
      %v1373 = vunpack.c.l.b16 %v448
      %v1374 = vunpack.c.h.b16 %v448
      %v1375 = vunpack.c.l.b16 %v449
      %v1376 = vunpack.c.h.b16 %v449
      %v1377 = vunpack.c.l.b16 %v450
      %v1378 = vunpack.c.h.b16 %v450
      %v1379 = vunpack.c.l.b16 %v451
      %v1380 = vunpack.c.h.b16 %v451
      %v1381 = vunpack.c.l.b16 %v452
      %v1382 = vunpack.c.h.b16 %v452
      %v1383 = vunpack.c.l.b16 %v453
      %v1384 = vunpack.c.h.b16 %v453
      %v1385 = vunpack.c.l.b16 %v454
      %v1386 = vunpack.c.h.b16 %v454
      %v1387 = vunpack.c.l.b16 %v455
      %v1388 = vunpack.c.h.b16 %v455
      %v1389 = vunpack.c.l.b16 %v456
      %v1390 = vunpack.c.h.b16 %v456
      %v1391 = vunpack.c.l.b16 %v457
      %v1392 = vunpack.c.h.b16 %v457
      %v1393 = vunpack.c.l.b16 %v458
      %v1394 = vunpack.c.h.b16 %v458
      %v1395 = vunpack.c.l.b16 %v459
      %v1396 = vunpack.c.h.b16 %v459
      %v1397 = vunpack.c.l.b16 %v460
      %v1398 = vunpack.c.h.b16 %v460
      %v1399 = vunpack.c.l.b16 %v461
      %v1400 = vunpack.c.h.b16 %v461
      %v1401 = vunpack.c.l.b16 %v462
      %v1402 = vunpack.c.h.b16 %v462
      %v1403 = vunpack.c.l.b16 %v463
      %v1404 = vunpack.c.h.b16 %v463
      %v1405 = vunpack.c.l.b16 %v464
      %v1406 = vunpack.c.h.b16 %v464
      %v1407 = vunpack.c.l.b16 %v465
      %v1408 = vunpack.c.h.b16 %v465
      %v1409 = vunpack.c.l.b16 %v466
      %v1410 = vunpack.c.h.b16 %v466
      %v1411 = vunpack.c.l.b16 %v467
      %v1412 = vunpack.c.h.b16 %v467
      %v1413 = vunpack.c.l.b16 %v468
      %v1414 = vunpack.c.h.b16 %v468
      %v1415 = vunpack.c.l.b16 %v469
      %v1416 = vunpack.c.h.b16 %v469
      %v1417 = vunpack.c.l.b16 %v470
      %v1418 = vunpack.c.h.b16 %v470
      %v1419 = vunpack.c.l.b16 %v471
      %v1420 = vunpack.c.h.b16 %v471
      %v1421 = vunpack.c.l.b16 %v472
      %v1422 = vunpack.c.h.b16 %v472
      %v1423 = vunpack.c.l.b16 %v473
      %v1424 = vunpack.c.h.b16 %v473
      %v1425 = vunpack.c.l.b16 %v474
      %v1426 = vunpack.c.h.b16 %v474
      %v1427 = vunpack.c.l.b16 %v475
      %v1428 = vunpack.c.h.b16 %v475
      %v1429 = vunpack.c.l.b16 %v476
      %v1430 = vunpack.c.h.b16 %v476
      %v1431 = vunpack.c.l.b16 %v477
      %v1432 = vunpack.c.h.b16 %v477
      %v1433 = vunpack.c.l.b16 %v478
      %v1434 = vunpack.c.h.b16 %v478
      %v1435 = vunpack.c.l.b16 %v479
      %v1436 = vunpack.c.h.b16 %v479
      %v1437 = vunpack.c.l.b16 %v480
      %v1438 = vunpack.c.h.b16 %v480
      %v1439 = vunpack.c.l.b16 %v481
      %v1440 = vunpack.c.h.b16 %v481
      %v1441 = vunpack.c.l.b16 %v482
      %v1442 = vunpack.c.h.b16 %v482
      %v1443 = vunpack.c.l.b16 %v483
      %v1444 = vunpack.c.h.b16 %v483
      %v1445 = vunpack.c.l.b16 %v484
      %v1446 = vunpack.c.h.b16 %v484
      %v1447 = vunpack.c.l.b16 %v485
      %v1448 = vunpack.c.h.b16 %v485
      %v1449 = vunpack.c.l.b16 %v486
      %v1450 = vunpack.c.h.b16 %v486
      %v1451 = vunpack.c.l.b16 %v487
      %v1452 = vunpack.c.h.b16 %v487
      %v1453 = vunpack.c.l.b16 %v488
      %v1454 = vunpack.c.h.b16 %v488
      %v1455 = vunpack.c.l.b16 %v489
      %v1456 = vunpack.c.h.b16 %v489
      %v1457 = vunpack.c.l.b16 %v490
      %v1458 = vunpack.c.h.b16 %v490
      %v1459 = vunpack.c.l.b16 %v491
      %v1460 = vunpack.c.h.b16 %v491
      %v1461 = vunpack.c.l.b16 %v492
      %v1462 = vunpack.c.h.b16 %v492
      %v1463 = vunpack.c.l.b16 %v493
      %v1464 = vunpack.c.h.b16 %v493
      %v1465 = vunpack.c.l.b16 %v494
      %v1466 = vunpack.c.h.b16 %v494
      %v1467 = vunpack.c.l.b16 %v495
      %v1468 = vunpack.c.h.b16 %v495
      %v1469 = vunpack.c.l.b16 %v496
      %v1470 = vunpack.c.h.b16 %v496
      %v1471 = vunpack.c.l.b16 %v497
      %v1472 = vunpack.c.h.b16 %v497
      %v1473 = vunpack.c.l.b16 %v498
      %v1474 = vunpack.c.h.b16 %v498
      %v1475 = vunpack.c.l.b16 %v499
      %v1476 = vunpack.c.h.b16 %v499
      %v1477 = vunpack.c.l.b16 %v500
      %v1478 = vunpack.c.h.b16 %v500
      %v1479 = vunpack.c.l.b16 %v501
      %v1480 = vunpack.c.h.b16 %v501
      %v1481 = vunpack.c.l.b16 %v502
      %v1482 = vunpack.c.h.b16 %v502
      %v1483 = vunpack.c.l.b16 %v503
      %v1484 = vunpack.c.h.b16 %v503
      %v1485 = vunpack.c.l.b16 %v504
      %v1486 = vunpack.c.h.b16 %v504
      %v1487 = vunpack.c.l.b16 %v505
      %v1488 = vunpack.c.h.b16 %v505
      %v1489 = vunpack.c.l.b16 %v506
      %v1490 = vunpack.c.h.b16 %v506
      %v1491 = vunpack.c.l.b16 %v507
      %v1492 = vunpack.c.h.b16 %v507
      %v1493 = vunpack.c.l.b16 %v508
      %v1494 = vunpack.c.h.b16 %v508
      %v1495 = vunpack.c.l.b16 %v509
      %v1496 = vunpack.c.h.b16 %v509
      %v1497 = vunpack.c.l.b16 %v510
      %v1498 = vunpack.c.h.b16 %v510
      %v1499 = vunpack.c.l.b16 %v511
      %v1500 = vunpack.c.h.b16 %v511
      %v1501 = vunpack.c.l.b16 %v512
      %v1502 = vunpack.c.h.b16 %v512
      %v1503 = vunpack.c.l.b16 %v513
      %v1504 = vunpack.c.h.b16 %v513
      %v1505 = vunpack.c.l.b16 %v514
      %v1506 = vunpack.c.h.b16 %v514
      %v1507 = vpack.c.b16 %v943, %v931
      %v1508 = vpack.c.b16 %v944, %v932
      %v1509 = vpack.c.b16 %v945, %v933
      %v1510 = vpack.c.b16 %v946, %v934
      %v1511 = vpack.c.b16 %v947, %v935
      %v1512 = vpack.c.b16 %v948, %v936
      %v1513 = vpack.c.b16 %v949, %v937
      %v1514 = vpack.c.b16 %v950, %v938
      %v1515 = vpack.c.b16 %v951, %v939
      %v1516 = vpack.c.b16 %v952, %v940
      %v1517 = vpack.c.b16 %v953, %v941
      %v1518 = vpack.c.b16 %v954, %v942
      %v1519 = vpack.c.b16 %v967, %v955
      %v1520 = vpack.c.b16 %v968, %v956
      %v1521 = vpack.c.b16 %v969, %v957
      %v1522 = vpack.c.b16 %v970, %v958
      %v1523 = vpack.c.b16 %v971, %v959
      %v1524 = vpack.c.b16 %v972, %v960
      %v1525 = vpack.c.b16 %v973, %v961
      %v1526 = vpack.c.b16 %v974, %v962
      %v1527 = vpack.c.b16 %v975, %v963
      %v1528 = vpack.c.b16 %v976, %v964
      %v1529 = vpack.c.b16 %v977, %v965
      %v1530 = vpack.c.b16 %v978, %v966
      %v1531 = vpack.c.b16 %v991, %v979
      %v1532 = vpack.c.b16 %v992, %v980
      %v1533 = vpack.c.b16 %v993, %v981
      %v1534 = vpack.c.b16 %v994, %v982
      %v1535 = vpack.c.b16 %v995, %v983
      %v1536 = vpack.c.b16 %v996, %v984
      %v1537 = vpack.c.b16 %v997, %v985
      %v1538 = vpack.c.b16 %v998, %v986
      %v1539 = vpack.c.b16 %v999, %v987
      %v1540 = vpack.c.b16 %v1000, %v988
      %v1541 = vpack.c.b16 %v1001, %v989
      %v1542 = vpack.c.b16 %v1002, %v990
      %v1543 = vpack.c.b16 %v1015, %v1003
      %v1544 = vpack.c.b16 %v1016, %v1004
      %v1545 = vpack.c.b16 %v1017, %v1005
      %v1546 = vpack.c.b16 %v1018, %v1006
      %v1547 = vpack.c.b16 %v1019, %v1007
      %v1548 = vpack.c.b16 %v1020, %v1008
      %v1549 = vpack.c.b16 %v1021, %v1009
      %v1550 = vpack.c.b16 %v1022, %v1010
      %v1551 = vpack.c.b16 %v1023, %v1011
      %v1552 = vpack.c.b16 %v1024, %v1012
      %v1553 = vpack.c.b16 %v1025, %v1013
      %v1554 = vpack.c.b16 %v1026, %v1014
      %v1555 = vpack.c.b16 %v1039, %v1027
      %v1556 = vpack.c.b16 %v1040, %v1028
      %v1557 = vpack.c.b16 %v1041, %v1029
      %v1558 = vpack.c.b16 %v1042, %v1030
      %v1559 = vpack.c.b16 %v1043, %v1031
      %v1560 = vpack.c.b16 %v1044, %v1032
      %v1561 = vpack.c.b16 %v1045, %v1033
      %v1562 = vpack.c.b16 %v1046, %v1034
      %v1563 = vpack.c.b16 %v1047, %v1035
      %v1564 = vpack.c.b16 %v1048, %v1036
      %v1565 = vpack.c.b16 %v1049, %v1037
      %v1566 = vpack.c.b16 %v1050, %v1038
      %v1567 = vpack.c.b16 %v1063, %v1051
      %v1568 = vpack.c.b16 %v1064, %v1052
      %v1569 = vpack.c.b16 %v1065, %v1053
      %v1570 = vpack.c.b16 %v1066, %v1054
      %v1571 = vpack.c.b16 %v1067, %v1055
      %v1572 = vpack.c.b16 %v1068, %v1056
      %v1573 = vpack.c.b16 %v1069, %v1057
      %v1574 = vpack.c.b16 %v1070, %v1058
      %v1575 = vpack.c.b16 %v1071, %v1059
      %v1576 = vpack.c.b16 %v1072, %v1060
      %v1577 = vpack.c.b16 %v1073, %v1061
      %v1578 = vpack.c.b16 %v1074, %v1062
      %v1579 = vpack.c.b16 %v1087, %v1075
      %v1580 = vpack.c.b16 %v1088, %v1076
      %v1581 = vpack.c.b16 %v1089, %v1077
      %v1582 = vpack.c.b16 %v1090, %v1078
      %v1583 = vpack.c.b16 %v1091, %v1079
      %v1584 = vpack.c.b16 %v1092, %v1080
      %v1585 = vpack.c.b16 %v1093, %v1081
      %v1586 = vpack.c.b16 %v1094, %v1082
      %v1587 = vpack.c.b16 %v1095, %v1083
      %v1588 = vpack.c.b16 %v1096, %v1084
      %v1589 = vpack.c.b16 %v1097, %v1085
      %v1590 = vpack.c.b16 %v1098, %v1086
      %v1591 = vpack.c.b16 %v1111, %v1099
      %v1592 = vpack.c.b16 %v1112, %v1100
      %v1593 = vpack.c.b16 %v1113, %v1101
      %v1594 = vpack.c.b16 %v1114, %v1102
      %v1595 = vpack.c.b16 %v1115, %v1103
      %v1596 = vpack.c.b16 %v1116, %v1104
      %v1597 = vpack.c.b16 %v1117, %v1105
      %v1598 = vpack.c.b16 %v1118, %v1106
      %v1599 = vpack.c.b16 %v1119, %v1107
      %v1600 = vpack.c.b16 %v1120, %v1108
      %v1601 = vpack.c.b16 %v1121, %v1109
      %v1602 = vpack.c.b16 %v1122, %v1110
      %v1603 = vpack.c.b16 %v1135, %v1123
      %v1604 = vpack.c.b16 %v1136, %v1124
      %v1605 = vpack.c.b16 %v1137, %v1125
      %v1606 = vpack.c.b16 %v1138, %v1126
      %v1607 = vpack.c.b16 %v1139, %v1127
      %v1608 = vpack.c.b16 %v1140, %v1128
      %v1609 = vpack.c.b16 %v1141, %v1129
      %v1610 = vpack.c.b16 %v1142, %v1130
      %v1611 = vpack.c.b16 %v1143, %v1131
      %v1612 = vpack.c.b16 %v1144, %v1132
      %v1613 = vpack.c.b16 %v1145, %v1133
      %v1614 = vpack.c.b16 %v1146, %v1134
      %v1615 = vpack.c.b16 %v1159, %v1147
      %v1616 = vpack.c.b16 %v1160, %v1148
      %v1617 = vpack.c.b16 %v1161, %v1149
      %v1618 = vpack.c.b16 %v1162, %v1150
      %v1619 = vpack.c.b16 %v1163, %v1151
      %v1620 = vpack.c.b16 %v1164, %v1152
      %v1621 = vpack.c.b16 %v1165, %v1153
      %v1622 = vpack.c.b16 %v1166, %v1154
      %v1623 = vpack.c.b16 %v1167, %v1155
      %v1624 = vpack.c.b16 %v1168, %v1156
      %v1625 = vpack.c.b16 %v1169, %v1157
      %v1626 = vpack.c.b16 %v1170, %v1158
      %v1627 = vpack.c.b16 %v1183, %v1171
      %v1628 = vpack.c.b16 %v1184, %v1172
      %v1629 = vpack.c.b16 %v1185, %v1173
      %v1630 = vpack.c.b16 %v1186, %v1174
      %v1631 = vpack.c.b16 %v1187, %v1175
      %v1632 = vpack.c.b16 %v1188, %v1176
      %v1633 = vpack.c.b16 %v1189, %v1177
      %v1634 = vpack.c.b16 %v1190, %v1178
      %v1635 = vpack.c.b16 %v1191, %v1179
      %v1636 = vpack.c.b16 %v1192, %v1180
      %v1637 = vpack.c.b16 %v1193, %v1181
      %v1638 = vpack.c.b16 %v1194, %v1182
      %v1639 = vpack.c.b16 %v1207, %v1195
      %v1640 = vpack.c.b16 %v1208, %v1196
      %v1641 = vpack.c.b16 %v1209, %v1197
      %v1642 = vpack.c.b16 %v1210, %v1198
      %v1643 = vpack.c.b16 %v1211, %v1199
      %v1644 = vpack.c.b16 %v1212, %v1200
      %v1645 = vpack.c.b16 %v1213, %v1201
      %v1646 = vpack.c.b16 %v1214, %v1202
      %v1647 = vpack.c.b16 %v1215, %v1203
      %v1648 = vpack.c.b16 %v1216, %v1204
      %v1649 = vpack.c.b16 %v1217, %v1205
      %v1650 = vpack.c.b16 %v1218, %v1206
      %v1651 = vpack.c.b16 %v1231, %v1219
      %v1652 = vpack.c.b16 %v1232, %v1220
      %v1653 = vpack.c.b16 %v1233, %v1221
      %v1654 = vpack.c.b16 %v1234, %v1222
      %v1655 = vpack.c.b16 %v1235, %v1223
      %v1656 = vpack.c.b16 %v1236, %v1224
      %v1657 = vpack.c.b16 %v1237, %v1225
      %v1658 = vpack.c.b16 %v1238, %v1226
      %v1659 = vpack.c.b16 %v1239, %v1227
      %v1660 = vpack.c.b16 %v1240, %v1228
      %v1661 = vpack.c.b16 %v1241, %v1229
      %v1662 = vpack.c.b16 %v1242, %v1230
      %v1663 = vpack.c.b16 %v1255, %v1243
      %v1664 = vpack.c.b16 %v1256, %v1244
      %v1665 = vpack.c.b16 %v1257, %v1245
      %v1666 = vpack.c.b16 %v1258, %v1246
      %v1667 = vpack.c.b16 %v1259, %v1247
      %v1668 = vpack.c.b16 %v1260, %v1248
      %v1669 = vpack.c.b16 %v1261, %v1249
      %v1670 = vpack.c.b16 %v1262, %v1250
      %v1671 = vpack.c.b16 %v1263, %v1251
      %v1672 = vpack.c.b16 %v1264, %v1252
      %v1673 = vpack.c.b16 %v1265, %v1253
      %v1674 = vpack.c.b16 %v1266, %v1254
      %v1675 = vpack.c.b16 %v1279, %v1267
      %v1676 = vpack.c.b16 %v1280, %v1268
      %v1677 = vpack.c.b16 %v1281, %v1269
      %v1678 = vpack.c.b16 %v1282, %v1270
      %v1679 = vpack.c.b16 %v1283, %v1271
      %v1680 = vpack.c.b16 %v1284, %v1272
      %v1681 = vpack.c.b16 %v1285, %v1273
      %v1682 = vpack.c.b16 %v1286, %v1274
      %v1683 = vpack.c.b16 %v1287, %v1275
      %v1684 = vpack.c.b16 %v1288, %v1276
      %v1685 = vpack.c.b16 %v1289, %v1277
      %v1686 = vpack.c.b16 %v1290, %v1278
      %v1687 = vpack.c.b16 %v1303, %v1291
      %v1688 = vpack.c.b16 %v1304, %v1292
      %v1689 = vpack.c.b16 %v1305, %v1293
      %v1690 = vpack.c.b16 %v1306, %v1294
      %v1691 = vpack.c.b16 %v1307, %v1295
      %v1692 = vpack.c.b16 %v1308, %v1296
      %v1693 = vpack.c.b16 %v1309, %v1297
      %v1694 = vpack.c.b16 %v1310, %v1298
      %v1695 = vpack.c.b16 %v1311, %v1299
      %v1696 = vpack.c.b16 %v1312, %v1300
      %v1697 = vpack.c.b16 %v1313, %v1301
      %v1698 = vpack.c.b16 %v1314, %v1302
      %v1699 = vpack.c.b16 %v1327, %v1315
      %v1700 = vpack.c.b16 %v1328, %v1316
      %v1701 = vpack.c.b16 %v1329, %v1317
      %v1702 = vpack.c.b16 %v1330, %v1318
      %v1703 = vpack.c.b16 %v1331, %v1319
      %v1704 = vpack.c.b16 %v1332, %v1320
      %v1705 = vpack.c.b16 %v1333, %v1321
      %v1706 = vpack.c.b16 %v1334, %v1322
      %v1707 = vpack.c.b16 %v1335, %v1323
      %v1708 = vpack.c.b16 %v1336, %v1324
      %v1709 = vpack.c.b16 %v1337, %v1325
      %v1710 = vpack.c.b16 %v1338, %v1326
      %v1711 = vpack.c.b16 %v1351, %v1339
      %v1712 = vpack.c.b16 %v1352, %v1340
      %v1713 = vpack.c.b16 %v1353, %v1341
      %v1714 = vpack.c.b16 %v1354, %v1342
      %v1715 = vpack.c.b16 %v1355, %v1343
      %v1716 = vpack.c.b16 %v1356, %v1344
      %v1717 = vpack.c.b16 %v1357, %v1345
      %v1718 = vpack.c.b16 %v1358, %v1346
      %v1719 = vpack.c.b16 %v1359, %v1347
      %v1720 = vpack.c.b16 %v1360, %v1348
      %v1721 = vpack.c.b16 %v1361, %v1349
      %v1722 = vpack.c.b16 %v1362, %v1350
      %v1723 = vpack.c.b16 %v1375, %v1363
      %v1724 = vpack.c.b16 %v1376, %v1364
      %v1725 = vpack.c.b16 %v1377, %v1365
      %v1726 = vpack.c.b16 %v1378, %v1366
      %v1727 = vpack.c.b16 %v1379, %v1367
      %v1728 = vpack.c.b16 %v1380, %v1368
      %v1729 = vpack.c.b16 %v1381, %v1369
      %v1730 = vpack.c.b16 %v1382, %v1370
      %v1731 = vpack.c.b16 %v1383, %v1371
      %v1732 = vpack.c.b16 %v1384, %v1372
      %v1733 = vpack.c.b16 %v1385, %v1373
      %v1734 = vpack.c.b16 %v1386, %v1374
      %v1735 = vpack.c.b16 %v1399, %v1387
      %v1736 = vpack.c.b16 %v1400, %v1388
      %v1737 = vpack.c.b16 %v1401, %v1389
      %v1738 = vpack.c.b16 %v1402, %v1390
      %v1739 = vpack.c.b16 %v1403, %v1391
      %v1740 = vpack.c.b16 %v1404, %v1392
      %v1741 = vpack.c.b16 %v1405, %v1393
      %v1742 = vpack.c.b16 %v1406, %v1394
      %v1743 = vpack.c.b16 %v1407, %v1395
      %v1744 = vpack.c.b16 %v1408, %v1396
      %v1745 = vpack.c.b16 %v1409, %v1397
      %v1746 = vpack.c.b16 %v1410, %v1398
      %v1747 = vpack.c.b16 %v1423, %v1411
      %v1748 = vpack.c.b16 %v1424, %v1412
      %v1749 = vpack.c.b16 %v1425, %v1413
      %v1750 = vpack.c.b16 %v1426, %v1414
      %v1751 = vpack.c.b16 %v1427, %v1415
      %v1752 = vpack.c.b16 %v1428, %v1416
      %v1753 = vpack.c.b16 %v1429, %v1417
      %v1754 = vpack.c.b16 %v1430, %v1418
      %v1755 = vpack.c.b16 %v1431, %v1419
      %v1756 = vpack.c.b16 %v1432, %v1420
      %v1757 = vpack.c.b16 %v1433, %v1421
      %v1758 = vpack.c.b16 %v1434, %v1422
      %v1759 = vpack.c.b16 %v1447, %v1435
      %v1760 = vpack.c.b16 %v1448, %v1436
      %v1761 = vpack.c.b16 %v1449, %v1437
      %v1762 = vpack.c.b16 %v1450, %v1438
      %v1763 = vpack.c.b16 %v1451, %v1439
      %v1764 = vpack.c.b16 %v1452, %v1440
      %v1765 = vpack.c.b16 %v1453, %v1441
      %v1766 = vpack.c.b16 %v1454, %v1442
      %v1767 = vpack.c.b16 %v1455, %v1443
      %v1768 = vpack.c.b16 %v1456, %v1444
      %v1769 = vpack.c.b16 %v1457, %v1445
      %v1770 = vpack.c.b16 %v1458, %v1446
      %v1771 = vpack.c.b16 %v1471, %v1459
      %v1772 = vpack.c.b16 %v1472, %v1460
      %v1773 = vpack.c.b16 %v1473, %v1461
      %v1774 = vpack.c.b16 %v1474, %v1462
      %v1775 = vpack.c.b16 %v1475, %v1463
      %v1776 = vpack.c.b16 %v1476, %v1464
      %v1777 = vpack.c.b16 %v1477, %v1465
      %v1778 = vpack.c.b16 %v1478, %v1466
      %v1779 = vpack.c.b16 %v1479, %v1467
      %v1780 = vpack.c.b16 %v1480, %v1468
      %v1781 = vpack.c.b16 %v1481, %v1469
      %v1782 = vpack.c.b16 %v1482, %v1470
      %v1783 = vpack.c.b16 %v1495, %v1483
      %v1784 = vpack.c.b16 %v1496, %v1484
      %v1785 = vpack.c.b16 %v1497, %v1485
      %v1786 = vpack.c.b16 %v1498, %v1486
      %v1787 = vpack.c.b16 %v1499, %v1487
      %v1788 = vpack.c.b16 %v1500, %v1488
      %v1789 = vpack.c.b16 %v1501, %v1489
      %v1790 = vpack.c.b16 %v1502, %v1490
      %v1791 = vpack.c.b16 %v1503, %v1491
      %v1792 = vpack.c.b16 %v1504, %v1492
      %v1793 = vpack.c.b16 %v1505, %v1493
      %v1794 = vpack.c.b16 %v1506, %v1494
      %2083 = vmatprep.subr.bf16.mxu0 %v1508
      %2084 = vmatpush1.bf16.msra.mxu0 %v1507
      %2085 = vmatprep.subr.bf16.mxu0 %v1520
      %2086 = vmatpush1.bf16.msra.mxu0 %v1519
      %2087 = vmatprep.subr.bf16.mxu0 %v1532
      %2088 = vmatpush1.bf16.msra.mxu0 %v1531
      %2089 = vmatprep.subr.bf16.mxu0 %v1544
      %2090 = vmatpush1.bf16.msra.mxu0 %v1543
      %2091 = vmatprep.subr.bf16.mxu0 %v1556
      %2092 = vmatpush1.bf16.msra.mxu0 %v1555
      %2093 = vmatprep.subr.bf16.mxu0 %v1568
      %2094 = vmatpush1.bf16.msra.mxu0 %v1567
      %2095 = vmatprep.subr.bf16.mxu0 %v1580
      %2096 = vmatpush1.bf16.msra.mxu0 %v1579
      %2097 = vmatprep.subr.bf16.mxu0 %v1592
      %2098 = vmatpush1.bf16.msra.mxu0 %v1591
      %2099 = vmatprep.subr.bf16.mxu0 %v1604
      %2100 = vmatpush1.bf16.msra.mxu0 %v1603
      %2101 = vmatprep.subr.bf16.mxu0 %v1616
      %2102 = vmatpush1.bf16.msra.mxu0 %v1615
      %2103 = vmatprep.subr.bf16.mxu0 %v1628
      %2104 = vmatpush1.bf16.msra.mxu0 %v1627
      %2105 = vmatprep.subr.bf16.mxu0 %v1640
      %2106 = vmatpush1.bf16.msra.mxu0 %v1639
      %2107 = vmatprep.subr.bf16.mxu0 %v1652
      %2108 = vmatpush1.bf16.msra.mxu0 %v1651
      %2109 = vmatprep.subr.bf16.mxu0 %v1664
      %2110 = vmatpush1.bf16.msra.mxu0 %v1663
      %2111 = vmatprep.subr.bf16.mxu0 %v1676
      %2112 = vmatpush1.bf16.msra.mxu0 %v1675
      %2113 = vmatprep.subr.bf16.mxu0 %v1688
      %2114 = vmatpush1.bf16.msra.mxu0 %v1687
      %2115 = vmatprep.mubr.bf16.mxu0 %v620
      %2116 = vmatmul.mubr.bf16.gmra.mrb[0].mxu0 %v619
      %v2117 = vpop.f32.mrb[0].mxu0
      %v2118 = vadd.f32 %v522, %v2117
      %v2119 = vpop.f32.mrb[0].mxu0
      %v2120 = vadd.f32 %v526, %v2119
      %v2121 = vpop.f32.mrb[0].mxu0
      %v2122 = vadd.f32 %v522, %v2121
      %v2123 = vpop.f32.mrb[0].mxu0
      %v2124 = vadd.f32 %v526, %v2123
      %2125 = vmatprep.mubr.bf16.mxu0 %v623
      %2126 = vmatmul.mubr.bf16.gmra.mrb[0].mxu0 %v622
      %v2127 = vpop.f32.mrb[0].mxu0
      %v2128 = vadd.f32 %v522, %v2127
      %v2129 = vpop.f32.mrb[0].mxu0
      %v2130 = vadd.f32 %v526, %v2129
      %v2131 = vpop.f32.mrb[0].mxu0
      %v2132 = vadd.f32 %v522, %v2131
      %v2133 = vpop.f32.mrb[0].mxu0
      %v2134 = vadd.f32 %v526, %v2133
      %2135 = vmatprep.mubr.bf16.mxu0 %v626
      %2136 = vmatmul.mubr.bf16.gmra.mrb[0].mxu0 %v625
      %v2137 = vpop.f32.mrb[0].mxu0
      %v2138 = vadd.f32 %v522, %v2137
      %v2139 = vpop.f32.mrb[0].mxu0
      %v2140 = vadd.f32 %v526, %v2139
      %v2141 = vpop.f32.mrb[0].mxu0
      %v2142 = vadd.f32 %v522, %v2141
      %v2143 = vpop.f32.mrb[0].mxu0
      %v2144 = vadd.f32 %v526, %v2143
      %2145 = vmatprep.mubr.bf16.mxu0 %v629
      %2146 = vmatmul.mubr.bf16.gmra.mrb[0].mxu0 %v628
      %v2147 = vpop.f32.mrb[0].mxu0
      %v2148 = vadd.f32 %v522, %v2147
      %v2149 = vpop.f32.mrb[0].mxu0
      %v2150 = vadd.f32 %v526, %v2149
      %v2151 = vpop.f32.mrb[0].mxu0
      %v2152 = vadd.f32 %v522, %v2151
      %v2153 = vpop.f32.mrb[0].mxu0
      %v2154 = vadd.f32 %v526, %v2153
      %2155 = vdwg.mxu0
      %2156 = vmatprep.subr.bf16.mxu0 %v1700
      %2157 = vmatpush1.bf16.msra.mxu0 %v1699
      %2158 = vmatprep.subr.bf16.mxu0 %v1712
      %2159 = vmatpush1.bf16.msra.mxu0 %v1711
      %2160 = vmatprep.subr.bf16.mxu0 %v1724
      %2161 = vmatpush1.bf16.msra.mxu0 %v1723
      %2162 = vmatprep.subr.bf16.mxu0 %v1736
      %2163 = vmatpush1.bf16.msra.mxu0 %v1735
      %2164 = vmatprep.subr.bf16.mxu0 %v1748
      %2165 = vmatpush1.bf16.msra.mxu0 %v1747
      %2166 = vmatprep.subr.bf16.mxu0 %v1760
      %2167 = vmatpush1.bf16.msra.mxu0 %v1759
      %2168 = vmatprep.subr.bf16.mxu0 %v1772
      %2169 = vmatpush1.bf16.msra.mxu0 %v1771
      %2170 = vmatprep.subr.bf16.mxu0 %v1784
      %2171 = vmatpush1.bf16.msra.mxu0 %v1783
      %2172 = vmatprep.subr.bf16.mxu0 0
      %2173 = vmatpush1.bf16.msra.mxu0 0
      %2174 = vmatprep.subr.bf16.mxu0 0
      %2175 = vmatpush1.bf16.msra.mxu0 0
      %2176 = vmatprep.subr.bf16.mxu0 0
      %2177 = vmatpush1.bf16.msra.mxu0 0
      %2178 = vmatprep.subr.bf16.mxu0 0
      %2179 = vmatpush1.bf16.msra.mxu0 0
      %2180 = vmatprep.subr.bf16.mxu0 0
      %2181 = vmatpush1.bf16.msra.mxu0 0
      %2182 = vmatprep.subr.bf16.mxu0 0
      %2183 = vmatpush1.bf16.msra.mxu0 0
      %2184 = vmatprep.subr.bf16.mxu0 0
      %2185 = vmatpush1.bf16.msra.mxu0 0
      %2186 = vmatprep.subr.bf16.mxu0 0
      %2187 = vmatpush1.bf16.msra.mxu0 0
      %2188 = vmatprep.mubr.bf16.mxu0 0
      %2189 = vmatmul.mubr.bf16.gmra.mrb[0].mxu0 %v621
      %v2190 = vpop.f32.mrb[0].mxu0
      %v2191 = vadd.f32 %v2118, %v2190
      %v2192 = vpop.f32.mrb[0].mxu0
      %v2193 = vadd.f32 %v2120, %v2192
      %v2194 = vpop.f32.mrb[0].mxu0
      %v2195 = vadd.f32 %v2122, %v2194
      %v2196 = vpop.f32.mrb[0].mxu0
      %v2197 = vadd.f32 %v2124, %v2196
      %2198 = vmatprep.mubr.bf16.mxu0 0
      %2199 = vmatmul.mubr.bf16.gmra.mrb[0].mxu0 %v624
      %v2200 = vpop.f32.mrb[0].mxu0
      %v2201 = vadd.f32 %v2128, %v2200
      %v2202 = vpop.f32.mrb[0].mxu0
      %v2203 = vadd.f32 %v2130, %v2202
      %v2204 = vpop.f32.mrb[0].mxu0
      %v2205 = vadd.f32 %v2132, %v2204
      %v2206 = vpop.f32.mrb[0].mxu0
      %v2207 = vadd.f32 %v2134, %v2206
      %2208 = vmatprep.mubr.bf16.mxu0 0
      %2209 = vmatmul.mubr.bf16.gmra.mrb[0].mxu0 %v627
      %v2210 = vpop.f32.mrb[0].mxu0
      %v2211 = vadd.f32 %v2138, %v2210
      %v2212 = vpop.f32.mrb[0].mxu0
      %v2213 = vadd.f32 %v2140, %v2212
      %v2214 = vpop.f32.mrb[0].mxu0
      %v2215 = vadd.f32 %v2142, %v2214
      %v2216 = vpop.f32.mrb[0].mxu0
      %v2217 = vadd.f32 %v2144, %v2216
      %2218 = vmatprep.mubr.bf16.mxu0 0
      %2219 = vmatmul.mubr.bf16.gmra.mrb[0].mxu0 %v630
      %v2220 = vpop.f32.mrb[0].mxu0
      %v2221 = vadd.f32 %v2148, %v2220
      %v2222 = vpop.f32.mrb[0].mxu0
      %v2223 = vadd.f32 %v2150, %v2222
      %v2224 = vpop.f32.mrb[0].mxu0
      %v2225 = vadd.f32 %v2152, %v2224
      %v2226 = vpop.f32.mrb[0].mxu0
      %v2227 = vadd.f32 %v2154, %v2226
      %2228 = vdwg.mxu0
      %2229 = vmatprep.subr.bf16.mxu0 %v1510
      %2230 = vmatpush1.bf16.msra.mxu0 %v1509
      %2231 = vmatprep.subr.bf16.mxu0 %v1522
      %2232 = vmatpush1.bf16.msra.mxu0 %v1521
      %2233 = vmatprep.subr.bf16.mxu0 %v1534
      %2234 = vmatpush1.bf16.msra.mxu0 %v1533
      %2235 = vmatprep.subr.bf16.mxu0 %v1546
      %2236 = vmatpush1.bf16.msra.mxu0 %v1545
      %2237 = vmatprep.subr.bf16.mxu0 %v1558
      %2238 = vmatpush1.bf16.msra.mxu0 %v1557
      %2239 = vmatprep.subr.bf16.mxu0 %v1570
      %2240 = vmatpush1.bf16.msra.mxu0 %v1569
      %2241 = vmatprep.subr.bf16.mxu0 %v1582
      %2242 = vmatpush1.bf16.msra.mxu0 %v1581
      %2243 = vmatprep.subr.bf16.mxu0 %v1594
      %2244 = vmatpush1.bf16.msra.mxu0 %v1593
      %2245 = vmatprep.subr.bf16.mxu0 %v1606
      %2246 = vmatpush1.bf16.msra.mxu0 %v1605
      %2247 = vmatprep.subr.bf16.mxu0 %v1618
      %2248 = vmatpush1.bf16.msra.mxu0 %v1617
      %2249 = vmatprep.subr.bf16.mxu0 %v1630
      %2250 = vmatpush1.bf16.msra.mxu0 %v1629
      %2251 = vmatprep.subr.bf16.mxu0 %v1642
      %2252 = vmatpush1.bf16.msra.mxu0 %v1641
      %2253 = vmatprep.subr.bf16.mxu0 %v1654
      %2254 = vmatpush1.bf16.msra.mxu0 %v1653
      %2255 = vmatprep.subr.bf16.mxu0 %v1666
      %2256 = vmatpush1.bf16.msra.mxu0 %v1665
      %2257 = vmatprep.subr.bf16.mxu0 %v1678
      %2258 = vmatpush1.bf16.msra.mxu0 %v1677
      %2259 = vmatprep.subr.bf16.mxu0 %v1690
      %2260 = vmatpush1.bf16.msra.mxu0 %v1689
      %2261 = vmatprep.mubr.bf16.mxu0 %v620
      %2262 = vmatmul.mubr.bf16.gmra.mrb[0].mxu0 %v619
      %v2263 = vpop.f32.mrb[0].mxu0
      %v2264 = vadd.f32 %v530, %v2263
      %v2265 = vpop.f32.mrb[0].mxu0
      %v2266 = vadd.f32 %v534, %v2265
      %v2267 = vpop.f32.mrb[0].mxu0
      %v2268 = vadd.f32 %v530, %v2267
      %v2269 = vpop.f32.mrb[0].mxu0
      %v2270 = vadd.f32 %v534, %v2269
      %2271 = vmatprep.mubr.bf16.mxu0 %v623
      %2272 = vmatmul.mubr.bf16.gmra.mrb[0].mxu0 %v622
      %v2273 = vpop.f32.mrb[0].mxu0
      %v2274 = vadd.f32 %v530, %v2273
      %v2275 = vpop.f32.mrb[0].mxu0
      %v2276 = vadd.f32 %v534, %v2275
      %v2277 = vpop.f32.mrb[0].mxu0
      %v2278 = vadd.f32 %v530, %v2277
      %v2279 = vpop.f32.mrb[0].mxu0
      %v2280 = vadd.f32 %v534, %v2279
      %2281 = vmatprep.mubr.bf16.mxu0 %v626
      %2282 = vmatmul.mubr.bf16.gmra.mrb[0].mxu0 %v625
      %v2283 = vpop.f32.mrb[0].mxu0
      %v2284 = vadd.f32 %v530, %v2283
      %v2285 = vpop.f32.mrb[0].mxu0
      %v2286 = vadd.f32 %v534, %v2285
      %v2287 = vpop.f32.mrb[0].mxu0
      %v2288 = vadd.f32 %v530, %v2287
      %v2289 = vpop.f32.mrb[0].mxu0
      %v2290 = vadd.f32 %v534, %v2289
      %2291 = vmatprep.mubr.bf16.mxu0 %v629
      %2292 = vmatmul.mubr.bf16.gmra.mrb[0].mxu0 %v628
      %v2293 = vpop.f32.mrb[0].mxu0
      %v2294 = vadd.f32 %v530, %v2293
      %v2295 = vpop.f32.mrb[0].mxu0
      %v2296 = vadd.f32 %v534, %v2295
      %v2297 = vpop.f32.mrb[0].mxu0
      %v2298 = vadd.f32 %v530, %v2297
      %v2299 = vpop.f32.mrb[0].mxu0
      %v2300 = vadd.f32 %v534, %v2299
      %2301 = vdwg.mxu0
      %2302 = vmatprep.subr.bf16.mxu0 %v1702
      %2303 = vmatpush1.bf16.msra.mxu0 %v1701
      %2304 = vmatprep.subr.bf16.mxu0 %v1714
      %2305 = vmatpush1.bf16.msra.mxu0 %v1713
      %2306 = vmatprep.subr.bf16.mxu0 %v1726
      %2307 = vmatpush1.bf16.msra.mxu0 %v1725
      %2308 = vmatprep.subr.bf16.mxu0 %v1738
      %2309 = vmatpush1.bf16.msra.mxu0 %v1737
      %2310 = vmatprep.subr.bf16.mxu0 %v1750
      %2311 = vmatpush1.bf16.msra.mxu0 %v1749
      %2312 = vmatprep.subr.bf16.mxu0 %v1762
      %2313 = vmatpush1.bf16.msra.mxu0 %v1761
      %2314 = vmatprep.subr.bf16.mxu0 %v1774
      %2315 = vmatpush1.bf16.msra.mxu0 %v1773
      %2316 = vmatprep.subr.bf16.mxu0 %v1786
      %2317 = vmatpush1.bf16.msra.mxu0 %v1785
      %2318 = vmatprep.subr.bf16.mxu0 0
      %2319 = vmatpush1.bf16.msra.mxu0 0
      %2320 = vmatprep.subr.bf16.mxu0 0
      %2321 = vmatpush1.bf16.msra.mxu0 0
      %2322 = vmatprep.subr.bf16.mxu0 0
      %2323 = vmatpush1.bf16.msra.mxu0 0
      %2324 = vmatprep.subr.bf16.mxu0 0
      %2325 = vmatpush1.bf16.msra.mxu0 0
      %2326 = vmatprep.subr.bf16.mxu0 0
      %2327 = vmatpush1.bf16.msra.mxu0 0
      %2328 = vmatprep.subr.bf16.mxu0 0
      %2329 = vmatpush1.bf16.msra.mxu0 0
      %2330 = vmatprep.subr.bf16.mxu0 0
      %2331 = vmatpush1.bf16.msra.mxu0 0
      %2332 = vmatprep.subr.bf16.mxu0 0
      %2333 = vmatpush1.bf16.msra.mxu0 0
      %2334 = vmatprep.mubr.bf16.mxu0 0
      %2335 = vmatmul.mubr.bf16.gmra.mrb[0].mxu0 %v621
      %v2336 = vpop.f32.mrb[0].mxu0
      %v2337 = vadd.f32 %v2264, %v2336
      %v2338 = vpop.f32.mrb[0].mxu0
      %v2339 = vadd.f32 %v2266, %v2338
      %v2340 = vpop.f32.mrb[0].mxu0
      %v2341 = vadd.f32 %v2268, %v2340
      %v2342 = vpop.f32.mrb[0].mxu0
      %v2343 = vadd.f32 %v2270, %v2342
      %2344 = vmatprep.mubr.bf16.mxu0 0
      %2345 = vmatmul.mubr.bf16.gmra.mrb[0].mxu0 %v624
      %v2346 = vpop.f32.mrb[0].mxu0
      %v2347 = vadd.f32 %v2274, %v2346
      %v2348 = vpop.f32.mrb[0].mxu0
      %v2349 = vadd.f32 %v2276, %v2348
      %v2350 = vpop.f32.mrb[0].mxu0
      %v2351 = vadd.f32 %v2278, %v2350
      %v2352 = vpop.f32.mrb[0].mxu0
      %v2353 = vadd.f32 %v2280, %v2352
      %2354 = vmatprep.mubr.bf16.mxu0 0
      %2355 = vmatmul.mubr.bf16.gmra.mrb[0].mxu0 %v627
      %v2356 = vpop.f32.mrb[0].mxu0
      %v2357 = vadd.f32 %v2284, %v2356
      %v2358 = vpop.f32.mrb[0].mxu0
      %v2359 = vadd.f32 %v2286, %v2358
      %v2360 = vpop.f32.mrb[0].mxu0
      %v2361 = vadd.f32 %v2288, %v2360
      %v2362 = vpop.f32.mrb[0].mxu0
      %v2363 = vadd.f32 %v2290, %v2362
      %2364 = vmatprep.mubr.bf16.mxu0 0
      %2365 = vmatmul.mubr.bf16.gmra.mrb[0].mxu0 %v630
      %v2366 = vpop.f32.mrb[0].mxu0
      %v2367 = vadd.f32 %v2294, %v2366
      %v2368 = vpop.f32.mrb[0].mxu0
      %v2369 = vadd.f32 %v2296, %v2368
      %v2370 = vpop.f32.mrb[0].mxu0
      %v2371 = vadd.f32 %v2298, %v2370
      %v2372 = vpop.f32.mrb[0].mxu0
      %v2373 = vadd.f32 %v2300, %v2372
      %2374 = vdwg.mxu0
      %2375 = vmatprep.subr.bf16.mxu0 %v1512
      %2376 = vmatpush1.bf16.msra.mxu0 %v1511
      %2377 = vmatprep.subr.bf16.mxu0 %v1524
      %2378 = vmatpush1.bf16.msra.mxu0 %v1523
      %2379 = vmatprep.subr.bf16.mxu0 %v1536
      %2380 = vmatpush1.bf16.msra.mxu0 %v1535
      %2381 = vmatprep.subr.bf16.mxu0 %v1548
      %2382 = vmatpush1.bf16.msra.mxu0 %v1547
      %2383 = vmatprep.subr.bf16.mxu0 %v1560
      %2384 = vmatpush1.bf16.msra.mxu0 %v1559
      %2385 = vmatprep.subr.bf16.mxu0 %v1572
      %2386 = vmatpush1.bf16.msra.mxu0 %v1571
      %2387 = vmatprep.subr.bf16.mxu0 %v1584
      %2388 = vmatpush1.bf16.msra.mxu0 %v1583
      %2389 = vmatprep.subr.bf16.mxu0 %v1596
      %2390 = vmatpush1.bf16.msra.mxu0 %v1595
      %2391 = vmatprep.subr.bf16.mxu0 %v1608
      %2392 = vmatpush1.bf16.msra.mxu0 %v1607
      %2393 = vmatprep.subr.bf16.mxu0 %v1620
      %2394 = vmatpush1.bf16.msra.mxu0 %v1619
      %2395 = vmatprep.subr.bf16.mxu0 %v1632
      %2396 = vmatpush1.bf16.msra.mxu0 %v1631
      %2397 = vmatprep.subr.bf16.mxu0 %v1644
      %2398 = vmatpush1.bf16.msra.mxu0 %v1643
      %2399 = vmatprep.subr.bf16.mxu0 %v1656
      %2400 = vmatpush1.bf16.msra.mxu0 %v1655
      %2401 = vmatprep.subr.bf16.mxu0 %v1668
      %2402 = vmatpush1.bf16.msra.mxu0 %v1667
      %2403 = vmatprep.subr.bf16.mxu0 %v1680
      %2404 = vmatpush1.bf16.msra.mxu0 %v1679
      %2405 = vmatprep.subr.bf16.mxu0 %v1692
      %2406 = vmatpush1.bf16.msra.mxu0 %v1691
      %2407 = vmatprep.mubr.bf16.mxu0 %v620
      %2408 = vmatmul.mubr.bf16.gmra.mrb[0].mxu0 %v619
      %v2409 = vpop.f32.mrb[0].mxu0
      %v2410 = vadd.f32 %v538, %v2409
      %v2411 = vpop.f32.mrb[0].mxu0
      %v2412 = vadd.f32 %v542, %v2411
      %v2413 = vpop.f32.mrb[0].mxu0
      %v2414 = vadd.f32 %v538, %v2413
      %v2415 = vpop.f32.mrb[0].mxu0
      %v2416 = vadd.f32 %v542, %v2415
      %2417 = vmatprep.mubr.bf16.mxu0 %v623
      %2418 = vmatmul.mubr.bf16.gmra.mrb[0].mxu0 %v622
      %v2419 = vpop.f32.mrb[0].mxu0
      %v2420 = vadd.f32 %v538, %v2419
      %v2421 = vpop.f32.mrb[0].mxu0
      %v2422 = vadd.f32 %v542, %v2421
      %v2423 = vpop.f32.mrb[0].mxu0
      %v2424 = vadd.f32 %v538, %v2423
      %v2425 = vpop.f32.mrb[0].mxu0
      %v2426 = vadd.f32 %v542, %v2425
      %2427 = vmatprep.mubr.bf16.mxu0 %v626
      %2428 = vmatmul.mubr.bf16.gmra.mrb[0].mxu0 %v625
      %v2429 = vpop.f32.mrb[0].mxu0
      %v2430 = vadd.f32 %v538, %v2429
      %v2431 = vpop.f32.mrb[0].mxu0
      %v2432 = vadd.f32 %v542, %v2431
      %v2433 = vpop.f32.mrb[0].mxu0
      %v2434 = vadd.f32 %v538, %v2433
      %v2435 = vpop.f32.mrb[0].mxu0
      %v2436 = vadd.f32 %v542, %v2435
      %2437 = vmatprep.mubr.bf16.mxu0 %v629
      %2438 = vmatmul.mubr.bf16.gmra.mrb[0].mxu0 %v628
      %v2439 = vpop.f32.mrb[0].mxu0
      %v2440 = vadd.f32 %v538, %v2439
      %v2441 = vpop.f32.mrb[0].mxu0
      %v2442 = vadd.f32 %v542, %v2441
      %v2443 = vpop.f32.mrb[0].mxu0
      %v2444 = vadd.f32 %v538, %v2443
      %v2445 = vpop.f32.mrb[0].mxu0
      %v2446 = vadd.f32 %v542, %v2445
      %2447 = vdwg.mxu0
      %2448 = vmatprep.subr.bf16.mxu0 %v1704
      %2449 = vmatpush1.bf16.msra.mxu0 %v1703
      %2450 = vmatprep.subr.bf16.mxu0 %v1716
      %2451 = vmatpush1.bf16.msra.mxu0 %v1715
      %2452 = vmatprep.subr.bf16.mxu0 %v1728
      %2453 = vmatpush1.bf16.msra.mxu0 %v1727
      %2454 = vmatprep.subr.bf16.mxu0 %v1740
      %2455 = vmatpush1.bf16.msra.mxu0 %v1739
      %2456 = vmatprep.subr.bf16.mxu0 %v1752
      %2457 = vmatpush1.bf16.msra.mxu0 %v1751
      %2458 = vmatprep.subr.bf16.mxu0 %v1764
      %2459 = vmatpush1.bf16.msra.mxu0 %v1763
      %2460 = vmatprep.subr.bf16.mxu0 %v1776
      %2461 = vmatpush1.bf16.msra.mxu0 %v1775
      %2462 = vmatprep.subr.bf16.mxu0 %v1788
      %2463 = vmatpush1.bf16.msra.mxu0 %v1787
      %2464 = vmatprep.subr.bf16.mxu0 0
      %2465 = vmatpush1.bf16.msra.mxu0 0
      %2466 = vmatprep.subr.bf16.mxu0 0
      %2467 = vmatpush1.bf16.msra.mxu0 0
      %2468 = vmatprep.subr.bf16.mxu0 0
      %2469 = vmatpush1.bf16.msra.mxu0 0
      %2470 = vmatprep.subr.bf16.mxu0 0
      %2471 = vmatpush1.bf16.msra.mxu0 0
      %2472 = vmatprep.subr.bf16.mxu0 0
      %2473 = vmatpush1.bf16.msra.mxu0 0
      %2474 = vmatprep.subr.bf16.mxu0 0
      %2475 = vmatpush1.bf16.msra.mxu0 0
      %2476 = vmatprep.subr.bf16.mxu0 0
      %2477 = vmatpush1.bf16.msra.mxu0 0
      %2478 = vmatprep.subr.bf16.mxu0 0
      %2479 = vmatpush1.bf16.msra.mxu0 0
      %2480 = vmatprep.mubr.bf16.mxu0 0
      %2481 = vmatmul.mubr.bf16.gmra.mrb[0].mxu0 %v621
      %v2482 = vpop.f32.mrb[0].mxu0
      %v2483 = vadd.f32 %v2410, %v2482
      %v2484 = vpop.f32.mrb[0].mxu0
      %v2485 = vadd.f32 %v2412, %v2484
      %v2486 = vpop.f32.mrb[0].mxu0
      %v2487 = vadd.f32 %v2414, %v2486
      %v2488 = vpop.f32.mrb[0].mxu0
      %v2489 = vadd.f32 %v2416, %v2488
      %2490 = vmatprep.mubr.bf16.mxu0 0
      %2491 = vmatmul.mubr.bf16.gmra.mrb[0].mxu0 %v624
      %v2492 = vpop.f32.mrb[0].mxu0
      %v2493 = vadd.f32 %v2420, %v2492
      %v2494 = vpop.f32.mrb[0].mxu0
      %v2495 = vadd.f32 %v2422, %v2494
      %v2496 = vpop.f32.mrb[0].mxu0
      %v2497 = vadd.f32 %v2424, %v2496
      %v2498 = vpop.f32.mrb[0].mxu0
      %v2499 = vadd.f32 %v2426, %v2498
      %2500 = vmatprep.mubr.bf16.mxu0 0
      %2501 = vmatmul.mubr.bf16.gmra.mrb[0].mxu0 %v627
      %v2502 = vpop.f32.mrb[0].mxu0
      %v2503 = vadd.f32 %v2430, %v2502
      %v2504 = vpop.f32.mrb[0].mxu0
      %v2505 = vadd.f32 %v2432, %v2504
      %v2506 = vpop.f32.mrb[0].mxu0
      %v2507 = vadd.f32 %v2434, %v2506
      %v2508 = vpop.f32.mrb[0].mxu0
      %v2509 = vadd.f32 %v2436, %v2508
      %2510 = vmatprep.mubr.bf16.mxu0 0
      %2511 = vmatmul.mubr.bf16.gmra.mrb[0].mxu0 %v630
      %v2512 = vpop.f32.mrb[0].mxu0
      %v2513 = vadd.f32 %v2440, %v2512
      %v2514 = vpop.f32.mrb[0].mxu0
      %v2515 = vadd.f32 %v2442, %v2514
      %v2516 = vpop.f32.mrb[0].mxu0
      %v2517 = vadd.f32 %v2444, %v2516
      %v2518 = vpop.f32.mrb[0].mxu0
      %v2519 = vadd.f32 %v2446, %v2518
      %2520 = vdwg.mxu0
      %2521 = vmatprep.subr.bf16.mxu0 %v1514
      %2522 = vmatpush1.bf16.msra.mxu0 %v1513
      %2523 = vmatprep.subr.bf16.mxu0 %v1526
      %2524 = vmatpush1.bf16.msra.mxu0 %v1525
      %2525 = vmatprep.subr.bf16.mxu0 %v1538
      %2526 = vmatpush1.bf16.msra.mxu0 %v1537
      %2527 = vmatprep.subr.bf16.mxu0 %v1550
      %2528 = vmatpush1.bf16.msra.mxu0 %v1549
      %2529 = vmatprep.subr.bf16.mxu0 %v1562
      %2530 = vmatpush1.bf16.msra.mxu0 %v1561
      %2531 = vmatprep.subr.bf16.mxu0 %v1574
      %2532 = vmatpush1.bf16.msra.mxu0 %v1573
      %2533 = vmatprep.subr.bf16.mxu0 %v1586
      %2534 = vmatpush1.bf16.msra.mxu0 %v1585
      %2535 = vmatprep.subr.bf16.mxu0 %v1598
      %2536 = vmatpush1.bf16.msra.mxu0 %v1597
      %2537 = vmatprep.subr.bf16.mxu0 %v1610
      %2538 = vmatpush1.bf16.msra.mxu0 %v1609
      %2539 = vmatprep.subr.bf16.mxu0 %v1622
      %2540 = vmatpush1.bf16.msra.mxu0 %v1621
      %2541 = vmatprep.subr.bf16.mxu0 %v1634
      %2542 = vmatpush1.bf16.msra.mxu0 %v1633
      %2543 = vmatprep.subr.bf16.mxu0 %v1646
      %2544 = vmatpush1.bf16.msra.mxu0 %v1645
      %2545 = vmatprep.subr.bf16.mxu0 %v1658
      %2546 = vmatpush1.bf16.msra.mxu0 %v1657
      %2547 = vmatprep.subr.bf16.mxu0 %v1670
      %2548 = vmatpush1.bf16.msra.mxu0 %v1669
      %2549 = vmatprep.subr.bf16.mxu0 %v1682
      %2550 = vmatpush1.bf16.msra.mxu0 %v1681
      %2551 = vmatprep.subr.bf16.mxu0 %v1694
      %2552 = vmatpush1.bf16.msra.mxu0 %v1693
      %2553 = vmatprep.mubr.bf16.mxu0 %v620
      %2554 = vmatmul.mubr.bf16.gmra.mrb[0].mxu0 %v619
      %v2555 = vpop.f32.mrb[0].mxu0
      %v2556 = vadd.f32 %v546, %v2555
      %v2557 = vpop.f32.mrb[0].mxu0
      %v2558 = vadd.f32 %v550, %v2557
      %v2559 = vpop.f32.mrb[0].mxu0
      %v2560 = vadd.f32 %v546, %v2559
      %v2561 = vpop.f32.mrb[0].mxu0
      %v2562 = vadd.f32 %v550, %v2561
      %2563 = vmatprep.mubr.bf16.mxu0 %v623
      %2564 = vmatmul.mubr.bf16.gmra.mrb[0].mxu0 %v622
      %v2565 = vpop.f32.mrb[0].mxu0
      %v2566 = vadd.f32 %v546, %v2565
      %v2567 = vpop.f32.mrb[0].mxu0
      %v2568 = vadd.f32 %v550, %v2567
      %v2569 = vpop.f32.mrb[0].mxu0
      %v2570 = vadd.f32 %v546, %v2569
      %v2571 = vpop.f32.mrb[0].mxu0
      %v2572 = vadd.f32 %v550, %v2571
      %2573 = vmatprep.mubr.bf16.mxu0 %v626
      %2574 = vmatmul.mubr.bf16.gmra.mrb[0].mxu0 %v625
      %v2575 = vpop.f32.mrb[0].mxu0
      %v2576 = vadd.f32 %v546, %v2575
      %v2577 = vpop.f32.mrb[0].mxu0
      %v2578 = vadd.f32 %v550, %v2577
      %v2579 = vpop.f32.mrb[0].mxu0
      %v2580 = vadd.f32 %v546, %v2579
      %v2581 = vpop.f32.mrb[0].mxu0
      %v2582 = vadd.f32 %v550, %v2581
      %2583 = vmatprep.mubr.bf16.mxu0 %v629
      %2584 = vmatmul.mubr.bf16.gmra.mrb[0].mxu0 %v628
      %v2585 = vpop.f32.mrb[0].mxu0
      %v2586 = vadd.f32 %v546, %v2585
      %v2587 = vpop.f32.mrb[0].mxu0
      %v2588 = vadd.f32 %v550, %v2587
      %v2589 = vpop.f32.mrb[0].mxu0
      %v2590 = vadd.f32 %v546, %v2589
      %v2591 = vpop.f32.mrb[0].mxu0
      %v2592 = vadd.f32 %v550, %v2591
      %2593 = vdwg.mxu0
      %2594 = vmatprep.subr.bf16.mxu0 %v1706
      %2595 = vmatpush1.bf16.msra.mxu0 %v1705
      %2596 = vmatprep.subr.bf16.mxu0 %v1718
      %2597 = vmatpush1.bf16.msra.mxu0 %v1717
      %2598 = vmatprep.subr.bf16.mxu0 %v1730
      %2599 = vmatpush1.bf16.msra.mxu0 %v1729
      %2600 = vmatprep.subr.bf16.mxu0 %v1742
      %2601 = vmatpush1.bf16.msra.mxu0 %v1741
      %2602 = vmatprep.subr.bf16.mxu0 %v1754
      %2603 = vmatpush1.bf16.msra.mxu0 %v1753
      %2604 = vmatprep.subr.bf16.mxu0 %v1766
      %2605 = vmatpush1.bf16.msra.mxu0 %v1765
      %2606 = vmatprep.subr.bf16.mxu0 %v1778
      %2607 = vmatpush1.bf16.msra.mxu0 %v1777
      %2608 = vmatprep.subr.bf16.mxu0 %v1790
      %2609 = vmatpush1.bf16.msra.mxu0 %v1789
      %2610 = vmatprep.subr.bf16.mxu0 0
      %2611 = vmatpush1.bf16.msra.mxu0 0
      %2612 = vmatprep.subr.bf16.mxu0 0
      %2613 = vmatpush1.bf16.msra.mxu0 0
      %2614 = vmatprep.subr.bf16.mxu0 0
      %2615 = vmatpush1.bf16.msra.mxu0 0
      %2616 = vmatprep.subr.bf16.mxu0 0
      %2617 = vmatpush1.bf16.msra.mxu0 0
      %2618 = vmatprep.subr.bf16.mxu0 0
      %2619 = vmatpush1.bf16.msra.mxu0 0
      %2620 = vmatprep.subr.bf16.mxu0 0
      %2621 = vmatpush1.bf16.msra.mxu0 0
      %2622 = vmatprep.subr.bf16.mxu0 0
      %2623 = vmatpush1.bf16.msra.mxu0 0
      %2624 = vmatprep.subr.bf16.mxu0 0
      %2625 = vmatpush1.bf16.msra.mxu0 0
      %2626 = vmatprep.mubr.bf16.mxu0 0
      %2627 = vmatmul.mubr.bf16.gmra.mrb[0].mxu0 %v621
      %v2628 = vpop.f32.mrb[0].mxu0
      %v2629 = vadd.f32 %v2556, %v2628
      %v2630 = vpop.f32.mrb[0].mxu0
      %v2631 = vadd.f32 %v2558, %v2630
      %v2632 = vpop.f32.mrb[0].mxu0
      %v2633 = vadd.f32 %v2560, %v2632
      %v2634 = vpop.f32.mrb[0].mxu0
      %v2635 = vadd.f32 %v2562, %v2634
      %2636 = vmatprep.mubr.bf16.mxu0 0
      %2637 = vmatmul.mubr.bf16.gmra.mrb[0].mxu0 %v624
      %v2638 = vpop.f32.mrb[0].mxu0
      %v2639 = vadd.f32 %v2566, %v2638
      %v2640 = vpop.f32.mrb[0].mxu0
      %v2641 = vadd.f32 %v2568, %v2640
      %v2642 = vpop.f32.mrb[0].mxu0
      %v2643 = vadd.f32 %v2570, %v2642
      %v2644 = vpop.f32.mrb[0].mxu0
      %v2645 = vadd.f32 %v2572, %v2644
      %2646 = vmatprep.mubr.bf16.mxu0 0
      %2647 = vmatmul.mubr.bf16.gmra.mrb[0].mxu0 %v627
      %v2648 = vpop.f32.mrb[0].mxu0
      %v2649 = vadd.f32 %v2576, %v2648
      %v2650 = vpop.f32.mrb[0].mxu0
      %v2651 = vadd.f32 %v2578, %v2650
      %v2652 = vpop.f32.mrb[0].mxu0
      %v2653 = vadd.f32 %v2580, %v2652
      %v2654 = vpop.f32.mrb[0].mxu0
      %v2655 = vadd.f32 %v2582, %v2654
      %2656 = vmatprep.mubr.bf16.mxu0 0
      %2657 = vmatmul.mubr.bf16.gmra.mrb[0].mxu0 %v630
      %v2658 = vpop.f32.mrb[0].mxu0
      %v2659 = vadd.f32 %v2586, %v2658
      %v2660 = vpop.f32.mrb[0].mxu0
      %v2661 = vadd.f32 %v2588, %v2660
      %v2662 = vpop.f32.mrb[0].mxu0
      %v2663 = vadd.f32 %v2590, %v2662
      %v2664 = vpop.f32.mrb[0].mxu0
      %v2665 = vadd.f32 %v2592, %v2664
      %2666 = vdwg.mxu0
      %2667 = vmatprep.subr.bf16.mxu0 %v1516
      %2668 = vmatpush1.bf16.msra.mxu0 %v1515
      %2669 = vmatprep.subr.bf16.mxu0 %v1528
      %2670 = vmatpush1.bf16.msra.mxu0 %v1527
      %2671 = vmatprep.subr.bf16.mxu0 %v1540
      %2672 = vmatpush1.bf16.msra.mxu0 %v1539
      %2673 = vmatprep.subr.bf16.mxu0 %v1552
      %2674 = vmatpush1.bf16.msra.mxu0 %v1551
      %2675 = vmatprep.subr.bf16.mxu0 %v1564
      %2676 = vmatpush1.bf16.msra.mxu0 %v1563
      %2677 = vmatprep.subr.bf16.mxu0 %v1576
      %2678 = vmatpush1.bf16.msra.mxu0 %v1575
      %2679 = vmatprep.subr.bf16.mxu0 %v1588
      %2680 = vmatpush1.bf16.msra.mxu0 %v1587
      %2681 = vmatprep.subr.bf16.mxu0 %v1600
      %2682 = vmatpush1.bf16.msra.mxu0 %v1599
      %2683 = vmatprep.subr.bf16.mxu0 %v1612
      %2684 = vmatpush1.bf16.msra.mxu0 %v1611
      %2685 = vmatprep.subr.bf16.mxu0 %v1624
      %2686 = vmatpush1.bf16.msra.mxu0 %v1623
      %2687 = vmatprep.subr.bf16.mxu0 %v1636
      %2688 = vmatpush1.bf16.msra.mxu0 %v1635
      %2689 = vmatprep.subr.bf16.mxu0 %v1648
      %2690 = vmatpush1.bf16.msra.mxu0 %v1647
      %2691 = vmatprep.subr.bf16.mxu0 %v1660
      %2692 = vmatpush1.bf16.msra.mxu0 %v1659
      %2693 = vmatprep.subr.bf16.mxu0 %v1672
      %2694 = vmatpush1.bf16.msra.mxu0 %v1671
      %2695 = vmatprep.subr.bf16.mxu0 %v1684
      %2696 = vmatpush1.bf16.msra.mxu0 %v1683
      %2697 = vmatprep.subr.bf16.mxu0 %v1696
      %2698 = vmatpush1.bf16.msra.mxu0 %v1695
      %2699 = vmatprep.mubr.bf16.mxu0 %v620
      %2700 = vmatmul.mubr.bf16.gmra.mrb[0].mxu0 %v619
      %v2701 = vpop.f32.mrb[0].mxu0
      %v2702 = vadd.f32 %v554, %v2701
      %v2703 = vpop.f32.mrb[0].mxu0
      %v2704 = vadd.f32 %v558, %v2703
      %v2705 = vpop.f32.mrb[0].mxu0
      %v2706 = vadd.f32 %v554, %v2705
      %v2707 = vpop.f32.mrb[0].mxu0
      %v2708 = vadd.f32 %v558, %v2707
      %2709 = vmatprep.mubr.bf16.mxu0 %v623
      %2710 = vmatmul.mubr.bf16.gmra.mrb[0].mxu0 %v622
      %v2711 = vpop.f32.mrb[0].mxu0
      %v2712 = vadd.f32 %v554, %v2711
      %v2713 = vpop.f32.mrb[0].mxu0
      %v2714 = vadd.f32 %v558, %v2713
      %v2715 = vpop.f32.mrb[0].mxu0
      %v2716 = vadd.f32 %v554, %v2715
      %v2717 = vpop.f32.mrb[0].mxu0
      %v2718 = vadd.f32 %v558, %v2717
      %2719 = vmatprep.mubr.bf16.mxu0 %v626
      %2720 = vmatmul.mubr.bf16.gmra.mrb[0].mxu0 %v625
      %v2721 = vpop.f32.mrb[0].mxu0
      %v2722 = vadd.f32 %v554, %v2721
      %v2723 = vpop.f32.mrb[0].mxu0
      %v2724 = vadd.f32 %v558, %v2723
      %v2725 = vpop.f32.mrb[0].mxu0
      %v2726 = vadd.f32 %v554, %v2725
      %v2727 = vpop.f32.mrb[0].mxu0
      %v2728 = vadd.f32 %v558, %v2727
      %2729 = vmatprep.mubr.bf16.mxu0 %v629
      %2730 = vmatmul.mubr.bf16.gmra.mrb[0].mxu0 %v628
      %v2731 = vpop.f32.mrb[0].mxu0
      %v2732 = vadd.f32 %v554, %v2731
      %v2733 = vpop.f32.mrb[0].mxu0
      %v2734 = vadd.f32 %v558, %v2733
      %v2735 = vpop.f32.mrb[0].mxu0
      %v2736 = vadd.f32 %v554, %v2735
      %v2737 = vpop.f32.mrb[0].mxu0
      %v2738 = vadd.f32 %v558, %v2737
      %2739 = vdwg.mxu0
      %2740 = vmatprep.subr.bf16.mxu0 %v1708
      %2741 = vmatpush1.bf16.msra.mxu0 %v1707
      %2742 = vmatprep.subr.bf16.mxu0 %v1720
      %2743 = vmatpush1.bf16.msra.mxu0 %v1719
      %2744 = vmatprep.subr.bf16.mxu0 %v1732
      %2745 = vmatpush1.bf16.msra.mxu0 %v1731
      %2746 = vmatprep.subr.bf16.mxu0 %v1744
      %2747 = vmatpush1.bf16.msra.mxu0 %v1743
      %2748 = vmatprep.subr.bf16.mxu0 %v1756
      %2749 = vmatpush1.bf16.msra.mxu0 %v1755
      %2750 = vmatprep.subr.bf16.mxu0 %v1768
      %2751 = vmatpush1.bf16.msra.mxu0 %v1767
      %2752 = vmatprep.subr.bf16.mxu0 %v1780
      %2753 = vmatpush1.bf16.msra.mxu0 %v1779
      %2754 = vmatprep.subr.bf16.mxu0 %v1792
      %2755 = vmatpush1.bf16.msra.mxu0 %v1791
      %2756 = vmatprep.subr.bf16.mxu0 0
      %2757 = vmatpush1.bf16.msra.mxu0 0
      %2758 = vmatprep.subr.bf16.mxu0 0
      %2759 = vmatpush1.bf16.msra.mxu0 0
      %2760 = vmatprep.subr.bf16.mxu0 0
      %2761 = vmatpush1.bf16.msra.mxu0 0
      %2762 = vmatprep.subr.bf16.mxu0 0
      %2763 = vmatpush1.bf16.msra.mxu0 0
      %2764 = vmatprep.subr.bf16.mxu0 0
      %2765 = vmatpush1.bf16.msra.mxu0 0
      %2766 = vmatprep.subr.bf16.mxu0 0
      %2767 = vmatpush1.bf16.msra.mxu0 0
      %2768 = vmatprep.subr.bf16.mxu0 0
      %2769 = vmatpush1.bf16.msra.mxu0 0
      %2770 = vmatprep.subr.bf16.mxu0 0
      %2771 = vmatpush1.bf16.msra.mxu0 0
      %2772 = vmatprep.mubr.bf16.mxu0 0
      %2773 = vmatmul.mubr.bf16.gmra.mrb[0].mxu0 %v621
      %v2774 = vpop.f32.mrb[0].mxu0
      %v2775 = vadd.f32 %v2702, %v2774
      %v2776 = vpop.f32.mrb[0].mxu0
      %v2777 = vadd.f32 %v2704, %v2776
      %v2778 = vpop.f32.mrb[0].mxu0
      %v2779 = vadd.f32 %v2706, %v2778
      %v2780 = vpop.f32.mrb[0].mxu0
      %v2781 = vadd.f32 %v2708, %v2780
      %2782 = vmatprep.mubr.bf16.mxu0 0
      %2783 = vmatmul.mubr.bf16.gmra.mrb[0].mxu0 %v624
      %v2784 = vpop.f32.mrb[0].mxu0
      %v2785 = vadd.f32 %v2712, %v2784
      %v2786 = vpop.f32.mrb[0].mxu0
      %v2787 = vadd.f32 %v2714, %v2786
      %v2788 = vpop.f32.mrb[0].mxu0
      %v2789 = vadd.f32 %v2716, %v2788
      %v2790 = vpop.f32.mrb[0].mxu0
      %v2791 = vadd.f32 %v2718, %v2790
      %2792 = vmatprep.mubr.bf16.mxu0 0
      %2793 = vmatmul.mubr.bf16.gmra.mrb[0].mxu0 %v627
      %v2794 = vpop.f32.mrb[0].mxu0
      %v2795 = vadd.f32 %v2722, %v2794
      %v2796 = vpop.f32.mrb[0].mxu0
      %v2797 = vadd.f32 %v2724, %v2796
      %v2798 = vpop.f32.mrb[0].mxu0
      %v2799 = vadd.f32 %v2726, %v2798
      %v2800 = vpop.f32.mrb[0].mxu0
      %v2801 = vadd.f32 %v2728, %v2800
      %2802 = vmatprep.mubr.bf16.mxu0 0
      %2803 = vmatmul.mubr.bf16.gmra.mrb[0].mxu0 %v630
      %v2804 = vpop.f32.mrb[0].mxu0
      %v2805 = vadd.f32 %v2732, %v2804
      %v2806 = vpop.f32.mrb[0].mxu0
      %v2807 = vadd.f32 %v2734, %v2806
      %v2808 = vpop.f32.mrb[0].mxu0
      %v2809 = vadd.f32 %v2736, %v2808
      %v2810 = vpop.f32.mrb[0].mxu0
      %v2811 = vadd.f32 %v2738, %v2810
      %2812 = vdwg.mxu0
      %2813 = vmatprep.subr.bf16.mxu0 %v1518
      %2814 = vmatpush1.bf16.msra.mxu0 %v1517
      %2815 = vmatprep.subr.bf16.mxu0 %v1530
      %2816 = vmatpush1.bf16.msra.mxu0 %v1529
      %2817 = vmatprep.subr.bf16.mxu0 %v1542
      %2818 = vmatpush1.bf16.msra.mxu0 %v1541
      %2819 = vmatprep.subr.bf16.mxu0 %v1554
      %2820 = vmatpush1.bf16.msra.mxu0 %v1553
      %2821 = vmatprep.subr.bf16.mxu0 %v1566
      %2822 = vmatpush1.bf16.msra.mxu0 %v1565
      %2823 = vmatprep.subr.bf16.mxu0 %v1578
      %2824 = vmatpush1.bf16.msra.mxu0 %v1577
      %2825 = vmatprep.subr.bf16.mxu0 %v1590
      %2826 = vmatpush1.bf16.msra.mxu0 %v1589
      %2827 = vmatprep.subr.bf16.mxu0 %v1602
      %2828 = vmatpush1.bf16.msra.mxu0 %v1601
      %2829 = vmatprep.subr.bf16.mxu0 %v1614
      %2830 = vmatpush1.bf16.msra.mxu0 %v1613
      %2831 = vmatprep.subr.bf16.mxu0 %v1626
      %2832 = vmatpush1.bf16.msra.mxu0 %v1625
      %2833 = vmatprep.subr.bf16.mxu0 %v1638
      %2834 = vmatpush1.bf16.msra.mxu0 %v1637
      %2835 = vmatprep.subr.bf16.mxu0 %v1650
      %2836 = vmatpush1.bf16.msra.mxu0 %v1649
      %2837 = vmatprep.subr.bf16.mxu0 %v1662
      %2838 = vmatpush1.bf16.msra.mxu0 %v1661
      %2839 = vmatprep.subr.bf16.mxu0 %v1674
      %2840 = vmatpush1.bf16.msra.mxu0 %v1673
      %2841 = vmatprep.subr.bf16.mxu0 %v1686
      %2842 = vmatpush1.bf16.msra.mxu0 %v1685
      %2843 = vmatprep.subr.bf16.mxu0 %v1698
      %2844 = vmatpush1.bf16.msra.mxu0 %v1697
      %2845 = vmatprep.mubr.bf16.mxu0 %v620
      %2846 = vmatmul.mubr.bf16.gmra.mrb[0].mxu0 %v619
      %v2847 = vpop.f32.mrb[0].mxu0
      %v2848 = vadd.f32 %v562, %v2847
      %v2849 = vpop.f32.mrb[0].mxu0
      %v2850 = vadd.f32 %v566, %v2849
      %v2851 = vpop.f32.mrb[0].mxu0
      %v2852 = vadd.f32 %v562, %v2851
      %v2853 = vpop.f32.mrb[0].mxu0
      %v2854 = vadd.f32 %v566, %v2853
      %2855 = vmatprep.mubr.bf16.mxu0 %v623
      %2856 = vmatmul.mubr.bf16.gmra.mrb[0].mxu0 %v622
      %v2857 = vpop.f32.mrb[0].mxu0
      %v2858 = vadd.f32 %v562, %v2857
      %v2859 = vpop.f32.mrb[0].mxu0
      %v2860 = vadd.f32 %v566, %v2859
      %v2861 = vpop.f32.mrb[0].mxu0
      %v2862 = vadd.f32 %v562, %v2861
      %v2863 = vpop.f32.mrb[0].mxu0
      %v2864 = vadd.f32 %v566, %v2863
      %2865 = vmatprep.mubr.bf16.mxu0 %v626
      %2866 = vmatmul.mubr.bf16.gmra.mrb[0].mxu0 %v625
      %v2867 = vpop.f32.mrb[0].mxu0
      %v2868 = vadd.f32 %v562, %v2867
      %v2869 = vpop.f32.mrb[0].mxu0
      %v2870 = vadd.f32 %v566, %v2869
      %v2871 = vpop.f32.mrb[0].mxu0
      %v2872 = vadd.f32 %v562, %v2871
      %v2873 = vpop.f32.mrb[0].mxu0
      %v2874 = vadd.f32 %v566, %v2873
      %2875 = vmatprep.mubr.bf16.mxu0 %v629
      %2876 = vmatmul.mubr.bf16.gmra.mrb[0].mxu0 %v628
      %v2877 = vpop.f32.mrb[0].mxu0
      %v2878 = vadd.f32 %v562, %v2877
      %v2879 = vpop.f32.mrb[0].mxu0
      %v2880 = vadd.f32 %v566, %v2879
      %v2881 = vpop.f32.mrb[0].mxu0
      %v2882 = vadd.f32 %v562, %v2881
      %v2883 = vpop.f32.mrb[0].mxu0
      %v2884 = vadd.f32 %v566, %v2883
      %2885 = vdwg.mxu0
      %2886 = vmatprep.subr.bf16.mxu0 %v1710
      %2887 = vmatpush1.bf16.msra.mxu0 %v1709
      %2888 = vmatprep.subr.bf16.mxu0 %v1722
      %2889 = vmatpush1.bf16.msra.mxu0 %v1721
      %2890 = vmatprep.subr.bf16.mxu0 %v1734
      %2891 = vmatpush1.bf16.msra.mxu0 %v1733
      %2892 = vmatprep.subr.bf16.mxu0 %v1746
      %2893 = vmatpush1.bf16.msra.mxu0 %v1745
      %2894 = vmatprep.subr.bf16.mxu0 %v1758
      %2895 = vmatpush1.bf16.msra.mxu0 %v1757
      %2896 = vmatprep.subr.bf16.mxu0 %v1770
      %2897 = vmatpush1.bf16.msra.mxu0 %v1769
      %2898 = vmatprep.subr.bf16.mxu0 %v1782
      %2899 = vmatpush1.bf16.msra.mxu0 %v1781
      %2900 = vmatprep.subr.bf16.mxu0 %v1794
      %2901 = vmatpush1.bf16.msra.mxu0 %v1793
      %2902 = vmatprep.subr.bf16.mxu0 0
      %2903 = vmatpush1.bf16.msra.mxu0 0
      %2904 = vmatprep.subr.bf16.mxu0 0
      %2905 = vmatpush1.bf16.msra.mxu0 0
      %2906 = vmatprep.subr.bf16.mxu0 0
      %2907 = vmatpush1.bf16.msra.mxu0 0
      %2908 = vmatprep.subr.bf16.mxu0 0
      %2909 = vmatpush1.bf16.msra.mxu0 0
      %2910 = vmatprep.subr.bf16.mxu0 0
      %2911 = vmatpush1.bf16.msra.mxu0 0
      %2912 = vmatprep.subr.bf16.mxu0 0
      %2913 = vmatpush1.bf16.msra.mxu0 0
      %2914 = vmatprep.subr.bf16.mxu0 0
      %2915 = vmatpush1.bf16.msra.mxu0 0
      %2916 = vmatprep.subr.bf16.mxu0 0
      %2917 = vmatpush1.bf16.msra.mxu0 0
      %2918 = vmatprep.mubr.bf16.mxu0 0
      %2919 = vmatmul.mubr.bf16.gmra.mrb[0].mxu0 %v621
      %v2920 = vpop.f32.mrb[0].mxu0
      %v2921 = vadd.f32 %v2848, %v2920
      %v2922 = vpop.f32.mrb[0].mxu0
      %v2923 = vadd.f32 %v2850, %v2922
      %v2924 = vpop.f32.mrb[0].mxu0
      %v2925 = vadd.f32 %v2852, %v2924
      %v2926 = vpop.f32.mrb[0].mxu0
      %v2927 = vadd.f32 %v2854, %v2926
      %2928 = vmatprep.mubr.bf16.mxu0 0
      %2929 = vmatmul.mubr.bf16.gmra.mrb[0].mxu0 %v624
      %v2930 = vpop.f32.mrb[0].mxu0
      %v2931 = vadd.f32 %v2858, %v2930
      %v2932 = vpop.f32.mrb[0].mxu0
      %v2933 = vadd.f32 %v2860, %v2932
      %v2934 = vpop.f32.mrb[0].mxu0
      %v2935 = vadd.f32 %v2862, %v2934
      %v2936 = vpop.f32.mrb[0].mxu0
      %v2937 = vadd.f32 %v2864, %v2936
      %2938 = vmatprep.mubr.bf16.mxu0 0
      %2939 = vmatmul.mubr.bf16.gmra.mrb[0].mxu0 %v627
      %v2940 = vpop.f32.mrb[0].mxu0
      %v2941 = vadd.f32 %v2868, %v2940
      %v2942 = vpop.f32.mrb[0].mxu0
      %v2943 = vadd.f32 %v2870, %v2942
      %v2944 = vpop.f32.mrb[0].mxu0
      %v2945 = vadd.f32 %v2872, %v2944
      %v2946 = vpop.f32.mrb[0].mxu0
      %v2947 = vadd.f32 %v2874, %v2946
      %2948 = vmatprep.mubr.bf16.mxu0 0
      %2949 = vmatmul.mubr.bf16.gmra.mrb[0].mxu0 %v630
      %v2950 = vpop.f32.mrb[0].mxu0
      %v2951 = vadd.f32 %v2878, %v2950
      %v2952 = vpop.f32.mrb[0].mxu0
      %v2953 = vadd.f32 %v2880, %v2952
      %v2954 = vpop.f32.mrb[0].mxu0
      %v2955 = vadd.f32 %v2882, %v2954
      %v2956 = vpop.f32.mrb[0].mxu0
      %v2957 = vadd.f32 %v2884, %v2956
      %2958 = vdwg.mxu0
      %v2959 = vxor.u32 %v2191, 2147483648
      %v2960 = vxor.u32 %v2193, 2147483648
      %v2961 = vxor.u32 %v2337, 2147483648
      %v2962 = vxor.u32 %v2339, 2147483648
      %v2963 = vxor.u32 %v2483, 2147483648
      %v2964 = vxor.u32 %v2485, 2147483648
      %v2965 = vxor.u32 %v2629, 2147483648
      %v2966 = vxor.u32 %v2631, 2147483648
      %v2967 = vxor.u32 %v2775, 2147483648
      %v2968 = vxor.u32 %v2777, 2147483648
      %v2969 = vxor.u32 %v2921, 2147483648
      %v2970 = vxor.u32 %v2923, 2147483648
      %v2971 = vxor.u32 %v2195, 2147483648
      %v2972 = vxor.u32 %v2197, 2147483648
      %v2973 = vxor.u32 %v2341, 2147483648
      %v2974 = vxor.u32 %v2343, 2147483648
      %v2975 = vxor.u32 %v2487, 2147483648
      %v2976 = vxor.u32 %v2489, 2147483648
      %v2977 = vxor.u32 %v2633, 2147483648
      %v2978 = vxor.u32 %v2635, 2147483648
      %v2979 = vxor.u32 %v2779, 2147483648
      %v2980 = vxor.u32 %v2781, 2147483648
      %v2981 = vxor.u32 %v2925, 2147483648
      %v2982 = vxor.u32 %v2927, 2147483648
      %v2983 = vxor.u32 %v2201, 2147483648
      %v2984 = vxor.u32 %v2203, 2147483648
      %v2985 = vxor.u32 %v2347, 2147483648
      %v2986 = vxor.u32 %v2349, 2147483648
      %v2987 = vxor.u32 %v2493, 2147483648
      %v2988 = vxor.u32 %v2495, 2147483648
      %v2989 = vxor.u32 %v2639, 2147483648
      %v2990 = vxor.u32 %v2641, 2147483648
      %v2991 = vxor.u32 %v2785, 2147483648
      %v2992 = vxor.u32 %v2787, 2147483648
      %v2993 = vxor.u32 %v2931, 2147483648
      %v2994 = vxor.u32 %v2933, 2147483648
      %v2995 = vxor.u32 %v2205, 2147483648
      %v2996 = vxor.u32 %v2207, 2147483648
      %v2997 = vxor.u32 %v2351, 2147483648
      %v2998 = vxor.u32 %v2353, 2147483648
      %v2999 = vxor.u32 %v2497, 2147483648
      %v3000 = vxor.u32 %v2499, 2147483648
      %v3001 = vxor.u32 %v2643, 2147483648
      %v3002 = vxor.u32 %v2645, 2147483648
      %v3003 = vxor.u32 %v2789, 2147483648
      %v3004 = vxor.u32 %v2791, 2147483648
      %v3005 = vxor.u32 %v2935, 2147483648
      %v3006 = vxor.u32 %v2937, 2147483648
      %v3007 = vxor.u32 %v2211, 2147483648
      %v3008 = vxor.u32 %v2213, 2147483648
      %v3009 = vxor.u32 %v2357, 2147483648
      %v3010 = vxor.u32 %v2359, 2147483648
      %v3011 = vxor.u32 %v2503, 2147483648
      %v3012 = vxor.u32 %v2505, 2147483648
      %v3013 = vxor.u32 %v2649, 2147483648
      %v3014 = vxor.u32 %v2651, 2147483648
      %v3015 = vxor.u32 %v2795, 2147483648
      %v3016 = vxor.u32 %v2797, 2147483648
      %v3017 = vxor.u32 %v2941, 2147483648
      %v3018 = vxor.u32 %v2943, 2147483648
      %v3019 = vxor.u32 %v2215, 2147483648
      %v3020 = vxor.u32 %v2217, 2147483648
      %v3021 = vxor.u32 %v2361, 2147483648
      %v3022 = vxor.u32 %v2363, 2147483648
      %v3023 = vxor.u32 %v2507, 2147483648
      %v3024 = vxor.u32 %v2509, 2147483648
      %v3025 = vxor.u32 %v2653, 2147483648
      %v3026 = vxor.u32 %v2655, 2147483648
      %v3027 = vxor.u32 %v2799, 2147483648
      %v3028 = vxor.u32 %v2801, 2147483648
      %v3029 = vxor.u32 %v2945, 2147483648
      %v3030 = vxor.u32 %v2947, 2147483648
      %v3031 = vxor.u32 %v2221, 2147483648
      %v3032 = vxor.u32 %v2223, 2147483648
      %v3033 = vxor.u32 %v2367, 2147483648
      %v3034 = vxor.u32 %v2369, 2147483648
      %v3035 = vxor.u32 %v2513, 2147483648
      %v3036 = vxor.u32 %v2515, 2147483648
      %v3037 = vxor.u32 %v2659, 2147483648
      %v3038 = vxor.u32 %v2661, 2147483648
      %v3039 = vxor.u32 %v2805, 2147483648
      %v3040 = vxor.u32 %v2807, 2147483648
      %v3041 = vxor.u32 %v2951, 2147483648
      %v3042 = vxor.u32 %v2953, 2147483648
      %v3043 = vxor.u32 %v2225, 2147483648
      %v3044 = vxor.u32 %v2227, 2147483648
      %v3045 = vxor.u32 %v2371, 2147483648
      %v3046 = vxor.u32 %v2373, 2147483648
      %v3047 = vxor.u32 %v2517, 2147483648
      %v3048 = vxor.u32 %v2519, 2147483648
      %v3049 = vxor.u32 %v2663, 2147483648
      %v3050 = vxor.u32 %v2665, 2147483648
      %v3051 = vxor.u32 %v2809, 2147483648
      %v3052 = vxor.u32 %v2811, 2147483648
      %v3053 = vxor.u32 %v2955, 2147483648
      %v3054 = vxor.u32 %v2957, 2147483648
      %v3055 = vmul.f32 %v2959, 1.442695
      %v3056 = vpow.pop %v3055
      %v3057 = vmul.f32 %v2960, 1.442695
      %v3058 = vpow.pop %v3057
      %v3059 = vmul.f32 %v2961, 1.442695
      %v3060 = vpow.pop %v3059
      %v3061 = vmul.f32 %v2962, 1.442695
      %v3062 = vpow.pop %v3061
      %v3063 = vmul.f32 %v2963, 1.442695
      %v3064 = vpow.pop %v3063
      %v3065 = vmul.f32 %v2964, 1.442695
      %v3066 = vpow.pop %v3065
      %v3067 = vmul.f32 %v2965, 1.442695
      %v3068 = vpow.pop %v3067
      %v3069 = vmul.f32 %v2966, 1.442695
      %v3070 = vpow.pop %v3069
      %v3071 = vmul.f32 %v2967, 1.442695
      %v3072 = vpow.pop %v3071
      %v3073 = vmul.f32 %v2968, 1.442695
      %v3074 = vpow.pop %v3073
      %v3075 = vmul.f32 %v2969, 1.442695
      %v3076 = vpow.pop %v3075
      %v3077 = vmul.f32 %v2970, 1.442695
      %v3078 = vpow.pop %v3077
      %v3079 = vmul.f32 %v2971, 1.442695
      %v3080 = vpow.pop %v3079
      %v3081 = vmul.f32 %v2972, 1.442695
      %v3082 = vpow.pop %v3081
      %v3083 = vmul.f32 %v2973, 1.442695
      %v3084 = vpow.pop %v3083
      %v3085 = vmul.f32 %v2974, 1.442695
      %v3086 = vpow.pop %v3085
      %v3087 = vmul.f32 %v2975, 1.442695
      %v3088 = vpow.pop %v3087
      %v3089 = vmul.f32 %v2976, 1.442695
      %v3090 = vpow.pop %v3089
      %v3091 = vmul.f32 %v2977, 1.442695
      %v3092 = vpow.pop %v3091
      %v3093 = vmul.f32 %v2978, 1.442695
      %v3094 = vpow.pop %v3093
      %v3095 = vmul.f32 %v2979, 1.442695
      %v3096 = vpow.pop %v3095
      %v3097 = vmul.f32 %v2980, 1.442695
      %v3098 = vpow.pop %v3097
      %v3099 = vmul.f32 %v2981, 1.442695
      %v3100 = vpow.pop %v3099
      %v3101 = vmul.f32 %v2982, 1.442695
      %v3102 = vpow.pop %v3101
      %v3103 = vmul.f32 %v2983, 1.442695
      %v3104 = vpow.pop %v3103
      %v3105 = vmul.f32 %v2984, 1.442695
      %v3106 = vpow.pop %v3105
      %v3107 = vmul.f32 %v2985, 1.442695
      %v3108 = vpow.pop %v3107
      %v3109 = vmul.f32 %v2986, 1.442695
      %v3110 = vpow.pop %v3109
      %v3111 = vmul.f32 %v2987, 1.442695
      %v3112 = vpow.pop %v3111
      %v3113 = vmul.f32 %v2988, 1.442695
      %v3114 = vpow.pop %v3113
      %v3115 = vmul.f32 %v2989, 1.442695
      %v3116 = vpow.pop %v3115
      %v3117 = vmul.f32 %v2990, 1.442695
      %v3118 = vpow.pop %v3117
      %v3119 = vmul.f32 %v2991, 1.442695
      %v3120 = vpow.pop %v3119
      %v3121 = vmul.f32 %v2992, 1.442695
      %v3122 = vpow.pop %v3121
      %v3123 = vmul.f32 %v2993, 1.442695
      %v3124 = vpow.pop %v3123
      %v3125 = vmul.f32 %v2994, 1.442695
      %v3126 = vpow.pop %v3125
      %v3127 = vmul.f32 %v2995, 1.442695
      %v3128 = vpow.pop %v3127
      %v3129 = vmul.f32 %v2996, 1.442695
      %v3130 = vpow.pop %v3129
      %v3131 = vmul.f32 %v2997, 1.442695
      %v3132 = vpow.pop %v3131
      %v3133 = vmul.f32 %v2998, 1.442695
      %v3134 = vpow.pop %v3133
      %v3135 = vmul.f32 %v2999, 1.442695
      %v3136 = vpow.pop %v3135
      %v3137 = vmul.f32 %v3000, 1.442695
      %v3138 = vpow.pop %v3137
      %v3139 = vmul.f32 %v3001, 1.442695
      %v3140 = vpow.pop %v3139
      %v3141 = vmul.f32 %v3002, 1.442695
      %v3142 = vpow.pop %v3141
      %v3143 = vmul.f32 %v3003, 1.442695
      %v3144 = vpow.pop %v3143
      %v3145 = vmul.f32 %v3004, 1.442695
      %v3146 = vpow.pop %v3145
      %v3147 = vmul.f32 %v3005, 1.442695
      %v3148 = vpow.pop %v3147
      %v3149 = vmul.f32 %v3006, 1.442695
      %v3150 = vpow.pop %v3149
      %v3151 = vmul.f32 %v3007, 1.442695
      %v3152 = vpow.pop %v3151
      %v3153 = vmul.f32 %v3008, 1.442695
      %v3154 = vpow.pop %v3153
      %v3155 = vmul.f32 %v3009, 1.442695
      %v3156 = vpow.pop %v3155
      %v3157 = vmul.f32 %v3010, 1.442695
      %v3158 = vpow.pop %v3157
      %v3159 = vmul.f32 %v3011, 1.442695
      %v3160 = vpow.pop %v3159
      %v3161 = vmul.f32 %v3012, 1.442695
      %v3162 = vpow.pop %v3161
      %v3163 = vmul.f32 %v3013, 1.442695
      %v3164 = vpow.pop %v3163
      %v3165 = vmul.f32 %v3014, 1.442695
      %v3166 = vpow.pop %v3165
      %v3167 = vmul.f32 %v3015, 1.442695
      %v3168 = vpow.pop %v3167
      %v3169 = vmul.f32 %v3016, 1.442695
      %v3170 = vpow.pop %v3169
      %v3171 = vmul.f32 %v3017, 1.442695
      %v3172 = vpow.pop %v3171
      %v3173 = vmul.f32 %v3018, 1.442695
      %v3174 = vpow.pop %v3173
      %v3175 = vmul.f32 %v3019, 1.442695
      %v3176 = vpow.pop %v3175
      %v3177 = vmul.f32 %v3020, 1.442695
      %v3178 = vpow.pop %v3177
      %v3179 = vmul.f32 %v3021, 1.442695
      %v3180 = vpow.pop %v3179
      %v3181 = vmul.f32 %v3022, 1.442695
      %v3182 = vpow.pop %v3181
      %v3183 = vmul.f32 %v3023, 1.442695
      %v3184 = vpow.pop %v3183
      %v3185 = vmul.f32 %v3024, 1.442695
      %v3186 = vpow.pop %v3185
      %v3187 = vmul.f32 %v3025, 1.442695
      %v3188 = vpow.pop %v3187
      %v3189 = vmul.f32 %v3026, 1.442695
      %v3190 = vpow.pop %v3189
      %v3191 = vmul.f32 %v3027, 1.442695
      %v3192 = vpow.pop %v3191
      %v3193 = vmul.f32 %v3028, 1.442695
      %v3194 = vpow.pop %v3193
      %v3195 = vmul.f32 %v3029, 1.442695
      %v3196 = vpow.pop %v3195
      %v3197 = vmul.f32 %v3030, 1.442695
      %v3198 = vpow.pop %v3197
      %v3199 = vmul.f32 %v3031, 1.442695
      %v3200 = vpow.pop %v3199
      %v3201 = vmul.f32 %v3032, 1.442695
      %v3202 = vpow.pop %v3201
      %v3203 = vmul.f32 %v3033, 1.442695
      %v3204 = vpow.pop %v3203
      %v3205 = vmul.f32 %v3034, 1.442695
      %v3206 = vpow.pop %v3205
      %v3207 = vmul.f32 %v3035, 1.442695
      %v3208 = vpow.pop %v3207
      %v3209 = vmul.f32 %v3036, 1.442695
      %v3210 = vpow.pop %v3209
      %v3211 = vmul.f32 %v3037, 1.442695
      %v3212 = vpow.pop %v3211
      %v3213 = vmul.f32 %v3038, 1.442695
      %v3214 = vpow.pop %v3213
      %v3215 = vmul.f32 %v3039, 1.442695
      %v3216 = vpow.pop %v3215
      %v3217 = vmul.f32 %v3040, 1.442695
      %v3218 = vpow.pop %v3217
      %v3219 = vmul.f32 %v3041, 1.442695
      %v3220 = vpow.pop %v3219
      %v3221 = vmul.f32 %v3042, 1.442695
      %v3222 = vpow.pop %v3221
      %v3223 = vmul.f32 %v3043, 1.442695
      %v3224 = vpow.pop %v3223
      %v3225 = vmul.f32 %v3044, 1.442695
      %v3226 = vpow.pop %v3225
      %v3227 = vmul.f32 %v3045, 1.442695
      %v3228 = vpow.pop %v3227
      %v3229 = vmul.f32 %v3046, 1.442695
      %v3230 = vpow.pop %v3229
      %v3231 = vmul.f32 %v3047, 1.442695
      %v3232 = vpow.pop %v3231
      %v3233 = vmul.f32 %v3048, 1.442695
      %v3234 = vpow.pop %v3233
      %v3235 = vmul.f32 %v3049, 1.442695
      %v3236 = vpow.pop %v3235
      %v3237 = vmul.f32 %v3050, 1.442695
      %v3238 = vpow.pop %v3237
      %v3239 = vmul.f32 %v3051, 1.442695
      %v3240 = vpow.pop %v3239
      %v3241 = vmul.f32 %v3052, 1.442695
      %v3242 = vpow.pop %v3241
      %v3243 = vmul.f32 %v3053, 1.442695
      %v3244 = vpow.pop %v3243
      %v3245 = vmul.f32 %v3054, 1.442695
      %v3246 = vpow.pop %v3245
      %v3247 = vadd.f32 %v3056, 1.0
      %v3248 = vadd.f32 %v3058, 1.0
      %v3249 = vadd.f32 %v3060, 1.0
      %v3250 = vadd.f32 %v3062, 1.0
      %v3251 = vadd.f32 %v3064, 1.0
      %v3252 = vadd.f32 %v3066, 1.0
      %v3253 = vadd.f32 %v3068, 1.0
      %v3254 = vadd.f32 %v3070, 1.0
      %v3255 = vadd.f32 %v3072, 1.0
      %v3256 = vadd.f32 %v3074, 1.0
      %v3257 = vadd.f32 %v3076, 1.0
      %v3258 = vadd.f32 %v3078, 1.0
      %v3259 = vadd.f32 %v3080, 1.0
      %v3260 = vadd.f32 %v3082, 1.0
      %v3261 = vadd.f32 %v3084, 1.0
      %v3262 = vadd.f32 %v3086, 1.0
      %v3263 = vadd.f32 %v3088, 1.0
      %v3264 = vadd.f32 %v3090, 1.0
      %v3265 = vadd.f32 %v3092, 1.0
      %v3266 = vadd.f32 %v3094, 1.0
      %v3267 = vadd.f32 %v3096, 1.0
      %v3268 = vadd.f32 %v3098, 1.0
      %v3269 = vadd.f32 %v3100, 1.0
      %v3270 = vadd.f32 %v3102, 1.0
      %v3271 = vadd.f32 %v3104, 1.0
      %v3272 = vadd.f32 %v3106, 1.0
      %v3273 = vadd.f32 %v3108, 1.0
      %v3274 = vadd.f32 %v3110, 1.0
      %v3275 = vadd.f32 %v3112, 1.0
      %v3276 = vadd.f32 %v3114, 1.0
      %v3277 = vadd.f32 %v3116, 1.0
      %v3278 = vadd.f32 %v3118, 1.0
      %v3279 = vadd.f32 %v3120, 1.0
      %v3280 = vadd.f32 %v3122, 1.0
      %v3281 = vadd.f32 %v3124, 1.0
      %v3282 = vadd.f32 %v3126, 1.0
      %v3283 = vadd.f32 %v3128, 1.0
      %v3284 = vadd.f32 %v3130, 1.0
      %v3285 = vadd.f32 %v3132, 1.0
      %v3286 = vadd.f32 %v3134, 1.0
      %v3287 = vadd.f32 %v3136, 1.0
      %v3288 = vadd.f32 %v3138, 1.0
      %v3289 = vadd.f32 %v3140, 1.0
      %v3290 = vadd.f32 %v3142, 1.0
      %v3291 = vadd.f32 %v3144, 1.0
      %v3292 = vadd.f32 %v3146, 1.0
      %v3293 = vadd.f32 %v3148, 1.0
      %v3294 = vadd.f32 %v3150, 1.0
      %v3295 = vadd.f32 %v3152, 1.0
      %v3296 = vadd.f32 %v3154, 1.0
      %v3297 = vadd.f32 %v3156, 1.0
      %v3298 = vadd.f32 %v3158, 1.0
      %v3299 = vadd.f32 %v3160, 1.0
      %v3300 = vadd.f32 %v3162, 1.0
      %v3301 = vadd.f32 %v3164, 1.0
      %v3302 = vadd.f32 %v3166, 1.0
      %v3303 = vadd.f32 %v3168, 1.0
      %v3304 = vadd.f32 %v3170, 1.0
      %v3305 = vadd.f32 %v3172, 1.0
      %v3306 = vadd.f32 %v3174, 1.0
      %v3307 = vadd.f32 %v3176, 1.0
      %v3308 = vadd.f32 %v3178, 1.0
      %v3309 = vadd.f32 %v3180, 1.0
      %v3310 = vadd.f32 %v3182, 1.0
      %v3311 = vadd.f32 %v3184, 1.0
      %v3312 = vadd.f32 %v3186, 1.0
      %v3313 = vadd.f32 %v3188, 1.0
      %v3314 = vadd.f32 %v3190, 1.0
      %v3315 = vadd.f32 %v3192, 1.0
      %v3316 = vadd.f32 %v3194, 1.0
      %v3317 = vadd.f32 %v3196, 1.0
      %v3318 = vadd.f32 %v3198, 1.0
      %v3319 = vadd.f32 %v3200, 1.0
      %v3320 = vadd.f32 %v3202, 1.0
      %v3321 = vadd.f32 %v3204, 1.0
      %v3322 = vadd.f32 %v3206, 1.0
      %v3323 = vadd.f32 %v3208, 1.0
      %v3324 = vadd.f32 %v3210, 1.0
      %v3325 = vadd.f32 %v3212, 1.0
      %v3326 = vadd.f32 %v3214, 1.0
      %v3327 = vadd.f32 %v3216, 1.0
      %v3328 = vadd.f32 %v3218, 1.0
      %v3329 = vadd.f32 %v3220, 1.0
      %v3330 = vadd.f32 %v3222, 1.0
      %v3331 = vadd.f32 %v3224, 1.0
      %v3332 = vadd.f32 %v3226, 1.0
      %v3333 = vadd.f32 %v3228, 1.0
      %v3334 = vadd.f32 %v3230, 1.0
      %v3335 = vadd.f32 %v3232, 1.0
      %v3336 = vadd.f32 %v3234, 1.0
      %v3337 = vadd.f32 %v3236, 1.0
      %v3338 = vadd.f32 %v3238, 1.0
      %v3339 = vadd.f32 %v3240, 1.0
      %v3340 = vadd.f32 %v3242, 1.0
      %v3341 = vadd.f32 %v3244, 1.0
      %v3342 = vadd.f32 %v3246, 1.0
      %v3343 = vrcp.pop %v3247
      %v3344 = vmul.f32 1.0, %v3343
      %v3345 = vrcp.pop %v3248
      %v3346 = vmul.f32 1.0, %v3345
      %v3347 = vrcp.pop %v3249
      %v3348 = vmul.f32 1.0, %v3347
      %v3349 = vrcp.pop %v3250
      %v3350 = vmul.f32 1.0, %v3349
      %v3351 = vrcp.pop %v3251
      %v3352 = vmul.f32 1.0, %v3351
      %v3353 = vrcp.pop %v3252
      %v3354 = vmul.f32 1.0, %v3353
      %v3355 = vrcp.pop %v3253
      %v3356 = vmul.f32 1.0, %v3355
      %v3357 = vrcp.pop %v3254
      %v3358 = vmul.f32 1.0, %v3357
      %v3359 = vrcp.pop %v3255
      %v3360 = vmul.f32 1.0, %v3359
      %v3361 = vrcp.pop %v3256
      %v3362 = vmul.f32 1.0, %v3361
      %v3363 = vrcp.pop %v3257
      %v3364 = vmul.f32 1.0, %v3363
      %v3365 = vrcp.pop %v3258
      %v3366 = vmul.f32 1.0, %v3365
      %v3367 = vrcp.pop %v3259
      %v3368 = vmul.f32 1.0, %v3367
      %v3369 = vrcp.pop %v3260
      %v3370 = vmul.f32 1.0, %v3369
      %v3371 = vrcp.pop %v3261
      %v3372 = vmul.f32 1.0, %v3371
      %v3373 = vrcp.pop %v3262
      %v3374 = vmul.f32 1.0, %v3373
      %v3375 = vrcp.pop %v3263
      %v3376 = vmul.f32 1.0, %v3375
      %v3377 = vrcp.pop %v3264
      %v3378 = vmul.f32 1.0, %v3377
      %v3379 = vrcp.pop %v3265
      %v3380 = vmul.f32 1.0, %v3379
      %v3381 = vrcp.pop %v3266
      %v3382 = vmul.f32 1.0, %v3381
      %v3383 = vrcp.pop %v3267
      %v3384 = vmul.f32 1.0, %v3383
      %v3385 = vrcp.pop %v3268
      %v3386 = vmul.f32 1.0, %v3385
      %v3387 = vrcp.pop %v3269
      %v3388 = vmul.f32 1.0, %v3387
      %v3389 = vrcp.pop %v3270
      %v3390 = vmul.f32 1.0, %v3389
      %v3391 = vrcp.pop %v3271
      %v3392 = vmul.f32 1.0, %v3391
      %v3393 = vrcp.pop %v3272
      %v3394 = vmul.f32 1.0, %v3393
      %v3395 = vrcp.pop %v3273
      %v3396 = vmul.f32 1.0, %v3395
      %v3397 = vrcp.pop %v3274
      %v3398 = vmul.f32 1.0, %v3397
      %v3399 = vrcp.pop %v3275
      %v3400 = vmul.f32 1.0, %v3399
      %v3401 = vrcp.pop %v3276
      %v3402 = vmul.f32 1.0, %v3401
      %v3403 = vrcp.pop %v3277
      %v3404 = vmul.f32 1.0, %v3403
      %v3405 = vrcp.pop %v3278
      %v3406 = vmul.f32 1.0, %v3405
      %v3407 = vrcp.pop %v3279
      %v3408 = vmul.f32 1.0, %v3407
      %v3409 = vrcp.pop %v3280
      %v3410 = vmul.f32 1.0, %v3409
      %v3411 = vrcp.pop %v3281
      %v3412 = vmul.f32 1.0, %v3411
      %v3413 = vrcp.pop %v3282
      %v3414 = vmul.f32 1.0, %v3413
      %v3415 = vrcp.pop %v3283
      %v3416 = vmul.f32 1.0, %v3415
      %v3417 = vrcp.pop %v3284
      %v3418 = vmul.f32 1.0, %v3417
      %v3419 = vrcp.pop %v3285
      %v3420 = vmul.f32 1.0, %v3419
      %v3421 = vrcp.pop %v3286
      %v3422 = vmul.f32 1.0, %v3421
      %v3423 = vrcp.pop %v3287
      %v3424 = vmul.f32 1.0, %v3423
      %v3425 = vrcp.pop %v3288
      %v3426 = vmul.f32 1.0, %v3425
      %v3427 = vrcp.pop %v3289
      %v3428 = vmul.f32 1.0, %v3427
      %v3429 = vrcp.pop %v3290
      %v3430 = vmul.f32 1.0, %v3429
      %v3431 = vrcp.pop %v3291
      %v3432 = vmul.f32 1.0, %v3431
      %v3433 = vrcp.pop %v3292
      %v3434 = vmul.f32 1.0, %v3433
      %v3435 = vrcp.pop %v3293
      %v3436 = vmul.f32 1.0, %v3435
      %v3437 = vrcp.pop %v3294
      %v3438 = vmul.f32 1.0, %v3437
      %v3439 = vrcp.pop %v3295
      %v3440 = vmul.f32 1.0, %v3439
      %v3441 = vrcp.pop %v3296
      %v3442 = vmul.f32 1.0, %v3441
      %v3443 = vrcp.pop %v3297
      %v3444 = vmul.f32 1.0, %v3443
      %v3445 = vrcp.pop %v3298
      %v3446 = vmul.f32 1.0, %v3445
      %v3447 = vrcp.pop %v3299
      %v3448 = vmul.f32 1.0, %v3447
      %v3449 = vrcp.pop %v3300
      %v3450 = vmul.f32 1.0, %v3449
      %v3451 = vrcp.pop %v3301
      %v3452 = vmul.f32 1.0, %v3451
      %v3453 = vrcp.pop %v3302
      %v3454 = vmul.f32 1.0, %v3453
      %v3455 = vrcp.pop %v3303
      %v3456 = vmul.f32 1.0, %v3455
      %v3457 = vrcp.pop %v3304
      %v3458 = vmul.f32 1.0, %v3457
      %v3459 = vrcp.pop %v3305
      %v3460 = vmul.f32 1.0, %v3459
      %v3461 = vrcp.pop %v3306
      %v3462 = vmul.f32 1.0, %v3461
      %v3463 = vrcp.pop %v3307
      %v3464 = vmul.f32 1.0, %v3463
      %v3465 = vrcp.pop %v3308
      %v3466 = vmul.f32 1.0, %v3465
      %v3467 = vrcp.pop %v3309
      %v3468 = vmul.f32 1.0, %v3467
      %v3469 = vrcp.pop %v3310
      %v3470 = vmul.f32 1.0, %v3469
      %v3471 = vrcp.pop %v3311
      %v3472 = vmul.f32 1.0, %v3471
      %v3473 = vrcp.pop %v3312
      %v3474 = vmul.f32 1.0, %v3473
      %v3475 = vrcp.pop %v3313
      %v3476 = vmul.f32 1.0, %v3475
      %v3477 = vrcp.pop %v3314
      %v3478 = vmul.f32 1.0, %v3477
      %v3479 = vrcp.pop %v3315
      %v3480 = vmul.f32 1.0, %v3479
      %v3481 = vrcp.pop %v3316
      %v3482 = vmul.f32 1.0, %v3481
      %v3483 = vrcp.pop %v3317
      %v3484 = vmul.f32 1.0, %v3483
      %v3485 = vrcp.pop %v3318
      %v3486 = vmul.f32 1.0, %v3485
      %v3487 = vrcp.pop %v3319
      %v3488 = vmul.f32 1.0, %v3487
      %v3489 = vrcp.pop %v3320
      %v3490 = vmul.f32 1.0, %v3489
      %v3491 = vrcp.pop %v3321
      %v3492 = vmul.f32 1.0, %v3491
      %v3493 = vrcp.pop %v3322
      %v3494 = vmul.f32 1.0, %v3493
      %v3495 = vrcp.pop %v3323
      %v3496 = vmul.f32 1.0, %v3495
      %v3497 = vrcp.pop %v3324
      %v3498 = vmul.f32 1.0, %v3497
      %v3499 = vrcp.pop %v3325
      %v3500 = vmul.f32 1.0, %v3499
      %v3501 = vrcp.pop %v3326
      %v3502 = vmul.f32 1.0, %v3501
      %v3503 = vrcp.pop %v3327
      %v3504 = vmul.f32 1.0, %v3503
      %v3505 = vrcp.pop %v3328
      %v3506 = vmul.f32 1.0, %v3505
      %v3507 = vrcp.pop %v3329
      %v3508 = vmul.f32 1.0, %v3507
      %v3509 = vrcp.pop %v3330
      %v3510 = vmul.f32 1.0, %v3509
      %v3511 = vrcp.pop %v3331
      %v3512 = vmul.f32 1.0, %v3511
      %v3513 = vrcp.pop %v3332
      %v3514 = vmul.f32 1.0, %v3513
      %v3515 = vrcp.pop %v3333
      %v3516 = vmul.f32 1.0, %v3515
      %v3517 = vrcp.pop %v3334
      %v3518 = vmul.f32 1.0, %v3517
      %v3519 = vrcp.pop %v3335
      %v3520 = vmul.f32 1.0, %v3519
      %v3521 = vrcp.pop %v3336
      %v3522 = vmul.f32 1.0, %v3521
      %v3523 = vrcp.pop %v3337
      %v3524 = vmul.f32 1.0, %v3523
      %v3525 = vrcp.pop %v3338
      %v3526 = vmul.f32 1.0, %v3525
      %v3527 = vrcp.pop %v3339
      %v3528 = vmul.f32 1.0, %v3527
      %v3529 = vrcp.pop %v3340
      %v3530 = vmul.f32 1.0, %v3529
      %v3531 = vrcp.pop %v3341
      %v3532 = vmul.f32 1.0, %v3531
      %v3533 = vrcp.pop %v3342
      %v3534 = vmul.f32 1.0, %v3533
      %v3535 = vmul.f32 %v2191, %v3344
      %v3536 = vmul.f32 %v2193, %v3346
      %v3537 = vmul.f32 %v2337, %v3348
      %v3538 = vmul.f32 %v2339, %v3350
      %v3539 = vmul.f32 %v2483, %v3352
      %v3540 = vmul.f32 %v2485, %v3354
      %v3541 = vmul.f32 %v2629, %v3356
      %v3542 = vmul.f32 %v2631, %v3358
      %v3543 = vmul.f32 %v2775, %v3360
      %v3544 = vmul.f32 %v2777, %v3362
      %v3545 = vmul.f32 %v2921, %v3364
      %v3546 = vmul.f32 %v2923, %v3366
      %v3547 = vmul.f32 %v2195, %v3368
      %v3548 = vmul.f32 %v2197, %v3370
      %v3549 = vmul.f32 %v2341, %v3372
      %v3550 = vmul.f32 %v2343, %v3374
      %v3551 = vmul.f32 %v2487, %v3376
      %v3552 = vmul.f32 %v2489, %v3378
      %v3553 = vmul.f32 %v2633, %v3380
      %v3554 = vmul.f32 %v2635, %v3382
      %v3555 = vmul.f32 %v2779, %v3384
      %v3556 = vmul.f32 %v2781, %v3386
      %v3557 = vmul.f32 %v2925, %v3388
      %v3558 = vmul.f32 %v2927, %v3390
      %v3559 = vmul.f32 %v2201, %v3392
      %v3560 = vmul.f32 %v2203, %v3394
      %v3561 = vmul.f32 %v2347, %v3396
      %v3562 = vmul.f32 %v2349, %v3398
      %v3563 = vmul.f32 %v2493, %v3400
      %v3564 = vmul.f32 %v2495, %v3402
      %v3565 = vmul.f32 %v2639, %v3404
      %v3566 = vmul.f32 %v2641, %v3406
      %v3567 = vmul.f32 %v2785, %v3408
      %v3568 = vmul.f32 %v2787, %v3410
      %v3569 = vmul.f32 %v2931, %v3412
      %v3570 = vmul.f32 %v2933, %v3414
      %v3571 = vmul.f32 %v2205, %v3416
      %v3572 = vmul.f32 %v2207, %v3418
      %v3573 = vmul.f32 %v2351, %v3420
      %v3574 = vmul.f32 %v2353, %v3422
      %v3575 = vmul.f32 %v2497, %v3424
      %v3576 = vmul.f32 %v2499, %v3426
      %v3577 = vmul.f32 %v2643, %v3428
      %v3578 = vmul.f32 %v2645, %v3430
      %v3579 = vmul.f32 %v2789, %v3432
      %v3580 = vmul.f32 %v2791, %v3434
      %v3581 = vmul.f32 %v2935, %v3436
      %v3582 = vmul.f32 %v2937, %v3438
      %v3583 = vmul.f32 %v2211, %v3440
      %v3584 = vmul.f32 %v2213, %v3442
      %v3585 = vmul.f32 %v2357, %v3444
      %v3586 = vmul.f32 %v2359, %v3446
      %v3587 = vmul.f32 %v2503, %v3448
      %v3588 = vmul.f32 %v2505, %v3450
      %v3589 = vmul.f32 %v2649, %v3452
      %v3590 = vmul.f32 %v2651, %v3454
      %v3591 = vmul.f32 %v2795, %v3456
      %v3592 = vmul.f32 %v2797, %v3458
      %v3593 = vmul.f32 %v2941, %v3460
      %v3594 = vmul.f32 %v2943, %v3462
      %v3595 = vmul.f32 %v2215, %v3464
      %v3596 = vmul.f32 %v2217, %v3466
      %v3597 = vmul.f32 %v2361, %v3468
      %v3598 = vmul.f32 %v2363, %v3470
      %v3599 = vmul.f32 %v2507, %v3472
      %v3600 = vmul.f32 %v2509, %v3474
      %v3601 = vmul.f32 %v2653, %v3476
      %v3602 = vmul.f32 %v2655, %v3478
      %v3603 = vmul.f32 %v2799, %v3480
      %v3604 = vmul.f32 %v2801, %v3482
      %v3605 = vmul.f32 %v2945, %v3484
      %v3606 = vmul.f32 %v2947, %v3486
      %v3607 = vmul.f32 %v2221, %v3488
      %v3608 = vmul.f32 %v2223, %v3490
      %v3609 = vmul.f32 %v2367, %v3492
      %v3610 = vmul.f32 %v2369, %v3494
      %v3611 = vmul.f32 %v2513, %v3496
      %v3612 = vmul.f32 %v2515, %v3498
      %v3613 = vmul.f32 %v2659, %v3500
      %v3614 = vmul.f32 %v2661, %v3502
      %v3615 = vmul.f32 %v2805, %v3504
      %v3616 = vmul.f32 %v2807, %v3506
      %v3617 = vmul.f32 %v2951, %v3508
      %v3618 = vmul.f32 %v2953, %v3510
      %v3619 = vmul.f32 %v2225, %v3512
      %v3620 = vmul.f32 %v2227, %v3514
      %v3621 = vmul.f32 %v2371, %v3516
      %v3622 = vmul.f32 %v2373, %v3518
      %v3623 = vmul.f32 %v2517, %v3520
      %v3624 = vmul.f32 %v2519, %v3522
      %v3625 = vmul.f32 %v2663, %v3524
      %v3626 = vmul.f32 %v2665, %v3526
      %v3627 = vmul.f32 %v2809, %v3528
      %v3628 = vmul.f32 %v2811, %v3530
      %v3629 = vmul.f32 %v2955, %v3532
      %v3630 = vmul.f32 %v2957, %v3534
      %v3631 = vld [vmem:[#allocation2] sm:$0xff]
      %v3632 = vld [vmem:[#allocation2 + $0x8] sm:$0xf]
      %v3633 = vadd.f32 %v3535, %v3547
      %v3634 = vadd.f32 %v3633, %v3559
      %v3635 = vadd.f32 %v3634, %v3571
      %v3636 = vadd.f32 %v3635, %v3583
      %v3637 = vadd.f32 %v3636, %v3595
      %v3638 = vadd.f32 %v3637, %v3607
      %v3639 = vadd.f32 %v3638, %v3619
      %v3640 = vrot.slane %v3639, 4
      %v3641 = vadd.f32 %v3639, %v3640
      %v3642 = vrot.slane %v3641, 2
      %v3643 = vadd.f32 %v3641, %v3642
      %v3644 = vrot.slane %v3643, 1
      %v3645 = vadd.f32 %v3643, %v3644
      %v3646 = vadd.f32 %v3536, %v3548
      %v3647 = vadd.f32 %v3646, %v3560
      %v3648 = vadd.f32 %v3647, %v3572
      %v3649 = vadd.f32 %v3648, %v3584
      %v3650 = vadd.f32 %v3649, %v3596
      %v3651 = vadd.f32 %v3650, %v3608
      %v3652 = vadd.f32 %v3651, %v3620
      %v3653 = vrot.slane %v3652, 4
      %v3654 = vadd.f32 %v3652, %v3653
      %v3655 = vrot.slane %v3654, 2
      %v3656 = vadd.f32 %v3654, %v3655
      %v3657 = vrot.slane %v3656, 1
      %v3658 = vadd.f32 %v3656, %v3657
      %v3659 = vadd.f32 %v3537, %v3549
      %v3660 = vadd.f32 %v3659, %v3561
      %v3661 = vadd.f32 %v3660, %v3573
      %v3662 = vadd.f32 %v3661, %v3585
      %v3663 = vadd.f32 %v3662, %v3597
      %v3664 = vadd.f32 %v3663, %v3609
      %v3665 = vadd.f32 %v3664, %v3621
      %v3666 = vrot.slane %v3665, 4
      %v3667 = vadd.f32 %v3665, %v3666
      %v3668 = vrot.slane %v3667, 2
      %v3669 = vadd.f32 %v3667, %v3668
      %v3670 = vrot.slane %v3669, 1
      %v3671 = vadd.f32 %v3669, %v3670
      %v3672 = vadd.f32 %v3538, %v3550
      %v3673 = vadd.f32 %v3672, %v3562
      %v3674 = vadd.f32 %v3673, %v3574
      %v3675 = vadd.f32 %v3674, %v3586
      %v3676 = vadd.f32 %v3675, %v3598
      %v3677 = vadd.f32 %v3676, %v3610
      %v3678 = vadd.f32 %v3677, %v3622
      %v3679 = vrot.slane %v3678, 4
      %v3680 = vadd.f32 %v3678, %v3679
      %v3681 = vrot.slane %v3680, 2
      %v3682 = vadd.f32 %v3680, %v3681
      %v3683 = vrot.slane %v3682, 1
      %v3684 = vadd.f32 %v3682, %v3683
      %v3685 = vadd.f32 %v3539, %v3551
      %v3686 = vadd.f32 %v3685, %v3563
      %v3687 = vadd.f32 %v3686, %v3575
      %v3688 = vadd.f32 %v3687, %v3587
      %v3689 = vadd.f32 %v3688, %v3599
      %v3690 = vadd.f32 %v3689, %v3611
      %v3691 = vadd.f32 %v3690, %v3623
      %v3692 = vrot.slane %v3691, 4
      %v3693 = vadd.f32 %v3691, %v3692
      %v3694 = vrot.slane %v3693, 2
      %v3695 = vadd.f32 %v3693, %v3694
      %v3696 = vrot.slane %v3695, 1
      %v3697 = vadd.f32 %v3695, %v3696
      %v3698 = vadd.f32 %v3540, %v3552
      %v3699 = vadd.f32 %v3698, %v3564
      %v3700 = vadd.f32 %v3699, %v3576
      %v3701 = vadd.f32 %v3700, %v3588
      %v3702 = vadd.f32 %v3701, %v3600
      %v3703 = vadd.f32 %v3702, %v3612
      %v3704 = vadd.f32 %v3703, %v3624
      %v3705 = vrot.slane %v3704, 4
      %v3706 = vadd.f32 %v3704, %v3705
      %v3707 = vrot.slane %v3706, 2
      %v3708 = vadd.f32 %v3706, %v3707
      %v3709 = vrot.slane %v3708, 1
      %v3710 = vadd.f32 %v3708, %v3709
      %v3711 = vadd.f32 %v3541, %v3553
      %v3712 = vadd.f32 %v3711, %v3565
      %v3713 = vadd.f32 %v3712, %v3577
      %v3714 = vadd.f32 %v3713, %v3589
      %v3715 = vadd.f32 %v3714, %v3601
      %v3716 = vadd.f32 %v3715, %v3613
      %v3717 = vadd.f32 %v3716, %v3625
      %v3718 = vrot.slane %v3717, 4
      %v3719 = vadd.f32 %v3717, %v3718
      %v3720 = vrot.slane %v3719, 2
      %v3721 = vadd.f32 %v3719, %v3720
      %v3722 = vrot.slane %v3721, 1
      %v3723 = vadd.f32 %v3721, %v3722
      %v3724 = vadd.f32 %v3542, %v3554
      %v3725 = vadd.f32 %v3724, %v3566
      %v3726 = vadd.f32 %v3725, %v3578
      %v3727 = vadd.f32 %v3726, %v3590
      %v3728 = vadd.f32 %v3727, %v3602
      %v3729 = vadd.f32 %v3728, %v3614
      %v3730 = vadd.f32 %v3729, %v3626
      %v3731 = vrot.slane %v3730, 4
      %v3732 = vadd.f32 %v3730, %v3731
      %v3733 = vrot.slane %v3732, 2
      %v3734 = vadd.f32 %v3732, %v3733
      %v3735 = vrot.slane %v3734, 1
      %v3736 = vadd.f32 %v3734, %v3735
      %v3737 = vadd.f32 %v3543, %v3555
      %v3738 = vadd.f32 %v3737, %v3567
      %v3739 = vadd.f32 %v3738, %v3579
      %v3740 = vadd.f32 %v3739, %v3591
      %v3741 = vadd.f32 %v3740, %v3603
      %v3742 = vadd.f32 %v3741, %v3615
      %v3743 = vadd.f32 %v3742, %v3627
      %v3744 = vrot.slane %v3743, 4
      %v3745 = vadd.f32 %v3743, %v3744
      %v3746 = vrot.slane %v3745, 2
      %v3747 = vadd.f32 %v3745, %v3746
      %v3748 = vrot.slane %v3747, 1
      %v3749 = vadd.f32 %v3747, %v3748
      %v3750 = vadd.f32 %v3544, %v3556
      %v3751 = vadd.f32 %v3750, %v3568
      %v3752 = vadd.f32 %v3751, %v3580
      %v3753 = vadd.f32 %v3752, %v3592
      %v3754 = vadd.f32 %v3753, %v3604
      %v3755 = vadd.f32 %v3754, %v3616
      %v3756 = vadd.f32 %v3755, %v3628
      %v3757 = vrot.slane %v3756, 4
      %v3758 = vadd.f32 %v3756, %v3757
      %v3759 = vrot.slane %v3758, 2
      %v3760 = vadd.f32 %v3758, %v3759
      %v3761 = vrot.slane %v3760, 1
      %v3762 = vadd.f32 %v3760, %v3761
      %v3763 = vadd.f32 %v3545, %v3557
      %v3764 = vadd.f32 %v3763, %v3569
      %v3765 = vadd.f32 %v3764, %v3581
      %v3766 = vadd.f32 %v3765, %v3593
      %v3767 = vadd.f32 %v3766, %v3605
      %v3768 = vadd.f32 %v3767, %v3617
      %v3769 = vadd.f32 %v3768, %v3629
      %v3770 = vrot.slane %v3769, 4
      %v3771 = vadd.f32 %v3769, %v3770
      %v3772 = vrot.slane %v3771, 2
      %v3773 = vadd.f32 %v3771, %v3772
      %v3774 = vrot.slane %v3773, 1
      %v3775 = vadd.f32 %v3773, %v3774
      %v3776 = vadd.f32 %v3546, %v3558
      %v3777 = vadd.f32 %v3776, %v3570
      %v3778 = vadd.f32 %v3777, %v3582
      %v3779 = vadd.f32 %v3778, %v3594
      %v3780 = vadd.f32 %v3779, %v3606
      %v3781 = vadd.f32 %v3780, %v3618
      %v3782 = vadd.f32 %v3781, %v3630
      %v3783 = vrot.slane %v3782, 4
      %v3784 = vadd.f32 %v3782, %v3783
      %v3785 = vrot.slane %v3784, 2
      %v3786 = vadd.f32 %v3784, %v3785
      %v3787 = vrot.slane %v3786, 1
      %v3788 = vadd.f32 %v3786, %v3787
      %v3801 = vcombine.low %v3645, %v3658
      %v3802 = vcombine.low %v3671, %v3684
      %v3803 = vcombine.low %v3697, %v3710
      %v3804 = vcombine.low %v3723, %v3736
      %v3806 = vunpack.c.l.s4 1966171168
      %v3807 = vunpack.c.0.s8 %v3806
      %v3808 = vlaneseq
      %v3809 = vshrl.u32 %v3808, 7
      %v3810 = vsub.s32 %v3807, %v3809
      %v3811 = vrot.slane %v3801, %v3810
      %v3813 = vunpack.c.l.s4 1966171168
      %v3814 = vunpack.c.0.s8 %v3813
      %v3815 = vlaneseq
      %v3816 = vshrl.u32 %v3815, 7
      %v3817 = vsub.s32 %v3814, %v3816
      %v3818 = vrot.slane %v3802, %v3817
      %v3820 = vunpack.c.l.s4 1966171168
      %v3821 = vunpack.c.0.s8 %v3820
      %v3822 = vlaneseq
      %v3823 = vshrl.u32 %v3822, 7
      %v3824 = vsub.s32 %v3821, %v3823
      %v3825 = vrot.slane %v3803, %v3824
      %v3827 = vunpack.c.l.s4 1966171168
      %v3828 = vunpack.c.0.s8 %v3827
      %v3829 = vlaneseq
      %v3830 = vshrl.u32 %v3829, 7
      %v3831 = vsub.s32 %v3828, %v3830
      %v3832 = vrot.slane %v3804, %v3831
      %v3833 = vcombine.low %v3811, %v3818
      %v3834 = vcombine.low %v3825, %v3832
      %v3836 = vunpack.c.l.s4 1966171168
      %v3837 = vunpack.c.0.s8 %v3836
      %v3838 = vlaneseq
      %v3839 = vshrl.u32 %v3838, 7
      %v3840 = vsub.s32 %v3837, %v3839
      %v3841 = vrot.slane %v3833, %v3840
      %v3843 = vunpack.c.l.s4 1966171168
      %v3844 = vunpack.c.0.s8 %v3843
      %v3845 = vlaneseq
      %v3846 = vshrl.u32 %v3845, 7
      %v3847 = vsub.s32 %v3844, %v3846
      %v3848 = vrot.slane %v3834, %v3847
      %v3849 = vcombine.low %v3841, %v3848
      %v3850 = vcombine.low %v3749, %v3762
      %v3851 = vcombine.low %v3775, %v3788
      %v3853 = vunpack.c.l.s4 1966171168
      %v3854 = vunpack.c.0.s8 %v3853
      %v3855 = vlaneseq
      %v3856 = vshrl.u32 %v3855, 7
      %v3857 = vsub.s32 %v3854, %v3856
      %v3858 = vrot.slane %v3850, %v3857
      %v3860 = vunpack.c.l.s4 1966171168
      %v3861 = vunpack.c.0.s8 %v3860
      %v3862 = vlaneseq
      %v3863 = vshrl.u32 %v3862, 7
      %v3864 = vsub.s32 %v3861, %v3863
      %v3865 = vrot.slane %v3851, %v3864
      %v3866 = vcombine.low %v3858, %v3865
      %v3868 = vunpack.c.l.s4 1966171168
      %v3869 = vunpack.c.0.s8 %v3868
      %v3870 = vlaneseq
      %v3871 = vshrl.u32 %v3870, 7
      %v3872 = vsub.s32 %v3869, %v3871
      %v3873 = vrot.slane %v3866, %v3872
      %v3876 = vadd.f32 %v3631, %v3849
      %v3877 = vadd.f32 %v3632, %v3873
      %3878 = vst [vmem:[#allocation2] sm:$0xff] %v3876
      %v3879 = vlaneseq
      %vm3880 = vcmp.ge.s32.totalorder %v3879, 0
      %vm3881 = vcmp.lt.s32.totalorder %v3879, 512
      %vm3882 = vmand %vm3880, %vm3881
      %3883 = vst.msk [vmem:[#allocation2 + $0x8] sm:$0xf] %vm3882, %v3877
      // Predicated region
      $region37: #{effnet_erosion_forward.4} parent=31 // pred_check
        %p3884 = pneg %p201
      $region38: #{effnet_erosion_forward.4} parent=31 // pred_check_branch
        %3886 = sbr.rel (%p3884) target = $region40
      $region39: #{effnet_erosion_forward.4} parent=31 // pred_region
        %v3887 = vld [vmem:[#allocation2] sm:$0xff]
        %v3888 = vld [vmem:[#allocation2 + $0x8] sm:$0xf]
        %v3889 = vmul.f32 %v3887, 0.015625
        %v3890 = vmul.f32 %v3888, 0.015625
        %3891 = vst [vmem:[%s199] sm:$0xff] %v3889
        %3892 = vst.msk [vmem:[%s199 + $0x8] sm:$0xf] %vm3882, %v3890
      $region40: #{effnet_erosion_forward.4} parent=31 // pred_fallthru
        _
      %p3893 = scmp.lt.s32.totalorder %s18, 1
      %s3894 = scalar_select %p3893, %s18, 1
      %s3895 = smul.addr %s3894, 12
      %s3896 = scalar_lea.vmem %s3, %s3895
      // Predicated region
      $region41: #{effnet_erosion_forward.4} parent=31 // pred_check
        %p3897 = pneg %p114
      $region42: #{effnet_erosion_forward.4} parent=31 // pred_check_branch
        %3899 = sbr.rel (%p3897) target = $region44
      $region43: #{effnet_erosion_forward.4} parent=31 // pred_region
        _
      $region44: #{effnet_erosion_forward.4} parent=31 // pred_fallthru
        _
    $region32: #{effnet_erosion_forward.4} parent=5 // pred_fallthru
      _
    %p3900 = scmp.le.s32.totalorder 2, %s9
    // Predicated region
    $region45: #{effnet_erosion_forward.4} parent=5 // pred_check
      %p3901 = pneg %p3900
    $region46: #{effnet_erosion_forward.4} parent=5 // pred_check_branch
      %3903 = sbr.rel (%p3901) target = $region48
    $region47: #{effnet_erosion_forward.4} parent=5 // pred_region
      %s3904 = ssub.s32 %s9, 2
      // Predicated region
      $region49: #{effnet_erosion_forward.4} parent=47 // pred_check
        %p3905 = pneg %p120
      $region50: #{effnet_erosion_forward.4} parent=47 // pred_check_branch
        %3907 = sbr.rel (%p3905) target = $region52
      $region51: #{effnet_erosion_forward.4} parent=47 // pred_region
        %p3908 = scmp.lt.s32.totalorder %s20, 1
        %s3909 = scalar_select %p3908, %s20, 1
        %s3910 = smul.addr %s3909, 12
        %s3911 = scalar_lea.vmem %s3, %s3910
      $region52: #{effnet_erosion_forward.4} parent=47 // pred_fallthru
        _
    $region48: #{effnet_erosion_forward.4} parent=5 // pred_fallthru
      _
  $region6: #{effnet_erosion_forward.4} parent=0 // loop_footer
    %s13 = sadd.s32 1, %s9
  $region7: #{effnet_erosion_forward.4} parent=0 // loop_footer_branch
    %8 = sbr.rel target = $region3
  $region8: #{effnet_erosion_forward.4} parent=0 // loop_exit
    _

// kernel: effnet_erosion_forward.5
$region0: #{effnet_erosion_forward.5}
  #allocation0 [shape = 'u32[]', space=smem, size = 0x4, offset = 0x4, fixed_abs, tag = 'smem constant byte address 0x4 - core index']
  #allocation1 [shape = 'u32[144,128]{1,0:T(1,128)}', space=vmem, size = 0x12000, scoped, tag = 'internal scratch']
  %s0 = inlined_call_operand.vmem [shape: bf16[2,1536], index: 0, kind: input, shape index: {}]
  %s1 = inlined_call_operand.vmem [shape: bf16[1536,512], index: 1, kind: input, shape index: {}]
  %s2 = inlined_call_operand.vmem [shape: f32[1,512], index: 2, kind: input, shape index: {}]
  %s3 = inlined_call_operand.vmem [shape: bf16[512,128], index: 3, kind: input, shape index: {}]
  %s4 = inlined_call_operand.vmem [shape: f32[1,128], index: 4, kind: input, shape index: {}]
  %s5 = inlined_call_operand.hbm [shape: f32[2,128], index: 5, kind: output, shape index: {}]
  %s6 = sld [smem:[#allocation0]]
  $region30: #{effnet_erosion_forward.5} parent=0
    _
  %s8 = ssub.s32 1, %s6
  %s9 = scalar_select 0, %s8, %s6
  $region1: #{effnet_erosion_forward.5} parent=0
    #allocation2 [shape = 'u8[1024]{0}', space=vmem, size = 0x400, scoped, tag = 'output window, operand 0, single buffered']
    #allocation3 [shape = 's32[1]{0}', space=sflag, size = 0x4, scoped, tag = 'scoped memory for effnet_erosion_forward.5']
    %10 = vsyncpa [#allocation3], 0
    // Predicated region
    $region2: #{effnet_erosion_forward.5} parent=1 // pred_check
      _
    $region3: #{effnet_erosion_forward.5} parent=1 // pred_check_branch
      %12 = sbr.rel (0) target = $region5
    $region4: #{effnet_erosion_forward.5} parent=1 // pred_region
      _
    $region5: #{effnet_erosion_forward.5} parent=1 // pred_fallthru
      _
    // Predicated region
    $region6: #{effnet_erosion_forward.5} parent=1 // pred_check
      _
    $region7: #{effnet_erosion_forward.5} parent=1 // pred_check_branch
      %14 = sbr.rel (0) target = $region9
    $region8: #{effnet_erosion_forward.5} parent=1 // pred_region
      _
    $region9: #{effnet_erosion_forward.5} parent=1 // pred_fallthru
      _
    // Predicated region
    $region10: #{effnet_erosion_forward.5} parent=1 // pred_check
      _
    $region11: #{effnet_erosion_forward.5} parent=1 // pred_check_branch
      %16 = sbr.rel (0) target = $region13
    $region12: #{effnet_erosion_forward.5} parent=1 // pred_region
      _
    $region13: #{effnet_erosion_forward.5} parent=1 // pred_fallthru
      _
    // Predicated region
    $region14: #{effnet_erosion_forward.5} parent=1 // pred_check
      _
    $region15: #{effnet_erosion_forward.5} parent=1 // pred_check_branch
      %18 = sbr.rel (0) target = $region17
    $region16: #{effnet_erosion_forward.5} parent=1 // pred_region
      _
    $region17: #{effnet_erosion_forward.5} parent=1 // pred_fallthru
      _
    // Predicated region
    $region18: #{effnet_erosion_forward.5} parent=1 // pred_check
      _
    $region19: #{effnet_erosion_forward.5} parent=1 // pred_check_branch
      %20 = sbr.rel (0) target = $region21
    $region20: #{effnet_erosion_forward.5} parent=1 // pred_region
      _
    $region21: #{effnet_erosion_forward.5} parent=1 // pred_fallthru
      _
    %v22 = vld [vmem:[%s0] sm:$0xff]
    %v23 = vld [vmem:[%s0 + $0x8] sm:$0xf]
    %v24 = vld [vmem:[%s1] sm:$0xff]
    %v25 = vld [vmem:[%s1 + $0x8] sm:$0xff]
    %v26 = vld [vmem:[%s1 + $0x10] sm:$0xff]
    %v27 = vld [vmem:[%s1 + $0x18] sm:$0xff]
    %v28 = vld [vmem:[%s1 + $0x20] sm:$0xff]
    %v29 = vld [vmem:[%s1 + $0x28] sm:$0xff]
    %v30 = vld [vmem:[%s1 + $0x30] sm:$0xff]
    %v31 = vld [vmem:[%s1 + $0x38] sm:$0xff]
    %v32 = vld [vmem:[%s1 + $0x40] sm:$0xff]
    %v33 = vld [vmem:[%s1 + $0x48] sm:$0xff]
    %v34 = vld [vmem:[%s1 + $0x50] sm:$0xff]
    %v35 = vld [vmem:[%s1 + $0x58] sm:$0xff]
    %v36 = vld [vmem:[%s1 + $0x60] sm:$0xff]
    %v37 = vld [vmem:[%s1 + $0x68] sm:$0xff]
    %v38 = vld [vmem:[%s1 + $0x70] sm:$0xff]
    %v39 = vld [vmem:[%s1 + $0x78] sm:$0xff]
    %v40 = vld [vmem:[%s1 + $0x80] sm:$0xff]
    %v41 = vld [vmem:[%s1 + $0x88] sm:$0xff]
    %v42 = vld [vmem:[%s1 + $0x90] sm:$0xff]
    %v43 = vld [vmem:[%s1 + $0x98] sm:$0xff]
    %v44 = vld [vmem:[%s1 + $0xa0] sm:$0xff]
    %v45 = vld [vmem:[%s1 + $0xa8] sm:$0xff]
    %v46 = vld [vmem:[%s1 + $0xb0] sm:$0xff]
    %v47 = vld [vmem:[%s1 + $0xb8] sm:$0xff]
    %v48 = vld [vmem:[%s1 + $0xc0] sm:$0xff]
    %v49 = vld [vmem:[%s1 + $0xc8] sm:$0xff]
    %v50 = vld [vmem:[%s1 + $0xd0] sm:$0xff]
    %v51 = vld [vmem:[%s1 + $0xd8] sm:$0xff]
    %v52 = vld [vmem:[%s1 + $0xe0] sm:$0xff]
    %v53 = vld [vmem:[%s1 + $0xe8] sm:$0xff]
    %v54 = vld [vmem:[%s1 + $0xf0] sm:$0xff]
    %v55 = vld [vmem:[%s1 + $0xf8] sm:$0xff]
    %v56 = vld [vmem:[%s1 + $0x100] sm:$0xff]
    %v57 = vld [vmem:[%s1 + $0x108] sm:$0xff]
    %v58 = vld [vmem:[%s1 + $0x110] sm:$0xff]
    %v59 = vld [vmem:[%s1 + $0x118] sm:$0xff]
    %v60 = vld [vmem:[%s1 + $0x120] sm:$0xff]
    %v61 = vld [vmem:[%s1 + $0x128] sm:$0xff]
    %v62 = vld [vmem:[%s1 + $0x130] sm:$0xff]
    %v63 = vld [vmem:[%s1 + $0x138] sm:$0xff]
    %v64 = vld [vmem:[%s1 + $0x140] sm:$0xff]
    %v65 = vld [vmem:[%s1 + $0x148] sm:$0xff]
    %v66 = vld [vmem:[%s1 + $0x150] sm:$0xff]
    %v67 = vld [vmem:[%s1 + $0x158] sm:$0xff]
    %v68 = vld [vmem:[%s1 + $0x160] sm:$0xff]
    %v69 = vld [vmem:[%s1 + $0x168] sm:$0xff]
    %v70 = vld [vmem:[%s1 + $0x170] sm:$0xff]
    %v71 = vld [vmem:[%s1 + $0x178] sm:$0xff]
    %v72 = vld [vmem:[%s1 + $0x180] sm:$0xff]
    %v73 = vld [vmem:[%s1 + $0x188] sm:$0xff]
    %v74 = vld [vmem:[%s1 + $0x190] sm:$0xff]
    %v75 = vld [vmem:[%s1 + $0x198] sm:$0xff]
    %v76 = vld [vmem:[%s1 + $0x1a0] sm:$0xff]
    %v77 = vld [vmem:[%s1 + $0x1a8] sm:$0xff]
    %v78 = vld [vmem:[%s1 + $0x1b0] sm:$0xff]
    %v79 = vld [vmem:[%s1 + $0x1b8] sm:$0xff]
    %v80 = vld [vmem:[%s1 + $0x1c0] sm:$0xff]
    %v81 = vld [vmem:[%s1 + $0x1c8] sm:$0xff]
    %v82 = vld [vmem:[%s1 + $0x1d0] sm:$0xff]
    %v83 = vld [vmem:[%s1 + $0x1d8] sm:$0xff]
    %v84 = vld [vmem:[%s1 + $0x1e0] sm:$0xff]
    %v85 = vld [vmem:[%s1 + $0x1e8] sm:$0xff]
    %v86 = vld [vmem:[%s1 + $0x1f0] sm:$0xff]
    %v87 = vld [vmem:[%s1 + $0x1f8] sm:$0xff]
    %v88 = vld [vmem:[%s1 + $0x200] sm:$0xff]
    %v89 = vld [vmem:[%s1 + $0x208] sm:$0xff]
    %v90 = vld [vmem:[%s1 + $0x210] sm:$0xff]
    %v91 = vld [vmem:[%s1 + $0x218] sm:$0xff]
    %v92 = vld [vmem:[%s1 + $0x220] sm:$0xff]
    %v93 = vld [vmem:[%s1 + $0x228] sm:$0xff]
    %v94 = vld [vmem:[%s1 + $0x230] sm:$0xff]
    %v95 = vld [vmem:[%s1 + $0x238] sm:$0xff]
    %v96 = vld [vmem:[%s1 + $0x240] sm:$0xff]
    %v97 = vld [vmem:[%s1 + $0x248] sm:$0xff]
    %v98 = vld [vmem:[%s1 + $0x250] sm:$0xff]
    %v99 = vld [vmem:[%s1 + $0x258] sm:$0xff]
    %v100 = vld [vmem:[%s1 + $0x260] sm:$0xff]
    %v101 = vld [vmem:[%s1 + $0x268] sm:$0xff]
    %v102 = vld [vmem:[%s1 + $0x270] sm:$0xff]
    %v103 = vld [vmem:[%s1 + $0x278] sm:$0xff]
    %v104 = vld [vmem:[%s1 + $0x280] sm:$0xff]
    %v105 = vld [vmem:[%s1 + $0x288] sm:$0xff]
    %v106 = vld [vmem:[%s1 + $0x290] sm:$0xff]
    %v107 = vld [vmem:[%s1 + $0x298] sm:$0xff]
    %v108 = vld [vmem:[%s1 + $0x2a0] sm:$0xff]
    %v109 = vld [vmem:[%s1 + $0x2a8] sm:$0xff]
    %v110 = vld [vmem:[%s1 + $0x2b0] sm:$0xff]
    %v111 = vld [vmem:[%s1 + $0x2b8] sm:$0xff]
    %v112 = vld [vmem:[%s1 + $0x2c0] sm:$0xff]
    %v113 = vld [vmem:[%s1 + $0x2c8] sm:$0xff]
    %v114 = vld [vmem:[%s1 + $0x2d0] sm:$0xff]
    %v115 = vld [vmem:[%s1 + $0x2d8] sm:$0xff]
    %v116 = vld [vmem:[%s1 + $0x2e0] sm:$0xff]
    %v117 = vld [vmem:[%s1 + $0x2e8] sm:$0xff]
    %v118 = vld [vmem:[%s1 + $0x2f0] sm:$0xff]
    %v119 = vld [vmem:[%s1 + $0x2f8] sm:$0xff]
    %v120 = vld [vmem:[%s1 + $0x300] sm:$0xff]
    %v121 = vld [vmem:[%s1 + $0x308] sm:$0xff]
    %v122 = vld [vmem:[%s1 + $0x310] sm:$0xff]
    %v123 = vld [vmem:[%s1 + $0x318] sm:$0xff]
    %v124 = vld [vmem:[%s1 + $0x320] sm:$0xff]
    %v125 = vld [vmem:[%s1 + $0x328] sm:$0xff]
    %v126 = vld [vmem:[%s1 + $0x330] sm:$0xff]
    %v127 = vld [vmem:[%s1 + $0x338] sm:$0xff]
    %v128 = vld [vmem:[%s1 + $0x340] sm:$0xff]
    %v129 = vld [vmem:[%s1 + $0x348] sm:$0xff]
    %v130 = vld [vmem:[%s1 + $0x350] sm:$0xff]
    %v131 = vld [vmem:[%s1 + $0x358] sm:$0xff]
    %v132 = vld [vmem:[%s1 + $0x360] sm:$0xff]
    %v133 = vld [vmem:[%s1 + $0x368] sm:$0xff]
    %v134 = vld [vmem:[%s1 + $0x370] sm:$0xff]
    %v135 = vld [vmem:[%s1 + $0x378] sm:$0xff]
    %v136 = vld [vmem:[%s1 + $0x380] sm:$0xff]
    %v137 = vld [vmem:[%s1 + $0x388] sm:$0xff]
    %v138 = vld [vmem:[%s1 + $0x390] sm:$0xff]
    %v139 = vld [vmem:[%s1 + $0x398] sm:$0xff]
    %v140 = vld [vmem:[%s1 + $0x3a0] sm:$0xff]
    %v141 = vld [vmem:[%s1 + $0x3a8] sm:$0xff]
    %v142 = vld [vmem:[%s1 + $0x3b0] sm:$0xff]
    %v143 = vld [vmem:[%s1 + $0x3b8] sm:$0xff]
    %v144 = vld [vmem:[%s1 + $0x3c0] sm:$0xff]
    %v145 = vld [vmem:[%s1 + $0x3c8] sm:$0xff]
    %v146 = vld [vmem:[%s1 + $0x3d0] sm:$0xff]
    %v147 = vld [vmem:[%s1 + $0x3d8] sm:$0xff]
    %v148 = vld [vmem:[%s1 + $0x3e0] sm:$0xff]
    %v149 = vld [vmem:[%s1 + $0x3e8] sm:$0xff]
    %v150 = vld [vmem:[%s1 + $0x3f0] sm:$0xff]
    %v151 = vld [vmem:[%s1 + $0x3f8] sm:$0xff]
    %v152 = vld [vmem:[%s1 + $0x400] sm:$0xff]
    %v153 = vld [vmem:[%s1 + $0x408] sm:$0xff]
    %v154 = vld [vmem:[%s1 + $0x410] sm:$0xff]
    %v155 = vld [vmem:[%s1 + $0x418] sm:$0xff]
    %v156 = vld [vmem:[%s1 + $0x420] sm:$0xff]
    %v157 = vld [vmem:[%s1 + $0x428] sm:$0xff]
    %v158 = vld [vmem:[%s1 + $0x430] sm:$0xff]
    %v159 = vld [vmem:[%s1 + $0x438] sm:$0xff]
    %v160 = vld [vmem:[%s1 + $0x440] sm:$0xff]
    %v161 = vld [vmem:[%s1 + $0x448] sm:$0xff]
    %v162 = vld [vmem:[%s1 + $0x450] sm:$0xff]
    %v163 = vld [vmem:[%s1 + $0x458] sm:$0xff]
    %v164 = vld [vmem:[%s1 + $0x460] sm:$0xff]
    %v165 = vld [vmem:[%s1 + $0x468] sm:$0xff]
    %v166 = vld [vmem:[%s1 + $0x470] sm:$0xff]
    %v167 = vld [vmem:[%s1 + $0x478] sm:$0xff]
    %v168 = vld [vmem:[%s1 + $0x480] sm:$0xff]
    %v169 = vld [vmem:[%s1 + $0x488] sm:$0xff]
    %v170 = vld [vmem:[%s1 + $0x490] sm:$0xff]
    %v171 = vld [vmem:[%s1 + $0x498] sm:$0xff]
    %v172 = vld [vmem:[%s1 + $0x4a0] sm:$0xff]
    %v173 = vld [vmem:[%s1 + $0x4a8] sm:$0xff]
    %v174 = vld [vmem:[%s1 + $0x4b0] sm:$0xff]
    %v175 = vld [vmem:[%s1 + $0x4b8] sm:$0xff]
    %v176 = vld [vmem:[%s1 + $0x4c0] sm:$0xff]
    %v177 = vld [vmem:[%s1 + $0x4c8] sm:$0xff]
    %v178 = vld [vmem:[%s1 + $0x4d0] sm:$0xff]
    %v179 = vld [vmem:[%s1 + $0x4d8] sm:$0xff]
    %v180 = vld [vmem:[%s1 + $0x4e0] sm:$0xff]
    %v181 = vld [vmem:[%s1 + $0x4e8] sm:$0xff]
    %v182 = vld [vmem:[%s1 + $0x4f0] sm:$0xff]
    %v183 = vld [vmem:[%s1 + $0x4f8] sm:$0xff]
    %v184 = vld [vmem:[%s1 + $0x500] sm:$0xff]
    %v185 = vld [vmem:[%s1 + $0x508] sm:$0xff]
    %v186 = vld [vmem:[%s1 + $0x510] sm:$0xff]
    %v187 = vld [vmem:[%s1 + $0x518] sm:$0xff]
    %v188 = vld [vmem:[%s1 + $0x520] sm:$0xff]
    %v189 = vld [vmem:[%s1 + $0x528] sm:$0xff]
    %v190 = vld [vmem:[%s1 + $0x530] sm:$0xff]
    %v191 = vld [vmem:[%s1 + $0x538] sm:$0xff]
    %v192 = vld [vmem:[%s1 + $0x540] sm:$0xff]
    %v193 = vld [vmem:[%s1 + $0x548] sm:$0xff]
    %v194 = vld [vmem:[%s1 + $0x550] sm:$0xff]
    %v195 = vld [vmem:[%s1 + $0x558] sm:$0xff]
    %v196 = vld [vmem:[%s1 + $0x560] sm:$0xff]
    %v197 = vld [vmem:[%s1 + $0x568] sm:$0xff]
    %v198 = vld [vmem:[%s1 + $0x570] sm:$0xff]
    %v199 = vld [vmem:[%s1 + $0x578] sm:$0xff]
    %v200 = vld [vmem:[%s1 + $0x580] sm:$0xff]
    %v201 = vld [vmem:[%s1 + $0x588] sm:$0xff]
    %v202 = vld [vmem:[%s1 + $0x590] sm:$0xff]
    %v203 = vld [vmem:[%s1 + $0x598] sm:$0xff]
    %v204 = vld [vmem:[%s1 + $0x5a0] sm:$0xff]
    %v205 = vld [vmem:[%s1 + $0x5a8] sm:$0xff]
    %v206 = vld [vmem:[%s1 + $0x5b0] sm:$0xff]
    %v207 = vld [vmem:[%s1 + $0x5b8] sm:$0xff]
    %v208 = vld [vmem:[%s1 + $0x5c0] sm:$0xff]
    %v209 = vld [vmem:[%s1 + $0x5c8] sm:$0xff]
    %v210 = vld [vmem:[%s1 + $0x5d0] sm:$0xff]
    %v211 = vld [vmem:[%s1 + $0x5d8] sm:$0xff]
    %v212 = vld [vmem:[%s1 + $0x5e0] sm:$0xff]
    %v213 = vld [vmem:[%s1 + $0x5e8] sm:$0xff]
    %v214 = vld [vmem:[%s1 + $0x5f0] sm:$0xff]
    %v215 = vld [vmem:[%s1 + $0x5f8] sm:$0xff]
    %v216 = vld [vmem:[%s1 + $0x600] sm:$0xff]
    %v217 = vld [vmem:[%s1 + $0x608] sm:$0xff]
    %v218 = vld [vmem:[%s1 + $0x610] sm:$0xff]
    %v219 = vld [vmem:[%s1 + $0x618] sm:$0xff]
    %v220 = vld [vmem:[%s1 + $0x620] sm:$0xff]
    %v221 = vld [vmem:[%s1 + $0x628] sm:$0xff]
    %v222 = vld [vmem:[%s1 + $0x630] sm:$0xff]
    %v223 = vld [vmem:[%s1 + $0x638] sm:$0xff]
    %v224 = vld [vmem:[%s1 + $0x640] sm:$0xff]
    %v225 = vld [vmem:[%s1 + $0x648] sm:$0xff]
    %v226 = vld [vmem:[%s1 + $0x650] sm:$0xff]
    %v227 = vld [vmem:[%s1 + $0x658] sm:$0xff]
    %v228 = vld [vmem:[%s1 + $0x660] sm:$0xff]
    %v229 = vld [vmem:[%s1 + $0x668] sm:$0xff]
    %v230 = vld [vmem:[%s1 + $0x670] sm:$0xff]
    %v231 = vld [vmem:[%s1 + $0x678] sm:$0xff]
    %v232 = vld [vmem:[%s1 + $0x680] sm:$0xff]
    %v233 = vld [vmem:[%s1 + $0x688] sm:$0xff]
    %v234 = vld [vmem:[%s1 + $0x690] sm:$0xff]
    %v235 = vld [vmem:[%s1 + $0x698] sm:$0xff]
    %v236 = vld [vmem:[%s1 + $0x6a0] sm:$0xff]
    %v237 = vld [vmem:[%s1 + $0x6a8] sm:$0xff]
    %v238 = vld [vmem:[%s1 + $0x6b0] sm:$0xff]
    %v239 = vld [vmem:[%s1 + $0x6b8] sm:$0xff]
    %v240 = vld [vmem:[%s1 + $0x6c0] sm:$0xff]
    %v241 = vld [vmem:[%s1 + $0x6c8] sm:$0xff]
    %v242 = vld [vmem:[%s1 + $0x6d0] sm:$0xff]
    %v243 = vld [vmem:[%s1 + $0x6d8] sm:$0xff]
    %v244 = vld [vmem:[%s1 + $0x6e0] sm:$0xff]
    %v245 = vld [vmem:[%s1 + $0x6e8] sm:$0xff]
    %v246 = vld [vmem:[%s1 + $0x6f0] sm:$0xff]
    %v247 = vld [vmem:[%s1 + $0x6f8] sm:$0xff]
    %v248 = vld [vmem:[%s1 + $0x700] sm:$0xff]
    %v249 = vld [vmem:[%s1 + $0x708] sm:$0xff]
    %v250 = vld [vmem:[%s1 + $0x710] sm:$0xff]
    %v251 = vld [vmem:[%s1 + $0x718] sm:$0xff]
    %v252 = vld [vmem:[%s1 + $0x720] sm:$0xff]
    %v253 = vld [vmem:[%s1 + $0x728] sm:$0xff]
    %v254 = vld [vmem:[%s1 + $0x730] sm:$0xff]
    %v255 = vld [vmem:[%s1 + $0x738] sm:$0xff]
    %v256 = vld [vmem:[%s1 + $0x740] sm:$0xff]
    %v257 = vld [vmem:[%s1 + $0x748] sm:$0xff]
    %v258 = vld [vmem:[%s1 + $0x750] sm:$0xff]
    %v259 = vld [vmem:[%s1 + $0x758] sm:$0xff]
    %v260 = vld [vmem:[%s1 + $0x760] sm:$0xff]
    %v261 = vld [vmem:[%s1 + $0x768] sm:$0xff]
    %v262 = vld [vmem:[%s1 + $0x770] sm:$0xff]
    %v263 = vld [vmem:[%s1 + $0x778] sm:$0xff]
    %v264 = vld [vmem:[%s1 + $0x780] sm:$0xff]
    %v265 = vld [vmem:[%s1 + $0x788] sm:$0xff]
    %v266 = vld [vmem:[%s1 + $0x790] sm:$0xff]
    %v267 = vld [vmem:[%s1 + $0x798] sm:$0xff]
    %v268 = vld [vmem:[%s1 + $0x7a0] sm:$0xff]
    %v269 = vld [vmem:[%s1 + $0x7a8] sm:$0xff]
    %v270 = vld [vmem:[%s1 + $0x7b0] sm:$0xff]
    %v271 = vld [vmem:[%s1 + $0x7b8] sm:$0xff]
    %v272 = vld [vmem:[%s1 + $0x7c0] sm:$0xff]
    %v273 = vld [vmem:[%s1 + $0x7c8] sm:$0xff]
    %v274 = vld [vmem:[%s1 + $0x7d0] sm:$0xff]
    %v275 = vld [vmem:[%s1 + $0x7d8] sm:$0xff]
    %v276 = vld [vmem:[%s1 + $0x7e0] sm:$0xff]
    %v277 = vld [vmem:[%s1 + $0x7e8] sm:$0xff]
    %v278 = vld [vmem:[%s1 + $0x7f0] sm:$0xff]
    %v279 = vld [vmem:[%s1 + $0x7f8] sm:$0xff]
    %v280 = vld [vmem:[%s1 + $0x800] sm:$0xff]
    %v281 = vld [vmem:[%s1 + $0x808] sm:$0xff]
    %v282 = vld [vmem:[%s1 + $0x810] sm:$0xff]
    %v283 = vld [vmem:[%s1 + $0x818] sm:$0xff]
    %v284 = vld [vmem:[%s1 + $0x820] sm:$0xff]
    %v285 = vld [vmem:[%s1 + $0x828] sm:$0xff]
    %v286 = vld [vmem:[%s1 + $0x830] sm:$0xff]
    %v287 = vld [vmem:[%s1 + $0x838] sm:$0xff]
    %v288 = vld [vmem:[%s1 + $0x840] sm:$0xff]
    %v289 = vld [vmem:[%s1 + $0x848] sm:$0xff]
    %v290 = vld [vmem:[%s1 + $0x850] sm:$0xff]
    %v291 = vld [vmem:[%s1 + $0x858] sm:$0xff]
    %v292 = vld [vmem:[%s1 + $0x860] sm:$0xff]
    %v293 = vld [vmem:[%s1 + $0x868] sm:$0xff]
    %v294 = vld [vmem:[%s1 + $0x870] sm:$0xff]
    %v295 = vld [vmem:[%s1 + $0x878] sm:$0xff]
    %v296 = vld [vmem:[%s1 + $0x880] sm:$0xff]
    %v297 = vld [vmem:[%s1 + $0x888] sm:$0xff]
    %v298 = vld [vmem:[%s1 + $0x890] sm:$0xff]
    %v299 = vld [vmem:[%s1 + $0x898] sm:$0xff]
    %v300 = vld [vmem:[%s1 + $0x8a0] sm:$0xff]
    %v301 = vld [vmem:[%s1 + $0x8a8] sm:$0xff]
    %v302 = vld [vmem:[%s1 + $0x8b0] sm:$0xff]
    %v303 = vld [vmem:[%s1 + $0x8b8] sm:$0xff]
    %v304 = vld [vmem:[%s1 + $0x8c0] sm:$0xff]
    %v305 = vld [vmem:[%s1 + $0x8c8] sm:$0xff]
    %v306 = vld [vmem:[%s1 + $0x8d0] sm:$0xff]
    %v307 = vld [vmem:[%s1 + $0x8d8] sm:$0xff]
    %v308 = vld [vmem:[%s1 + $0x8e0] sm:$0xff]
    %v309 = vld [vmem:[%s1 + $0x8e8] sm:$0xff]
    %v310 = vld [vmem:[%s1 + $0x8f0] sm:$0xff]
    %v311 = vld [vmem:[%s1 + $0x8f8] sm:$0xff]
    %v312 = vld [vmem:[%s1 + $0x900] sm:$0xff]
    %v313 = vld [vmem:[%s1 + $0x908] sm:$0xff]
    %v314 = vld [vmem:[%s1 + $0x910] sm:$0xff]
    %v315 = vld [vmem:[%s1 + $0x918] sm:$0xff]
    %v316 = vld [vmem:[%s1 + $0x920] sm:$0xff]
    %v317 = vld [vmem:[%s1 + $0x928] sm:$0xff]
    %v318 = vld [vmem:[%s1 + $0x930] sm:$0xff]
    %v319 = vld [vmem:[%s1 + $0x938] sm:$0xff]
    %v320 = vld [vmem:[%s1 + $0x940] sm:$0xff]
    %v321 = vld [vmem:[%s1 + $0x948] sm:$0xff]
    %v322 = vld [vmem:[%s1 + $0x950] sm:$0xff]
    %v323 = vld [vmem:[%s1 + $0x958] sm:$0xff]
    %v324 = vld [vmem:[%s1 + $0x960] sm:$0xff]
    %v325 = vld [vmem:[%s1 + $0x968] sm:$0xff]
    %v326 = vld [vmem:[%s1 + $0x970] sm:$0xff]
    %v327 = vld [vmem:[%s1 + $0x978] sm:$0xff]
    %v328 = vld [vmem:[%s1 + $0x980] sm:$0xff]
    %v329 = vld [vmem:[%s1 + $0x988] sm:$0xff]
    %v330 = vld [vmem:[%s1 + $0x990] sm:$0xff]
    %v331 = vld [vmem:[%s1 + $0x998] sm:$0xff]
    %v332 = vld [vmem:[%s1 + $0x9a0] sm:$0xff]
    %v333 = vld [vmem:[%s1 + $0x9a8] sm:$0xff]
    %v334 = vld [vmem:[%s1 + $0x9b0] sm:$0xff]
    %v335 = vld [vmem:[%s1 + $0x9b8] sm:$0xff]
    %v336 = vld [vmem:[%s1 + $0x9c0] sm:$0xff]
    %v337 = vld [vmem:[%s1 + $0x9c8] sm:$0xff]
    %v338 = vld [vmem:[%s1 + $0x9d0] sm:$0xff]
    %v339 = vld [vmem:[%s1 + $0x9d8] sm:$0xff]
    %v340 = vld [vmem:[%s1 + $0x9e0] sm:$0xff]
    %v341 = vld [vmem:[%s1 + $0x9e8] sm:$0xff]
    %v342 = vld [vmem:[%s1 + $0x9f0] sm:$0xff]
    %v343 = vld [vmem:[%s1 + $0x9f8] sm:$0xff]
    %v344 = vld [vmem:[%s1 + $0xa00] sm:$0xff]
    %v345 = vld [vmem:[%s1 + $0xa08] sm:$0xff]
    %v346 = vld [vmem:[%s1 + $0xa10] sm:$0xff]
    %v347 = vld [vmem:[%s1 + $0xa18] sm:$0xff]
    %v348 = vld [vmem:[%s1 + $0xa20] sm:$0xff]
    %v349 = vld [vmem:[%s1 + $0xa28] sm:$0xff]
    %v350 = vld [vmem:[%s1 + $0xa30] sm:$0xff]
    %v351 = vld [vmem:[%s1 + $0xa38] sm:$0xff]
    %v352 = vld [vmem:[%s1 + $0xa40] sm:$0xff]
    %v353 = vld [vmem:[%s1 + $0xa48] sm:$0xff]
    %v354 = vld [vmem:[%s1 + $0xa50] sm:$0xff]
    %v355 = vld [vmem:[%s1 + $0xa58] sm:$0xff]
    %v356 = vld [vmem:[%s1 + $0xa60] sm:$0xff]
    %v357 = vld [vmem:[%s1 + $0xa68] sm:$0xff]
    %v358 = vld [vmem:[%s1 + $0xa70] sm:$0xff]
    %v359 = vld [vmem:[%s1 + $0xa78] sm:$0xff]
    %v360 = vld [vmem:[%s1 + $0xa80] sm:$0xff]
    %v361 = vld [vmem:[%s1 + $0xa88] sm:$0xff]
    %v362 = vld [vmem:[%s1 + $0xa90] sm:$0xff]
    %v363 = vld [vmem:[%s1 + $0xa98] sm:$0xff]
    %v364 = vld [vmem:[%s1 + $0xaa0] sm:$0xff]
    %v365 = vld [vmem:[%s1 + $0xaa8] sm:$0xff]
    %v366 = vld [vmem:[%s1 + $0xab0] sm:$0xff]
    %v367 = vld [vmem:[%s1 + $0xab8] sm:$0xff]
    %v368 = vld [vmem:[%s1 + $0xac0] sm:$0xff]
    %v369 = vld [vmem:[%s1 + $0xac8] sm:$0xff]
    %v370 = vld [vmem:[%s1 + $0xad0] sm:$0xff]
    %v371 = vld [vmem:[%s1 + $0xad8] sm:$0xff]
    %v372 = vld [vmem:[%s1 + $0xae0] sm:$0xff]
    %v373 = vld [vmem:[%s1 + $0xae8] sm:$0xff]
    %v374 = vld [vmem:[%s1 + $0xaf0] sm:$0xff]
    %v375 = vld [vmem:[%s1 + $0xaf8] sm:$0xff]
    %v376 = vld [vmem:[%s1 + $0xb00] sm:$0xff]
    %v377 = vld [vmem:[%s1 + $0xb08] sm:$0xff]
    %v378 = vld [vmem:[%s1 + $0xb10] sm:$0xff]
    %v379 = vld [vmem:[%s1 + $0xb18] sm:$0xff]
    %v380 = vld [vmem:[%s1 + $0xb20] sm:$0xff]
    %v381 = vld [vmem:[%s1 + $0xb28] sm:$0xff]
    %v382 = vld [vmem:[%s1 + $0xb30] sm:$0xff]
    %v383 = vld [vmem:[%s1 + $0xb38] sm:$0xff]
    %v384 = vld [vmem:[%s1 + $0xb40] sm:$0xff]
    %v385 = vld [vmem:[%s1 + $0xb48] sm:$0xff]
    %v386 = vld [vmem:[%s1 + $0xb50] sm:$0xff]
    %v387 = vld [vmem:[%s1 + $0xb58] sm:$0xff]
    %v388 = vld [vmem:[%s1 + $0xb60] sm:$0xff]
    %v389 = vld [vmem:[%s1 + $0xb68] sm:$0xff]
    %v390 = vld [vmem:[%s1 + $0xb70] sm:$0xff]
    %v391 = vld [vmem:[%s1 + $0xb78] sm:$0xff]
    %v392 = vld [vmem:[%s1 + $0xb80] sm:$0xff]
    %v393 = vld [vmem:[%s1 + $0xb88] sm:$0xff]
    %v394 = vld [vmem:[%s1 + $0xb90] sm:$0xff]
    %v395 = vld [vmem:[%s1 + $0xb98] sm:$0xff]
    %v396 = vld [vmem:[%s1 + $0xba0] sm:$0xff]
    %v397 = vld [vmem:[%s1 + $0xba8] sm:$0xff]
    %v398 = vld [vmem:[%s1 + $0xbb0] sm:$0xff]
    %v399 = vld [vmem:[%s1 + $0xbb8] sm:$0xff]
    %v400 = vld [vmem:[%s1 + $0xbc0] sm:$0xff]
    %v401 = vld [vmem:[%s1 + $0xbc8] sm:$0xff]
    %v402 = vld [vmem:[%s1 + $0xbd0] sm:$0xff]
    %v403 = vld [vmem:[%s1 + $0xbd8] sm:$0xff]
    %v404 = vld [vmem:[%s1 + $0xbe0] sm:$0xff]
    %v405 = vld [vmem:[%s1 + $0xbe8] sm:$0xff]
    %v406 = vld [vmem:[%s1 + $0xbf0] sm:$0xff]
    %v407 = vld [vmem:[%s1 + $0xbf8] sm:$0xff]
    %v408 = vld [vmem:[%s2] sm:$0xf]
    %v410 = vlaneseq
    %v411 = vshrl.u32 %v410, 7
    %v412 = vsub.s32 0, %v411
    %v413 = vrot.slane %v408, %v412
    %v414 = vlaneseq
    %v415 = vshrl.u32 %v414, 7
    %v416 = vsub.s32 1, %v415
    %v417 = vrot.slane %v408, %v416
    %v418 = vlaneseq
    %v419 = vshrl.u32 %v418, 7
    %v420 = vsub.s32 2, %v419
    %v421 = vrot.slane %v408, %v420
    %v422 = vlaneseq
    %v423 = vshrl.u32 %v422, 7
    %v424 = vsub.s32 3, %v423
    %v425 = vrot.slane %v408, %v424
    %v432 = vcombine.high %v22, %v22
    %v434 = vunpack.c.l.s4 1966171168
    %v435 = vunpack.c.0.s8 %v434
    %v436 = vlaneseq
    %v437 = vshrl.u32 %v436, 7
    %v438 = vsub.s32 %v435, %v437
    %v439 = vrot.slane %v22, %v438
    %v441 = vunpack.c.l.s4 1966171168
    %v442 = vunpack.c.0.s8 %v441
    %v443 = vlaneseq
    %v444 = vshrl.u32 %v443, 7
    %v445 = vsub.s32 %v442, %v444
    %v446 = vrot.slane %v432, %v445
    %v447 = vcombine.high %v439, %v439
    %v448 = vcombine.high %v446, %v446
    %v450 = vunpack.c.l.s4 1966171168
    %v451 = vunpack.c.0.s8 %v450
    %v452 = vlaneseq
    %v453 = vshrl.u32 %v452, 7
    %v454 = vsub.s32 %v451, %v453
    %v455 = vrot.slane %v439, %v454
    %v457 = vunpack.c.l.s4 1966171168
    %v458 = vunpack.c.0.s8 %v457
    %v459 = vlaneseq
    %v460 = vshrl.u32 %v459, 7
    %v461 = vsub.s32 %v458, %v460
    %v462 = vrot.slane %v446, %v461
    %v464 = vunpack.c.l.s4 1966171168
    %v465 = vunpack.c.0.s8 %v464
    %v466 = vlaneseq
    %v467 = vshrl.u32 %v466, 7
    %v468 = vsub.s32 %v465, %v467
    %v469 = vrot.slane %v447, %v468
    %v471 = vunpack.c.l.s4 1966171168
    %v472 = vunpack.c.0.s8 %v471
    %v473 = vlaneseq
    %v474 = vshrl.u32 %v473, 7
    %v475 = vsub.s32 %v472, %v474
    %v476 = vrot.slane %v448, %v475
    %v477 = vcombine.high %v455, %v455
    %v478 = vcombine.high %v462, %v462
    %v479 = vcombine.high %v469, %v469
    %v480 = vcombine.high %v476, %v476
    %v482 = vunpack.c.l.s4 1966171168
    %v483 = vunpack.c.0.s8 %v482
    %v484 = vlaneseq
    %v485 = vshrl.u32 %v484, 7
    %v486 = vsub.s32 %v483, %v485
    %v487 = vrot.slane %v23, %v486
    %v488 = vcombine.high %v487, %v487
    %v490 = vunpack.c.l.s4 1966171168
    %v491 = vunpack.c.0.s8 %v490
    %v492 = vlaneseq
    %v493 = vshrl.u32 %v492, 7
    %v494 = vsub.s32 %v491, %v493
    %v495 = vrot.slane %v487, %v494
    %v497 = vunpack.c.l.s4 1966171168
    %v498 = vunpack.c.0.s8 %v497
    %v499 = vlaneseq
    %v500 = vshrl.u32 %v499, 7
    %v501 = vsub.s32 %v498, %v500
    %v502 = vrot.slane %v488, %v501
    %v503 = vcombine.high %v495, %v495
    %v504 = vcombine.high %v502, %v502
    %v901 = vunpack.c.l.b16 %v24
    %v902 = vunpack.c.h.b16 %v24
    %v903 = vunpack.c.l.b16 %v25
    %v904 = vunpack.c.h.b16 %v25
    %v905 = vunpack.c.l.b16 %v26
    %v906 = vunpack.c.h.b16 %v26
    %v907 = vunpack.c.l.b16 %v27
    %v908 = vunpack.c.h.b16 %v27
    %v909 = vunpack.c.l.b16 %v28
    %v910 = vunpack.c.h.b16 %v28
    %v911 = vunpack.c.l.b16 %v29
    %v912 = vunpack.c.h.b16 %v29
    %v913 = vunpack.c.l.b16 %v30
    %v914 = vunpack.c.h.b16 %v30
    %v915 = vunpack.c.l.b16 %v31
    %v916 = vunpack.c.h.b16 %v31
    %v917 = vunpack.c.l.b16 %v32
    %v918 = vunpack.c.h.b16 %v32
    %v919 = vunpack.c.l.b16 %v33
    %v920 = vunpack.c.h.b16 %v33
    %v921 = vunpack.c.l.b16 %v34
    %v922 = vunpack.c.h.b16 %v34
    %v923 = vunpack.c.l.b16 %v35
    %v924 = vunpack.c.h.b16 %v35
    %v925 = vunpack.c.l.b16 %v36
    %v926 = vunpack.c.h.b16 %v36
    %v927 = vunpack.c.l.b16 %v37
    %v928 = vunpack.c.h.b16 %v37
    %v929 = vunpack.c.l.b16 %v38
    %v930 = vunpack.c.h.b16 %v38
    %v931 = vunpack.c.l.b16 %v39
    %v932 = vunpack.c.h.b16 %v39
    %v933 = vunpack.c.l.b16 %v40
    %v934 = vunpack.c.h.b16 %v40
    %v935 = vunpack.c.l.b16 %v41
    %v936 = vunpack.c.h.b16 %v41
    %v937 = vunpack.c.l.b16 %v42
    %v938 = vunpack.c.h.b16 %v42
    %v939 = vunpack.c.l.b16 %v43
    %v940 = vunpack.c.h.b16 %v43
    %v941 = vunpack.c.l.b16 %v44
    %v942 = vunpack.c.h.b16 %v44
    %v943 = vunpack.c.l.b16 %v45
    %v944 = vunpack.c.h.b16 %v45
    %v945 = vunpack.c.l.b16 %v46
    %v946 = vunpack.c.h.b16 %v46
    %v947 = vunpack.c.l.b16 %v47
    %v948 = vunpack.c.h.b16 %v47
    %v949 = vunpack.c.l.b16 %v48
    %v950 = vunpack.c.h.b16 %v48
    %v951 = vunpack.c.l.b16 %v49
    %v952 = vunpack.c.h.b16 %v49
    %v953 = vunpack.c.l.b16 %v50
    %v954 = vunpack.c.h.b16 %v50
    %v955 = vunpack.c.l.b16 %v51
    %v956 = vunpack.c.h.b16 %v51
    %v957 = vunpack.c.l.b16 %v52
    %v958 = vunpack.c.h.b16 %v52
    %v959 = vunpack.c.l.b16 %v53
    %v960 = vunpack.c.h.b16 %v53
    %v961 = vunpack.c.l.b16 %v54
    %v962 = vunpack.c.h.b16 %v54
    %v963 = vunpack.c.l.b16 %v55
    %v964 = vunpack.c.h.b16 %v55
    %v965 = vunpack.c.l.b16 %v56
    %v966 = vunpack.c.h.b16 %v56
    %v967 = vunpack.c.l.b16 %v57
    %v968 = vunpack.c.h.b16 %v57
    %v969 = vunpack.c.l.b16 %v58
    %v970 = vunpack.c.h.b16 %v58
    %v971 = vunpack.c.l.b16 %v59
    %v972 = vunpack.c.h.b16 %v59
    %v973 = vunpack.c.l.b16 %v60
    %v974 = vunpack.c.h.b16 %v60
    %v975 = vunpack.c.l.b16 %v61
    %v976 = vunpack.c.h.b16 %v61
    %v977 = vunpack.c.l.b16 %v62
    %v978 = vunpack.c.h.b16 %v62
    %v979 = vunpack.c.l.b16 %v63
    %v980 = vunpack.c.h.b16 %v63
    %v981 = vunpack.c.l.b16 %v64
    %v982 = vunpack.c.h.b16 %v64
    %v983 = vunpack.c.l.b16 %v65
    %v984 = vunpack.c.h.b16 %v65
    %v985 = vunpack.c.l.b16 %v66
    %v986 = vunpack.c.h.b16 %v66
    %v987 = vunpack.c.l.b16 %v67
    %v988 = vunpack.c.h.b16 %v67
    %v989 = vunpack.c.l.b16 %v68
    %v990 = vunpack.c.h.b16 %v68
    %v991 = vunpack.c.l.b16 %v69
    %v992 = vunpack.c.h.b16 %v69
    %v993 = vunpack.c.l.b16 %v70
    %v994 = vunpack.c.h.b16 %v70
    %v995 = vunpack.c.l.b16 %v71
    %v996 = vunpack.c.h.b16 %v71
    %v997 = vunpack.c.l.b16 %v72
    %v998 = vunpack.c.h.b16 %v72
    %v999 = vunpack.c.l.b16 %v73
    %v1000 = vunpack.c.h.b16 %v73
    %v1001 = vunpack.c.l.b16 %v74
    %v1002 = vunpack.c.h.b16 %v74
    %v1003 = vunpack.c.l.b16 %v75
    %v1004 = vunpack.c.h.b16 %v75
    %v1005 = vunpack.c.l.b16 %v76
    %v1006 = vunpack.c.h.b16 %v76
    %v1007 = vunpack.c.l.b16 %v77
    %v1008 = vunpack.c.h.b16 %v77
    %v1009 = vunpack.c.l.b16 %v78
    %v1010 = vunpack.c.h.b16 %v78
    %v1011 = vunpack.c.l.b16 %v79
    %v1012 = vunpack.c.h.b16 %v79
    %v1013 = vunpack.c.l.b16 %v80
    %v1014 = vunpack.c.h.b16 %v80
    %v1015 = vunpack.c.l.b16 %v81
    %v1016 = vunpack.c.h.b16 %v81
    %v1017 = vunpack.c.l.b16 %v82
    %v1018 = vunpack.c.h.b16 %v82
    %v1019 = vunpack.c.l.b16 %v83
    %v1020 = vunpack.c.h.b16 %v83
    %v1021 = vunpack.c.l.b16 %v84
    %v1022 = vunpack.c.h.b16 %v84
    %v1023 = vunpack.c.l.b16 %v85
    %v1024 = vunpack.c.h.b16 %v85
    %v1025 = vunpack.c.l.b16 %v86
    %v1026 = vunpack.c.h.b16 %v86
    %v1027 = vunpack.c.l.b16 %v87
    %v1028 = vunpack.c.h.b16 %v87
    %v1029 = vunpack.c.l.b16 %v88
    %v1030 = vunpack.c.h.b16 %v88
    %v1031 = vunpack.c.l.b16 %v89
    %v1032 = vunpack.c.h.b16 %v89
    %v1033 = vunpack.c.l.b16 %v90
    %v1034 = vunpack.c.h.b16 %v90
    %v1035 = vunpack.c.l.b16 %v91
    %v1036 = vunpack.c.h.b16 %v91
    %v1037 = vunpack.c.l.b16 %v92
    %v1038 = vunpack.c.h.b16 %v92
    %v1039 = vunpack.c.l.b16 %v93
    %v1040 = vunpack.c.h.b16 %v93
    %v1041 = vunpack.c.l.b16 %v94
    %v1042 = vunpack.c.h.b16 %v94
    %v1043 = vunpack.c.l.b16 %v95
    %v1044 = vunpack.c.h.b16 %v95
    %v1045 = vunpack.c.l.b16 %v96
    %v1046 = vunpack.c.h.b16 %v96
    %v1047 = vunpack.c.l.b16 %v97
    %v1048 = vunpack.c.h.b16 %v97
    %v1049 = vunpack.c.l.b16 %v98
    %v1050 = vunpack.c.h.b16 %v98
    %v1051 = vunpack.c.l.b16 %v99
    %v1052 = vunpack.c.h.b16 %v99
    %v1053 = vunpack.c.l.b16 %v100
    %v1054 = vunpack.c.h.b16 %v100
    %v1055 = vunpack.c.l.b16 %v101
    %v1056 = vunpack.c.h.b16 %v101
    %v1057 = vunpack.c.l.b16 %v102
    %v1058 = vunpack.c.h.b16 %v102
    %v1059 = vunpack.c.l.b16 %v103
    %v1060 = vunpack.c.h.b16 %v103
    %v1061 = vunpack.c.l.b16 %v104
    %v1062 = vunpack.c.h.b16 %v104
    %v1063 = vunpack.c.l.b16 %v105
    %v1064 = vunpack.c.h.b16 %v105
    %v1065 = vunpack.c.l.b16 %v106
    %v1066 = vunpack.c.h.b16 %v106
    %v1067 = vunpack.c.l.b16 %v107
    %v1068 = vunpack.c.h.b16 %v107
    %v1069 = vunpack.c.l.b16 %v108
    %v1070 = vunpack.c.h.b16 %v108
    %v1071 = vunpack.c.l.b16 %v109
    %v1072 = vunpack.c.h.b16 %v109
    %v1073 = vunpack.c.l.b16 %v110
    %v1074 = vunpack.c.h.b16 %v110
    %v1075 = vunpack.c.l.b16 %v111
    %v1076 = vunpack.c.h.b16 %v111
    %v1077 = vunpack.c.l.b16 %v112
    %v1078 = vunpack.c.h.b16 %v112
    %v1079 = vunpack.c.l.b16 %v113
    %v1080 = vunpack.c.h.b16 %v113
    %v1081 = vunpack.c.l.b16 %v114
    %v1082 = vunpack.c.h.b16 %v114
    %v1083 = vunpack.c.l.b16 %v115
    %v1084 = vunpack.c.h.b16 %v115
    %v1085 = vunpack.c.l.b16 %v116
    %v1086 = vunpack.c.h.b16 %v116
    %v1087 = vunpack.c.l.b16 %v117
    %v1088 = vunpack.c.h.b16 %v117
    %v1089 = vunpack.c.l.b16 %v118
    %v1090 = vunpack.c.h.b16 %v118
    %v1091 = vunpack.c.l.b16 %v119
    %v1092 = vunpack.c.h.b16 %v119
    %v1093 = vunpack.c.l.b16 %v120
    %v1094 = vunpack.c.h.b16 %v120
    %v1095 = vunpack.c.l.b16 %v121
    %v1096 = vunpack.c.h.b16 %v121
    %v1097 = vunpack.c.l.b16 %v122
    %v1098 = vunpack.c.h.b16 %v122
    %v1099 = vunpack.c.l.b16 %v123
    %v1100 = vunpack.c.h.b16 %v123
    %v1101 = vunpack.c.l.b16 %v124
    %v1102 = vunpack.c.h.b16 %v124
    %v1103 = vunpack.c.l.b16 %v125
    %v1104 = vunpack.c.h.b16 %v125
    %v1105 = vunpack.c.l.b16 %v126
    %v1106 = vunpack.c.h.b16 %v126
    %v1107 = vunpack.c.l.b16 %v127
    %v1108 = vunpack.c.h.b16 %v127
    %v1109 = vunpack.c.l.b16 %v128
    %v1110 = vunpack.c.h.b16 %v128
    %v1111 = vunpack.c.l.b16 %v129
    %v1112 = vunpack.c.h.b16 %v129
    %v1113 = vunpack.c.l.b16 %v130
    %v1114 = vunpack.c.h.b16 %v130
    %v1115 = vunpack.c.l.b16 %v131
    %v1116 = vunpack.c.h.b16 %v131
    %v1117 = vunpack.c.l.b16 %v132
    %v1118 = vunpack.c.h.b16 %v132
    %v1119 = vunpack.c.l.b16 %v133
    %v1120 = vunpack.c.h.b16 %v133
    %v1121 = vunpack.c.l.b16 %v134
    %v1122 = vunpack.c.h.b16 %v134
    %v1123 = vunpack.c.l.b16 %v135
    %v1124 = vunpack.c.h.b16 %v135
    %v1125 = vunpack.c.l.b16 %v136
    %v1126 = vunpack.c.h.b16 %v136
    %v1127 = vunpack.c.l.b16 %v137
    %v1128 = vunpack.c.h.b16 %v137
    %v1129 = vunpack.c.l.b16 %v138
    %v1130 = vunpack.c.h.b16 %v138
    %v1131 = vunpack.c.l.b16 %v139
    %v1132 = vunpack.c.h.b16 %v139
    %v1133 = vunpack.c.l.b16 %v140
    %v1134 = vunpack.c.h.b16 %v140
    %v1135 = vunpack.c.l.b16 %v141
    %v1136 = vunpack.c.h.b16 %v141
    %v1137 = vunpack.c.l.b16 %v142
    %v1138 = vunpack.c.h.b16 %v142
    %v1139 = vunpack.c.l.b16 %v143
    %v1140 = vunpack.c.h.b16 %v143
    %v1141 = vunpack.c.l.b16 %v144
    %v1142 = vunpack.c.h.b16 %v144
    %v1143 = vunpack.c.l.b16 %v145
    %v1144 = vunpack.c.h.b16 %v145
    %v1145 = vunpack.c.l.b16 %v146
    %v1146 = vunpack.c.h.b16 %v146
    %v1147 = vunpack.c.l.b16 %v147
    %v1148 = vunpack.c.h.b16 %v147
    %v1149 = vunpack.c.l.b16 %v148
    %v1150 = vunpack.c.h.b16 %v148
    %v1151 = vunpack.c.l.b16 %v149
    %v1152 = vunpack.c.h.b16 %v149
    %v1153 = vunpack.c.l.b16 %v150
    %v1154 = vunpack.c.h.b16 %v150
    %v1155 = vunpack.c.l.b16 %v151
    %v1156 = vunpack.c.h.b16 %v151
    %v1157 = vunpack.c.l.b16 %v152
    %v1158 = vunpack.c.h.b16 %v152
    %v1159 = vunpack.c.l.b16 %v153
    %v1160 = vunpack.c.h.b16 %v153
    %v1161 = vunpack.c.l.b16 %v154
    %v1162 = vunpack.c.h.b16 %v154
    %v1163 = vunpack.c.l.b16 %v155
    %v1164 = vunpack.c.h.b16 %v155
    %v1165 = vunpack.c.l.b16 %v156
    %v1166 = vunpack.c.h.b16 %v156
    %v1167 = vunpack.c.l.b16 %v157
    %v1168 = vunpack.c.h.b16 %v157
    %v1169 = vunpack.c.l.b16 %v158
    %v1170 = vunpack.c.h.b16 %v158
    %v1171 = vunpack.c.l.b16 %v159
    %v1172 = vunpack.c.h.b16 %v159
    %v1173 = vunpack.c.l.b16 %v160
    %v1174 = vunpack.c.h.b16 %v160
    %v1175 = vunpack.c.l.b16 %v161
    %v1176 = vunpack.c.h.b16 %v161
    %v1177 = vunpack.c.l.b16 %v162
    %v1178 = vunpack.c.h.b16 %v162
    %v1179 = vunpack.c.l.b16 %v163
    %v1180 = vunpack.c.h.b16 %v163
    %v1181 = vunpack.c.l.b16 %v164
    %v1182 = vunpack.c.h.b16 %v164
    %v1183 = vunpack.c.l.b16 %v165
    %v1184 = vunpack.c.h.b16 %v165
    %v1185 = vunpack.c.l.b16 %v166
    %v1186 = vunpack.c.h.b16 %v166
    %v1187 = vunpack.c.l.b16 %v167
    %v1188 = vunpack.c.h.b16 %v167
    %v1189 = vunpack.c.l.b16 %v168
    %v1190 = vunpack.c.h.b16 %v168
    %v1191 = vunpack.c.l.b16 %v169
    %v1192 = vunpack.c.h.b16 %v169
    %v1193 = vunpack.c.l.b16 %v170
    %v1194 = vunpack.c.h.b16 %v170
    %v1195 = vunpack.c.l.b16 %v171
    %v1196 = vunpack.c.h.b16 %v171
    %v1197 = vunpack.c.l.b16 %v172
    %v1198 = vunpack.c.h.b16 %v172
    %v1199 = vunpack.c.l.b16 %v173
    %v1200 = vunpack.c.h.b16 %v173
    %v1201 = vunpack.c.l.b16 %v174
    %v1202 = vunpack.c.h.b16 %v174
    %v1203 = vunpack.c.l.b16 %v175
    %v1204 = vunpack.c.h.b16 %v175
    %v1205 = vunpack.c.l.b16 %v176
    %v1206 = vunpack.c.h.b16 %v176
    %v1207 = vunpack.c.l.b16 %v177
    %v1208 = vunpack.c.h.b16 %v177
    %v1209 = vunpack.c.l.b16 %v178
    %v1210 = vunpack.c.h.b16 %v178
    %v1211 = vunpack.c.l.b16 %v179
    %v1212 = vunpack.c.h.b16 %v179
    %v1213 = vunpack.c.l.b16 %v180
    %v1214 = vunpack.c.h.b16 %v180
    %v1215 = vunpack.c.l.b16 %v181
    %v1216 = vunpack.c.h.b16 %v181
    %v1217 = vunpack.c.l.b16 %v182
    %v1218 = vunpack.c.h.b16 %v182
    %v1219 = vunpack.c.l.b16 %v183
    %v1220 = vunpack.c.h.b16 %v183
    %v1221 = vunpack.c.l.b16 %v184
    %v1222 = vunpack.c.h.b16 %v184
    %v1223 = vunpack.c.l.b16 %v185
    %v1224 = vunpack.c.h.b16 %v185
    %v1225 = vunpack.c.l.b16 %v186
    %v1226 = vunpack.c.h.b16 %v186
    %v1227 = vunpack.c.l.b16 %v187
    %v1228 = vunpack.c.h.b16 %v187
    %v1229 = vunpack.c.l.b16 %v188
    %v1230 = vunpack.c.h.b16 %v188
    %v1231 = vunpack.c.l.b16 %v189
    %v1232 = vunpack.c.h.b16 %v189
    %v1233 = vunpack.c.l.b16 %v190
    %v1234 = vunpack.c.h.b16 %v190
    %v1235 = vunpack.c.l.b16 %v191
    %v1236 = vunpack.c.h.b16 %v191
    %v1237 = vunpack.c.l.b16 %v192
    %v1238 = vunpack.c.h.b16 %v192
    %v1239 = vunpack.c.l.b16 %v193
    %v1240 = vunpack.c.h.b16 %v193
    %v1241 = vunpack.c.l.b16 %v194
    %v1242 = vunpack.c.h.b16 %v194
    %v1243 = vunpack.c.l.b16 %v195
    %v1244 = vunpack.c.h.b16 %v195
    %v1245 = vunpack.c.l.b16 %v196
    %v1246 = vunpack.c.h.b16 %v196
    %v1247 = vunpack.c.l.b16 %v197
    %v1248 = vunpack.c.h.b16 %v197
    %v1249 = vunpack.c.l.b16 %v198
    %v1250 = vunpack.c.h.b16 %v198
    %v1251 = vunpack.c.l.b16 %v199
    %v1252 = vunpack.c.h.b16 %v199
    %v1253 = vunpack.c.l.b16 %v200
    %v1254 = vunpack.c.h.b16 %v200
    %v1255 = vunpack.c.l.b16 %v201
    %v1256 = vunpack.c.h.b16 %v201
    %v1257 = vunpack.c.l.b16 %v202
    %v1258 = vunpack.c.h.b16 %v202
    %v1259 = vunpack.c.l.b16 %v203
    %v1260 = vunpack.c.h.b16 %v203
    %v1261 = vunpack.c.l.b16 %v204
    %v1262 = vunpack.c.h.b16 %v204
    %v1263 = vunpack.c.l.b16 %v205
    %v1264 = vunpack.c.h.b16 %v205
    %v1265 = vunpack.c.l.b16 %v206
    %v1266 = vunpack.c.h.b16 %v206
    %v1267 = vunpack.c.l.b16 %v207
    %v1268 = vunpack.c.h.b16 %v207
    %v1269 = vunpack.c.l.b16 %v208
    %v1270 = vunpack.c.h.b16 %v208
    %v1271 = vunpack.c.l.b16 %v209
    %v1272 = vunpack.c.h.b16 %v209
    %v1273 = vunpack.c.l.b16 %v210
    %v1274 = vunpack.c.h.b16 %v210
    %v1275 = vunpack.c.l.b16 %v211
    %v1276 = vunpack.c.h.b16 %v211
    %v1277 = vunpack.c.l.b16 %v212
    %v1278 = vunpack.c.h.b16 %v212
    %v1279 = vunpack.c.l.b16 %v213
    %v1280 = vunpack.c.h.b16 %v213
    %v1281 = vunpack.c.l.b16 %v214
    %v1282 = vunpack.c.h.b16 %v214
    %v1283 = vunpack.c.l.b16 %v215
    %v1284 = vunpack.c.h.b16 %v215
    %v1285 = vunpack.c.l.b16 %v216
    %v1286 = vunpack.c.h.b16 %v216
    %v1287 = vunpack.c.l.b16 %v217
    %v1288 = vunpack.c.h.b16 %v217
    %v1289 = vunpack.c.l.b16 %v218
    %v1290 = vunpack.c.h.b16 %v218
    %v1291 = vunpack.c.l.b16 %v219
    %v1292 = vunpack.c.h.b16 %v219
    %v1293 = vunpack.c.l.b16 %v220
    %v1294 = vunpack.c.h.b16 %v220
    %v1295 = vunpack.c.l.b16 %v221
    %v1296 = vunpack.c.h.b16 %v221
    %v1297 = vunpack.c.l.b16 %v222
    %v1298 = vunpack.c.h.b16 %v222
    %v1299 = vunpack.c.l.b16 %v223
    %v1300 = vunpack.c.h.b16 %v223
    %v1301 = vunpack.c.l.b16 %v224
    %v1302 = vunpack.c.h.b16 %v224
    %v1303 = vunpack.c.l.b16 %v225
    %v1304 = vunpack.c.h.b16 %v225
    %v1305 = vunpack.c.l.b16 %v226
    %v1306 = vunpack.c.h.b16 %v226
    %v1307 = vunpack.c.l.b16 %v227
    %v1308 = vunpack.c.h.b16 %v227
    %v1309 = vunpack.c.l.b16 %v228
    %v1310 = vunpack.c.h.b16 %v228
    %v1311 = vunpack.c.l.b16 %v229
    %v1312 = vunpack.c.h.b16 %v229
    %v1313 = vunpack.c.l.b16 %v230
    %v1314 = vunpack.c.h.b16 %v230
    %v1315 = vunpack.c.l.b16 %v231
    %v1316 = vunpack.c.h.b16 %v231
    %v1317 = vunpack.c.l.b16 %v232
    %v1318 = vunpack.c.h.b16 %v232
    %v1319 = vunpack.c.l.b16 %v233
    %v1320 = vunpack.c.h.b16 %v233
    %v1321 = vunpack.c.l.b16 %v234
    %v1322 = vunpack.c.h.b16 %v234
    %v1323 = vunpack.c.l.b16 %v235
    %v1324 = vunpack.c.h.b16 %v235
    %v1325 = vunpack.c.l.b16 %v236
    %v1326 = vunpack.c.h.b16 %v236
    %v1327 = vunpack.c.l.b16 %v237
    %v1328 = vunpack.c.h.b16 %v237
    %v1329 = vunpack.c.l.b16 %v238
    %v1330 = vunpack.c.h.b16 %v238
    %v1331 = vunpack.c.l.b16 %v239
    %v1332 = vunpack.c.h.b16 %v239
    %v1333 = vunpack.c.l.b16 %v240
    %v1334 = vunpack.c.h.b16 %v240
    %v1335 = vunpack.c.l.b16 %v241
    %v1336 = vunpack.c.h.b16 %v241
    %v1337 = vunpack.c.l.b16 %v242
    %v1338 = vunpack.c.h.b16 %v242
    %v1339 = vunpack.c.l.b16 %v243
    %v1340 = vunpack.c.h.b16 %v243
    %v1341 = vunpack.c.l.b16 %v244
    %v1342 = vunpack.c.h.b16 %v244
    %v1343 = vunpack.c.l.b16 %v245
    %v1344 = vunpack.c.h.b16 %v245
    %v1345 = vunpack.c.l.b16 %v246
    %v1346 = vunpack.c.h.b16 %v246
    %v1347 = vunpack.c.l.b16 %v247
    %v1348 = vunpack.c.h.b16 %v247
    %v1349 = vunpack.c.l.b16 %v248
    %v1350 = vunpack.c.h.b16 %v248
    %v1351 = vunpack.c.l.b16 %v249
    %v1352 = vunpack.c.h.b16 %v249
    %v1353 = vunpack.c.l.b16 %v250
    %v1354 = vunpack.c.h.b16 %v250
    %v1355 = vunpack.c.l.b16 %v251
    %v1356 = vunpack.c.h.b16 %v251
    %v1357 = vunpack.c.l.b16 %v252
    %v1358 = vunpack.c.h.b16 %v252
    %v1359 = vunpack.c.l.b16 %v253
    %v1360 = vunpack.c.h.b16 %v253
    %v1361 = vunpack.c.l.b16 %v254
    %v1362 = vunpack.c.h.b16 %v254
    %v1363 = vunpack.c.l.b16 %v255
    %v1364 = vunpack.c.h.b16 %v255
    %v1365 = vunpack.c.l.b16 %v256
    %v1366 = vunpack.c.h.b16 %v256
    %v1367 = vunpack.c.l.b16 %v257
    %v1368 = vunpack.c.h.b16 %v257
    %v1369 = vunpack.c.l.b16 %v258
    %v1370 = vunpack.c.h.b16 %v258
    %v1371 = vunpack.c.l.b16 %v259
    %v1372 = vunpack.c.h.b16 %v259
    %v1373 = vunpack.c.l.b16 %v260
    %v1374 = vunpack.c.h.b16 %v260
    %v1375 = vunpack.c.l.b16 %v261
    %v1376 = vunpack.c.h.b16 %v261
    %v1377 = vunpack.c.l.b16 %v262
    %v1378 = vunpack.c.h.b16 %v262
    %v1379 = vunpack.c.l.b16 %v263
    %v1380 = vunpack.c.h.b16 %v263
    %v1381 = vunpack.c.l.b16 %v264
    %v1382 = vunpack.c.h.b16 %v264
    %v1383 = vunpack.c.l.b16 %v265
    %v1384 = vunpack.c.h.b16 %v265
    %v1385 = vunpack.c.l.b16 %v266
    %v1386 = vunpack.c.h.b16 %v266
    %v1387 = vunpack.c.l.b16 %v267
    %v1388 = vunpack.c.h.b16 %v267
    %v1389 = vunpack.c.l.b16 %v268
    %v1390 = vunpack.c.h.b16 %v268
    %v1391 = vunpack.c.l.b16 %v269
    %v1392 = vunpack.c.h.b16 %v269
    %v1393 = vunpack.c.l.b16 %v270
    %v1394 = vunpack.c.h.b16 %v270
    %v1395 = vunpack.c.l.b16 %v271
    %v1396 = vunpack.c.h.b16 %v271
    %v1397 = vunpack.c.l.b16 %v272
    %v1398 = vunpack.c.h.b16 %v272
    %v1399 = vunpack.c.l.b16 %v273
    %v1400 = vunpack.c.h.b16 %v273
    %v1401 = vunpack.c.l.b16 %v274
    %v1402 = vunpack.c.h.b16 %v274
    %v1403 = vunpack.c.l.b16 %v275
    %v1404 = vunpack.c.h.b16 %v275
    %v1405 = vunpack.c.l.b16 %v276
    %v1406 = vunpack.c.h.b16 %v276
    %v1407 = vunpack.c.l.b16 %v277
    %v1408 = vunpack.c.h.b16 %v277
    %v1409 = vunpack.c.l.b16 %v278
    %v1410 = vunpack.c.h.b16 %v278
    %v1411 = vunpack.c.l.b16 %v279
    %v1412 = vunpack.c.h.b16 %v279
    %v1413 = vunpack.c.l.b16 %v280
    %v1414 = vunpack.c.h.b16 %v280
    %v1415 = vunpack.c.l.b16 %v281
    %v1416 = vunpack.c.h.b16 %v281
    %v1417 = vunpack.c.l.b16 %v282
    %v1418 = vunpack.c.h.b16 %v282
    %v1419 = vunpack.c.l.b16 %v283
    %v1420 = vunpack.c.h.b16 %v283
    %v1421 = vunpack.c.l.b16 %v284
    %v1422 = vunpack.c.h.b16 %v284
    %v1423 = vunpack.c.l.b16 %v285
    %v1424 = vunpack.c.h.b16 %v285
    %v1425 = vunpack.c.l.b16 %v286
    %v1426 = vunpack.c.h.b16 %v286
    %v1427 = vunpack.c.l.b16 %v287
    %v1428 = vunpack.c.h.b16 %v287
    %v1429 = vunpack.c.l.b16 %v288
    %v1430 = vunpack.c.h.b16 %v288
    %v1431 = vunpack.c.l.b16 %v289
    %v1432 = vunpack.c.h.b16 %v289
    %v1433 = vunpack.c.l.b16 %v290
    %v1434 = vunpack.c.h.b16 %v290
    %v1435 = vunpack.c.l.b16 %v291
    %v1436 = vunpack.c.h.b16 %v291
    %v1437 = vunpack.c.l.b16 %v292
    %v1438 = vunpack.c.h.b16 %v292
    %v1439 = vunpack.c.l.b16 %v293
    %v1440 = vunpack.c.h.b16 %v293
    %v1441 = vunpack.c.l.b16 %v294
    %v1442 = vunpack.c.h.b16 %v294
    %v1443 = vunpack.c.l.b16 %v295
    %v1444 = vunpack.c.h.b16 %v295
    %v1445 = vunpack.c.l.b16 %v296
    %v1446 = vunpack.c.h.b16 %v296
    %v1447 = vunpack.c.l.b16 %v297
    %v1448 = vunpack.c.h.b16 %v297
    %v1449 = vunpack.c.l.b16 %v298
    %v1450 = vunpack.c.h.b16 %v298
    %v1451 = vunpack.c.l.b16 %v299
    %v1452 = vunpack.c.h.b16 %v299
    %v1453 = vunpack.c.l.b16 %v300
    %v1454 = vunpack.c.h.b16 %v300
    %v1455 = vunpack.c.l.b16 %v301
    %v1456 = vunpack.c.h.b16 %v301
    %v1457 = vunpack.c.l.b16 %v302
    %v1458 = vunpack.c.h.b16 %v302
    %v1459 = vunpack.c.l.b16 %v303
    %v1460 = vunpack.c.h.b16 %v303
    %v1461 = vunpack.c.l.b16 %v304
    %v1462 = vunpack.c.h.b16 %v304
    %v1463 = vunpack.c.l.b16 %v305
    %v1464 = vunpack.c.h.b16 %v305
    %v1465 = vunpack.c.l.b16 %v306
    %v1466 = vunpack.c.h.b16 %v306
    %v1467 = vunpack.c.l.b16 %v307
    %v1468 = vunpack.c.h.b16 %v307
    %v1469 = vunpack.c.l.b16 %v308
    %v1470 = vunpack.c.h.b16 %v308
    %v1471 = vunpack.c.l.b16 %v309
    %v1472 = vunpack.c.h.b16 %v309
    %v1473 = vunpack.c.l.b16 %v310
    %v1474 = vunpack.c.h.b16 %v310
    %v1475 = vunpack.c.l.b16 %v311
    %v1476 = vunpack.c.h.b16 %v311
    %v1477 = vunpack.c.l.b16 %v312
    %v1478 = vunpack.c.h.b16 %v312
    %v1479 = vunpack.c.l.b16 %v313
    %v1480 = vunpack.c.h.b16 %v313
    %v1481 = vunpack.c.l.b16 %v314
    %v1482 = vunpack.c.h.b16 %v314
    %v1483 = vunpack.c.l.b16 %v315
    %v1484 = vunpack.c.h.b16 %v315
    %v1485 = vunpack.c.l.b16 %v316
    %v1486 = vunpack.c.h.b16 %v316
    %v1487 = vunpack.c.l.b16 %v317
    %v1488 = vunpack.c.h.b16 %v317
    %v1489 = vunpack.c.l.b16 %v318
    %v1490 = vunpack.c.h.b16 %v318
    %v1491 = vunpack.c.l.b16 %v319
    %v1492 = vunpack.c.h.b16 %v319
    %v1493 = vunpack.c.l.b16 %v320
    %v1494 = vunpack.c.h.b16 %v320
    %v1495 = vunpack.c.l.b16 %v321
    %v1496 = vunpack.c.h.b16 %v321
    %v1497 = vunpack.c.l.b16 %v322
    %v1498 = vunpack.c.h.b16 %v322
    %v1499 = vunpack.c.l.b16 %v323
    %v1500 = vunpack.c.h.b16 %v323
    %v1501 = vunpack.c.l.b16 %v324
    %v1502 = vunpack.c.h.b16 %v324
    %v1503 = vunpack.c.l.b16 %v325
    %v1504 = vunpack.c.h.b16 %v325
    %v1505 = vunpack.c.l.b16 %v326
    %v1506 = vunpack.c.h.b16 %v326
    %v1507 = vunpack.c.l.b16 %v327
    %v1508 = vunpack.c.h.b16 %v327
    %v1509 = vunpack.c.l.b16 %v328
    %v1510 = vunpack.c.h.b16 %v328
    %v1511 = vunpack.c.l.b16 %v329
    %v1512 = vunpack.c.h.b16 %v329
    %v1513 = vunpack.c.l.b16 %v330
    %v1514 = vunpack.c.h.b16 %v330
    %v1515 = vunpack.c.l.b16 %v331
    %v1516 = vunpack.c.h.b16 %v331
    %v1517 = vunpack.c.l.b16 %v332
    %v1518 = vunpack.c.h.b16 %v332
    %v1519 = vunpack.c.l.b16 %v333
    %v1520 = vunpack.c.h.b16 %v333
    %v1521 = vunpack.c.l.b16 %v334
    %v1522 = vunpack.c.h.b16 %v334
    %v1523 = vunpack.c.l.b16 %v335
    %v1524 = vunpack.c.h.b16 %v335
    %v1525 = vunpack.c.l.b16 %v336
    %v1526 = vunpack.c.h.b16 %v336
    %v1527 = vunpack.c.l.b16 %v337
    %v1528 = vunpack.c.h.b16 %v337
    %v1529 = vunpack.c.l.b16 %v338
    %v1530 = vunpack.c.h.b16 %v338
    %v1531 = vunpack.c.l.b16 %v339
    %v1532 = vunpack.c.h.b16 %v339
    %v1533 = vunpack.c.l.b16 %v340
    %v1534 = vunpack.c.h.b16 %v340
    %v1535 = vunpack.c.l.b16 %v341
    %v1536 = vunpack.c.h.b16 %v341
    %v1537 = vunpack.c.l.b16 %v342
    %v1538 = vunpack.c.h.b16 %v342
    %v1539 = vunpack.c.l.b16 %v343
    %v1540 = vunpack.c.h.b16 %v343
    %v1541 = vunpack.c.l.b16 %v344
    %v1542 = vunpack.c.h.b16 %v344
    %v1543 = vunpack.c.l.b16 %v345
    %v1544 = vunpack.c.h.b16 %v345
    %v1545 = vunpack.c.l.b16 %v346
    %v1546 = vunpack.c.h.b16 %v346
    %v1547 = vunpack.c.l.b16 %v347
    %v1548 = vunpack.c.h.b16 %v347
    %v1549 = vunpack.c.l.b16 %v348
    %v1550 = vunpack.c.h.b16 %v348
    %v1551 = vunpack.c.l.b16 %v349
    %v1552 = vunpack.c.h.b16 %v349
    %v1553 = vunpack.c.l.b16 %v350
    %v1554 = vunpack.c.h.b16 %v350
    %v1555 = vunpack.c.l.b16 %v351
    %v1556 = vunpack.c.h.b16 %v351
    %v1557 = vunpack.c.l.b16 %v352
    %v1558 = vunpack.c.h.b16 %v352
    %v1559 = vunpack.c.l.b16 %v353
    %v1560 = vunpack.c.h.b16 %v353
    %v1561 = vunpack.c.l.b16 %v354
    %v1562 = vunpack.c.h.b16 %v354
    %v1563 = vunpack.c.l.b16 %v355
    %v1564 = vunpack.c.h.b16 %v355
    %v1565 = vunpack.c.l.b16 %v356
    %v1566 = vunpack.c.h.b16 %v356
    %v1567 = vunpack.c.l.b16 %v357
    %v1568 = vunpack.c.h.b16 %v357
    %v1569 = vunpack.c.l.b16 %v358
    %v1570 = vunpack.c.h.b16 %v358
    %v1571 = vunpack.c.l.b16 %v359
    %v1572 = vunpack.c.h.b16 %v359
    %v1573 = vunpack.c.l.b16 %v360
    %v1574 = vunpack.c.h.b16 %v360
    %v1575 = vunpack.c.l.b16 %v361
    %v1576 = vunpack.c.h.b16 %v361
    %v1577 = vunpack.c.l.b16 %v362
    %v1578 = vunpack.c.h.b16 %v362
    %v1579 = vunpack.c.l.b16 %v363
    %v1580 = vunpack.c.h.b16 %v363
    %v1581 = vunpack.c.l.b16 %v364
    %v1582 = vunpack.c.h.b16 %v364
    %v1583 = vunpack.c.l.b16 %v365
    %v1584 = vunpack.c.h.b16 %v365
    %v1585 = vunpack.c.l.b16 %v366
    %v1586 = vunpack.c.h.b16 %v366
    %v1587 = vunpack.c.l.b16 %v367
    %v1588 = vunpack.c.h.b16 %v367
    %v1589 = vunpack.c.l.b16 %v368
    %v1590 = vunpack.c.h.b16 %v368
    %v1591 = vunpack.c.l.b16 %v369
    %v1592 = vunpack.c.h.b16 %v369
    %v1593 = vunpack.c.l.b16 %v370
    %v1594 = vunpack.c.h.b16 %v370
    %v1595 = vunpack.c.l.b16 %v371
    %v1596 = vunpack.c.h.b16 %v371
    %v1597 = vunpack.c.l.b16 %v372
    %v1598 = vunpack.c.h.b16 %v372
    %v1599 = vunpack.c.l.b16 %v373
    %v1600 = vunpack.c.h.b16 %v373
    %v1601 = vunpack.c.l.b16 %v374
    %v1602 = vunpack.c.h.b16 %v374
    %v1603 = vunpack.c.l.b16 %v375
    %v1604 = vunpack.c.h.b16 %v375
    %v1605 = vunpack.c.l.b16 %v376
    %v1606 = vunpack.c.h.b16 %v376
    %v1607 = vunpack.c.l.b16 %v377
    %v1608 = vunpack.c.h.b16 %v377
    %v1609 = vunpack.c.l.b16 %v378
    %v1610 = vunpack.c.h.b16 %v378
    %v1611 = vunpack.c.l.b16 %v379
    %v1612 = vunpack.c.h.b16 %v379
    %v1613 = vunpack.c.l.b16 %v380
    %v1614 = vunpack.c.h.b16 %v380
    %v1615 = vunpack.c.l.b16 %v381
    %v1616 = vunpack.c.h.b16 %v381
    %v1617 = vunpack.c.l.b16 %v382
    %v1618 = vunpack.c.h.b16 %v382
    %v1619 = vunpack.c.l.b16 %v383
    %v1620 = vunpack.c.h.b16 %v383
    %v1621 = vunpack.c.l.b16 %v384
    %v1622 = vunpack.c.h.b16 %v384
    %v1623 = vunpack.c.l.b16 %v385
    %v1624 = vunpack.c.h.b16 %v385
    %v1625 = vunpack.c.l.b16 %v386
    %v1626 = vunpack.c.h.b16 %v386
    %v1627 = vunpack.c.l.b16 %v387
    %v1628 = vunpack.c.h.b16 %v387
    %v1629 = vunpack.c.l.b16 %v388
    %v1630 = vunpack.c.h.b16 %v388
    %v1631 = vunpack.c.l.b16 %v389
    %v1632 = vunpack.c.h.b16 %v389
    %v1633 = vunpack.c.l.b16 %v390
    %v1634 = vunpack.c.h.b16 %v390
    %v1635 = vunpack.c.l.b16 %v391
    %v1636 = vunpack.c.h.b16 %v391
    %v1637 = vunpack.c.l.b16 %v392
    %v1638 = vunpack.c.h.b16 %v392
    %v1639 = vunpack.c.l.b16 %v393
    %v1640 = vunpack.c.h.b16 %v393
    %v1641 = vunpack.c.l.b16 %v394
    %v1642 = vunpack.c.h.b16 %v394
    %v1643 = vunpack.c.l.b16 %v395
    %v1644 = vunpack.c.h.b16 %v395
    %v1645 = vunpack.c.l.b16 %v396
    %v1646 = vunpack.c.h.b16 %v396
    %v1647 = vunpack.c.l.b16 %v397
    %v1648 = vunpack.c.h.b16 %v397
    %v1649 = vunpack.c.l.b16 %v398
    %v1650 = vunpack.c.h.b16 %v398
    %v1651 = vunpack.c.l.b16 %v399
    %v1652 = vunpack.c.h.b16 %v399
    %v1653 = vunpack.c.l.b16 %v400
    %v1654 = vunpack.c.h.b16 %v400
    %v1655 = vunpack.c.l.b16 %v401
    %v1656 = vunpack.c.h.b16 %v401
    %v1657 = vunpack.c.l.b16 %v402
    %v1658 = vunpack.c.h.b16 %v402
    %v1659 = vunpack.c.l.b16 %v403
    %v1660 = vunpack.c.h.b16 %v403
    %v1661 = vunpack.c.l.b16 %v404
    %v1662 = vunpack.c.h.b16 %v404
    %v1663 = vunpack.c.l.b16 %v405
    %v1664 = vunpack.c.h.b16 %v405
    %v1665 = vunpack.c.l.b16 %v406
    %v1666 = vunpack.c.h.b16 %v406
    %v1667 = vunpack.c.l.b16 %v407
    %v1668 = vunpack.c.h.b16 %v407
    %v1669 = vpack.c.b16 %v905, %v901
    %v1670 = vpack.c.b16 %v906, %v902
    %v1671 = vpack.c.b16 %v907, %v903
    %v1672 = vpack.c.b16 %v908, %v904
    %v1673 = vpack.c.b16 %v913, %v909
    %v1674 = vpack.c.b16 %v914, %v910
    %v1675 = vpack.c.b16 %v915, %v911
    %v1676 = vpack.c.b16 %v916, %v912
    %v1677 = vpack.c.b16 %v921, %v917
    %v1678 = vpack.c.b16 %v922, %v918
    %v1679 = vpack.c.b16 %v923, %v919
    %v1680 = vpack.c.b16 %v924, %v920
    %v1681 = vpack.c.b16 %v929, %v925
    %v1682 = vpack.c.b16 %v930, %v926
    %v1683 = vpack.c.b16 %v931, %v927
    %v1684 = vpack.c.b16 %v932, %v928
    %v1685 = vpack.c.b16 %v937, %v933
    %v1686 = vpack.c.b16 %v938, %v934
    %v1687 = vpack.c.b16 %v939, %v935
    %v1688 = vpack.c.b16 %v940, %v936
    %v1689 = vpack.c.b16 %v945, %v941
    %v1690 = vpack.c.b16 %v946, %v942
    %v1691 = vpack.c.b16 %v947, %v943
    %v1692 = vpack.c.b16 %v948, %v944
    %v1693 = vpack.c.b16 %v953, %v949
    %v1694 = vpack.c.b16 %v954, %v950
    %v1695 = vpack.c.b16 %v955, %v951
    %v1696 = vpack.c.b16 %v956, %v952
    %v1697 = vpack.c.b16 %v961, %v957
    %v1698 = vpack.c.b16 %v962, %v958
    %v1699 = vpack.c.b16 %v963, %v959
    %v1700 = vpack.c.b16 %v964, %v960
    %v1701 = vpack.c.b16 %v969, %v965
    %v1702 = vpack.c.b16 %v970, %v966
    %v1703 = vpack.c.b16 %v971, %v967
    %v1704 = vpack.c.b16 %v972, %v968
    %v1705 = vpack.c.b16 %v977, %v973
    %v1706 = vpack.c.b16 %v978, %v974
    %v1707 = vpack.c.b16 %v979, %v975
    %v1708 = vpack.c.b16 %v980, %v976
    %v1709 = vpack.c.b16 %v985, %v981
    %v1710 = vpack.c.b16 %v986, %v982
    %v1711 = vpack.c.b16 %v987, %v983
    %v1712 = vpack.c.b16 %v988, %v984
    %v1713 = vpack.c.b16 %v993, %v989
    %v1714 = vpack.c.b16 %v994, %v990
    %v1715 = vpack.c.b16 %v995, %v991
    %v1716 = vpack.c.b16 %v996, %v992
    %v1717 = vpack.c.b16 %v1001, %v997
    %v1718 = vpack.c.b16 %v1002, %v998
    %v1719 = vpack.c.b16 %v1003, %v999
    %v1720 = vpack.c.b16 %v1004, %v1000
    %v1721 = vpack.c.b16 %v1009, %v1005
    %v1722 = vpack.c.b16 %v1010, %v1006
    %v1723 = vpack.c.b16 %v1011, %v1007
    %v1724 = vpack.c.b16 %v1012, %v1008
    %v1725 = vpack.c.b16 %v1017, %v1013
    %v1726 = vpack.c.b16 %v1018, %v1014
    %v1727 = vpack.c.b16 %v1019, %v1015
    %v1728 = vpack.c.b16 %v1020, %v1016
    %v1729 = vpack.c.b16 %v1025, %v1021
    %v1730 = vpack.c.b16 %v1026, %v1022
    %v1731 = vpack.c.b16 %v1027, %v1023
    %v1732 = vpack.c.b16 %v1028, %v1024
    %v1733 = vpack.c.b16 %v1033, %v1029
    %v1734 = vpack.c.b16 %v1034, %v1030
    %v1735 = vpack.c.b16 %v1035, %v1031
    %v1736 = vpack.c.b16 %v1036, %v1032
    %v1737 = vpack.c.b16 %v1041, %v1037
    %v1738 = vpack.c.b16 %v1042, %v1038
    %v1739 = vpack.c.b16 %v1043, %v1039
    %v1740 = vpack.c.b16 %v1044, %v1040
    %v1741 = vpack.c.b16 %v1049, %v1045
    %v1742 = vpack.c.b16 %v1050, %v1046
    %v1743 = vpack.c.b16 %v1051, %v1047
    %v1744 = vpack.c.b16 %v1052, %v1048
    %v1745 = vpack.c.b16 %v1057, %v1053
    %v1746 = vpack.c.b16 %v1058, %v1054
    %v1747 = vpack.c.b16 %v1059, %v1055
    %v1748 = vpack.c.b16 %v1060, %v1056
    %v1749 = vpack.c.b16 %v1065, %v1061
    %v1750 = vpack.c.b16 %v1066, %v1062
    %v1751 = vpack.c.b16 %v1067, %v1063
    %v1752 = vpack.c.b16 %v1068, %v1064
    %v1753 = vpack.c.b16 %v1073, %v1069
    %v1754 = vpack.c.b16 %v1074, %v1070
    %v1755 = vpack.c.b16 %v1075, %v1071
    %v1756 = vpack.c.b16 %v1076, %v1072
    %v1757 = vpack.c.b16 %v1081, %v1077
    %v1758 = vpack.c.b16 %v1082, %v1078
    %v1759 = vpack.c.b16 %v1083, %v1079
    %v1760 = vpack.c.b16 %v1084, %v1080
    %v1761 = vpack.c.b16 %v1089, %v1085
    %v1762 = vpack.c.b16 %v1090, %v1086
    %v1763 = vpack.c.b16 %v1091, %v1087
    %v1764 = vpack.c.b16 %v1092, %v1088
    %v1765 = vpack.c.b16 %v1097, %v1093
    %v1766 = vpack.c.b16 %v1098, %v1094
    %v1767 = vpack.c.b16 %v1099, %v1095
    %v1768 = vpack.c.b16 %v1100, %v1096
    %v1769 = vpack.c.b16 %v1105, %v1101
    %v1770 = vpack.c.b16 %v1106, %v1102
    %v1771 = vpack.c.b16 %v1107, %v1103
    %v1772 = vpack.c.b16 %v1108, %v1104
    %v1773 = vpack.c.b16 %v1113, %v1109
    %v1774 = vpack.c.b16 %v1114, %v1110
    %v1775 = vpack.c.b16 %v1115, %v1111
    %v1776 = vpack.c.b16 %v1116, %v1112
    %v1777 = vpack.c.b16 %v1121, %v1117
    %v1778 = vpack.c.b16 %v1122, %v1118
    %v1779 = vpack.c.b16 %v1123, %v1119
    %v1780 = vpack.c.b16 %v1124, %v1120
    %v1781 = vpack.c.b16 %v1129, %v1125
    %v1782 = vpack.c.b16 %v1130, %v1126
    %v1783 = vpack.c.b16 %v1131, %v1127
    %v1784 = vpack.c.b16 %v1132, %v1128
    %v1785 = vpack.c.b16 %v1137, %v1133
    %v1786 = vpack.c.b16 %v1138, %v1134
    %v1787 = vpack.c.b16 %v1139, %v1135
    %v1788 = vpack.c.b16 %v1140, %v1136
    %v1789 = vpack.c.b16 %v1145, %v1141
    %v1790 = vpack.c.b16 %v1146, %v1142
    %v1791 = vpack.c.b16 %v1147, %v1143
    %v1792 = vpack.c.b16 %v1148, %v1144
    %v1793 = vpack.c.b16 %v1153, %v1149
    %v1794 = vpack.c.b16 %v1154, %v1150
    %v1795 = vpack.c.b16 %v1155, %v1151
    %v1796 = vpack.c.b16 %v1156, %v1152
    %v1797 = vpack.c.b16 %v1161, %v1157
    %v1798 = vpack.c.b16 %v1162, %v1158
    %v1799 = vpack.c.b16 %v1163, %v1159
    %v1800 = vpack.c.b16 %v1164, %v1160
    %v1801 = vpack.c.b16 %v1169, %v1165
    %v1802 = vpack.c.b16 %v1170, %v1166
    %v1803 = vpack.c.b16 %v1171, %v1167
    %v1804 = vpack.c.b16 %v1172, %v1168
    %v1805 = vpack.c.b16 %v1177, %v1173
    %v1806 = vpack.c.b16 %v1178, %v1174
    %v1807 = vpack.c.b16 %v1179, %v1175
    %v1808 = vpack.c.b16 %v1180, %v1176
    %v1809 = vpack.c.b16 %v1185, %v1181
    %v1810 = vpack.c.b16 %v1186, %v1182
    %v1811 = vpack.c.b16 %v1187, %v1183
    %v1812 = vpack.c.b16 %v1188, %v1184
    %v1813 = vpack.c.b16 %v1193, %v1189
    %v1814 = vpack.c.b16 %v1194, %v1190
    %v1815 = vpack.c.b16 %v1195, %v1191
    %v1816 = vpack.c.b16 %v1196, %v1192
    %v1817 = vpack.c.b16 %v1201, %v1197
    %v1818 = vpack.c.b16 %v1202, %v1198
    %v1819 = vpack.c.b16 %v1203, %v1199
    %v1820 = vpack.c.b16 %v1204, %v1200
    %v1821 = vpack.c.b16 %v1209, %v1205
    %v1822 = vpack.c.b16 %v1210, %v1206
    %v1823 = vpack.c.b16 %v1211, %v1207
    %v1824 = vpack.c.b16 %v1212, %v1208
    %v1825 = vpack.c.b16 %v1217, %v1213
    %v1826 = vpack.c.b16 %v1218, %v1214
    %v1827 = vpack.c.b16 %v1219, %v1215
    %v1828 = vpack.c.b16 %v1220, %v1216
    %v1829 = vpack.c.b16 %v1225, %v1221
    %v1830 = vpack.c.b16 %v1226, %v1222
    %v1831 = vpack.c.b16 %v1227, %v1223
    %v1832 = vpack.c.b16 %v1228, %v1224
    %v1833 = vpack.c.b16 %v1233, %v1229
    %v1834 = vpack.c.b16 %v1234, %v1230
    %v1835 = vpack.c.b16 %v1235, %v1231
    %v1836 = vpack.c.b16 %v1236, %v1232
    %v1837 = vpack.c.b16 %v1241, %v1237
    %v1838 = vpack.c.b16 %v1242, %v1238
    %v1839 = vpack.c.b16 %v1243, %v1239
    %v1840 = vpack.c.b16 %v1244, %v1240
    %v1841 = vpack.c.b16 %v1249, %v1245
    %v1842 = vpack.c.b16 %v1250, %v1246
    %v1843 = vpack.c.b16 %v1251, %v1247
    %v1844 = vpack.c.b16 %v1252, %v1248
    %v1845 = vpack.c.b16 %v1257, %v1253
    %v1846 = vpack.c.b16 %v1258, %v1254
    %v1847 = vpack.c.b16 %v1259, %v1255
    %v1848 = vpack.c.b16 %v1260, %v1256
    %v1849 = vpack.c.b16 %v1265, %v1261
    %v1850 = vpack.c.b16 %v1266, %v1262
    %v1851 = vpack.c.b16 %v1267, %v1263
    %v1852 = vpack.c.b16 %v1268, %v1264
    %v1853 = vpack.c.b16 %v1273, %v1269
    %v1854 = vpack.c.b16 %v1274, %v1270
    %v1855 = vpack.c.b16 %v1275, %v1271
    %v1856 = vpack.c.b16 %v1276, %v1272
    %v1857 = vpack.c.b16 %v1281, %v1277
    %v1858 = vpack.c.b16 %v1282, %v1278
    %v1859 = vpack.c.b16 %v1283, %v1279
    %v1860 = vpack.c.b16 %v1284, %v1280
    %v1861 = vpack.c.b16 %v1289, %v1285
    %v1862 = vpack.c.b16 %v1290, %v1286
    %v1863 = vpack.c.b16 %v1291, %v1287
    %v1864 = vpack.c.b16 %v1292, %v1288
    %v1865 = vpack.c.b16 %v1297, %v1293
    %v1866 = vpack.c.b16 %v1298, %v1294
    %v1867 = vpack.c.b16 %v1299, %v1295
    %v1868 = vpack.c.b16 %v1300, %v1296
    %v1869 = vpack.c.b16 %v1305, %v1301
    %v1870 = vpack.c.b16 %v1306, %v1302
    %v1871 = vpack.c.b16 %v1307, %v1303
    %v1872 = vpack.c.b16 %v1308, %v1304
    %v1873 = vpack.c.b16 %v1313, %v1309
    %v1874 = vpack.c.b16 %v1314, %v1310
    %v1875 = vpack.c.b16 %v1315, %v1311
    %v1876 = vpack.c.b16 %v1316, %v1312
    %v1877 = vpack.c.b16 %v1321, %v1317
    %v1878 = vpack.c.b16 %v1322, %v1318
    %v1879 = vpack.c.b16 %v1323, %v1319
    %v1880 = vpack.c.b16 %v1324, %v1320
    %v1881 = vpack.c.b16 %v1329, %v1325
    %v1882 = vpack.c.b16 %v1330, %v1326
    %v1883 = vpack.c.b16 %v1331, %v1327
    %v1884 = vpack.c.b16 %v1332, %v1328
    %v1885 = vpack.c.b16 %v1337, %v1333
    %v1886 = vpack.c.b16 %v1338, %v1334
    %v1887 = vpack.c.b16 %v1339, %v1335
    %v1888 = vpack.c.b16 %v1340, %v1336
    %v1889 = vpack.c.b16 %v1345, %v1341
    %v1890 = vpack.c.b16 %v1346, %v1342
    %v1891 = vpack.c.b16 %v1347, %v1343
    %v1892 = vpack.c.b16 %v1348, %v1344
    %v1893 = vpack.c.b16 %v1353, %v1349
    %v1894 = vpack.c.b16 %v1354, %v1350
    %v1895 = vpack.c.b16 %v1355, %v1351
    %v1896 = vpack.c.b16 %v1356, %v1352
    %v1897 = vpack.c.b16 %v1361, %v1357
    %v1898 = vpack.c.b16 %v1362, %v1358
    %v1899 = vpack.c.b16 %v1363, %v1359
    %v1900 = vpack.c.b16 %v1364, %v1360
    %v1901 = vpack.c.b16 %v1369, %v1365
    %v1902 = vpack.c.b16 %v1370, %v1366
    %v1903 = vpack.c.b16 %v1371, %v1367
    %v1904 = vpack.c.b16 %v1372, %v1368
    %v1905 = vpack.c.b16 %v1377, %v1373
    %v1906 = vpack.c.b16 %v1378, %v1374
    %v1907 = vpack.c.b16 %v1379, %v1375
    %v1908 = vpack.c.b16 %v1380, %v1376
    %v1909 = vpack.c.b16 %v1385, %v1381
    %v1910 = vpack.c.b16 %v1386, %v1382
    %v1911 = vpack.c.b16 %v1387, %v1383
    %v1912 = vpack.c.b16 %v1388, %v1384
    %v1913 = vpack.c.b16 %v1393, %v1389
    %v1914 = vpack.c.b16 %v1394, %v1390
    %v1915 = vpack.c.b16 %v1395, %v1391
    %v1916 = vpack.c.b16 %v1396, %v1392
    %v1917 = vpack.c.b16 %v1401, %v1397
    %v1918 = vpack.c.b16 %v1402, %v1398
    %v1919 = vpack.c.b16 %v1403, %v1399
    %v1920 = vpack.c.b16 %v1404, %v1400
    %v1921 = vpack.c.b16 %v1409, %v1405
    %v1922 = vpack.c.b16 %v1410, %v1406
    %v1923 = vpack.c.b16 %v1411, %v1407
    %v1924 = vpack.c.b16 %v1412, %v1408
    %v1925 = vpack.c.b16 %v1417, %v1413
    %v1926 = vpack.c.b16 %v1418, %v1414
    %v1927 = vpack.c.b16 %v1419, %v1415
    %v1928 = vpack.c.b16 %v1420, %v1416
    %v1929 = vpack.c.b16 %v1425, %v1421
    %v1930 = vpack.c.b16 %v1426, %v1422
    %v1931 = vpack.c.b16 %v1427, %v1423
    %v1932 = vpack.c.b16 %v1428, %v1424
    %v1933 = vpack.c.b16 %v1433, %v1429
    %v1934 = vpack.c.b16 %v1434, %v1430
    %v1935 = vpack.c.b16 %v1435, %v1431
    %v1936 = vpack.c.b16 %v1436, %v1432
    %v1937 = vpack.c.b16 %v1441, %v1437
    %v1938 = vpack.c.b16 %v1442, %v1438
    %v1939 = vpack.c.b16 %v1443, %v1439
    %v1940 = vpack.c.b16 %v1444, %v1440
    %v1941 = vpack.c.b16 %v1449, %v1445
    %v1942 = vpack.c.b16 %v1450, %v1446
    %v1943 = vpack.c.b16 %v1451, %v1447
    %v1944 = vpack.c.b16 %v1452, %v1448
    %v1945 = vpack.c.b16 %v1457, %v1453
    %v1946 = vpack.c.b16 %v1458, %v1454
    %v1947 = vpack.c.b16 %v1459, %v1455
    %v1948 = vpack.c.b16 %v1460, %v1456
    %v1949 = vpack.c.b16 %v1465, %v1461
    %v1950 = vpack.c.b16 %v1466, %v1462
    %v1951 = vpack.c.b16 %v1467, %v1463
    %v1952 = vpack.c.b16 %v1468, %v1464
    %v1953 = vpack.c.b16 %v1473, %v1469
    %v1954 = vpack.c.b16 %v1474, %v1470
    %v1955 = vpack.c.b16 %v1475, %v1471
    %v1956 = vpack.c.b16 %v1476, %v1472
    %v1957 = vpack.c.b16 %v1481, %v1477
    %v1958 = vpack.c.b16 %v1482, %v1478
    %v1959 = vpack.c.b16 %v1483, %v1479
    %v1960 = vpack.c.b16 %v1484, %v1480
    %v1961 = vpack.c.b16 %v1489, %v1485
    %v1962 = vpack.c.b16 %v1490, %v1486
    %v1963 = vpack.c.b16 %v1491, %v1487
    %v1964 = vpack.c.b16 %v1492, %v1488
    %v1965 = vpack.c.b16 %v1497, %v1493
    %v1966 = vpack.c.b16 %v1498, %v1494
    %v1967 = vpack.c.b16 %v1499, %v1495
    %v1968 = vpack.c.b16 %v1500, %v1496
    %v1969 = vpack.c.b16 %v1505, %v1501
    %v1970 = vpack.c.b16 %v1506, %v1502
    %v1971 = vpack.c.b16 %v1507, %v1503
    %v1972 = vpack.c.b16 %v1508, %v1504
    %v1973 = vpack.c.b16 %v1513, %v1509
    %v1974 = vpack.c.b16 %v1514, %v1510
    %v1975 = vpack.c.b16 %v1515, %v1511
    %v1976 = vpack.c.b16 %v1516, %v1512
    %v1977 = vpack.c.b16 %v1521, %v1517
    %v1978 = vpack.c.b16 %v1522, %v1518
    %v1979 = vpack.c.b16 %v1523, %v1519
    %v1980 = vpack.c.b16 %v1524, %v1520
    %v1981 = vpack.c.b16 %v1529, %v1525
    %v1982 = vpack.c.b16 %v1530, %v1526
    %v1983 = vpack.c.b16 %v1531, %v1527
    %v1984 = vpack.c.b16 %v1532, %v1528
    %v1985 = vpack.c.b16 %v1537, %v1533
    %v1986 = vpack.c.b16 %v1538, %v1534
    %v1987 = vpack.c.b16 %v1539, %v1535
    %v1988 = vpack.c.b16 %v1540, %v1536
    %v1989 = vpack.c.b16 %v1545, %v1541
    %v1990 = vpack.c.b16 %v1546, %v1542
    %v1991 = vpack.c.b16 %v1547, %v1543
    %v1992 = vpack.c.b16 %v1548, %v1544
    %v1993 = vpack.c.b16 %v1553, %v1549
    %v1994 = vpack.c.b16 %v1554, %v1550
    %v1995 = vpack.c.b16 %v1555, %v1551
    %v1996 = vpack.c.b16 %v1556, %v1552
    %v1997 = vpack.c.b16 %v1561, %v1557
    %v1998 = vpack.c.b16 %v1562, %v1558
    %v1999 = vpack.c.b16 %v1563, %v1559
    %v2000 = vpack.c.b16 %v1564, %v1560
    %v2001 = vpack.c.b16 %v1569, %v1565
    %v2002 = vpack.c.b16 %v1570, %v1566
    %v2003 = vpack.c.b16 %v1571, %v1567
    %v2004 = vpack.c.b16 %v1572, %v1568
    %v2005 = vpack.c.b16 %v1577, %v1573
    %v2006 = vpack.c.b16 %v1578, %v1574
    %v2007 = vpack.c.b16 %v1579, %v1575
    %v2008 = vpack.c.b16 %v1580, %v1576
    %v2009 = vpack.c.b16 %v1585, %v1581
    %v2010 = vpack.c.b16 %v1586, %v1582
    %v2011 = vpack.c.b16 %v1587, %v1583
    %v2012 = vpack.c.b16 %v1588, %v1584
    %v2013 = vpack.c.b16 %v1593, %v1589
    %v2014 = vpack.c.b16 %v1594, %v1590
    %v2015 = vpack.c.b16 %v1595, %v1591
    %v2016 = vpack.c.b16 %v1596, %v1592
    %v2017 = vpack.c.b16 %v1601, %v1597
    %v2018 = vpack.c.b16 %v1602, %v1598
    %v2019 = vpack.c.b16 %v1603, %v1599
    %v2020 = vpack.c.b16 %v1604, %v1600
    %v2021 = vpack.c.b16 %v1609, %v1605
    %v2022 = vpack.c.b16 %v1610, %v1606
    %v2023 = vpack.c.b16 %v1611, %v1607
    %v2024 = vpack.c.b16 %v1612, %v1608
    %v2025 = vpack.c.b16 %v1617, %v1613
    %v2026 = vpack.c.b16 %v1618, %v1614
    %v2027 = vpack.c.b16 %v1619, %v1615
    %v2028 = vpack.c.b16 %v1620, %v1616
    %v2029 = vpack.c.b16 %v1625, %v1621
    %v2030 = vpack.c.b16 %v1626, %v1622
    %v2031 = vpack.c.b16 %v1627, %v1623
    %v2032 = vpack.c.b16 %v1628, %v1624
    %v2033 = vpack.c.b16 %v1633, %v1629
    %v2034 = vpack.c.b16 %v1634, %v1630
    %v2035 = vpack.c.b16 %v1635, %v1631
    %v2036 = vpack.c.b16 %v1636, %v1632
    %v2037 = vpack.c.b16 %v1641, %v1637
    %v2038 = vpack.c.b16 %v1642, %v1638
    %v2039 = vpack.c.b16 %v1643, %v1639
    %v2040 = vpack.c.b16 %v1644, %v1640
    %v2041 = vpack.c.b16 %v1649, %v1645
    %v2042 = vpack.c.b16 %v1650, %v1646
    %v2043 = vpack.c.b16 %v1651, %v1647
    %v2044 = vpack.c.b16 %v1652, %v1648
    %v2045 = vpack.c.b16 %v1657, %v1653
    %v2046 = vpack.c.b16 %v1658, %v1654
    %v2047 = vpack.c.b16 %v1659, %v1655
    %v2048 = vpack.c.b16 %v1660, %v1656
    %v2049 = vpack.c.b16 %v1665, %v1661
    %v2050 = vpack.c.b16 %v1666, %v1662
    %v2051 = vpack.c.b16 %v1667, %v1663
    %v2052 = vpack.c.b16 %v1668, %v1664
    %2437 = vmatprep.subr.bf16.mxu0 %v1670
    %2438 = vmatpush1.bf16.msra.mxu0 %v1669
    %2439 = vmatprep.subr.bf16.mxu0 %v1674
    %2440 = vmatpush1.bf16.msra.mxu0 %v1673
    %2441 = vmatprep.subr.bf16.mxu0 %v1678
    %2442 = vmatpush1.bf16.msra.mxu0 %v1677
    %2443 = vmatprep.subr.bf16.mxu0 %v1682
    %2444 = vmatpush1.bf16.msra.mxu0 %v1681
    %2445 = vmatprep.subr.bf16.mxu0 %v1686
    %2446 = vmatpush1.bf16.msra.mxu0 %v1685
    %2447 = vmatprep.subr.bf16.mxu0 %v1690
    %2448 = vmatpush1.bf16.msra.mxu0 %v1689
    %2449 = vmatprep.subr.bf16.mxu0 %v1694
    %2450 = vmatpush1.bf16.msra.mxu0 %v1693
    %2451 = vmatprep.subr.bf16.mxu0 %v1698
    %2452 = vmatpush1.bf16.msra.mxu0 %v1697
    %2453 = vmatprep.subr.bf16.mxu0 %v1702
    %2454 = vmatpush1.bf16.msra.mxu0 %v1701
    %2455 = vmatprep.subr.bf16.mxu0 %v1706
    %2456 = vmatpush1.bf16.msra.mxu0 %v1705
    %2457 = vmatprep.subr.bf16.mxu0 %v1710
    %2458 = vmatpush1.bf16.msra.mxu0 %v1709
    %2459 = vmatprep.subr.bf16.mxu0 %v1714
    %2460 = vmatpush1.bf16.msra.mxu0 %v1713
    %2461 = vmatprep.subr.bf16.mxu0 %v1718
    %2462 = vmatpush1.bf16.msra.mxu0 %v1717
    %2463 = vmatprep.subr.bf16.mxu0 %v1722
    %2464 = vmatpush1.bf16.msra.mxu0 %v1721
    %2465 = vmatprep.subr.bf16.mxu0 %v1726
    %2466 = vmatpush1.bf16.msra.mxu0 %v1725
    %2467 = vmatprep.subr.bf16.mxu0 %v1730
    %2468 = vmatpush1.bf16.msra.mxu0 %v1729
    %2469 = vmatprep.mubr.bf16.mxu0 %v469
    %2470 = vmatmul.mubr.bf16.gmra.mrb[0].mxu0 %v455
    %v2471 = vpop.f32.mrb[0].mxu0
    %v2472 = vadd.f32 %v413, %v2471
    %v2473 = vpop.f32.mrb[0].mxu0
    %v2474 = vadd.f32 %v417, %v2473
    %v2475 = vpop.f32.mrb[0].mxu0
    %v2476 = vpop.f32.mrb[0].mxu0
    %2477 = vdwg.mxu0
    %2478 = vmatprep.subr.bf16.mxu0 %v1734
    %2479 = vmatpush1.bf16.msra.mxu0 %v1733
    %2480 = vmatprep.subr.bf16.mxu0 %v1738
    %2481 = vmatpush1.bf16.msra.mxu0 %v1737
    %2482 = vmatprep.subr.bf16.mxu0 %v1742
    %2483 = vmatpush1.bf16.msra.mxu0 %v1741
    %2484 = vmatprep.subr.bf16.mxu0 %v1746
    %2485 = vmatpush1.bf16.msra.mxu0 %v1745
    %2486 = vmatprep.subr.bf16.mxu0 %v1750
    %2487 = vmatpush1.bf16.msra.mxu0 %v1749
    %2488 = vmatprep.subr.bf16.mxu0 %v1754
    %2489 = vmatpush1.bf16.msra.mxu0 %v1753
    %2490 = vmatprep.subr.bf16.mxu0 %v1758
    %2491 = vmatpush1.bf16.msra.mxu0 %v1757
    %2492 = vmatprep.subr.bf16.mxu0 %v1762
    %2493 = vmatpush1.bf16.msra.mxu0 %v1761
    %2494 = vmatprep.subr.bf16.mxu0 %v1766
    %2495 = vmatpush1.bf16.msra.mxu0 %v1765
    %2496 = vmatprep.subr.bf16.mxu0 %v1770
    %2497 = vmatpush1.bf16.msra.mxu0 %v1769
    %2498 = vmatprep.subr.bf16.mxu0 %v1774
    %2499 = vmatpush1.bf16.msra.mxu0 %v1773
    %2500 = vmatprep.subr.bf16.mxu0 %v1778
    %2501 = vmatpush1.bf16.msra.mxu0 %v1777
    %2502 = vmatprep.subr.bf16.mxu0 %v1782
    %2503 = vmatpush1.bf16.msra.mxu0 %v1781
    %2504 = vmatprep.subr.bf16.mxu0 %v1786
    %2505 = vmatpush1.bf16.msra.mxu0 %v1785
    %2506 = vmatprep.subr.bf16.mxu0 %v1790
    %2507 = vmatpush1.bf16.msra.mxu0 %v1789
    %2508 = vmatprep.subr.bf16.mxu0 %v1794
    %2509 = vmatpush1.bf16.msra.mxu0 %v1793
    %2510 = vmatprep.mubr.bf16.mxu0 %v479
    %2511 = vmatmul.mubr.bf16.gmra.mrb[0].mxu0 %v477
    %v2512 = vpop.f32.mrb[0].mxu0
    %v2513 = vadd.f32 %v2472, %v2512
    %v2514 = vpop.f32.mrb[0].mxu0
    %v2515 = vadd.f32 %v2474, %v2514
    %v2516 = vpop.f32.mrb[0].mxu0
    %v2517 = vpop.f32.mrb[0].mxu0
    %2518 = vdwg.mxu0
    %2519 = vmatprep.subr.bf16.mxu0 %v1798
    %2520 = vmatpush1.bf16.msra.mxu0 %v1797
    %2521 = vmatprep.subr.bf16.mxu0 %v1802
    %2522 = vmatpush1.bf16.msra.mxu0 %v1801
    %2523 = vmatprep.subr.bf16.mxu0 %v1806
    %2524 = vmatpush1.bf16.msra.mxu0 %v1805
    %2525 = vmatprep.subr.bf16.mxu0 %v1810
    %2526 = vmatpush1.bf16.msra.mxu0 %v1809
    %2527 = vmatprep.subr.bf16.mxu0 %v1814
    %2528 = vmatpush1.bf16.msra.mxu0 %v1813
    %2529 = vmatprep.subr.bf16.mxu0 %v1818
    %2530 = vmatpush1.bf16.msra.mxu0 %v1817
    %2531 = vmatprep.subr.bf16.mxu0 %v1822
    %2532 = vmatpush1.bf16.msra.mxu0 %v1821
    %2533 = vmatprep.subr.bf16.mxu0 %v1826
    %2534 = vmatpush1.bf16.msra.mxu0 %v1825
    %2535 = vmatprep.subr.bf16.mxu0 %v1830
    %2536 = vmatpush1.bf16.msra.mxu0 %v1829
    %2537 = vmatprep.subr.bf16.mxu0 %v1834
    %2538 = vmatpush1.bf16.msra.mxu0 %v1833
    %2539 = vmatprep.subr.bf16.mxu0 %v1838
    %2540 = vmatpush1.bf16.msra.mxu0 %v1837
    %2541 = vmatprep.subr.bf16.mxu0 %v1842
    %2542 = vmatpush1.bf16.msra.mxu0 %v1841
    %2543 = vmatprep.subr.bf16.mxu0 %v1846
    %2544 = vmatpush1.bf16.msra.mxu0 %v1845
    %2545 = vmatprep.subr.bf16.mxu0 %v1850
    %2546 = vmatpush1.bf16.msra.mxu0 %v1849
    %2547 = vmatprep.subr.bf16.mxu0 %v1854
    %2548 = vmatpush1.bf16.msra.mxu0 %v1853
    %2549 = vmatprep.subr.bf16.mxu0 %v1858
    %2550 = vmatpush1.bf16.msra.mxu0 %v1857
    %2551 = vmatprep.mubr.bf16.mxu0 %v476
    %2552 = vmatmul.mubr.bf16.gmra.mrb[0].mxu0 %v462
    %v2553 = vpop.f32.mrb[0].mxu0
    %v2554 = vadd.f32 %v2513, %v2553
    %v2555 = vpop.f32.mrb[0].mxu0
    %v2556 = vadd.f32 %v2515, %v2555
    %v2557 = vpop.f32.mrb[0].mxu0
    %v2558 = vpop.f32.mrb[0].mxu0
    %2559 = vdwg.mxu0
    %2560 = vmatprep.subr.bf16.mxu0 %v1862
    %2561 = vmatpush1.bf16.msra.mxu0 %v1861
    %2562 = vmatprep.subr.bf16.mxu0 %v1866
    %2563 = vmatpush1.bf16.msra.mxu0 %v1865
    %2564 = vmatprep.subr.bf16.mxu0 %v1870
    %2565 = vmatpush1.bf16.msra.mxu0 %v1869
    %2566 = vmatprep.subr.bf16.mxu0 %v1874
    %2567 = vmatpush1.bf16.msra.mxu0 %v1873
    %2568 = vmatprep.subr.bf16.mxu0 %v1878
    %2569 = vmatpush1.bf16.msra.mxu0 %v1877
    %2570 = vmatprep.subr.bf16.mxu0 %v1882
    %2571 = vmatpush1.bf16.msra.mxu0 %v1881
    %2572 = vmatprep.subr.bf16.mxu0 %v1886
    %2573 = vmatpush1.bf16.msra.mxu0 %v1885
    %2574 = vmatprep.subr.bf16.mxu0 %v1890
    %2575 = vmatpush1.bf16.msra.mxu0 %v1889
    %2576 = vmatprep.subr.bf16.mxu0 %v1894
    %2577 = vmatpush1.bf16.msra.mxu0 %v1893
    %2578 = vmatprep.subr.bf16.mxu0 %v1898
    %2579 = vmatpush1.bf16.msra.mxu0 %v1897
    %2580 = vmatprep.subr.bf16.mxu0 %v1902
    %2581 = vmatpush1.bf16.msra.mxu0 %v1901
    %2582 = vmatprep.subr.bf16.mxu0 %v1906
    %2583 = vmatpush1.bf16.msra.mxu0 %v1905
    %2584 = vmatprep.subr.bf16.mxu0 %v1910
    %2585 = vmatpush1.bf16.msra.mxu0 %v1909
    %2586 = vmatprep.subr.bf16.mxu0 %v1914
    %2587 = vmatpush1.bf16.msra.mxu0 %v1913
    %2588 = vmatprep.subr.bf16.mxu0 %v1918
    %2589 = vmatpush1.bf16.msra.mxu0 %v1917
    %2590 = vmatprep.subr.bf16.mxu0 %v1922
    %2591 = vmatpush1.bf16.msra.mxu0 %v1921
    %2592 = vmatprep.mubr.bf16.mxu0 %v480
    %2593 = vmatmul.mubr.bf16.gmra.mrb[0].mxu0 %v478
    %v2594 = vpop.f32.mrb[0].mxu0
    %v2595 = vadd.f32 %v2554, %v2594
    %v2596 = vpop.f32.mrb[0].mxu0
    %v2597 = vadd.f32 %v2556, %v2596
    %v2598 = vpop.f32.mrb[0].mxu0
    %v2599 = vpop.f32.mrb[0].mxu0
    %2600 = vdwg.mxu0
    %2601 = vmatprep.subr.bf16.mxu0 %v1926
    %2602 = vmatpush1.bf16.msra.mxu0 %v1925
    %2603 = vmatprep.subr.bf16.mxu0 %v1930
    %2604 = vmatpush1.bf16.msra.mxu0 %v1929
    %2605 = vmatprep.subr.bf16.mxu0 %v1934
    %2606 = vmatpush1.bf16.msra.mxu0 %v1933
    %2607 = vmatprep.subr.bf16.mxu0 %v1938
    %2608 = vmatpush1.bf16.msra.mxu0 %v1937
    %2609 = vmatprep.subr.bf16.mxu0 %v1942
    %2610 = vmatpush1.bf16.msra.mxu0 %v1941
    %2611 = vmatprep.subr.bf16.mxu0 %v1946
    %2612 = vmatpush1.bf16.msra.mxu0 %v1945
    %2613 = vmatprep.subr.bf16.mxu0 %v1950
    %2614 = vmatpush1.bf16.msra.mxu0 %v1949
    %2615 = vmatprep.subr.bf16.mxu0 %v1954
    %2616 = vmatpush1.bf16.msra.mxu0 %v1953
    %2617 = vmatprep.subr.bf16.mxu0 %v1958
    %2618 = vmatpush1.bf16.msra.mxu0 %v1957
    %2619 = vmatprep.subr.bf16.mxu0 %v1962
    %2620 = vmatpush1.bf16.msra.mxu0 %v1961
    %2621 = vmatprep.subr.bf16.mxu0 %v1966
    %2622 = vmatpush1.bf16.msra.mxu0 %v1965
    %2623 = vmatprep.subr.bf16.mxu0 %v1970
    %2624 = vmatpush1.bf16.msra.mxu0 %v1969
    %2625 = vmatprep.subr.bf16.mxu0 %v1974
    %2626 = vmatpush1.bf16.msra.mxu0 %v1973
    %2627 = vmatprep.subr.bf16.mxu0 %v1978
    %2628 = vmatpush1.bf16.msra.mxu0 %v1977
    %2629 = vmatprep.subr.bf16.mxu0 %v1982
    %2630 = vmatpush1.bf16.msra.mxu0 %v1981
    %2631 = vmatprep.subr.bf16.mxu0 %v1986
    %2632 = vmatpush1.bf16.msra.mxu0 %v1985
    %2633 = vmatprep.mubr.bf16.mxu0 %v502
    %2634 = vmatmul.mubr.bf16.gmra.mrb[0].mxu0 %v495
    %v2635 = vpop.f32.mrb[0].mxu0
    %v2636 = vadd.f32 %v2595, %v2635
    %v2637 = vpop.f32.mrb[0].mxu0
    %v2638 = vadd.f32 %v2597, %v2637
    %v2639 = vpop.f32.mrb[0].mxu0
    %v2640 = vpop.f32.mrb[0].mxu0
    %2641 = vdwg.mxu0
    %2642 = vmatprep.subr.bf16.mxu0 %v1990
    %2643 = vmatpush1.bf16.msra.mxu0 %v1989
    %2644 = vmatprep.subr.bf16.mxu0 %v1994
    %2645 = vmatpush1.bf16.msra.mxu0 %v1993
    %2646 = vmatprep.subr.bf16.mxu0 %v1998
    %2647 = vmatpush1.bf16.msra.mxu0 %v1997
    %2648 = vmatprep.subr.bf16.mxu0 %v2002
    %2649 = vmatpush1.bf16.msra.mxu0 %v2001
    %2650 = vmatprep.subr.bf16.mxu0 %v2006
    %2651 = vmatpush1.bf16.msra.mxu0 %v2005
    %2652 = vmatprep.subr.bf16.mxu0 %v2010
    %2653 = vmatpush1.bf16.msra.mxu0 %v2009
    %2654 = vmatprep.subr.bf16.mxu0 %v2014
    %2655 = vmatpush1.bf16.msra.mxu0 %v2013
    %2656 = vmatprep.subr.bf16.mxu0 %v2018
    %2657 = vmatpush1.bf16.msra.mxu0 %v2017
    %2658 = vmatprep.subr.bf16.mxu0 %v2022
    %2659 = vmatpush1.bf16.msra.mxu0 %v2021
    %2660 = vmatprep.subr.bf16.mxu0 %v2026
    %2661 = vmatpush1.bf16.msra.mxu0 %v2025
    %2662 = vmatprep.subr.bf16.mxu0 %v2030
    %2663 = vmatpush1.bf16.msra.mxu0 %v2029
    %2664 = vmatprep.subr.bf16.mxu0 %v2034
    %2665 = vmatpush1.bf16.msra.mxu0 %v2033
    %2666 = vmatprep.subr.bf16.mxu0 %v2038
    %2667 = vmatpush1.bf16.msra.mxu0 %v2037
    %2668 = vmatprep.subr.bf16.mxu0 %v2042
    %2669 = vmatpush1.bf16.msra.mxu0 %v2041
    %2670 = vmatprep.subr.bf16.mxu0 %v2046
    %2671 = vmatpush1.bf16.msra.mxu0 %v2045
    %2672 = vmatprep.subr.bf16.mxu0 %v2050
    %2673 = vmatpush1.bf16.msra.mxu0 %v2049
    %2674 = vmatprep.mubr.bf16.mxu0 %v504
    %2675 = vmatmul.mubr.bf16.gmra.mrb[0].mxu0 %v503
    %v2676 = vpop.f32.mrb[0].mxu0
    %v2677 = vadd.f32 %v2636, %v2676
    %v2678 = vpop.f32.mrb[0].mxu0
    %v2679 = vadd.f32 %v2638, %v2678
    %v2680 = vpop.f32.mrb[0].mxu0
    %v2681 = vpop.f32.mrb[0].mxu0
    %2682 = vdwg.mxu0
    %2683 = vmatprep.subr.bf16.mxu0 %v1672
    %2684 = vmatpush1.bf16.msra.mxu0 %v1671
    %2685 = vmatprep.subr.bf16.mxu0 %v1676
    %2686 = vmatpush1.bf16.msra.mxu0 %v1675
    %2687 = vmatprep.subr.bf16.mxu0 %v1680
    %2688 = vmatpush1.bf16.msra.mxu0 %v1679
    %2689 = vmatprep.subr.bf16.mxu0 %v1684
    %2690 = vmatpush1.bf16.msra.mxu0 %v1683
    %2691 = vmatprep.subr.bf16.mxu0 %v1688
    %2692 = vmatpush1.bf16.msra.mxu0 %v1687
    %2693 = vmatprep.subr.bf16.mxu0 %v1692
    %2694 = vmatpush1.bf16.msra.mxu0 %v1691
    %2695 = vmatprep.subr.bf16.mxu0 %v1696
    %2696 = vmatpush1.bf16.msra.mxu0 %v1695
    %2697 = vmatprep.subr.bf16.mxu0 %v1700
    %2698 = vmatpush1.bf16.msra.mxu0 %v1699
    %2699 = vmatprep.subr.bf16.mxu0 %v1704
    %2700 = vmatpush1.bf16.msra.mxu0 %v1703
    %2701 = vmatprep.subr.bf16.mxu0 %v1708
    %2702 = vmatpush1.bf16.msra.mxu0 %v1707
    %2703 = vmatprep.subr.bf16.mxu0 %v1712
    %2704 = vmatpush1.bf16.msra.mxu0 %v1711
    %2705 = vmatprep.subr.bf16.mxu0 %v1716
    %2706 = vmatpush1.bf16.msra.mxu0 %v1715
    %2707 = vmatprep.subr.bf16.mxu0 %v1720
    %2708 = vmatpush1.bf16.msra.mxu0 %v1719
    %2709 = vmatprep.subr.bf16.mxu0 %v1724
    %2710 = vmatpush1.bf16.msra.mxu0 %v1723
    %2711 = vmatprep.subr.bf16.mxu0 %v1728
    %2712 = vmatpush1.bf16.msra.mxu0 %v1727
    %2713 = vmatprep.subr.bf16.mxu0 %v1732
    %2714 = vmatpush1.bf16.msra.mxu0 %v1731
    %2715 = vmatprep.mubr.bf16.mxu0 %v469
    %2716 = vmatmul.mubr.bf16.gmra.mrb[0].mxu0 %v455
    %v2717 = vpop.f32.mrb[0].mxu0
    %v2718 = vadd.f32 %v421, %v2717
    %v2719 = vpop.f32.mrb[0].mxu0
    %v2720 = vadd.f32 %v425, %v2719
    %v2721 = vpop.f32.mrb[0].mxu0
    %v2722 = vpop.f32.mrb[0].mxu0
    %2723 = vdwg.mxu0
    %2724 = vmatprep.subr.bf16.mxu0 %v1736
    %2725 = vmatpush1.bf16.msra.mxu0 %v1735
    %2726 = vmatprep.subr.bf16.mxu0 %v1740
    %2727 = vmatpush1.bf16.msra.mxu0 %v1739
    %2728 = vmatprep.subr.bf16.mxu0 %v1744
    %2729 = vmatpush1.bf16.msra.mxu0 %v1743
    %2730 = vmatprep.subr.bf16.mxu0 %v1748
    %2731 = vmatpush1.bf16.msra.mxu0 %v1747
    %2732 = vmatprep.subr.bf16.mxu0 %v1752
    %2733 = vmatpush1.bf16.msra.mxu0 %v1751
    %2734 = vmatprep.subr.bf16.mxu0 %v1756
    %2735 = vmatpush1.bf16.msra.mxu0 %v1755
    %2736 = vmatprep.subr.bf16.mxu0 %v1760
    %2737 = vmatpush1.bf16.msra.mxu0 %v1759
    %2738 = vmatprep.subr.bf16.mxu0 %v1764
    %2739 = vmatpush1.bf16.msra.mxu0 %v1763
    %2740 = vmatprep.subr.bf16.mxu0 %v1768
    %2741 = vmatpush1.bf16.msra.mxu0 %v1767
    %2742 = vmatprep.subr.bf16.mxu0 %v1772
    %2743 = vmatpush1.bf16.msra.mxu0 %v1771
    %2744 = vmatprep.subr.bf16.mxu0 %v1776
    %2745 = vmatpush1.bf16.msra.mxu0 %v1775
    %2746 = vmatprep.subr.bf16.mxu0 %v1780
    %2747 = vmatpush1.bf16.msra.mxu0 %v1779
    %2748 = vmatprep.subr.bf16.mxu0 %v1784
    %2749 = vmatpush1.bf16.msra.mxu0 %v1783
    %2750 = vmatprep.subr.bf16.mxu0 %v1788
    %2751 = vmatpush1.bf16.msra.mxu0 %v1787
    %2752 = vmatprep.subr.bf16.mxu0 %v1792
    %2753 = vmatpush1.bf16.msra.mxu0 %v1791
    %2754 = vmatprep.subr.bf16.mxu0 %v1796
    %2755 = vmatpush1.bf16.msra.mxu0 %v1795
    %2756 = vmatprep.mubr.bf16.mxu0 %v479
    %2757 = vmatmul.mubr.bf16.gmra.mrb[0].mxu0 %v477
    %v2758 = vpop.f32.mrb[0].mxu0
    %v2759 = vadd.f32 %v2718, %v2758
    %v2760 = vpop.f32.mrb[0].mxu0
    %v2761 = vadd.f32 %v2720, %v2760
    %v2762 = vpop.f32.mrb[0].mxu0
    %v2763 = vpop.f32.mrb[0].mxu0
    %2764 = vdwg.mxu0
    %2765 = vmatprep.subr.bf16.mxu0 %v1800
    %2766 = vmatpush1.bf16.msra.mxu0 %v1799
    %2767 = vmatprep.subr.bf16.mxu0 %v1804
    %2768 = vmatpush1.bf16.msra.mxu0 %v1803
    %2769 = vmatprep.subr.bf16.mxu0 %v1808
    %2770 = vmatpush1.bf16.msra.mxu0 %v1807
    %2771 = vmatprep.subr.bf16.mxu0 %v1812
    %2772 = vmatpush1.bf16.msra.mxu0 %v1811
    %2773 = vmatprep.subr.bf16.mxu0 %v1816
    %2774 = vmatpush1.bf16.msra.mxu0 %v1815
    %2775 = vmatprep.subr.bf16.mxu0 %v1820
    %2776 = vmatpush1.bf16.msra.mxu0 %v1819
    %2777 = vmatprep.subr.bf16.mxu0 %v1824
    %2778 = vmatpush1.bf16.msra.mxu0 %v1823
    %2779 = vmatprep.subr.bf16.mxu0 %v1828
    %2780 = vmatpush1.bf16.msra.mxu0 %v1827
    %2781 = vmatprep.subr.bf16.mxu0 %v1832
    %2782 = vmatpush1.bf16.msra.mxu0 %v1831
    %2783 = vmatprep.subr.bf16.mxu0 %v1836
    %2784 = vmatpush1.bf16.msra.mxu0 %v1835
    %2785 = vmatprep.subr.bf16.mxu0 %v1840
    %2786 = vmatpush1.bf16.msra.mxu0 %v1839
    %2787 = vmatprep.subr.bf16.mxu0 %v1844
    %2788 = vmatpush1.bf16.msra.mxu0 %v1843
    %2789 = vmatprep.subr.bf16.mxu0 %v1848
    %2790 = vmatpush1.bf16.msra.mxu0 %v1847
    %2791 = vmatprep.subr.bf16.mxu0 %v1852
    %2792 = vmatpush1.bf16.msra.mxu0 %v1851
    %2793 = vmatprep.subr.bf16.mxu0 %v1856
    %2794 = vmatpush1.bf16.msra.mxu0 %v1855
    %2795 = vmatprep.subr.bf16.mxu0 %v1860
    %2796 = vmatpush1.bf16.msra.mxu0 %v1859
    %2797 = vmatprep.mubr.bf16.mxu0 %v476
    %2798 = vmatmul.mubr.bf16.gmra.mrb[0].mxu0 %v462
    %v2799 = vpop.f32.mrb[0].mxu0
    %v2800 = vadd.f32 %v2759, %v2799
    %v2801 = vpop.f32.mrb[0].mxu0
    %v2802 = vadd.f32 %v2761, %v2801
    %v2803 = vpop.f32.mrb[0].mxu0
    %v2804 = vpop.f32.mrb[0].mxu0
    %2805 = vdwg.mxu0
    %2806 = vmatprep.subr.bf16.mxu0 %v1864
    %2807 = vmatpush1.bf16.msra.mxu0 %v1863
    %2808 = vmatprep.subr.bf16.mxu0 %v1868
    %2809 = vmatpush1.bf16.msra.mxu0 %v1867
    %2810 = vmatprep.subr.bf16.mxu0 %v1872
    %2811 = vmatpush1.bf16.msra.mxu0 %v1871
    %2812 = vmatprep.subr.bf16.mxu0 %v1876
    %2813 = vmatpush1.bf16.msra.mxu0 %v1875
    %2814 = vmatprep.subr.bf16.mxu0 %v1880
    %2815 = vmatpush1.bf16.msra.mxu0 %v1879
    %2816 = vmatprep.subr.bf16.mxu0 %v1884
    %2817 = vmatpush1.bf16.msra.mxu0 %v1883
    %2818 = vmatprep.subr.bf16.mxu0 %v1888
    %2819 = vmatpush1.bf16.msra.mxu0 %v1887
    %2820 = vmatprep.subr.bf16.mxu0 %v1892
    %2821 = vmatpush1.bf16.msra.mxu0 %v1891
    %2822 = vmatprep.subr.bf16.mxu0 %v1896
    %2823 = vmatpush1.bf16.msra.mxu0 %v1895
    %2824 = vmatprep.subr.bf16.mxu0 %v1900
    %2825 = vmatpush1.bf16.msra.mxu0 %v1899
    %2826 = vmatprep.subr.bf16.mxu0 %v1904
    %2827 = vmatpush1.bf16.msra.mxu0 %v1903
    %2828 = vmatprep.subr.bf16.mxu0 %v1908
    %2829 = vmatpush1.bf16.msra.mxu0 %v1907
    %2830 = vmatprep.subr.bf16.mxu0 %v1912
    %2831 = vmatpush1.bf16.msra.mxu0 %v1911
    %2832 = vmatprep.subr.bf16.mxu0 %v1916
    %2833 = vmatpush1.bf16.msra.mxu0 %v1915
    %2834 = vmatprep.subr.bf16.mxu0 %v1920
    %2835 = vmatpush1.bf16.msra.mxu0 %v1919
    %2836 = vmatprep.subr.bf16.mxu0 %v1924
    %2837 = vmatpush1.bf16.msra.mxu0 %v1923
    %2838 = vmatprep.mubr.bf16.mxu0 %v480
    %2839 = vmatmul.mubr.bf16.gmra.mrb[0].mxu0 %v478
    %v2840 = vpop.f32.mrb[0].mxu0
    %v2841 = vadd.f32 %v2800, %v2840
    %v2842 = vpop.f32.mrb[0].mxu0
    %v2843 = vadd.f32 %v2802, %v2842
    %v2844 = vpop.f32.mrb[0].mxu0
    %v2845 = vpop.f32.mrb[0].mxu0
    %2846 = vdwg.mxu0
    %2847 = vmatprep.subr.bf16.mxu0 %v1928
    %2848 = vmatpush1.bf16.msra.mxu0 %v1927
    %2849 = vmatprep.subr.bf16.mxu0 %v1932
    %2850 = vmatpush1.bf16.msra.mxu0 %v1931
    %2851 = vmatprep.subr.bf16.mxu0 %v1936
    %2852 = vmatpush1.bf16.msra.mxu0 %v1935
    %2853 = vmatprep.subr.bf16.mxu0 %v1940
    %2854 = vmatpush1.bf16.msra.mxu0 %v1939
    %2855 = vmatprep.subr.bf16.mxu0 %v1944
    %2856 = vmatpush1.bf16.msra.mxu0 %v1943
    %2857 = vmatprep.subr.bf16.mxu0 %v1948
    %2858 = vmatpush1.bf16.msra.mxu0 %v1947
    %2859 = vmatprep.subr.bf16.mxu0 %v1952
    %2860 = vmatpush1.bf16.msra.mxu0 %v1951
    %2861 = vmatprep.subr.bf16.mxu0 %v1956
    %2862 = vmatpush1.bf16.msra.mxu0 %v1955
    %2863 = vmatprep.subr.bf16.mxu0 %v1960
    %2864 = vmatpush1.bf16.msra.mxu0 %v1959
    %2865 = vmatprep.subr.bf16.mxu0 %v1964
    %2866 = vmatpush1.bf16.msra.mxu0 %v1963
    %2867 = vmatprep.subr.bf16.mxu0 %v1968
    %2868 = vmatpush1.bf16.msra.mxu0 %v1967
    %2869 = vmatprep.subr.bf16.mxu0 %v1972
    %2870 = vmatpush1.bf16.msra.mxu0 %v1971
    %2871 = vmatprep.subr.bf16.mxu0 %v1976
    %2872 = vmatpush1.bf16.msra.mxu0 %v1975
    %2873 = vmatprep.subr.bf16.mxu0 %v1980
    %2874 = vmatpush1.bf16.msra.mxu0 %v1979
    %2875 = vmatprep.subr.bf16.mxu0 %v1984
    %2876 = vmatpush1.bf16.msra.mxu0 %v1983
    %2877 = vmatprep.subr.bf16.mxu0 %v1988
    %2878 = vmatpush1.bf16.msra.mxu0 %v1987
    %2879 = vmatprep.mubr.bf16.mxu0 %v502
    %2880 = vmatmul.mubr.bf16.gmra.mrb[0].mxu0 %v495
    %v2881 = vpop.f32.mrb[0].mxu0
    %v2882 = vadd.f32 %v2841, %v2881
    %v2883 = vpop.f32.mrb[0].mxu0
    %v2884 = vadd.f32 %v2843, %v2883
    %v2885 = vpop.f32.mrb[0].mxu0
    %v2886 = vpop.f32.mrb[0].mxu0
    %2887 = vdwg.mxu0
    %2888 = vmatprep.subr.bf16.mxu0 %v1992
    %2889 = vmatpush1.bf16.msra.mxu0 %v1991
    %2890 = vmatprep.subr.bf16.mxu0 %v1996
    %2891 = vmatpush1.bf16.msra.mxu0 %v1995
    %2892 = vmatprep.subr.bf16.mxu0 %v2000
    %2893 = vmatpush1.bf16.msra.mxu0 %v1999
    %2894 = vmatprep.subr.bf16.mxu0 %v2004
    %2895 = vmatpush1.bf16.msra.mxu0 %v2003
    %2896 = vmatprep.subr.bf16.mxu0 %v2008
    %2897 = vmatpush1.bf16.msra.mxu0 %v2007
    %2898 = vmatprep.subr.bf16.mxu0 %v2012
    %2899 = vmatpush1.bf16.msra.mxu0 %v2011
    %2900 = vmatprep.subr.bf16.mxu0 %v2016
    %2901 = vmatpush1.bf16.msra.mxu0 %v2015
    %2902 = vmatprep.subr.bf16.mxu0 %v2020
    %2903 = vmatpush1.bf16.msra.mxu0 %v2019
    %2904 = vmatprep.subr.bf16.mxu0 %v2024
    %2905 = vmatpush1.bf16.msra.mxu0 %v2023
    %2906 = vmatprep.subr.bf16.mxu0 %v2028
    %2907 = vmatpush1.bf16.msra.mxu0 %v2027
    %2908 = vmatprep.subr.bf16.mxu0 %v2032
    %2909 = vmatpush1.bf16.msra.mxu0 %v2031
    %2910 = vmatprep.subr.bf16.mxu0 %v2036
    %2911 = vmatpush1.bf16.msra.mxu0 %v2035
    %2912 = vmatprep.subr.bf16.mxu0 %v2040
    %2913 = vmatpush1.bf16.msra.mxu0 %v2039
    %2914 = vmatprep.subr.bf16.mxu0 %v2044
    %2915 = vmatpush1.bf16.msra.mxu0 %v2043
    %2916 = vmatprep.subr.bf16.mxu0 %v2048
    %2917 = vmatpush1.bf16.msra.mxu0 %v2047
    %2918 = vmatprep.subr.bf16.mxu0 %v2052
    %2919 = vmatpush1.bf16.msra.mxu0 %v2051
    %2920 = vmatprep.mubr.bf16.mxu0 %v504
    %2921 = vmatmul.mubr.bf16.gmra.mrb[0].mxu0 %v503
    %v2922 = vpop.f32.mrb[0].mxu0
    %v2923 = vadd.f32 %v2882, %v2922
    %v2924 = vpop.f32.mrb[0].mxu0
    %v2925 = vadd.f32 %v2884, %v2924
    %v2926 = vpop.f32.mrb[0].mxu0
    %v2927 = vpop.f32.mrb[0].mxu0
    %2928 = vdwg.mxu0
    %v2929 = vmax.f32 %v2677, 0.0
    %v2930 = vmax.f32 %v2679, 0.0
    %v2931 = vmax.f32 %v2923, 0.0
    %v2932 = vmax.f32 %v2925, 0.0
    %v2933 = vpack.c.bf16 %v2929, %v2929
    %v2934 = vpack.c.bf16 %v2930, %v2930
    %v2935 = vpack.c.bf16 %v2931, %v2931
    %v2936 = vpack.c.bf16 %v2932, %v2932
    %v2937 = vld [vmem:[%s3] sm:$0xf]
    %v2938 = vld [vmem:[%s3 + $0x4] sm:$0xf]
    %v2939 = vld [vmem:[%s3 + $0x8] sm:$0xf]
    %v2940 = vld [vmem:[%s3 + $0xc] sm:$0xf]
    %v2941 = vld [vmem:[%s3 + $0x10] sm:$0xf]
    %v2942 = vld [vmem:[%s3 + $0x14] sm:$0xf]
    %v2943 = vld [vmem:[%s3 + $0x18] sm:$0xf]
    %v2944 = vld [vmem:[%s3 + $0x1c] sm:$0xf]
    %v2945 = vld [vmem:[%s3 + $0x20] sm:$0xf]
    %v2946 = vld [vmem:[%s3 + $0x24] sm:$0xf]
    %v2947 = vld [vmem:[%s3 + $0x28] sm:$0xf]
    %v2948 = vld [vmem:[%s3 + $0x2c] sm:$0xf]
    %v2949 = vld [vmem:[%s3 + $0x30] sm:$0xf]
    %v2950 = vld [vmem:[%s3 + $0x34] sm:$0xf]
    %v2951 = vld [vmem:[%s3 + $0x38] sm:$0xf]
    %v2952 = vld [vmem:[%s3 + $0x3c] sm:$0xf]
    %v2953 = vld [vmem:[%s3 + $0x40] sm:$0xf]
    %v2954 = vld [vmem:[%s3 + $0x44] sm:$0xf]
    %v2955 = vld [vmem:[%s3 + $0x48] sm:$0xf]
    %v2956 = vld [vmem:[%s3 + $0x4c] sm:$0xf]
    %v2957 = vld [vmem:[%s3 + $0x50] sm:$0xf]
    %v2958 = vld [vmem:[%s3 + $0x54] sm:$0xf]
    %v2959 = vld [vmem:[%s3 + $0x58] sm:$0xf]
    %v2960 = vld [vmem:[%s3 + $0x5c] sm:$0xf]
    %v2961 = vld [vmem:[%s3 + $0x60] sm:$0xf]
    %v2962 = vld [vmem:[%s3 + $0x64] sm:$0xf]
    %v2963 = vld [vmem:[%s3 + $0x68] sm:$0xf]
    %v2964 = vld [vmem:[%s3 + $0x6c] sm:$0xf]
    %v2965 = vld [vmem:[%s3 + $0x70] sm:$0xf]
    %v2966 = vld [vmem:[%s3 + $0x74] sm:$0xf]
    %v2967 = vld [vmem:[%s3 + $0x78] sm:$0xf]
    %v2968 = vld [vmem:[%s3 + $0x7c] sm:$0xf]
    %v2969 = vld [vmem:[%s3 + $0x80] sm:$0xf]
    %v2970 = vld [vmem:[%s3 + $0x84] sm:$0xf]
    %v2971 = vld [vmem:[%s3 + $0x88] sm:$0xf]
    %v2972 = vld [vmem:[%s3 + $0x8c] sm:$0xf]
    %v2973 = vld [vmem:[%s3 + $0x90] sm:$0xf]
    %v2974 = vld [vmem:[%s3 + $0x94] sm:$0xf]
    %v2975 = vld [vmem:[%s3 + $0x98] sm:$0xf]
    %v2976 = vld [vmem:[%s3 + $0x9c] sm:$0xf]
    %v2977 = vld [vmem:[%s3 + $0xa0] sm:$0xf]
    %v2978 = vld [vmem:[%s3 + $0xa4] sm:$0xf]
    %v2979 = vld [vmem:[%s3 + $0xa8] sm:$0xf]
    %v2980 = vld [vmem:[%s3 + $0xac] sm:$0xf]
    %v2981 = vld [vmem:[%s3 + $0xb0] sm:$0xf]
    %v2982 = vld [vmem:[%s3 + $0xb4] sm:$0xf]
    %v2983 = vld [vmem:[%s3 + $0xb8] sm:$0xf]
    %v2984 = vld [vmem:[%s3 + $0xbc] sm:$0xf]
    %v2985 = vld [vmem:[%s3 + $0xc0] sm:$0xf]
    %v2986 = vld [vmem:[%s3 + $0xc4] sm:$0xf]
    %v2987 = vld [vmem:[%s3 + $0xc8] sm:$0xf]
    %v2988 = vld [vmem:[%s3 + $0xcc] sm:$0xf]
    %v2989 = vld [vmem:[%s3 + $0xd0] sm:$0xf]
    %v2990 = vld [vmem:[%s3 + $0xd4] sm:$0xf]
    %v2991 = vld [vmem:[%s3 + $0xd8] sm:$0xf]
    %v2992 = vld [vmem:[%s3 + $0xdc] sm:$0xf]
    %v2993 = vld [vmem:[%s3 + $0xe0] sm:$0xf]
    %v2994 = vld [vmem:[%s3 + $0xe4] sm:$0xf]
    %v2995 = vld [vmem:[%s3 + $0xe8] sm:$0xf]
    %v2996 = vld [vmem:[%s3 + $0xec] sm:$0xf]
    %v2997 = vld [vmem:[%s3 + $0xf0] sm:$0xf]
    %v2998 = vld [vmem:[%s3 + $0xf4] sm:$0xf]
    %v2999 = vld [vmem:[%s3 + $0xf8] sm:$0xf]
    %v3000 = vld [vmem:[%s3 + $0xfc] sm:$0xf]
    %v3001 = vld [vmem:[%s4] sm:$0x1]
    %v3003 = vlaneseq
    %v3004 = vshrl.u32 %v3003, 7
    %v3005 = vsub.s32 0, %v3004
    %v3006 = vrot.slane %v3001, %v3005
    %v3072 = vunpack.c.l.b16 %v2937
    %v3073 = vunpack.c.l.b16 %v2938
    %v3074 = vunpack.c.l.b16 %v2939
    %v3075 = vunpack.c.l.b16 %v2940
    %v3076 = vunpack.c.l.b16 %v2941
    %v3077 = vunpack.c.l.b16 %v2942
    %v3078 = vunpack.c.l.b16 %v2943
    %v3079 = vunpack.c.l.b16 %v2944
    %v3080 = vunpack.c.l.b16 %v2945
    %v3081 = vunpack.c.l.b16 %v2946
    %v3082 = vunpack.c.l.b16 %v2947
    %v3083 = vunpack.c.l.b16 %v2948
    %v3084 = vunpack.c.l.b16 %v2949
    %v3085 = vunpack.c.l.b16 %v2950
    %v3086 = vunpack.c.l.b16 %v2951
    %v3087 = vunpack.c.l.b16 %v2952
    %v3088 = vunpack.c.l.b16 %v2953
    %v3089 = vunpack.c.l.b16 %v2954
    %v3090 = vunpack.c.l.b16 %v2955
    %v3091 = vunpack.c.l.b16 %v2956
    %v3092 = vunpack.c.l.b16 %v2957
    %v3093 = vunpack.c.l.b16 %v2958
    %v3094 = vunpack.c.l.b16 %v2959
    %v3095 = vunpack.c.l.b16 %v2960
    %v3096 = vunpack.c.l.b16 %v2961
    %v3097 = vunpack.c.l.b16 %v2962
    %v3098 = vunpack.c.l.b16 %v2963
    %v3099 = vunpack.c.l.b16 %v2964
    %v3100 = vunpack.c.l.b16 %v2965
    %v3101 = vunpack.c.l.b16 %v2966
    %v3102 = vunpack.c.l.b16 %v2967
    %v3103 = vunpack.c.l.b16 %v2968
    %v3104 = vunpack.c.l.b16 %v2969
    %v3105 = vunpack.c.l.b16 %v2970
    %v3106 = vunpack.c.l.b16 %v2971
    %v3107 = vunpack.c.l.b16 %v2972
    %v3108 = vunpack.c.l.b16 %v2973
    %v3109 = vunpack.c.l.b16 %v2974
    %v3110 = vunpack.c.l.b16 %v2975
    %v3111 = vunpack.c.l.b16 %v2976
    %v3112 = vunpack.c.l.b16 %v2977
    %v3113 = vunpack.c.l.b16 %v2978
    %v3114 = vunpack.c.l.b16 %v2979
    %v3115 = vunpack.c.l.b16 %v2980
    %v3116 = vunpack.c.l.b16 %v2981
    %v3117 = vunpack.c.l.b16 %v2982
    %v3118 = vunpack.c.l.b16 %v2983
    %v3119 = vunpack.c.l.b16 %v2984
    %v3120 = vunpack.c.l.b16 %v2985
    %v3121 = vunpack.c.l.b16 %v2986
    %v3122 = vunpack.c.l.b16 %v2987
    %v3123 = vunpack.c.l.b16 %v2988
    %v3124 = vunpack.c.l.b16 %v2989
    %v3125 = vunpack.c.l.b16 %v2990
    %v3126 = vunpack.c.l.b16 %v2991
    %v3127 = vunpack.c.l.b16 %v2992
    %v3128 = vunpack.c.l.b16 %v2993
    %v3129 = vunpack.c.l.b16 %v2994
    %v3130 = vunpack.c.l.b16 %v2995
    %v3131 = vunpack.c.l.b16 %v2996
    %v3132 = vunpack.c.l.b16 %v2997
    %v3133 = vunpack.c.l.b16 %v2998
    %v3134 = vunpack.c.l.b16 %v2999
    %v3135 = vunpack.c.l.b16 %v3000
    %v3136 = vpack.c.b16 %v3073, %v3072
    %v3137 = vpack.c.b16 %v3075, %v3074
    %v3138 = vpack.c.b16 %v3077, %v3076
    %v3139 = vpack.c.b16 %v3079, %v3078
    %v3140 = vpack.c.b16 %v3081, %v3080
    %v3141 = vpack.c.b16 %v3083, %v3082
    %v3142 = vpack.c.b16 %v3085, %v3084
    %v3143 = vpack.c.b16 %v3087, %v3086
    %v3144 = vpack.c.b16 %v3089, %v3088
    %v3145 = vpack.c.b16 %v3091, %v3090
    %v3146 = vpack.c.b16 %v3093, %v3092
    %v3147 = vpack.c.b16 %v3095, %v3094
    %v3148 = vpack.c.b16 %v3097, %v3096
    %v3149 = vpack.c.b16 %v3099, %v3098
    %v3150 = vpack.c.b16 %v3101, %v3100
    %v3151 = vpack.c.b16 %v3103, %v3102
    %v3152 = vpack.c.b16 %v3105, %v3104
    %v3153 = vpack.c.b16 %v3107, %v3106
    %v3154 = vpack.c.b16 %v3109, %v3108
    %v3155 = vpack.c.b16 %v3111, %v3110
    %v3156 = vpack.c.b16 %v3113, %v3112
    %v3157 = vpack.c.b16 %v3115, %v3114
    %v3158 = vpack.c.b16 %v3117, %v3116
    %v3159 = vpack.c.b16 %v3119, %v3118
    %v3160 = vpack.c.b16 %v3121, %v3120
    %v3161 = vpack.c.b16 %v3123, %v3122
    %v3162 = vpack.c.b16 %v3125, %v3124
    %v3163 = vpack.c.b16 %v3127, %v3126
    %v3164 = vpack.c.b16 %v3129, %v3128
    %v3165 = vpack.c.b16 %v3131, %v3130
    %v3166 = vpack.c.b16 %v3133, %v3132
    %v3167 = vpack.c.b16 %v3135, %v3134
    %3200 = vmatprep.subr.bf16.mxu0 0
    %3201 = vmatpush1.bf16.msra.mxu0 %v3136
    %3202 = vmatprep.subr.bf16.mxu0 0
    %3203 = vmatpush1.bf16.msra.mxu0 %v3137
    %3204 = vmatprep.subr.bf16.mxu0 0
    %3205 = vmatpush1.bf16.msra.mxu0 %v3138
    %3206 = vmatprep.subr.bf16.mxu0 0
    %3207 = vmatpush1.bf16.msra.mxu0 %v3139
    %3208 = vmatprep.subr.bf16.mxu0 0
    %3209 = vmatpush1.bf16.msra.mxu0 %v3140
    %3210 = vmatprep.subr.bf16.mxu0 0
    %3211 = vmatpush1.bf16.msra.mxu0 %v3141
    %3212 = vmatprep.subr.bf16.mxu0 0
    %3213 = vmatpush1.bf16.msra.mxu0 %v3142
    %3214 = vmatprep.subr.bf16.mxu0 0
    %3215 = vmatpush1.bf16.msra.mxu0 %v3143
    %3216 = vmatprep.subr.bf16.mxu0 0
    %3217 = vmatpush1.bf16.msra.mxu0 %v3144
    %3218 = vmatprep.subr.bf16.mxu0 0
    %3219 = vmatpush1.bf16.msra.mxu0 %v3145
    %3220 = vmatprep.subr.bf16.mxu0 0
    %3221 = vmatpush1.bf16.msra.mxu0 %v3146
    %3222 = vmatprep.subr.bf16.mxu0 0
    %3223 = vmatpush1.bf16.msra.mxu0 %v3147
    %3224 = vmatprep.subr.bf16.mxu0 0
    %3225 = vmatpush1.bf16.msra.mxu0 %v3148
    %3226 = vmatprep.subr.bf16.mxu0 0
    %3227 = vmatpush1.bf16.msra.mxu0 %v3149
    %3228 = vmatprep.subr.bf16.mxu0 0
    %3229 = vmatpush1.bf16.msra.mxu0 %v3150
    %3230 = vmatprep.subr.bf16.mxu0 0
    %3231 = vmatpush1.bf16.msra.mxu0 %v3151
    %3232 = vmatprep.mubr.bf16.mxu0 %v2934
    %3233 = vmatmul.mubr.bf16.gmra.mrb[0].mxu0 %v2933
    %v3234 = vpop.f32.mrb[0].mxu0
    %v3235 = vadd.f32 %v3006, %v3234
    %v3236 = vpop.f32.mrb[0].mxu0
    %v3237 = vpop.f32.mrb[0].mxu0
    %v3238 = vpop.f32.mrb[0].mxu0
    %3239 = vdwg.mxu0
    %3240 = vmatprep.subr.bf16.mxu0 0
    %3241 = vmatpush1.bf16.msra.mxu0 %v3152
    %3242 = vmatprep.subr.bf16.mxu0 0
    %3243 = vmatpush1.bf16.msra.mxu0 %v3153
    %3244 = vmatprep.subr.bf16.mxu0 0
    %3245 = vmatpush1.bf16.msra.mxu0 %v3154
    %3246 = vmatprep.subr.bf16.mxu0 0
    %3247 = vmatpush1.bf16.msra.mxu0 %v3155
    %3248 = vmatprep.subr.bf16.mxu0 0
    %3249 = vmatpush1.bf16.msra.mxu0 %v3156
    %3250 = vmatprep.subr.bf16.mxu0 0
    %3251 = vmatpush1.bf16.msra.mxu0 %v3157
    %3252 = vmatprep.subr.bf16.mxu0 0
    %3253 = vmatpush1.bf16.msra.mxu0 %v3158
    %3254 = vmatprep.subr.bf16.mxu0 0
    %3255 = vmatpush1.bf16.msra.mxu0 %v3159
    %3256 = vmatprep.subr.bf16.mxu0 0
    %3257 = vmatpush1.bf16.msra.mxu0 %v3160
    %3258 = vmatprep.subr.bf16.mxu0 0
    %3259 = vmatpush1.bf16.msra.mxu0 %v3161
    %3260 = vmatprep.subr.bf16.mxu0 0
    %3261 = vmatpush1.bf16.msra.mxu0 %v3162
    %3262 = vmatprep.subr.bf16.mxu0 0
    %3263 = vmatpush1.bf16.msra.mxu0 %v3163
    %3264 = vmatprep.subr.bf16.mxu0 0
    %3265 = vmatpush1.bf16.msra.mxu0 %v3164
    %3266 = vmatprep.subr.bf16.mxu0 0
    %3267 = vmatpush1.bf16.msra.mxu0 %v3165
    %3268 = vmatprep.subr.bf16.mxu0 0
    %3269 = vmatpush1.bf16.msra.mxu0 %v3166
    %3270 = vmatprep.subr.bf16.mxu0 0
    %3271 = vmatpush1.bf16.msra.mxu0 %v3167
    %3272 = vmatprep.mubr.bf16.mxu0 %v2936
    %3273 = vmatmul.mubr.bf16.gmra.mrb[0].mxu0 %v2935
    %v3274 = vpop.f32.mrb[0].mxu0
    %v3275 = vadd.f32 %v3235, %v3274
    %v3276 = vpop.f32.mrb[0].mxu0
    %v3277 = vpop.f32.mrb[0].mxu0
    %v3278 = vpop.f32.mrb[0].mxu0
    %3279 = vdwg.mxu0
    %3280 = vst [vmem:[#allocation2] sm:$0x3] %v3275
    // Predicated region
    $region22: #{effnet_erosion_forward.5} parent=1 // pred_check
      _
    $region23: #{effnet_erosion_forward.5} parent=1 // pred_check_branch
      %3282 = sbr.rel (0) target = $region25
    $region24: #{effnet_erosion_forward.5} parent=1 // pred_region
      %s3284 = ssub.s32 32, 32
      %3285 = vsyncadd [#allocation3], %s3284
      %s3287 = sshll.u32 [#allocation2], 4
      %s3288 = int_to_ptr.vmem [resolvable:$true] %s3287
      %3290 = dma.vmem_to_hbm [thread:$0]  %s3288, 32, %s5, [#allocation3]
    $region25: #{effnet_erosion_forward.5} parent=1 // pred_fallthru
      _
    // Predicated region
    $region26: #{effnet_erosion_forward.5} parent=1 // pred_check
      _
    $region27: #{effnet_erosion_forward.5} parent=1 // pred_check_branch
      %3292 = sbr.rel (0) target = $region29
    $region28: #{effnet_erosion_forward.5} parent=1 // pred_region
      %3293 = dma.done [#allocation3], 32
    $region29: #{effnet_erosion_forward.5} parent=1 // pred_fallthru
      _
    %3294 = vsyncpa [#allocation3], 1

</llo_original>
